<compile_context>
chip_gen: v6e
topology: v6e:2x2x1
jax: 0.10.0
libtpu: 0.0.40
codegen_flags: <defaults>
</compile_context>

<pallas_src>
import functools

import jax
import jax.numpy as jnp
from jax import lax
from jax.experimental import pallas as pl
from jax.experimental.pallas import tpu as pltpu

EPS = 1e-5


def _largest_divisor_leq(n, cap):
    for d in range(max(1, min(n, cap)), 0, -1):
        if n % d == 0:
            return d
    return 1


def _pick_tile_h(Ho, cap):
    """Largest row-tile TH with Ho % TH == 0 and TH <= cap (kills padded rows + the final
    slice); falls back to TH=cap with zero-row padding when Ho has no decent divisor."""
    if Ho <= cap:
        return Ho, Ho
    d = _largest_divisor_leq(Ho, cap)
    if d >= max(8, cap // 2):
        return d, Ho
    TH = cap
    n_tiles = -(-Ho // TH)
    return TH, n_tiles * TH


def _vmem_limit_bytes():
    """~75% of physical VMEM, capped at 96 MiB: ~48 MiB on v7x (64 MiB part), 96 MiB on
    v5e/v6e (128 MiB parts)."""
    try:
        cap = int(pltpu.get_tpu_info().vmem_capacity_bytes)
    except Exception:
        cap = 64 << 20
    return int(max(32 << 20, min(cap * 3 // 4, 96 << 20)))


def _conv_stats_kernel(x_ref, w_ref, y_ref, sum_ref, sq_ref, *, K, TH, Wo):
    """Pass 1: transposed conv (tap-folded MXU matmul) + per-batch per-channel sum/sumsq.

    x_ref:   (Hp_pad, Wp, Cin) bf16  -- full padded image of this batch element, resident
             across the row-tile grid axis (DMA'd once per batch element).
    w_ref:   (K*K*Cin, Cout) bf16    -- spatially flipped, tap-flattened weights (resident).
    y_ref:   (TH, Wo, Cout) bf16     -- conv output tile (pipelined / double-buffered).
    sum_ref, sq_ref: (1, Cout) f32   -- per-batch accumulators, resident across row tiles.
    """
    i = pl.program_id(1)

    @pl.when(i == 0)
    def _init():
        sum_ref[...] = jnp.zeros_like(sum_ref)
        sq_ref[...] = jnp.zeros_like(sq_ref)

    h0 = pl.multiple_of(i * TH, TH)

    # Gather the K*K shifted slabs once per tile and fold the taps into the contraction:
    # LHS (TH, Wo, K*K*Cin) @ W (K*K*Cin, Cout)  ->  MXU M = TH*Wo, K = K*K*Cin.
    slabs = []
    for kh in range(K):
        rows = x_ref[pl.ds(h0 + kh, TH), :, :]          # (TH, Wp, Cin)
        for kw in range(K):
            slabs.append(rows[:, kw:kw + Wo, :])        # (TH, Wo, Cin)
    lhs = jnp.concatenate(slabs, axis=-1)               # (TH, Wo, K*K*Cin) bf16

    acc = lax.dot_general(lhs, w_ref[...],
                          dimension_numbers=(((2,), (0,)), ((), ())),
                          preferred_element_type=jnp.float32)   # (TH, Wo, Cout) f32

    y_ref[...] = acc.astype(y_ref.dtype)                # bf16 intermediate storage
    # Stats from the f32 accumulator (zero-padded extra rows contribute exactly zero).
    sum_ref[...] += jnp.sum(acc, axis=(0, 1))[None]
    sq_ref[...] += jnp.sum(acc * acc, axis=(0, 1))[None]


def _bn_relu_kernel(y_ref, scale_ref, shift_ref, o_ref):
    """Pass 2: y * scale + shift, ReLU on a lane-dense flat view. f32 elementwise math."""
    y = y_ref[...].astype(jnp.float32)
    o_ref[...] = jnp.maximum(y * scale_ref[...] + shift_ref[...], 0.0).astype(o_ref.dtype)


def deconv2d_forward(x_nchw, weight, gamma, beta, *, tile_h_cap=64):
    """x_nchw: (N, Cin, H, W) f32
       weight: (Cin, Cout, K, K) f32  (ConvTranspose2d weight layout)
       gamma, beta: (Cout,) batch-norm affine params
       returns: (N, Cout, H+K-1, W+K-1) f32  (stride=1, padding=0)
    """
    N, Cin, H, W = x_nchw.shape
    Cout, K = weight.shape[1], weight.shape[2]
    Ho, Wo = H + K - 1, W + K - 1
    Wp = W + 2 * (K - 1)

    TH, Ho_pad = _pick_tile_h(Ho, tile_h_cap)
    n_tiles = Ho_pad // TH
    Hp_pad = Ho_pad + K - 1

    # NCHW -> NHWC once; zero-pad for the "full" correlation.  Any extra bottom rows (only
    # when Ho has no usable divisor) read pure zero padding -> zero conv output -> zero
    # contribution to the BN sums (the true element count is used below).
    x_nhwc = jnp.transpose(x_nchw, (0, 2, 3, 1))
    x_pad = jnp.pad(x_nhwc, ((0, 0), (K - 1, Ho_pad - H), (K - 1, K - 1), (0, 0)))
    x_pad = x_pad.astype(jnp.bfloat16)                          # bf16 MXU inputs

    # ConvTranspose2d (stride=1) == full correlation with the spatially flipped kernel.
    # Fold the K*K taps into the contraction dim: (K, K, Cin, Cout) -> (K*K*Cin, Cout),
    # matching the (kh, kw, ci) order of the slab concatenation in the kernel.
    w_kern = jnp.transpose(jnp.flip(weight, axis=(2, 3)), (2, 3, 0, 1))   # (K,K,Cin,Cout)
    w2 = w_kern.reshape(K * K * Cin, Cout).astype(jnp.bfloat16)

    vmem_limit = _vmem_limit_bytes()

    # TODO(synk): for very large H*W*Cin, replace the per-batch resident padded image with a
    # halo-tiled (TH+K-1, Wp, Cin) block (manual make_async_copy) so VMEM is O(TH*Wp*Cin).
    kernel1 = functools.partial(_conv_stats_kernel, K=K, TH=TH, Wo=Wo)
    conv, b_sum, b_sq = pl.pallas_call(
        kernel1,
        out_shape=(
            jax.ShapeDtypeStruct((N, Ho_pad, Wo, Cout), jnp.bfloat16),
            jax.ShapeDtypeStruct((N, 1, Cout), jnp.float32),
            jax.ShapeDtypeStruct((N, 1, Cout), jnp.float32),
        ),
        grid_spec=pltpu.PrefetchScalarGridSpec(
            num_scalar_prefetch=0,
            grid=(N, n_tiles),
            in_specs=[
                # Full padded image per batch element; resident across the row-tile axis.
                pl.BlockSpec((None, Hp_pad, Wp, Cin), lambda n, i: (n, 0, 0, 0)),
                # Tap-flattened weights: resident for the whole grid.
                pl.BlockSpec((K * K * Cin, Cout), lambda n, i: (0, 0)),
            ],
            out_specs=(
                pl.BlockSpec((None, TH, Wo, Cout), lambda n, i: (n, i, 0, 0)),
                pl.BlockSpec((None, 1, Cout), lambda n, i: (n, 0, 0)),   # per-batch stats
                pl.BlockSpec((None, 1, Cout), lambda n, i: (n, 0, 0)),
            ),
        ),
        compiler_params=pltpu.CompilerParams(
            # Per-batch partial stats make the batch axis race-free -> "parallel" (uses
            # both TCs on v7x); the row-tile axis carries the resident accumulators.
            dimension_semantics=("parallel", "arbitrary"),
            vmem_limit_bytes=vmem_limit,
        ),
    )(x_pad, w2)

    # O(Cout) BN bookkeeping between the passes (training-mode biased batch statistics).
    # TODO(synk): E[y^2]-E[y]^2 in f32 can cancel when |mean| >> std; switch to shifted
    # accumulation if this layer ever follows large-activation layers.
    count = float(N * Ho * Wo)                    # padded rows contribute 0 to the sums
    ch_sum = jnp.sum(b_sum, axis=0)               # (1, Cout)
    ch_sq = jnp.sum(b_sq, axis=0)                 # (1, Cout)
    mean = ch_sum / count
    var = ch_sq / count - mean * mean
    inv_std = lax.rsqrt(var + EPS)
    scale = gamma.reshape(1, Cout).astype(jnp.float32) * inv_std
    shift = beta.reshape(1, Cout).astype(jnp.float32) - mean * scale

    # Pass 2: lane-dense flat view (N*n_tiles, TH, Wo*Cout), large blocks, both TCs.
    F = Wo * Cout
    NT = N * n_tiles
    conv3 = conv.reshape(NT, TH, F)               # contiguous collapse -> free
    scale3 = jnp.tile(scale, (1, Wo)).reshape(1, 1, F)
    shift3 = jnp.tile(shift, (1, Wo)).reshape(1, 1, F)

    rows_cap = max(1, (4 << 20) // max(1, TH * F * 6))    # ~4 MiB blocks (bf16 in + f32 out)
    BG = _largest_divisor_leq(NT, rows_cap)

    out_flat = pl.pallas_call(
        _bn_relu_kernel,
        out_shape=jax.ShapeDtypeStruct((NT, TH, F), jnp.float32),
        grid_spec=pltpu.PrefetchScalarGridSpec(
            num_scalar_prefetch=0,
            grid=(NT // BG,),
            in_specs=[
                pl.BlockSpec((BG, TH, F), lambda b: (b, 0, 0)),
                pl.BlockSpec((1, 1, F), lambda b: (0, 0, 0)),
                pl.BlockSpec((1, 1, F), lambda b: (0, 0, 0)),
            ],
            out_specs=pl.BlockSpec((BG, TH, F), lambda b: (b, 0, 0)),
        ),
        compiler_params=pltpu.CompilerParams(
            dimension_semantics=("parallel",),
            vmem_limit_bytes=vmem_limit,
        ),
    )(conv3, scale3, shift3)

    out = out_flat.reshape(N, Ho_pad, Wo, Cout)
    if Ho_pad != Ho:                              # only in the no-divisor fallback
        out = out[:, :Ho]
    # TODO(synk): when Wo % 128 == 0, write NCHW directly from pass 2 (in-kernel XLU
    # transpose) to drop this final XLA transpose pass over HBM.
    return jnp.transpose(out, (0, 3, 1, 2))


def reference_forward(x_nchw, weight, gamma, beta,
                      matmul_dtype=jnp.float32, store_dtype=jnp.float32):
    """Pure-JAX reference: ConvTranspose2d(stride=1, no bias) + train-mode BatchNorm2d + ReLU.
    `matmul_dtype=bf16` rounds the conv inputs like the MXU path; `store_dtype=bf16` rounds
    the conv intermediate like the kernel's bf16 storage (stats from f32 in both)."""
    N, Cin, H, W = x_nchw.shape
    Cout, K = weight.shape[1], weight.shape[2]
    Ho, Wo = H + K - 1, W + K - 1
    xq = x_nchw.astype(matmul_dtype).astype(jnp.float32)
    wq = weight.astype(matmul_dtype).astype(jnp.float32)
    y = jnp.zeros((N, Cout, Ho, Wo), jnp.float32)
    for kh in range(K):
        for kw in range(K):
            y = y.at[:, :, kh:kh + H, kw:kw + W].add(
                jnp.einsum('nchw,cd->ndhw', xq, wq[:, :, kh, kw]))
    mean = y.mean(axis=(0, 2, 3), keepdims=True)
    var = ((y - mean) ** 2).mean(axis=(0, 2, 3), keepdims=True)
    y_stored = y.astype(store_dtype).astype(jnp.float32)
    yn = (y_stored - mean) / jnp.sqrt(var + EPS)
    yn = yn * gamma.reshape(1, Cout, 1, 1) + beta.reshape(1, Cout, 1, 1)
    return jnp.maximum(yn, 0.0)


if __name__ == "__main__":
    key = jax.random.PRNGKey(0)
    kx, kw = jax.random.split(key)

    N, Cin, H, W = 2, 4, 16, 16
    Cout, K = 8, 3

    x = jax.random.normal(kx, (N, Cin, H, W), dtype=jnp.float32)

    # Kaiming-uniform-style init for ConvTranspose2d weight (Cin, Cout, K, K).
    fan_in = Cout * K * K
    bound = (1.0 / fan_in) ** 0.5
    weight = jax.random.uniform(kw, (Cin, Cout, K, K), jnp.float32, -bound, bound)

    # BatchNorm2d affine params as initialized by init_bn: ones / zeros.
    gamma = jnp.ones((Cout,), jnp.float32)
    beta = jnp.zeros((Cout,), jnp.float32)

    y = jax.block_until_ready(deconv2d_forward(x, weight, gamma, beta))
    assert y.shape == (N, Cout, H + K - 1, W + K - 1), y.shape

    # Tight structural check: reference with bf16 MXU inputs and bf16 intermediate storage
    # (exactly mirroring the kernel's rounding points; accumulation is f32 in both).
    y_ref_bf16 = reference_forward(x, weight, gamma, beta,
                                   matmul_dtype=jnp.bfloat16, store_dtype=jnp.bfloat16)
    assert jnp.allclose(y, y_ref_bf16, atol=3e-3, rtol=3e-3), \
        float(jnp.max(jnp.abs(y - y_ref_bf16)))

    # Loose sanity check against the full-f32 reference (bf16 MXU inputs / storage are
    # intentional).
    y_ref_f32 = reference_forward(x, weight, gamma, beta)
    assert jnp.allclose(y, y_ref_f32, atol=1e-1, rtol=1e-1), \
        float(jnp.max(jnp.abs(y - y_ref_f32)))

    print("KERNEL_OK")
</pallas_src>

<mosaic_0001>
module attributes {stable_mosaic.version = 11 : i64} {
  func.func @_conv_stats_kernel(%arg0: i32, %arg1: i32, %arg2: memref<1x20x20x4xbf16, #tpu.memory_space<vmem>>, %arg3: memref<36x8xbf16, #tpu.memory_space<vmem>>, %arg4: memref<1x18x18x8xbf16, #tpu.memory_space<vmem>>, %arg5: memref<1x1x8xf32, #tpu.memory_space<vmem>>, %arg6: memref<1x1x8xf32, #tpu.memory_space<vmem>>) attributes {dimension_semantics = [#tpu.dimension_semantics<parallel>, #tpu.dimension_semantics<arbitrary>], iteration_bounds = array<i64: 2, 1>, scalar_prefetch = 0 : i64, scratch_operands = 0 : i64, tpu.core_type = #tpu.core_type<tc>, window_params = [{transform_indices = @transform_0, window_bounds = array<i64: 1, 20, 20, 4>}, {pipeline_mode = #tpu.pipeline_mode<synchronous>, transform_indices = @transform_1, window_bounds = array<i64: 36, 8>}, {transform_indices = @transform_2, window_bounds = array<i64: 1, 18, 18, 8>}, {transform_indices = @transform_3, window_bounds = array<i64: 1, 1, 8>}, {transform_indices = @transform_4, window_bounds = array<i64: 1, 1, 8>}]} {
    %c0_i32 = arith.constant 0 : i32
    %0 = arith.cmpi eq, %arg1, %c0_i32 : i32
    %1 = arith.extui %0 : i1 to i32
    %c0_i32_0 = arith.constant 0 : i32
    %2 = arith.cmpi ne, %1, %c0_i32_0 : i32
    scf.if %2 {
      %cst_30 = arith.constant 0.000000e+00 : f32
      %50 = vector.broadcast %cst_30 : f32 to vector<1x8xf32>
      %c0_31 = arith.constant 0 : index
      %c0_32 = arith.constant 0 : index
      %c0_33 = arith.constant 0 : index
      %51 = vector.load %arg5[%c0_31, %c0_32, %c0_33] : memref<1x1x8xf32, #tpu.memory_space<vmem>>, vector<1x1x8xf32>
      %52 = vector.shape_cast %51 : vector<1x1x8xf32> to vector<1x8xf32>
      %53 = vector.shape_cast %50 : vector<1x8xf32> to vector<1x1x8xf32>
      tpu.vector_store %arg5[%c0_31, %c0_32, %c0_33], %53 {strides = array<i32>} : memref<1x1x8xf32, #tpu.memory_space<vmem>>, vector<1x1x8xf32>,
      %cst_34 = arith.constant 0.000000e+00 : f32
      %54 = vector.broadcast %cst_34 : f32 to vector<1x8xf32>
      %c0_35 = arith.constant 0 : index
      %c0_36 = arith.constant 0 : index
      %c0_37 = arith.constant 0 : index
      %55 = vector.load %arg6[%c0_35, %c0_36, %c0_37] : memref<1x1x8xf32, #tpu.memory_space<vmem>>, vector<1x1x8xf32>
      %56 = vector.shape_cast %55 : vector<1x1x8xf32> to vector<1x8xf32>
      %57 = vector.shape_cast %54 : vector<1x8xf32> to vector<1x1x8xf32>
      tpu.vector_store %arg6[%c0_35, %c0_36, %c0_37], %57 {strides = array<i32>} : memref<1x1x8xf32, #tpu.memory_space<vmem>>, vector<1x1x8xf32>,
    } else {
    }
    %c18_i32 = arith.constant 18 : i32
    %3 = arith.muli %arg1, %c18_i32 : i32
    %4 = tpu.assume_multiple %3, 18 : i32
    %c0_i32_1 = arith.constant 0 : i32
    %5 = arith.addi %4, %c0_i32_1 : i32
    %c0 = arith.constant 0 : index
    %6 = arith.index_cast %5 : i32 to index
    %c0_2 = arith.constant 0 : index
    %c0_3 = arith.constant 0 : index
    %7 = vector.load %arg2[%c0, %6, %c0_2, %c0_3] : memref<1x20x20x4xbf16, #tpu.memory_space<vmem>>, vector<1x18x20x4xbf16>
    %8 = vector.shape_cast %7 : vector<1x18x20x4xbf16> to vector<18x20x4xbf16>
    %9 = vector.extract_strided_slice %8 {offsets = [0, 0, 0], sizes = [18, 18, 4], strides = [1, 1, 1]} : vector<18x20x4xbf16> to vector<18x18x4xbf16>
    %10 = vector.extract_strided_slice %8 {offsets = [0, 1, 0], sizes = [18, 18, 4], strides = [1, 1, 1]} : vector<18x20x4xbf16> to vector<18x18x4xbf16>
    %11 = vector.extract_strided_slice %8 {offsets = [0, 2, 0], sizes = [18, 18, 4], strides = [1, 1, 1]} : vector<18x20x4xbf16> to vector<18x18x4xbf16>
    %c1_i32 = arith.constant 1 : i32
    %12 = arith.addi %4, %c1_i32 : i32
    %c0_4 = arith.constant 0 : index
    %13 = arith.index_cast %12 : i32 to index
    %c0_5 = arith.constant 0 : index
    %c0_6 = arith.constant 0 : index
    %14 = vector.load %arg2[%c0_4, %13, %c0_5, %c0_6] : memref<1x20x20x4xbf16, #tpu.memory_space<vmem>>, vector<1x18x20x4xbf16>
    %15 = vector.shape_cast %14 : vector<1x18x20x4xbf16> to vector<18x20x4xbf16>
    %16 = vector.extract_strided_slice %15 {offsets = [0, 0, 0], sizes = [18, 18, 4], strides = [1, 1, 1]} : vector<18x20x4xbf16> to vector<18x18x4xbf16>
    %17 = vector.extract_strided_slice %15 {offsets = [0, 1, 0], sizes = [18, 18, 4], strides = [1, 1, 1]} : vector<18x20x4xbf16> to vector<18x18x4xbf16>
    %18 = vector.extract_strided_slice %15 {offsets = [0, 2, 0], sizes = [18, 18, 4], strides = [1, 1, 1]} : vector<18x20x4xbf16> to vector<18x18x4xbf16>
    %c2_i32 = arith.constant 2 : i32
    %19 = arith.addi %4, %c2_i32 : i32
    %c0_7 = arith.constant 0 : index
    %20 = arith.index_cast %19 : i32 to index
    %c0_8 = arith.constant 0 : index
    %c0_9 = arith.constant 0 : index
    %21 = vector.load %arg2[%c0_7, %20, %c0_8, %c0_9] : memref<1x20x20x4xbf16, #tpu.memory_space<vmem>>, vector<1x18x20x4xbf16>
    %22 = vector.shape_cast %21 : vector<1x18x20x4xbf16> to vector<18x20x4xbf16>
    %23 = vector.extract_strided_slice %22 {offsets = [0, 0, 0], sizes = [18, 18, 4], strides = [1, 1, 1]} : vector<18x20x4xbf16> to vector<18x18x4xbf16>
    %24 = vector.extract_strided_slice %22 {offsets = [0, 1, 0], sizes = [18, 18, 4], strides = [1, 1, 1]} : vector<18x20x4xbf16> to vector<18x18x4xbf16>
    %25 = vector.extract_strided_slice %22 {offsets = [0, 2, 0], sizes = [18, 18, 4], strides = [1, 1, 1]} : vector<18x20x4xbf16> to vector<18x18x4xbf16>
    %26 = tpu.concatenate %9, %10, %11, %16, %17, %18, %23, %24, %25 in 2 : vector<18x18x4xbf16>, vector<18x18x4xbf16>, vector<18x18x4xbf16>, vector<18x18x4xbf16>, vector<18x18x4xbf16>, vector<18x18x4xbf16>, vector<18x18x4xbf16>, vector<18x18x4xbf16>, vector<18x18x4xbf16> -> vector<18x18x36xbf16>
    %c0_10 = arith.constant 0 : index
    %c0_11 = arith.constant 0 : index
    %27 = vector.load %arg3[%c0_10, %c0_11] : memref<36x8xbf16, #tpu.memory_space<vmem>>, vector<36x8xbf16>
    %cst = arith.constant dense<0.000000e+00> : vector<18x18x8xf32>
    %28 = tpu.matmul %26, %27, %cst {dimension_numbers = #tpu.dot_dimension_numbers<[2], [0], [0, 1], [1], [0, 0, 0, 1, 1, 1], [], []>} : vector<18x18x36xbf16>, vector<36x8xbf16>, vector<18x18x8xf32> -> vector<18x18x8xf32>
    %29 = arith.truncf %28 : vector<18x18x8xf32> to vector<18x18x8xbf16>
    %c0_12 = arith.constant 0 : index
    %c0_13 = arith.constant 0 : index
    %c0_14 = arith.constant 0 : index
    %c0_15 = arith.constant 0 : index
    %30 = vector.load %arg4[%c0_12, %c0_13, %c0_14, %c0_15] : memref<1x18x18x8xbf16, #tpu.memory_space<vmem>>, vector<1x18x18x8xbf16>
    %31 = vector.shape_cast %30 : vector<1x18x18x8xbf16> to vector<18x18x8xbf16>
    %32 = vector.shape_cast %29 : vector<18x18x8xbf16> to vector<1x18x18x8xbf16>
    tpu.vector_store %arg4[%c0_12, %c0_13, %c0_14, %c0_15], %32 {strides = array<i32>} : memref<1x18x18x8xbf16, #tpu.memory_space<vmem>>, vector<1x18x18x8xbf16>,
    %c0_16 = arith.constant 0 : index
    %c0_17 = arith.constant 0 : index
    %c0_18 = arith.constant 0 : index
    %33 = vector.load %arg5[%c0_16, %c0_17, %c0_18] : memref<1x1x8xf32, #tpu.memory_space<vmem>>, vector<1x1x8xf32>
    %34 = vector.shape_cast %33 : vector<1x1x8xf32> to vector<1x8xf32>
    %cst_19 = arith.constant dense<0.000000e+00> : vector<8xf32>
    %35 = vector.multi_reduction <add>, %28, %cst_19 [0, 1] : vector<18x18x8xf32> to vector<8xf32>
    %36 = vector.shape_cast %35 : vector<8xf32> to vector<1x8xf32>
    %37 = arith.addf %34, %36 : vector<1x8xf32>
    %c0_20 = arith.constant 0 : index
    %c0_21 = arith.constant 0 : index
    %c0_22 = arith.constant 0 : index
    %38 = vector.load %arg5[%c0_20, %c0_21, %c0_22] : memref<1x1x8xf32, #tpu.memory_space<vmem>>, vector<1x1x8xf32>
    %39 = vector.shape_cast %38 : vector<1x1x8xf32> to vector<1x8xf32>
    %40 = vector.shape_cast %37 : vector<1x8xf32> to vector<1x1x8xf32>
    tpu.vector_store %arg5[%c0_20, %c0_21, %c0_22], %40 {strides = array<i32>} : memref<1x1x8xf32, #tpu.memory_space<vmem>>, vector<1x1x8xf32>,
    %c0_23 = arith.constant 0 : index
    %c0_24 = arith.constant 0 : index
    %c0_25 = arith.constant 0 : index
    %41 = vector.load %arg6[%c0_23, %c0_24, %c0_25] : memref<1x1x8xf32, #tpu.memory_space<vmem>>, vector<1x1x8xf32>
    %42 = vector.shape_cast %41 : vector<1x1x8xf32> to vector<1x8xf32>
    %43 = arith.mulf %28, %28 : vector<18x18x8xf32>
    %cst_26 = arith.constant dense<0.000000e+00> : vector<8xf32>
    %44 = vector.multi_reduction <add>, %43, %cst_26 [0, 1] : vector<18x18x8xf32> to vector<8xf32>
    %45 = vector.shape_cast %44 : vector<8xf32> to vector<1x8xf32>
    %46 = arith.addf %42, %45 : vector<1x8xf32>
    %c0_27 = arith.constant 0 : index
    %c0_28 = arith.constant 0 : index
    %c0_29 = arith.constant 0 : index
    %47 = vector.load %arg6[%c0_27, %c0_28, %c0_29] : memref<1x1x8xf32, #tpu.memory_space<vmem>>, vector<1x1x8xf32>
    %48 = vector.shape_cast %47 : vector<1x1x8xf32> to vector<1x8xf32>
    %49 = vector.shape_cast %46 : vector<1x8xf32> to vector<1x1x8xf32>
    tpu.vector_store %arg6[%c0_27, %c0_28, %c0_29], %49 {strides = array<i32>} : memref<1x1x8xf32, #tpu.memory_space<vmem>>, vector<1x1x8xf32>,
    return
  }
  func.func @transform_0(%arg0: i32, %arg1: i32) -> (i32, i32, i32, i32) {
    %c0_i32 = arith.constant 0 : i32
    %c0_i32_0 = arith.constant 0 : i32
    %c0_i32_1 = arith.constant 0 : i32
    %c0_i32_2 = arith.constant 0 : i32
    return %arg0, %c0_i32, %c0_i32_0, %c0_i32_1 : i32, i32, i32, i32
  }
  func.func @transform_1(%arg0: i32, %arg1: i32) -> (i32, i32) {
    %c0_i32 = arith.constant 0 : i32
    %c0_i32_0 = arith.constant 0 : i32
    %c0_i32_1 = arith.constant 0 : i32
    return %c0_i32, %c0_i32_0 : i32, i32
  }
  func.func @transform_2(%arg0: i32, %arg1: i32) -> (i32, i32, i32, i32) {
    %c0_i32 = arith.constant 0 : i32
    %c0_i32_0 = arith.constant 0 : i32
    %c0_i32_1 = arith.constant 0 : i32
    return %arg0, %arg1, %c0_i32, %c0_i32_0 : i32, i32, i32, i32
  }
  func.func @transform_3(%arg0: i32, %arg1: i32) -> (i32, i32, i32) {
    %c0_i32 = arith.constant 0 : i32
    %c0_i32_0 = arith.constant 0 : i32
    %c0_i32_1 = arith.constant 0 : i32
    return %arg0, %c0_i32, %c0_i32_0 : i32, i32, i32
  }
  func.func @transform_4(%arg0: i32, %arg1: i32) -> (i32, i32, i32) {
    %c0_i32 = arith.constant 0 : i32
    %c0_i32_0 = arith.constant 0 : i32
    %c0_i32_1 = arith.constant 0 : i32
    return %arg0, %c0_i32, %c0_i32_0 : i32, i32, i32
  }
}

</mosaic_0001>

<llo_original>
// kernel: tpu_custom_call.1
$region0: #{tpu_custom_call.1}
  #allocation0 [shape = 'u32[]', space=smem, size = 0x4, offset = 0x4, fixed_abs, tag = 'smem constant byte address 0x4 - core index']
  #allocation1 [shape = 'u32[144,128]{1,0:T(1,128)}', space=vmem, size = 0x12000, scoped, tag = 'internal scratch']
  %s0 = inlined_call_operand.vmem [shape: bf16[2,20,20,4], index: 0, kind: input, shape index: {}]
  %s1 = inlined_call_operand.vmem [shape: bf16[36,8], index: 1, kind: input, shape index: {}]
  %s2 = inlined_call_operand.vmem [shape: bf16[2,18,18,8], index: 2, kind: output, shape index: {0}]
  %s3 = inlined_call_operand.hbm [shape: f32[2,1,8], index: 3, kind: output, shape index: {1}]
  %s4 = inlined_call_operand.hbm [shape: f32[2,1,8], index: 4, kind: output, shape index: {2}]
  %5 = xla_tuple %s2, %s3, %s4
  %s6 = sld [smem:[#allocation0]]
  $region61: #{tpu_custom_call.1} parent=0
    _
  %s8 = ssub.s32 1, %s6
  %s9 = scalar_select 0, %s8, %s6
  $region1: #{tpu_custom_call.1} parent=0
    #allocation2 [shape = 'u8[1024]{0}', space=vmem, size = 0x400, scoped, tag = 'output window, operand 1']
    #allocation3 [shape = 's32[2]{0}', space=sflag, size = 0x8, scoped, tag = 'scoped memory for tpu_custom_call.1']
    #allocation4 [shape = 'u8[1024]{0}', space=vmem, size = 0x400, scoped, tag = 'output window, operand 2']
    #allocation5 [shape = 's32[2]{0}', space=sflag, size = 0x8, scoped, tag = 'scoped memory for tpu_custom_call.1']
    %10 = vsyncpa [#allocation3], 0
    %s11 = scalar_lea.sflag [#allocation3], 1
    %12 = vsyncpa %s11, 0
    %13 = vsyncpa [#allocation5], 0
    %s14 = scalar_lea.sflag [#allocation5], 1
    %15 = vsyncpa %s14, 0
    loop: start=0, step=1, limit=4
    $region2: #{tpu_custom_call.1} parent=1 // loop_pre_header
      _
    $region3: #{tpu_custom_call.1} parent=1 // loop_header
      %s17 = sphi 0, %s21
      %p18 = scmp.ge.s32.totalorder %s17, 4
      %s24 = sphi 0, %s36
      %s25 = sphi 0, %s32
      %s26 = sphi 0, %s24
      %s27 = sphi 0, %s25
      %s28 = sphi 0, %s26
      %s29 = sphi 0, %s27
      %s39 = sphi 0, %s41
      %s42 = sphi 0, %s39
      %s43 = sphi 0, %s42
      %s59 = sphi 0, %s43
      %s63 = sphi 0, %s63
      %s65 = sphi 0, %s63
      %s66 = sphi 0, %s65
      %s80 = sphi 0, %s66
      %s88 = sphi 0, %s90
      %s91 = sphi 0, %s88
      %s92 = sphi 0, %s91
      %s108 = sphi 0, %s92
      %s114 = sphi 0, %s116
      %s117 = sphi 0, %s114
      %s118 = sphi 0, %s117
      %s134 = sphi 0, %s118
      %s140 = sphi 0, %s142
      %s143 = sphi 0, %s140
      %s144 = sphi 0, %s143
      %s160 = sphi 0, %s144
    $region4: #{tpu_custom_call.1} parent=1 // loop_header_branch
      %20 = sbr.rel (%p18) target = $region8
    $region5: #{tpu_custom_call.1} parent=1 // loop_body
      %s22 = ssub.s32 %s17, 1
      %s23 = ssub.s32 %s17, 2
      %s30 = sadd.s32 1, %s25
      %p31 = scmp.ge.s32.totalorder %s30, 1
      %s32 = scalar_select %p31, 0, %s30
      %s33 = sadd.s32 1, %s24
      %s34 = scalar_select %p31, %s33, %s24
      %p35 = scmp.ge.s32.totalorder %s34, 2
      %s36 = scalar_select %p35, 0, %s34
      %s37 = ssub.s32 %s24, %s36
      %p38 = scmp.eq.s32.totalorder %s37, 0
      %s40 = sadd.s32 %s39, 1
      %s41 = scalar_select %p38, %s39, %s40
      %p44 = pneg %p38
      %p45 = scmp.eq.s32.totalorder %s17, 1
      %p46 = por %p44, %p45
      %p47 = scmp.ne.s32.totalorder %s39, %s42
      %p48 = scmp.eq.s32.totalorder %s17, 0
      %p49 = por %p47, %p48
      %p50 = scmp.ne.s32.totalorder %s39, %s42
      %p51 = scmp.eq.s32.totalorder %s22, 1
      %p52 = por %p50, %p51
      %p53 = scmp.ne.s32.totalorder %s42, %s43
      %p54 = scmp.eq.s32.totalorder %s22, 0
      %p55 = por %p53, %p54
      %p56 = scmp.ne.s32.totalorder %s42, %s43
      %p57 = scmp.eq.s32.totalorder %s23, 1
      %p58 = por %p56, %p57
      %p60 = scmp.ne.s32.totalorder %s43, %s59
      %p61 = scmp.eq.s32.totalorder %s23, 0
      %p62 = por %p60, %p61
      %s64 = sadd.s32 %s63, 1
      %p67 = scmp.eq.s32.totalorder %s17, 1
      %p68 = scmp.ne.s32.totalorder %s63, %s65
      %p69 = scmp.eq.s32.totalorder %s17, 0
      %p70 = por %p68, %p69
      %p71 = scmp.ne.s32.totalorder %s63, %s65
      %p72 = scmp.eq.s32.totalorder %s22, 1
      %p73 = por %p71, %p72
      %p74 = scmp.ne.s32.totalorder %s65, %s66
      %p75 = scmp.eq.s32.totalorder %s22, 0
      %p76 = por %p74, %p75
      %p77 = scmp.ne.s32.totalorder %s65, %s66
      %p78 = scmp.eq.s32.totalorder %s23, 1
      %p79 = por %p77, %p78
      %p81 = scmp.ne.s32.totalorder %s66, %s80
      %p82 = scmp.eq.s32.totalorder %s23, 0
      %p83 = por %p81, %p82
      %s84 = ssub.s32 %s24, %s36
      %s85 = ssub.s32 %s25, %s32
      %s86 = sor.u32 %s84, %s85
      %p87 = scmp.eq.s32.totalorder %s86, 0
      %s89 = sadd.s32 %s88, 1
      %s90 = scalar_select %p87, %s88, %s89
      %p93 = pneg %p87
      %p94 = scmp.eq.s32.totalorder %s17, 1
      %p95 = por %p93, %p94
      %p96 = scmp.ne.s32.totalorder %s88, %s91
      %p97 = scmp.eq.s32.totalorder %s17, 0
      %p98 = por %p96, %p97
      %p99 = scmp.ne.s32.totalorder %s88, %s91
      %p100 = scmp.eq.s32.totalorder %s22, 1
      %p101 = por %p99, %p100
      %p102 = scmp.ne.s32.totalorder %s91, %s92
      %p103 = scmp.eq.s32.totalorder %s22, 0
      %p104 = por %p102, %p103
      %p105 = scmp.ne.s32.totalorder %s91, %s92
      %p106 = scmp.eq.s32.totalorder %s23, 1
      %p107 = por %p105, %p106
      %p109 = scmp.ne.s32.totalorder %s92, %s108
      %p110 = scmp.eq.s32.totalorder %s23, 0
      %p111 = por %p109, %p110
      %s112 = ssub.s32 %s24, %s36
      %p113 = scmp.eq.s32.totalorder %s112, 0
      %s115 = sadd.s32 %s114, 1
      %s116 = scalar_select %p113, %s114, %s115
      %p119 = pneg %p113
      %p120 = scmp.eq.s32.totalorder %s17, 1
      %p121 = por %p119, %p120
      %p122 = scmp.ne.s32.totalorder %s114, %s117
      %p123 = scmp.eq.s32.totalorder %s17, 0
      %p124 = por %p122, %p123
      %p125 = scmp.ne.s32.totalorder %s114, %s117
      %p126 = scmp.eq.s32.totalorder %s22, 1
      %p127 = por %p125, %p126
      %p128 = scmp.ne.s32.totalorder %s117, %s118
      %p129 = scmp.eq.s32.totalorder %s22, 0
      %p130 = por %p128, %p129
      %p131 = scmp.ne.s32.totalorder %s117, %s118
      %p132 = scmp.eq.s32.totalorder %s23, 1
      %p133 = por %p131, %p132
      %p135 = scmp.ne.s32.totalorder %s118, %s134
      %p136 = scmp.eq.s32.totalorder %s23, 0
      %p137 = por %p135, %p136
      %s138 = ssub.s32 %s24, %s36
      %p139 = scmp.eq.s32.totalorder %s138, 0
      %s141 = sadd.s32 %s140, 1
      %s142 = scalar_select %p139, %s140, %s141
      %p145 = pneg %p139
      %p146 = scmp.eq.s32.totalorder %s17, 1
      %p147 = por %p145, %p146
      %p148 = scmp.ne.s32.totalorder %s140, %s143
      %p149 = scmp.eq.s32.totalorder %s17, 0
      %p150 = por %p148, %p149
      %p151 = scmp.ne.s32.totalorder %s140, %s143
      %p152 = scmp.eq.s32.totalorder %s22, 1
      %p153 = por %p151, %p152
      %p154 = scmp.ne.s32.totalorder %s143, %s144
      %p155 = scmp.eq.s32.totalorder %s22, 0
      %p156 = por %p154, %p155
      %p157 = scmp.ne.s32.totalorder %s143, %s144
      %p158 = scmp.eq.s32.totalorder %s23, 1
      %p159 = por %p157, %p158
      %p161 = scmp.ne.s32.totalorder %s144, %s160
      %p162 = scmp.eq.s32.totalorder %s23, 0
      %p163 = por %p161, %p162
      %p164 = scmp.le.s32.totalorder 1, %s17
      %p165 = scmp.lt.s32.totalorder %s17, 3
      %p166 = pnand %p164, %p165
      %p167 = pneg %p166
      // Predicated region
      $region9: #{tpu_custom_call.1} parent=5 // pred_check
        _
      $region10: #{tpu_custom_call.1} parent=5 // pred_check_branch
        %169 = sbr.rel (%p166) target = $region12
      $region11: #{tpu_custom_call.1} parent=5 // pred_region
        %s170 = ssub.s32 %s17, 1
        // Predicated region
        $region13: #{tpu_custom_call.1} parent=11 // pred_check
          %p171 = pneg %p76
        $region14: #{tpu_custom_call.1} parent=11 // pred_check_branch
          %173 = sbr.rel (%p171) target = $region16
        $region15: #{tpu_custom_call.1} parent=11 // pred_region
          _
        $region16: #{tpu_custom_call.1} parent=11 // pred_fallthru
          _
      $region12: #{tpu_custom_call.1} parent=5 // pred_fallthru
        _
      %p174 = scmp.lt.s32.totalorder %s17, 2
      // Predicated region
      $region17: #{tpu_custom_call.1} parent=5 // pred_check
        %p175 = pneg %p174
      $region18: #{tpu_custom_call.1} parent=5 // pred_check_branch
        %177 = sbr.rel (%p175) target = $region20
      $region19: #{tpu_custom_call.1} parent=5 // pred_region
        // Predicated region
        $region21: #{tpu_custom_call.1} parent=19 // pred_check
          %p178 = pneg %p49
        $region22: #{tpu_custom_call.1} parent=19 // pred_check_branch
          %180 = sbr.rel (%p178) target = $region24
        $region23: #{tpu_custom_call.1} parent=19 // pred_region
          %p181 = scmp.lt.s32.totalorder %s24, 1
          %s182 = scalar_select %p181, %s24, 1
          %s183 = smul.addr %s182, 60
          %s184 = smul.addr %s183, 4
          %s185 = scalar_lea.vmem %s0, %s184
        $region24: #{tpu_custom_call.1} parent=19 // pred_fallthru
          _
      $region20: #{tpu_custom_call.1} parent=5 // pred_fallthru
        _
      %p186 = scmp.le.s32.totalorder 1, %s17
      %p187 = scmp.lt.s32.totalorder %s17, 3
      %p188 = pnand %p186, %p187
      %p189 = pneg %p188
      // Predicated region
      $region25: #{tpu_custom_call.1} parent=5 // pred_check
        _
      $region26: #{tpu_custom_call.1} parent=5 // pred_check_branch
        %191 = sbr.rel (%p188) target = $region28
      $region27: #{tpu_custom_call.1} parent=5 // pred_region
        %s192 = ssub.s32 %s17, 1
        %p193 = scmp.lt.s32.totalorder %s26, 1
        %s194 = scalar_select %p193, %s26, 1
        %s195 = smul.addr %s194, 60
        %s196 = smul.addr %s195, 4
        %s197 = scalar_lea.vmem %s0, %s196
        %p198 = pneg %p55
        %p199 = pneg %p52
        %p200 = pneg %p76
        %p201 = pneg %p73
        %p202 = pneg %p104
        %p203 = pneg %p101
        %s204 = smul.u32 18, %s27
        %p205 = scmp.lt.s32.totalorder %s26, 1
        %s206 = scalar_select %p205, %s26, 1
        %p207 = scmp.lt.s32.totalorder %s204, 17
        %s208 = scalar_select %p207, %s204, 17
        %s209 = smul.addr %s208, 3
        %s210 = smul.addr %s206, 54
        %s211 = sadd.s32 %s209, %s210
        %s212 = smul.addr %s211, 4
        %s213 = scalar_lea.vmem %s2, %s212
        %p214 = pneg %p130
        %p215 = pneg %p127
        %s216 = sand.u32 %s117, 1
        %s217 = scalar_lea.sflag [#allocation3], %s216
        %s218 = sand.u32 %s117, 1
        %s219 = scalar_lea.vmem [#allocation2], %s218
        %p220 = pneg %p156
        %p221 = pneg %p153
        %s222 = sand.u32 %s143, 1
        %s223 = scalar_lea.sflag [#allocation5], %s222
        %s224 = sand.u32 %s143, 1
        %s225 = scalar_lea.vmem [#allocation4], %s224
        %p226 = scmp.lt.s32.totalorder %s26, 1
        %s227 = scalar_select %p226, %s26, 1
        %s228 = smul.addr %s227, 60
        %s229 = smul.addr %s228, 4
        %s230 = scalar_lea.vmem %s0, %s229
        %s231 = smul.u32 18, %s27
        %p232 = scmp.lt.s32.totalorder %s26, 1
        %s233 = scalar_select %p232, %s26, 1
        %p234 = scmp.lt.s32.totalorder %s231, 17
        %s235 = scalar_select %p234, %s231, 17
        %s236 = smul.addr %s235, 3
        %s237 = smul.addr %s233, 54
        %s238 = sadd.s32 %s236, %s237
        %s239 = smul.addr %s238, 4
        %s240 = scalar_lea.vmem %s2, %s239
        %s241 = smul.u32 18, %s27
        %p243 = scmp.eq.s32.totalorder %s27, 0
        // Predicated region
        $region29: #{tpu_custom_call.1} parent=27 // pred_check
          %p244 = pneg %p243
        $region30: #{tpu_custom_call.1} parent=27 // pred_check_branch
          %246 = sbr.rel (%p244) target = $region32
        $region31: #{tpu_custom_call.1} parent=27 // pred_region
          %vm247 = vcmask 57344
          %248 = vst.msk [vmem:[%s219] sm:$0x1] %vm247, 0.0
          %249 = vst.msk [vmem:[%s225] sm:$0x1] %vm247, 0.0
        $region32: #{tpu_custom_call.1} parent=27 // pred_fallthru
          _
        %s250 = smul.u32 %s27, 18
        %s251 = smul.u32 %s250, 3
        %s252 = smul.addr %s251, 4
        %s253 = scalar_lea.vmem %s230, %s252
        %v254 = vld [vmem:[%s253] sm:$0xf]
        %v255 = vld [vmem:[%s253 + $0x4] sm:$0xf]
        %v256 = vld [vmem:[%s253 + $0x8] sm:$0x3]
        %v257 = vld [vmem:[%s253 + $0xc] sm:$0xf]
        %v258 = vld [vmem:[%s253 + $0x10] sm:$0xf]
        %v259 = vld [vmem:[%s253 + $0x14] sm:$0x3]
        %v260 = vld [vmem:[%s253 + $0x18] sm:$0xf]
        %v261 = vld [vmem:[%s253 + $0x1c] sm:$0xf]
        %v262 = vld [vmem:[%s253 + $0x20] sm:$0x3]
        %v263 = vld [vmem:[%s253 + $0x24] sm:$0xf]
        %v264 = vld [vmem:[%s253 + $0x28] sm:$0xf]
        %v265 = vld [vmem:[%s253 + $0x2c] sm:$0x3]
        %v266 = vld [vmem:[%s253 + $0x30] sm:$0xf]
        %v267 = vld [vmem:[%s253 + $0x34] sm:$0xf]
        %v268 = vld [vmem:[%s253 + $0x38] sm:$0x3]
        %v269 = vld [vmem:[%s253 + $0x3c] sm:$0xf]
        %v270 = vld [vmem:[%s253 + $0x40] sm:$0xf]
        %v271 = vld [vmem:[%s253 + $0x44] sm:$0x3]
        %v272 = vld [vmem:[%s253 + $0x48] sm:$0xf]
        %v273 = vld [vmem:[%s253 + $0x4c] sm:$0xf]
        %v274 = vld [vmem:[%s253 + $0x50] sm:$0x3]
        %v275 = vld [vmem:[%s253 + $0x54] sm:$0xf]
        %v276 = vld [vmem:[%s253 + $0x58] sm:$0xf]
        %v277 = vld [vmem:[%s253 + $0x5c] sm:$0x3]
        %v278 = vld [vmem:[%s253 + $0x60] sm:$0xf]
        %v279 = vld [vmem:[%s253 + $0x64] sm:$0xf]
        %v280 = vld [vmem:[%s253 + $0x68] sm:$0x3]
        %v281 = vld [vmem:[%s253 + $0x6c] sm:$0xf]
        %v282 = vld [vmem:[%s253 + $0x70] sm:$0xf]
        %v283 = vld [vmem:[%s253 + $0x74] sm:$0x3]
        %v284 = vld [vmem:[%s253 + $0x78] sm:$0xf]
        %v285 = vld [vmem:[%s253 + $0x7c] sm:$0xf]
        %v286 = vld [vmem:[%s253 + $0x80] sm:$0x3]
        %v287 = vld [vmem:[%s253 + $0x84] sm:$0xf]
        %v288 = vld [vmem:[%s253 + $0x88] sm:$0xf]
        %v289 = vld [vmem:[%s253 + $0x8c] sm:$0x3]
        %v290 = vld [vmem:[%s253 + $0x90] sm:$0xf]
        %v291 = vld [vmem:[%s253 + $0x94] sm:$0xf]
        %v292 = vld [vmem:[%s253 + $0x98] sm:$0x3]
        %v293 = vld [vmem:[%s253 + $0x9c] sm:$0xf]
        %v294 = vld [vmem:[%s253 + $0xa0] sm:$0xf]
        %v295 = vld [vmem:[%s253 + $0xa4] sm:$0x3]
        %v296 = vld [vmem:[%s253 + $0xa8] sm:$0xf]
        %v297 = vld [vmem:[%s253 + $0xac] sm:$0xf]
        %v298 = vld [vmem:[%s253 + $0xb0] sm:$0x3]
        %v299 = vld [vmem:[%s253 + $0xb4] sm:$0xf]
        %v300 = vld [vmem:[%s253 + $0xb8] sm:$0xf]
        %v301 = vld [vmem:[%s253 + $0xbc] sm:$0x3]
        %v302 = vld [vmem:[%s253 + $0xc0] sm:$0xf]
        %v303 = vld [vmem:[%s253 + $0xc4] sm:$0xf]
        %v304 = vld [vmem:[%s253 + $0xc8] sm:$0x3]
        %v305 = vld [vmem:[%s253 + $0xcc] sm:$0xf]
        %v306 = vld [vmem:[%s253 + $0xd0] sm:$0xf]
        %v307 = vld [vmem:[%s253 + $0xd4] sm:$0x3]
        %s308 = sadd.s32 %s250, 1
        %s309 = smul.u32 %s308, 3
        %s310 = smul.addr %s309, 4
        %s311 = scalar_lea.vmem %s230, %s310
        %v312 = vld [vmem:[%s311] sm:$0xf]
        %v313 = vld [vmem:[%s311 + $0x4] sm:$0xf]
        %v314 = vld [vmem:[%s311 + $0x8] sm:$0x3]
        %v315 = vld [vmem:[%s311 + $0xc] sm:$0xf]
        %v316 = vld [vmem:[%s311 + $0x10] sm:$0xf]
        %v317 = vld [vmem:[%s311 + $0x14] sm:$0x3]
        %v318 = vld [vmem:[%s311 + $0x18] sm:$0xf]
        %v319 = vld [vmem:[%s311 + $0x1c] sm:$0xf]
        %v320 = vld [vmem:[%s311 + $0x20] sm:$0x3]
        %v321 = vld [vmem:[%s311 + $0x24] sm:$0xf]
        %v322 = vld [vmem:[%s311 + $0x28] sm:$0xf]
        %v323 = vld [vmem:[%s311 + $0x2c] sm:$0x3]
        %v324 = vld [vmem:[%s311 + $0x30] sm:$0xf]
        %v325 = vld [vmem:[%s311 + $0x34] sm:$0xf]
        %v326 = vld [vmem:[%s311 + $0x38] sm:$0x3]
        %v327 = vld [vmem:[%s311 + $0x3c] sm:$0xf]
        %v328 = vld [vmem:[%s311 + $0x40] sm:$0xf]
        %v329 = vld [vmem:[%s311 + $0x44] sm:$0x3]
        %v330 = vld [vmem:[%s311 + $0x48] sm:$0xf]
        %v331 = vld [vmem:[%s311 + $0x4c] sm:$0xf]
        %v332 = vld [vmem:[%s311 + $0x50] sm:$0x3]
        %v333 = vld [vmem:[%s311 + $0x54] sm:$0xf]
        %v334 = vld [vmem:[%s311 + $0x58] sm:$0xf]
        %v335 = vld [vmem:[%s311 + $0x5c] sm:$0x3]
        %v336 = vld [vmem:[%s311 + $0x60] sm:$0xf]
        %v337 = vld [vmem:[%s311 + $0x64] sm:$0xf]
        %v338 = vld [vmem:[%s311 + $0x68] sm:$0x3]
        %v339 = vld [vmem:[%s311 + $0x6c] sm:$0xf]
        %v340 = vld [vmem:[%s311 + $0x70] sm:$0xf]
        %v341 = vld [vmem:[%s311 + $0x74] sm:$0x3]
        %v342 = vld [vmem:[%s311 + $0x78] sm:$0xf]
        %v343 = vld [vmem:[%s311 + $0x7c] sm:$0xf]
        %v344 = vld [vmem:[%s311 + $0x80] sm:$0x3]
        %v345 = vld [vmem:[%s311 + $0x84] sm:$0xf]
        %v346 = vld [vmem:[%s311 + $0x88] sm:$0xf]
        %v347 = vld [vmem:[%s311 + $0x8c] sm:$0x3]
        %v348 = vld [vmem:[%s311 + $0x90] sm:$0xf]
        %v349 = vld [vmem:[%s311 + $0x94] sm:$0xf]
        %v350 = vld [vmem:[%s311 + $0x98] sm:$0x3]
        %v351 = vld [vmem:[%s311 + $0x9c] sm:$0xf]
        %v352 = vld [vmem:[%s311 + $0xa0] sm:$0xf]
        %v353 = vld [vmem:[%s311 + $0xa4] sm:$0x3]
        %v354 = vld [vmem:[%s311 + $0xa8] sm:$0xf]
        %v355 = vld [vmem:[%s311 + $0xac] sm:$0xf]
        %v356 = vld [vmem:[%s311 + $0xb0] sm:$0x3]
        %v357 = vld [vmem:[%s311 + $0xb4] sm:$0xf]
        %v358 = vld [vmem:[%s311 + $0xb8] sm:$0xf]
        %v359 = vld [vmem:[%s311 + $0xbc] sm:$0x3]
        %v360 = vld [vmem:[%s311 + $0xc0] sm:$0xf]
        %v361 = vld [vmem:[%s311 + $0xc4] sm:$0xf]
        %v362 = vld [vmem:[%s311 + $0xc8] sm:$0x3]
        %v363 = vld [vmem:[%s311 + $0xcc] sm:$0xf]
        %v364 = vld [vmem:[%s311 + $0xd0] sm:$0xf]
        %v365 = vld [vmem:[%s311 + $0xd4] sm:$0x3]
        %s366 = sadd.s32 %s250, 2
        %s367 = smul.u32 %s366, 3
        %s368 = smul.addr %s367, 4
        %s369 = scalar_lea.vmem %s230, %s368
        %v370 = vld [vmem:[%s369] sm:$0xf]
        %v371 = vld [vmem:[%s369 + $0x4] sm:$0xf]
        %v372 = vld [vmem:[%s369 + $0x8] sm:$0x3]
        %v373 = vld [vmem:[%s369 + $0xc] sm:$0xf]
        %v374 = vld [vmem:[%s369 + $0x10] sm:$0xf]
        %v375 = vld [vmem:[%s369 + $0x14] sm:$0x3]
        %v376 = vld [vmem:[%s369 + $0x18] sm:$0xf]
        %v377 = vld [vmem:[%s369 + $0x1c] sm:$0xf]
        %v378 = vld [vmem:[%s369 + $0x20] sm:$0x3]
        %v379 = vld [vmem:[%s369 + $0x24] sm:$0xf]
        %v380 = vld [vmem:[%s369 + $0x28] sm:$0xf]
        %v381 = vld [vmem:[%s369 + $0x2c] sm:$0x3]
        %v382 = vld [vmem:[%s369 + $0x30] sm:$0xf]
        %v383 = vld [vmem:[%s369 + $0x34] sm:$0xf]
        %v384 = vld [vmem:[%s369 + $0x38] sm:$0x3]
        %v385 = vld [vmem:[%s369 + $0x3c] sm:$0xf]
        %v386 = vld [vmem:[%s369 + $0x40] sm:$0xf]
        %v387 = vld [vmem:[%s369 + $0x44] sm:$0x3]
        %v388 = vld [vmem:[%s369 + $0x48] sm:$0xf]
        %v389 = vld [vmem:[%s369 + $0x4c] sm:$0xf]
        %v390 = vld [vmem:[%s369 + $0x50] sm:$0x3]
        %v391 = vld [vmem:[%s369 + $0x54] sm:$0xf]
        %v392 = vld [vmem:[%s369 + $0x58] sm:$0xf]
        %v393 = vld [vmem:[%s369 + $0x5c] sm:$0x3]
        %v394 = vld [vmem:[%s369 + $0x60] sm:$0xf]
        %v395 = vld [vmem:[%s369 + $0x64] sm:$0xf]
        %v396 = vld [vmem:[%s369 + $0x68] sm:$0x3]
        %v397 = vld [vmem:[%s369 + $0x6c] sm:$0xf]
        %v398 = vld [vmem:[%s369 + $0x70] sm:$0xf]
        %v399 = vld [vmem:[%s369 + $0x74] sm:$0x3]
        %v400 = vld [vmem:[%s369 + $0x78] sm:$0xf]
        %v401 = vld [vmem:[%s369 + $0x7c] sm:$0xf]
        %v402 = vld [vmem:[%s369 + $0x80] sm:$0x3]
        %v403 = vld [vmem:[%s369 + $0x84] sm:$0xf]
        %v404 = vld [vmem:[%s369 + $0x88] sm:$0xf]
        %v405 = vld [vmem:[%s369 + $0x8c] sm:$0x3]
        %v406 = vld [vmem:[%s369 + $0x90] sm:$0xf]
        %v407 = vld [vmem:[%s369 + $0x94] sm:$0xf]
        %v408 = vld [vmem:[%s369 + $0x98] sm:$0x3]
        %v409 = vld [vmem:[%s369 + $0x9c] sm:$0xf]
        %v410 = vld [vmem:[%s369 + $0xa0] sm:$0xf]
        %v411 = vld [vmem:[%s369 + $0xa4] sm:$0x3]
        %v412 = vld [vmem:[%s369 + $0xa8] sm:$0xf]
        %v413 = vld [vmem:[%s369 + $0xac] sm:$0xf]
        %v414 = vld [vmem:[%s369 + $0xb0] sm:$0x3]
        %v415 = vld [vmem:[%s369 + $0xb4] sm:$0xf]
        %v416 = vld [vmem:[%s369 + $0xb8] sm:$0xf]
        %v417 = vld [vmem:[%s369 + $0xbc] sm:$0x3]
        %v418 = vld [vmem:[%s369 + $0xc0] sm:$0xf]
        %v419 = vld [vmem:[%s369 + $0xc4] sm:$0xf]
        %v420 = vld [vmem:[%s369 + $0xc8] sm:$0x3]
        %v421 = vld [vmem:[%s369 + $0xcc] sm:$0xf]
        %v422 = vld [vmem:[%s369 + $0xd0] sm:$0xf]
        %v423 = vld [vmem:[%s369 + $0xd4] sm:$0x3]
        %v478 = vunpack.c.l.b16 %v254
        %v479 = vunpack.c.l.b16 %v255
        %v480 = vunpack.c.l.b16 %v256
        %v481 = vunpack.c.l.b16 %v257
        %v482 = vunpack.c.l.b16 %v258
        %v483 = vunpack.c.l.b16 %v259
        %v484 = vunpack.c.l.b16 %v260
        %v485 = vunpack.c.l.b16 %v261
        %v486 = vunpack.c.l.b16 %v262
        %v487 = vunpack.c.l.b16 %v263
        %v488 = vunpack.c.l.b16 %v264
        %v489 = vunpack.c.l.b16 %v265
        %v490 = vunpack.c.l.b16 %v266
        %v491 = vunpack.c.l.b16 %v267
        %v492 = vunpack.c.l.b16 %v268
        %v493 = vunpack.c.l.b16 %v269
        %v494 = vunpack.c.l.b16 %v270
        %v495 = vunpack.c.l.b16 %v271
        %v496 = vunpack.c.l.b16 %v272
        %v497 = vunpack.c.l.b16 %v273
        %v498 = vunpack.c.l.b16 %v274
        %v499 = vunpack.c.l.b16 %v275
        %v500 = vunpack.c.l.b16 %v276
        %v501 = vunpack.c.l.b16 %v277
        %v502 = vunpack.c.l.b16 %v278
        %v503 = vunpack.c.l.b16 %v279
        %v504 = vunpack.c.l.b16 %v280
        %v505 = vunpack.c.l.b16 %v281
        %v506 = vunpack.c.l.b16 %v282
        %v507 = vunpack.c.l.b16 %v283
        %v508 = vunpack.c.l.b16 %v284
        %v509 = vunpack.c.l.b16 %v285
        %v510 = vunpack.c.l.b16 %v286
        %v511 = vunpack.c.l.b16 %v287
        %v512 = vunpack.c.l.b16 %v288
        %v513 = vunpack.c.l.b16 %v289
        %v514 = vunpack.c.l.b16 %v290
        %v515 = vunpack.c.l.b16 %v291
        %v516 = vunpack.c.l.b16 %v292
        %v517 = vunpack.c.l.b16 %v293
        %v518 = vunpack.c.l.b16 %v294
        %v519 = vunpack.c.l.b16 %v295
        %v520 = vunpack.c.l.b16 %v296
        %v521 = vunpack.c.l.b16 %v297
        %v522 = vunpack.c.l.b16 %v298
        %v523 = vunpack.c.l.b16 %v299
        %v524 = vunpack.c.l.b16 %v300
        %v525 = vunpack.c.l.b16 %v301
        %v526 = vunpack.c.l.b16 %v302
        %v527 = vunpack.c.l.b16 %v303
        %v528 = vunpack.c.l.b16 %v304
        %v529 = vunpack.c.l.b16 %v305
        %v530 = vunpack.c.l.b16 %v306
        %v531 = vunpack.c.l.b16 %v307
        %v532 = vpack.c.b16 %v479, %v478
        %v533 = vpack.c.b16 %v480, %v480
        %v534 = vpack.c.b16 %v482, %v481
        %v535 = vpack.c.b16 %v483, %v483
        %v536 = vpack.c.b16 %v485, %v484
        %v537 = vpack.c.b16 %v486, %v486
        %v538 = vpack.c.b16 %v488, %v487
        %v539 = vpack.c.b16 %v489, %v489
        %v540 = vpack.c.b16 %v491, %v490
        %v541 = vpack.c.b16 %v492, %v492
        %v542 = vpack.c.b16 %v494, %v493
        %v543 = vpack.c.b16 %v495, %v495
        %v544 = vpack.c.b16 %v497, %v496
        %v545 = vpack.c.b16 %v498, %v498
        %v546 = vpack.c.b16 %v500, %v499
        %v547 = vpack.c.b16 %v501, %v501
        %v548 = vpack.c.b16 %v503, %v502
        %v549 = vpack.c.b16 %v504, %v504
        %v550 = vpack.c.b16 %v506, %v505
        %v551 = vpack.c.b16 %v507, %v507
        %v552 = vpack.c.b16 %v509, %v508
        %v553 = vpack.c.b16 %v510, %v510
        %v554 = vpack.c.b16 %v512, %v511
        %v555 = vpack.c.b16 %v513, %v513
        %v556 = vpack.c.b16 %v515, %v514
        %v557 = vpack.c.b16 %v516, %v516
        %v558 = vpack.c.b16 %v518, %v517
        %v559 = vpack.c.b16 %v519, %v519
        %v560 = vpack.c.b16 %v521, %v520
        %v561 = vpack.c.b16 %v522, %v522
        %v562 = vpack.c.b16 %v524, %v523
        %v563 = vpack.c.b16 %v525, %v525
        %v564 = vpack.c.b16 %v527, %v526
        %v565 = vpack.c.b16 %v528, %v528
        %v566 = vpack.c.b16 %v530, %v529
        %v567 = vpack.c.b16 %v531, %v531
        %vm568 = vsmask.f32 7424
        %v570 = vshrl.u32 %v532, 16
        %v572 = vshll.u32 %v532, 16
        %v574 = vrot.slane %v572, 1
        %v575 = vor.u32 %v570, %v574
        %v577 = vshll.u32 %v533, 16
        %v579 = vrot.slane %v577, 1
        %v580 = vsel %vm568, %v575, %v579
        %v581 = vshrl.u32 %v533, 16
        %v583 = vor.u32 %v581, %v579
        %v585 = vshrl.u32 %v534, 16
        %v587 = vshll.u32 %v534, 16
        %v589 = vrot.slane %v587, 1
        %v590 = vor.u32 %v585, %v589
        %v592 = vshll.u32 %v535, 16
        %v594 = vrot.slane %v592, 1
        %v595 = vsel %vm568, %v590, %v594
        %v596 = vshrl.u32 %v535, 16
        %v598 = vor.u32 %v596, %v594
        %v600 = vshrl.u32 %v536, 16
        %v602 = vshll.u32 %v536, 16
        %v604 = vrot.slane %v602, 1
        %v605 = vor.u32 %v600, %v604
        %v607 = vshll.u32 %v537, 16
        %v609 = vrot.slane %v607, 1
        %v610 = vsel %vm568, %v605, %v609
        %v611 = vshrl.u32 %v537, 16
        %v613 = vor.u32 %v611, %v609
        %v615 = vshrl.u32 %v538, 16
        %v617 = vshll.u32 %v538, 16
        %v619 = vrot.slane %v617, 1
        %v620 = vor.u32 %v615, %v619
        %v622 = vshll.u32 %v539, 16
        %v624 = vrot.slane %v622, 1
        %v625 = vsel %vm568, %v620, %v624
        %v626 = vshrl.u32 %v539, 16
        %v628 = vor.u32 %v626, %v624
        %v630 = vshrl.u32 %v540, 16
        %v632 = vshll.u32 %v540, 16
        %v634 = vrot.slane %v632, 1
        %v635 = vor.u32 %v630, %v634
        %v637 = vshll.u32 %v541, 16
        %v639 = vrot.slane %v637, 1
        %v640 = vsel %vm568, %v635, %v639
        %v641 = vshrl.u32 %v541, 16
        %v643 = vor.u32 %v641, %v639
        %v645 = vshrl.u32 %v542, 16
        %v647 = vshll.u32 %v542, 16
        %v649 = vrot.slane %v647, 1
        %v650 = vor.u32 %v645, %v649
        %v652 = vshll.u32 %v543, 16
        %v654 = vrot.slane %v652, 1
        %v655 = vsel %vm568, %v650, %v654
        %v656 = vshrl.u32 %v543, 16
        %v658 = vor.u32 %v656, %v654
        %v660 = vshrl.u32 %v544, 16
        %v662 = vshll.u32 %v544, 16
        %v664 = vrot.slane %v662, 1
        %v665 = vor.u32 %v660, %v664
        %v667 = vshll.u32 %v545, 16
        %v669 = vrot.slane %v667, 1
        %v670 = vsel %vm568, %v665, %v669
        %v671 = vshrl.u32 %v545, 16
        %v673 = vor.u32 %v671, %v669
        %v675 = vshrl.u32 %v546, 16
        %v677 = vshll.u32 %v546, 16
        %v679 = vrot.slane %v677, 1
        %v680 = vor.u32 %v675, %v679
        %v682 = vshll.u32 %v547, 16
        %v684 = vrot.slane %v682, 1
        %v685 = vsel %vm568, %v680, %v684
        %v686 = vshrl.u32 %v547, 16
        %v688 = vor.u32 %v686, %v684
        %v690 = vshrl.u32 %v548, 16
        %v692 = vshll.u32 %v548, 16
        %v694 = vrot.slane %v692, 1
        %v695 = vor.u32 %v690, %v694
        %v697 = vshll.u32 %v549, 16
        %v699 = vrot.slane %v697, 1
        %v700 = vsel %vm568, %v695, %v699
        %v701 = vshrl.u32 %v549, 16
        %v703 = vor.u32 %v701, %v699
        %v705 = vshrl.u32 %v550, 16
        %v707 = vshll.u32 %v550, 16
        %v709 = vrot.slane %v707, 1
        %v710 = vor.u32 %v705, %v709
        %v712 = vshll.u32 %v551, 16
        %v714 = vrot.slane %v712, 1
        %v715 = vsel %vm568, %v710, %v714
        %v716 = vshrl.u32 %v551, 16
        %v718 = vor.u32 %v716, %v714
        %v720 = vshrl.u32 %v552, 16
        %v722 = vshll.u32 %v552, 16
        %v724 = vrot.slane %v722, 1
        %v725 = vor.u32 %v720, %v724
        %v727 = vshll.u32 %v553, 16
        %v729 = vrot.slane %v727, 1
        %v730 = vsel %vm568, %v725, %v729
        %v731 = vshrl.u32 %v553, 16
        %v733 = vor.u32 %v731, %v729
        %v735 = vshrl.u32 %v554, 16
        %v737 = vshll.u32 %v554, 16
        %v739 = vrot.slane %v737, 1
        %v740 = vor.u32 %v735, %v739
        %v742 = vshll.u32 %v555, 16
        %v744 = vrot.slane %v742, 1
        %v745 = vsel %vm568, %v740, %v744
        %v746 = vshrl.u32 %v555, 16
        %v748 = vor.u32 %v746, %v744
        %v750 = vshrl.u32 %v556, 16
        %v752 = vshll.u32 %v556, 16
        %v754 = vrot.slane %v752, 1
        %v755 = vor.u32 %v750, %v754
        %v757 = vshll.u32 %v557, 16
        %v759 = vrot.slane %v757, 1
        %v760 = vsel %vm568, %v755, %v759
        %v761 = vshrl.u32 %v557, 16
        %v763 = vor.u32 %v761, %v759
        %v765 = vshrl.u32 %v558, 16
        %v767 = vshll.u32 %v558, 16
        %v769 = vrot.slane %v767, 1
        %v770 = vor.u32 %v765, %v769
        %v772 = vshll.u32 %v559, 16
        %v774 = vrot.slane %v772, 1
        %v775 = vsel %vm568, %v770, %v774
        %v776 = vshrl.u32 %v559, 16
        %v778 = vor.u32 %v776, %v774
        %v780 = vshrl.u32 %v560, 16
        %v782 = vshll.u32 %v560, 16
        %v784 = vrot.slane %v782, 1
        %v785 = vor.u32 %v780, %v784
        %v787 = vshll.u32 %v561, 16
        %v789 = vrot.slane %v787, 1
        %v790 = vsel %vm568, %v785, %v789
        %v791 = vshrl.u32 %v561, 16
        %v793 = vor.u32 %v791, %v789
        %v795 = vshrl.u32 %v562, 16
        %v797 = vshll.u32 %v562, 16
        %v799 = vrot.slane %v797, 1
        %v800 = vor.u32 %v795, %v799
        %v802 = vshll.u32 %v563, 16
        %v804 = vrot.slane %v802, 1
        %v805 = vsel %vm568, %v800, %v804
        %v806 = vshrl.u32 %v563, 16
        %v808 = vor.u32 %v806, %v804
        %v810 = vshrl.u32 %v564, 16
        %v812 = vshll.u32 %v564, 16
        %v814 = vrot.slane %v812, 1
        %v815 = vor.u32 %v810, %v814
        %v817 = vshll.u32 %v565, 16
        %v819 = vrot.slane %v817, 1
        %v820 = vsel %vm568, %v815, %v819
        %v821 = vshrl.u32 %v565, 16
        %v823 = vor.u32 %v821, %v819
        %v825 = vshrl.u32 %v566, 16
        %v827 = vshll.u32 %v566, 16
        %v829 = vrot.slane %v827, 1
        %v830 = vor.u32 %v825, %v829
        %v832 = vshll.u32 %v567, 16
        %v834 = vrot.slane %v832, 1
        %v835 = vsel %vm568, %v830, %v834
        %v836 = vshrl.u32 %v567, 16
        %v838 = vor.u32 %v836, %v834
        %839 = vrot.lane.b32.xlu0 %v580, 4
        %v840 = vpop.permute.xlu0 %839
        %841 = vrot.lane.b32.xlu0 %v583, 4
        %v842 = vpop.permute.xlu0 %841
        %843 = vrot.lane.b32.xlu0 %v595, 4
        %v844 = vpop.permute.xlu0 %843
        %845 = vrot.lane.b32.xlu0 %v598, 4
        %v846 = vpop.permute.xlu0 %845
        %847 = vrot.lane.b32.xlu0 %v610, 4
        %v848 = vpop.permute.xlu0 %847
        %849 = vrot.lane.b32.xlu0 %v613, 4
        %v850 = vpop.permute.xlu0 %849
        %851 = vrot.lane.b32.xlu0 %v625, 4
        %v852 = vpop.permute.xlu0 %851
        %853 = vrot.lane.b32.xlu0 %v628, 4
        %v854 = vpop.permute.xlu0 %853
        %855 = vrot.lane.b32.xlu0 %v640, 4
        %v856 = vpop.permute.xlu0 %855
        %857 = vrot.lane.b32.xlu0 %v643, 4
        %v858 = vpop.permute.xlu0 %857
        %859 = vrot.lane.b32.xlu0 %v655, 4
        %v860 = vpop.permute.xlu0 %859
        %861 = vrot.lane.b32.xlu0 %v658, 4
        %v862 = vpop.permute.xlu0 %861
        %863 = vrot.lane.b32.xlu0 %v670, 4
        %v864 = vpop.permute.xlu0 %863
        %865 = vrot.lane.b32.xlu0 %v673, 4
        %v866 = vpop.permute.xlu0 %865
        %867 = vrot.lane.b32.xlu0 %v685, 4
        %v868 = vpop.permute.xlu0 %867
        %869 = vrot.lane.b32.xlu0 %v688, 4
        %v870 = vpop.permute.xlu0 %869
        %871 = vrot.lane.b32.xlu0 %v700, 4
        %v872 = vpop.permute.xlu0 %871
        %873 = vrot.lane.b32.xlu0 %v703, 4
        %v874 = vpop.permute.xlu0 %873
        %875 = vrot.lane.b32.xlu0 %v715, 4
        %v876 = vpop.permute.xlu0 %875
        %877 = vrot.lane.b32.xlu0 %v718, 4
        %v878 = vpop.permute.xlu0 %877
        %879 = vrot.lane.b32.xlu0 %v730, 4
        %v880 = vpop.permute.xlu0 %879
        %881 = vrot.lane.b32.xlu0 %v733, 4
        %v882 = vpop.permute.xlu0 %881
        %883 = vrot.lane.b32.xlu0 %v745, 4
        %v884 = vpop.permute.xlu0 %883
        %885 = vrot.lane.b32.xlu0 %v748, 4
        %v886 = vpop.permute.xlu0 %885
        %887 = vrot.lane.b32.xlu0 %v760, 4
        %v888 = vpop.permute.xlu0 %887
        %889 = vrot.lane.b32.xlu0 %v763, 4
        %v890 = vpop.permute.xlu0 %889
        %891 = vrot.lane.b32.xlu0 %v775, 4
        %v892 = vpop.permute.xlu0 %891
        %893 = vrot.lane.b32.xlu0 %v778, 4
        %v894 = vpop.permute.xlu0 %893
        %895 = vrot.lane.b32.xlu0 %v790, 4
        %v896 = vpop.permute.xlu0 %895
        %897 = vrot.lane.b32.xlu0 %v793, 4
        %v898 = vpop.permute.xlu0 %897
        %899 = vrot.lane.b32.xlu0 %v805, 4
        %v900 = vpop.permute.xlu0 %899
        %901 = vrot.lane.b32.xlu0 %v808, 4
        %v902 = vpop.permute.xlu0 %901
        %903 = vrot.lane.b32.xlu0 %v820, 4
        %v904 = vpop.permute.xlu0 %903
        %905 = vrot.lane.b32.xlu0 %v823, 4
        %v906 = vpop.permute.xlu0 %905
        %907 = vrot.lane.b32.xlu0 %v835, 4
        %v908 = vpop.permute.xlu0 %907
        %909 = vrot.lane.b32.xlu0 %v838, 4
        %v910 = vpop.permute.xlu0 %909
        %vm911 = vcmask 1046528
        %v912 = vrot.slane %v532, 1
        %v913 = vrot.slane %v533, 1
        %v914 = vsel %vm911, %v912, %v913
        %v915 = vrot.slane %v534, 1
        %v916 = vrot.slane %v535, 1
        %v917 = vsel %vm911, %v915, %v916
        %v918 = vrot.slane %v536, 1
        %v919 = vrot.slane %v537, 1
        %v920 = vsel %vm911, %v918, %v919
        %v921 = vrot.slane %v538, 1
        %v922 = vrot.slane %v539, 1
        %v923 = vsel %vm911, %v921, %v922
        %v924 = vrot.slane %v540, 1
        %v925 = vrot.slane %v541, 1
        %v926 = vsel %vm911, %v924, %v925
        %v927 = vrot.slane %v542, 1
        %v928 = vrot.slane %v543, 1
        %v929 = vsel %vm911, %v927, %v928
        %v930 = vrot.slane %v544, 1
        %v931 = vrot.slane %v545, 1
        %v932 = vsel %vm911, %v930, %v931
        %v933 = vrot.slane %v546, 1
        %v934 = vrot.slane %v547, 1
        %v935 = vsel %vm911, %v933, %v934
        %v936 = vrot.slane %v548, 1
        %v937 = vrot.slane %v549, 1
        %v938 = vsel %vm911, %v936, %v937
        %v939 = vrot.slane %v550, 1
        %v940 = vrot.slane %v551, 1
        %v941 = vsel %vm911, %v939, %v940
        %v942 = vrot.slane %v552, 1
        %v943 = vrot.slane %v553, 1
        %v944 = vsel %vm911, %v942, %v943
        %v945 = vrot.slane %v554, 1
        %v946 = vrot.slane %v555, 1
        %v947 = vsel %vm911, %v945, %v946
        %v948 = vrot.slane %v556, 1
        %v949 = vrot.slane %v557, 1
        %v950 = vsel %vm911, %v948, %v949
        %v951 = vrot.slane %v558, 1
        %v952 = vrot.slane %v559, 1
        %v953 = vsel %vm911, %v951, %v952
        %v954 = vrot.slane %v560, 1
        %v955 = vrot.slane %v561, 1
        %v956 = vsel %vm911, %v954, %v955
        %v957 = vrot.slane %v562, 1
        %v958 = vrot.slane %v563, 1
        %v959 = vsel %vm911, %v957, %v958
        %v960 = vrot.slane %v564, 1
        %v961 = vrot.slane %v565, 1
        %v962 = vsel %vm911, %v960, %v961
        %v963 = vrot.slane %v566, 1
        %v964 = vrot.slane %v567, 1
        %v965 = vsel %vm911, %v963, %v964
        %966 = vrot.lane.b32.xlu0 %v914, 8
        %v967 = vpop.permute.xlu0 %966
        %968 = vrot.lane.b32.xlu0 %v913, 8
        %v969 = vpop.permute.xlu0 %968
        %970 = vrot.lane.b32.xlu0 %v917, 8
        %v971 = vpop.permute.xlu0 %970
        %972 = vrot.lane.b32.xlu0 %v916, 8
        %v973 = vpop.permute.xlu0 %972
        %974 = vrot.lane.b32.xlu0 %v920, 8
        %v975 = vpop.permute.xlu0 %974
        %976 = vrot.lane.b32.xlu0 %v919, 8
        %v977 = vpop.permute.xlu0 %976
        %978 = vrot.lane.b32.xlu0 %v923, 8
        %v979 = vpop.permute.xlu0 %978
        %980 = vrot.lane.b32.xlu0 %v922, 8
        %v981 = vpop.permute.xlu0 %980
        %982 = vrot.lane.b32.xlu0 %v926, 8
        %v983 = vpop.permute.xlu0 %982
        %984 = vrot.lane.b32.xlu0 %v925, 8
        %v985 = vpop.permute.xlu0 %984
        %986 = vrot.lane.b32.xlu0 %v929, 8
        %v987 = vpop.permute.xlu0 %986
        %988 = vrot.lane.b32.xlu0 %v928, 8
        %v989 = vpop.permute.xlu0 %988
        %990 = vrot.lane.b32.xlu0 %v932, 8
        %v991 = vpop.permute.xlu0 %990
        %992 = vrot.lane.b32.xlu0 %v931, 8
        %v993 = vpop.permute.xlu0 %992
        %994 = vrot.lane.b32.xlu0 %v935, 8
        %v995 = vpop.permute.xlu0 %994
        %996 = vrot.lane.b32.xlu0 %v934, 8
        %v997 = vpop.permute.xlu0 %996
        %998 = vrot.lane.b32.xlu0 %v938, 8
        %v999 = vpop.permute.xlu0 %998
        %1000 = vrot.lane.b32.xlu0 %v937, 8
        %v1001 = vpop.permute.xlu0 %1000
        %1002 = vrot.lane.b32.xlu0 %v941, 8
        %v1003 = vpop.permute.xlu0 %1002
        %1004 = vrot.lane.b32.xlu0 %v940, 8
        %v1005 = vpop.permute.xlu0 %1004
        %1006 = vrot.lane.b32.xlu0 %v944, 8
        %v1007 = vpop.permute.xlu0 %1006
        %1008 = vrot.lane.b32.xlu0 %v943, 8
        %v1009 = vpop.permute.xlu0 %1008
        %1010 = vrot.lane.b32.xlu0 %v947, 8
        %v1011 = vpop.permute.xlu0 %1010
        %1012 = vrot.lane.b32.xlu0 %v946, 8
        %v1013 = vpop.permute.xlu0 %1012
        %1014 = vrot.lane.b32.xlu0 %v950, 8
        %v1015 = vpop.permute.xlu0 %1014
        %1016 = vrot.lane.b32.xlu0 %v949, 8
        %v1017 = vpop.permute.xlu0 %1016
        %1018 = vrot.lane.b32.xlu0 %v953, 8
        %v1019 = vpop.permute.xlu0 %1018
        %1020 = vrot.lane.b32.xlu0 %v952, 8
        %v1021 = vpop.permute.xlu0 %1020
        %1022 = vrot.lane.b32.xlu0 %v956, 8
        %v1023 = vpop.permute.xlu0 %1022
        %1024 = vrot.lane.b32.xlu0 %v955, 8
        %v1025 = vpop.permute.xlu0 %1024
        %1026 = vrot.lane.b32.xlu0 %v959, 8
        %v1027 = vpop.permute.xlu0 %1026
        %1028 = vrot.lane.b32.xlu0 %v958, 8
        %v1029 = vpop.permute.xlu0 %1028
        %1030 = vrot.lane.b32.xlu0 %v962, 8
        %v1031 = vpop.permute.xlu0 %1030
        %1032 = vrot.lane.b32.xlu0 %v961, 8
        %v1033 = vpop.permute.xlu0 %1032
        %1034 = vrot.lane.b32.xlu0 %v965, 8
        %v1035 = vpop.permute.xlu0 %1034
        %1036 = vrot.lane.b32.xlu0 %v964, 8
        %v1037 = vpop.permute.xlu0 %1036
        %v1092 = vunpack.c.l.b16 %v312
        %v1093 = vunpack.c.l.b16 %v313
        %v1094 = vunpack.c.l.b16 %v314
        %v1095 = vunpack.c.l.b16 %v315
        %v1096 = vunpack.c.l.b16 %v316
        %v1097 = vunpack.c.l.b16 %v317
        %v1098 = vunpack.c.l.b16 %v318
        %v1099 = vunpack.c.l.b16 %v319
        %v1100 = vunpack.c.l.b16 %v320
        %v1101 = vunpack.c.l.b16 %v321
        %v1102 = vunpack.c.l.b16 %v322
        %v1103 = vunpack.c.l.b16 %v323
        %v1104 = vunpack.c.l.b16 %v324
        %v1105 = vunpack.c.l.b16 %v325
        %v1106 = vunpack.c.l.b16 %v326
        %v1107 = vunpack.c.l.b16 %v327
        %v1108 = vunpack.c.l.b16 %v328
        %v1109 = vunpack.c.l.b16 %v329
        %v1110 = vunpack.c.l.b16 %v330
        %v1111 = vunpack.c.l.b16 %v331
        %v1112 = vunpack.c.l.b16 %v332
        %v1113 = vunpack.c.l.b16 %v333
        %v1114 = vunpack.c.l.b16 %v334
        %v1115 = vunpack.c.l.b16 %v335
        %v1116 = vunpack.c.l.b16 %v336
        %v1117 = vunpack.c.l.b16 %v337
        %v1118 = vunpack.c.l.b16 %v338
        %v1119 = vunpack.c.l.b16 %v339
        %v1120 = vunpack.c.l.b16 %v340
        %v1121 = vunpack.c.l.b16 %v341
        %v1122 = vunpack.c.l.b16 %v342
        %v1123 = vunpack.c.l.b16 %v343
        %v1124 = vunpack.c.l.b16 %v344
        %v1125 = vunpack.c.l.b16 %v345
        %v1126 = vunpack.c.l.b16 %v346
        %v1127 = vunpack.c.l.b16 %v347
        %v1128 = vunpack.c.l.b16 %v348
        %v1129 = vunpack.c.l.b16 %v349
        %v1130 = vunpack.c.l.b16 %v350
        %v1131 = vunpack.c.l.b16 %v351
        %v1132 = vunpack.c.l.b16 %v352
        %v1133 = vunpack.c.l.b16 %v353
        %v1134 = vunpack.c.l.b16 %v354
        %v1135 = vunpack.c.l.b16 %v355
        %v1136 = vunpack.c.l.b16 %v356
        %v1137 = vunpack.c.l.b16 %v357
        %v1138 = vunpack.c.l.b16 %v358
        %v1139 = vunpack.c.l.b16 %v359
        %v1140 = vunpack.c.l.b16 %v360
        %v1141 = vunpack.c.l.b16 %v361
        %v1142 = vunpack.c.l.b16 %v362
        %v1143 = vunpack.c.l.b16 %v363
        %v1144 = vunpack.c.l.b16 %v364
        %v1145 = vunpack.c.l.b16 %v365
        %v1146 = vpack.c.b16 %v1093, %v1092
        %v1147 = vpack.c.b16 %v1094, %v1094
        %v1148 = vpack.c.b16 %v1096, %v1095
        %v1149 = vpack.c.b16 %v1097, %v1097
        %v1150 = vpack.c.b16 %v1099, %v1098
        %v1151 = vpack.c.b16 %v1100, %v1100
        %v1152 = vpack.c.b16 %v1102, %v1101
        %v1153 = vpack.c.b16 %v1103, %v1103
        %v1154 = vpack.c.b16 %v1105, %v1104
        %v1155 = vpack.c.b16 %v1106, %v1106
        %v1156 = vpack.c.b16 %v1108, %v1107
        %v1157 = vpack.c.b16 %v1109, %v1109
        %v1158 = vpack.c.b16 %v1111, %v1110
        %v1159 = vpack.c.b16 %v1112, %v1112
        %v1160 = vpack.c.b16 %v1114, %v1113
        %v1161 = vpack.c.b16 %v1115, %v1115
        %v1162 = vpack.c.b16 %v1117, %v1116
        %v1163 = vpack.c.b16 %v1118, %v1118
        %v1164 = vpack.c.b16 %v1120, %v1119
        %v1165 = vpack.c.b16 %v1121, %v1121
        %v1166 = vpack.c.b16 %v1123, %v1122
        %v1167 = vpack.c.b16 %v1124, %v1124
        %v1168 = vpack.c.b16 %v1126, %v1125
        %v1169 = vpack.c.b16 %v1127, %v1127
        %v1170 = vpack.c.b16 %v1129, %v1128
        %v1171 = vpack.c.b16 %v1130, %v1130
        %v1172 = vpack.c.b16 %v1132, %v1131
        %v1173 = vpack.c.b16 %v1133, %v1133
        %v1174 = vpack.c.b16 %v1135, %v1134
        %v1175 = vpack.c.b16 %v1136, %v1136
        %v1176 = vpack.c.b16 %v1138, %v1137
        %v1177 = vpack.c.b16 %v1139, %v1139
        %v1178 = vpack.c.b16 %v1141, %v1140
        %v1179 = vpack.c.b16 %v1142, %v1142
        %v1180 = vpack.c.b16 %v1144, %v1143
        %v1181 = vpack.c.b16 %v1145, %v1145
        %1182 = vrot.lane.b32.xlu0 %v1146, 12
        %v1183 = vpop.permute.xlu0 %1182
        %1184 = vrot.lane.b32.xlu0 %v1147, 12
        %v1185 = vpop.permute.xlu0 %1184
        %1186 = vrot.lane.b32.xlu0 %v1148, 12
        %v1187 = vpop.permute.xlu0 %1186
        %1188 = vrot.lane.b32.xlu0 %v1149, 12
        %v1189 = vpop.permute.xlu0 %1188
        %1190 = vrot.lane.b32.xlu0 %v1150, 12
        %v1191 = vpop.permute.xlu0 %1190
        %1192 = vrot.lane.b32.xlu0 %v1151, 12
        %v1193 = vpop.permute.xlu0 %1192
        %1194 = vrot.lane.b32.xlu0 %v1152, 12
        %v1195 = vpop.permute.xlu0 %1194
        %1196 = vrot.lane.b32.xlu0 %v1153, 12
        %v1197 = vpop.permute.xlu0 %1196
        %1198 = vrot.lane.b32.xlu0 %v1154, 12
        %v1199 = vpop.permute.xlu0 %1198
        %1200 = vrot.lane.b32.xlu0 %v1155, 12
        %v1201 = vpop.permute.xlu0 %1200
        %1202 = vrot.lane.b32.xlu0 %v1156, 12
        %v1203 = vpop.permute.xlu0 %1202
        %1204 = vrot.lane.b32.xlu0 %v1157, 12
        %v1205 = vpop.permute.xlu0 %1204
        %1206 = vrot.lane.b32.xlu0 %v1158, 12
        %v1207 = vpop.permute.xlu0 %1206
        %1208 = vrot.lane.b32.xlu0 %v1159, 12
        %v1209 = vpop.permute.xlu0 %1208
        %1210 = vrot.lane.b32.xlu0 %v1160, 12
        %v1211 = vpop.permute.xlu0 %1210
        %1212 = vrot.lane.b32.xlu0 %v1161, 12
        %v1213 = vpop.permute.xlu0 %1212
        %1214 = vrot.lane.b32.xlu0 %v1162, 12
        %v1215 = vpop.permute.xlu0 %1214
        %1216 = vrot.lane.b32.xlu0 %v1163, 12
        %v1217 = vpop.permute.xlu0 %1216
        %1218 = vrot.lane.b32.xlu0 %v1164, 12
        %v1219 = vpop.permute.xlu0 %1218
        %1220 = vrot.lane.b32.xlu0 %v1165, 12
        %v1221 = vpop.permute.xlu0 %1220
        %1222 = vrot.lane.b32.xlu0 %v1166, 12
        %v1223 = vpop.permute.xlu0 %1222
        %1224 = vrot.lane.b32.xlu0 %v1167, 12
        %v1225 = vpop.permute.xlu0 %1224
        %1226 = vrot.lane.b32.xlu0 %v1168, 12
        %v1227 = vpop.permute.xlu0 %1226
        %1228 = vrot.lane.b32.xlu0 %v1169, 12
        %v1229 = vpop.permute.xlu0 %1228
        %1230 = vrot.lane.b32.xlu0 %v1170, 12
        %v1231 = vpop.permute.xlu0 %1230
        %1232 = vrot.lane.b32.xlu0 %v1171, 12
        %v1233 = vpop.permute.xlu0 %1232
        %1234 = vrot.lane.b32.xlu0 %v1172, 12
        %v1235 = vpop.permute.xlu0 %1234
        %1236 = vrot.lane.b32.xlu0 %v1173, 12
        %v1237 = vpop.permute.xlu0 %1236
        %1238 = vrot.lane.b32.xlu0 %v1174, 12
        %v1239 = vpop.permute.xlu0 %1238
        %1240 = vrot.lane.b32.xlu0 %v1175, 12
        %v1241 = vpop.permute.xlu0 %1240
        %1242 = vrot.lane.b32.xlu0 %v1176, 12
        %v1243 = vpop.permute.xlu0 %1242
        %1244 = vrot.lane.b32.xlu0 %v1177, 12
        %v1245 = vpop.permute.xlu0 %1244
        %1246 = vrot.lane.b32.xlu0 %v1178, 12
        %v1247 = vpop.permute.xlu0 %1246
        %1248 = vrot.lane.b32.xlu0 %v1179, 12
        %v1249 = vpop.permute.xlu0 %1248
        %1250 = vrot.lane.b32.xlu0 %v1180, 12
        %v1251 = vpop.permute.xlu0 %1250
        %1252 = vrot.lane.b32.xlu0 %v1181, 12
        %v1253 = vpop.permute.xlu0 %1252
        %v1255 = vshrl.u32 %v1146, 16
        %v1257 = vshll.u32 %v1146, 16
        %v1259 = vrot.slane %v1257, 1
        %v1260 = vor.u32 %v1255, %v1259
        %v1262 = vshll.u32 %v1147, 16
        %v1264 = vrot.slane %v1262, 1
        %v1265 = vsel %vm568, %v1260, %v1264
        %v1266 = vshrl.u32 %v1147, 16
        %v1268 = vor.u32 %v1266, %v1264
        %v1270 = vshrl.u32 %v1148, 16
        %v1272 = vshll.u32 %v1148, 16
        %v1274 = vrot.slane %v1272, 1
        %v1275 = vor.u32 %v1270, %v1274
        %v1277 = vshll.u32 %v1149, 16
        %v1279 = vrot.slane %v1277, 1
        %v1280 = vsel %vm568, %v1275, %v1279
        %v1281 = vshrl.u32 %v1149, 16
        %v1283 = vor.u32 %v1281, %v1279
        %v1285 = vshrl.u32 %v1150, 16
        %v1287 = vshll.u32 %v1150, 16
        %v1289 = vrot.slane %v1287, 1
        %v1290 = vor.u32 %v1285, %v1289
        %v1292 = vshll.u32 %v1151, 16
        %v1294 = vrot.slane %v1292, 1
        %v1295 = vsel %vm568, %v1290, %v1294
        %v1296 = vshrl.u32 %v1151, 16
        %v1298 = vor.u32 %v1296, %v1294
        %v1300 = vshrl.u32 %v1152, 16
        %v1302 = vshll.u32 %v1152, 16
        %v1304 = vrot.slane %v1302, 1
        %v1305 = vor.u32 %v1300, %v1304
        %v1307 = vshll.u32 %v1153, 16
        %v1309 = vrot.slane %v1307, 1
        %v1310 = vsel %vm568, %v1305, %v1309
        %v1311 = vshrl.u32 %v1153, 16
        %v1313 = vor.u32 %v1311, %v1309
        %v1315 = vshrl.u32 %v1154, 16
        %v1317 = vshll.u32 %v1154, 16
        %v1319 = vrot.slane %v1317, 1
        %v1320 = vor.u32 %v1315, %v1319
        %v1322 = vshll.u32 %v1155, 16
        %v1324 = vrot.slane %v1322, 1
        %v1325 = vsel %vm568, %v1320, %v1324
        %v1326 = vshrl.u32 %v1155, 16
        %v1328 = vor.u32 %v1326, %v1324
        %v1330 = vshrl.u32 %v1156, 16
        %v1332 = vshll.u32 %v1156, 16
        %v1334 = vrot.slane %v1332, 1
        %v1335 = vor.u32 %v1330, %v1334
        %v1337 = vshll.u32 %v1157, 16
        %v1339 = vrot.slane %v1337, 1
        %v1340 = vsel %vm568, %v1335, %v1339
        %v1341 = vshrl.u32 %v1157, 16
        %v1343 = vor.u32 %v1341, %v1339
        %v1345 = vshrl.u32 %v1158, 16
        %v1347 = vshll.u32 %v1158, 16
        %v1349 = vrot.slane %v1347, 1
        %v1350 = vor.u32 %v1345, %v1349
        %v1352 = vshll.u32 %v1159, 16
        %v1354 = vrot.slane %v1352, 1
        %v1355 = vsel %vm568, %v1350, %v1354
        %v1356 = vshrl.u32 %v1159, 16
        %v1358 = vor.u32 %v1356, %v1354
        %v1360 = vshrl.u32 %v1160, 16
        %v1362 = vshll.u32 %v1160, 16
        %v1364 = vrot.slane %v1362, 1
        %v1365 = vor.u32 %v1360, %v1364
        %v1367 = vshll.u32 %v1161, 16
        %v1369 = vrot.slane %v1367, 1
        %v1370 = vsel %vm568, %v1365, %v1369
        %v1371 = vshrl.u32 %v1161, 16
        %v1373 = vor.u32 %v1371, %v1369
        %v1375 = vshrl.u32 %v1162, 16
        %v1377 = vshll.u32 %v1162, 16
        %v1379 = vrot.slane %v1377, 1
        %v1380 = vor.u32 %v1375, %v1379
        %v1382 = vshll.u32 %v1163, 16
        %v1384 = vrot.slane %v1382, 1
        %v1385 = vsel %vm568, %v1380, %v1384
        %v1386 = vshrl.u32 %v1163, 16
        %v1388 = vor.u32 %v1386, %v1384
        %v1390 = vshrl.u32 %v1164, 16
        %v1392 = vshll.u32 %v1164, 16
        %v1394 = vrot.slane %v1392, 1
        %v1395 = vor.u32 %v1390, %v1394
        %v1397 = vshll.u32 %v1165, 16
        %v1399 = vrot.slane %v1397, 1
        %v1400 = vsel %vm568, %v1395, %v1399
        %v1401 = vshrl.u32 %v1165, 16
        %v1403 = vor.u32 %v1401, %v1399
        %v1405 = vshrl.u32 %v1166, 16
        %v1407 = vshll.u32 %v1166, 16
        %v1409 = vrot.slane %v1407, 1
        %v1410 = vor.u32 %v1405, %v1409
        %v1412 = vshll.u32 %v1167, 16
        %v1414 = vrot.slane %v1412, 1
        %v1415 = vsel %vm568, %v1410, %v1414
        %v1416 = vshrl.u32 %v1167, 16
        %v1418 = vor.u32 %v1416, %v1414
        %v1420 = vshrl.u32 %v1168, 16
        %v1422 = vshll.u32 %v1168, 16
        %v1424 = vrot.slane %v1422, 1
        %v1425 = vor.u32 %v1420, %v1424
        %v1427 = vshll.u32 %v1169, 16
        %v1429 = vrot.slane %v1427, 1
        %v1430 = vsel %vm568, %v1425, %v1429
        %v1431 = vshrl.u32 %v1169, 16
        %v1433 = vor.u32 %v1431, %v1429
        %v1435 = vshrl.u32 %v1170, 16
        %v1437 = vshll.u32 %v1170, 16
        %v1439 = vrot.slane %v1437, 1
        %v1440 = vor.u32 %v1435, %v1439
        %v1442 = vshll.u32 %v1171, 16
        %v1444 = vrot.slane %v1442, 1
        %v1445 = vsel %vm568, %v1440, %v1444
        %v1446 = vshrl.u32 %v1171, 16
        %v1448 = vor.u32 %v1446, %v1444
        %v1450 = vshrl.u32 %v1172, 16
        %v1452 = vshll.u32 %v1172, 16
        %v1454 = vrot.slane %v1452, 1
        %v1455 = vor.u32 %v1450, %v1454
        %v1457 = vshll.u32 %v1173, 16
        %v1459 = vrot.slane %v1457, 1
        %v1460 = vsel %vm568, %v1455, %v1459
        %v1461 = vshrl.u32 %v1173, 16
        %v1463 = vor.u32 %v1461, %v1459
        %v1465 = vshrl.u32 %v1174, 16
        %v1467 = vshll.u32 %v1174, 16
        %v1469 = vrot.slane %v1467, 1
        %v1470 = vor.u32 %v1465, %v1469
        %v1472 = vshll.u32 %v1175, 16
        %v1474 = vrot.slane %v1472, 1
        %v1475 = vsel %vm568, %v1470, %v1474
        %v1476 = vshrl.u32 %v1175, 16
        %v1478 = vor.u32 %v1476, %v1474
        %v1480 = vshrl.u32 %v1176, 16
        %v1482 = vshll.u32 %v1176, 16
        %v1484 = vrot.slane %v1482, 1
        %v1485 = vor.u32 %v1480, %v1484
        %v1487 = vshll.u32 %v1177, 16
        %v1489 = vrot.slane %v1487, 1
        %v1490 = vsel %vm568, %v1485, %v1489
        %v1491 = vshrl.u32 %v1177, 16
        %v1493 = vor.u32 %v1491, %v1489
        %v1495 = vshrl.u32 %v1178, 16
        %v1497 = vshll.u32 %v1178, 16
        %v1499 = vrot.slane %v1497, 1
        %v1500 = vor.u32 %v1495, %v1499
        %v1502 = vshll.u32 %v1179, 16
        %v1504 = vrot.slane %v1502, 1
        %v1505 = vsel %vm568, %v1500, %v1504
        %v1506 = vshrl.u32 %v1179, 16
        %v1508 = vor.u32 %v1506, %v1504
        %v1510 = vshrl.u32 %v1180, 16
        %v1512 = vshll.u32 %v1180, 16
        %v1514 = vrot.slane %v1512, 1
        %v1515 = vor.u32 %v1510, %v1514
        %v1517 = vshll.u32 %v1181, 16
        %v1519 = vrot.slane %v1517, 1
        %v1520 = vsel %vm568, %v1515, %v1519
        %v1521 = vshrl.u32 %v1181, 16
        %v1523 = vor.u32 %v1521, %v1519
        %1524 = vrot.lane.b32.xlu0 %v1265, 16
        %v1525 = vpop.permute.xlu0 %1524
        %1526 = vrot.lane.b32.xlu0 %v1268, 16
        %v1527 = vpop.permute.xlu0 %1526
        %1528 = vrot.lane.b32.xlu0 %v1280, 16
        %v1529 = vpop.permute.xlu0 %1528
        %1530 = vrot.lane.b32.xlu0 %v1283, 16
        %v1531 = vpop.permute.xlu0 %1530
        %1532 = vrot.lane.b32.xlu0 %v1295, 16
        %v1533 = vpop.permute.xlu0 %1532
        %1534 = vrot.lane.b32.xlu0 %v1298, 16
        %v1535 = vpop.permute.xlu0 %1534
        %1536 = vrot.lane.b32.xlu0 %v1310, 16
        %v1537 = vpop.permute.xlu0 %1536
        %1538 = vrot.lane.b32.xlu0 %v1313, 16
        %v1539 = vpop.permute.xlu0 %1538
        %1540 = vrot.lane.b32.xlu0 %v1325, 16
        %v1541 = vpop.permute.xlu0 %1540
        %1542 = vrot.lane.b32.xlu0 %v1328, 16
        %v1543 = vpop.permute.xlu0 %1542
        %1544 = vrot.lane.b32.xlu0 %v1340, 16
        %v1545 = vpop.permute.xlu0 %1544
        %1546 = vrot.lane.b32.xlu0 %v1343, 16
        %v1547 = vpop.permute.xlu0 %1546
        %1548 = vrot.lane.b32.xlu0 %v1355, 16
        %v1549 = vpop.permute.xlu0 %1548
        %1550 = vrot.lane.b32.xlu0 %v1358, 16
        %v1551 = vpop.permute.xlu0 %1550
        %1552 = vrot.lane.b32.xlu0 %v1370, 16
        %v1553 = vpop.permute.xlu0 %1552
        %1554 = vrot.lane.b32.xlu0 %v1373, 16
        %v1555 = vpop.permute.xlu0 %1554
        %1556 = vrot.lane.b32.xlu0 %v1385, 16
        %v1557 = vpop.permute.xlu0 %1556
        %1558 = vrot.lane.b32.xlu0 %v1388, 16
        %v1559 = vpop.permute.xlu0 %1558
        %1560 = vrot.lane.b32.xlu0 %v1400, 16
        %v1561 = vpop.permute.xlu0 %1560
        %1562 = vrot.lane.b32.xlu0 %v1403, 16
        %v1563 = vpop.permute.xlu0 %1562
        %1564 = vrot.lane.b32.xlu0 %v1415, 16
        %v1565 = vpop.permute.xlu0 %1564
        %1566 = vrot.lane.b32.xlu0 %v1418, 16
        %v1567 = vpop.permute.xlu0 %1566
        %1568 = vrot.lane.b32.xlu0 %v1430, 16
        %v1569 = vpop.permute.xlu0 %1568
        %1570 = vrot.lane.b32.xlu0 %v1433, 16
        %v1571 = vpop.permute.xlu0 %1570
        %1572 = vrot.lane.b32.xlu0 %v1445, 16
        %v1573 = vpop.permute.xlu0 %1572
        %1574 = vrot.lane.b32.xlu0 %v1448, 16
        %v1575 = vpop.permute.xlu0 %1574
        %1576 = vrot.lane.b32.xlu0 %v1460, 16
        %v1577 = vpop.permute.xlu0 %1576
        %1578 = vrot.lane.b32.xlu0 %v1463, 16
        %v1579 = vpop.permute.xlu0 %1578
        %1580 = vrot.lane.b32.xlu0 %v1475, 16
        %v1581 = vpop.permute.xlu0 %1580
        %1582 = vrot.lane.b32.xlu0 %v1478, 16
        %v1583 = vpop.permute.xlu0 %1582
        %1584 = vrot.lane.b32.xlu0 %v1490, 16
        %v1585 = vpop.permute.xlu0 %1584
        %1586 = vrot.lane.b32.xlu0 %v1493, 16
        %v1587 = vpop.permute.xlu0 %1586
        %1588 = vrot.lane.b32.xlu0 %v1505, 16
        %v1589 = vpop.permute.xlu0 %1588
        %1590 = vrot.lane.b32.xlu0 %v1508, 16
        %v1591 = vpop.permute.xlu0 %1590
        %1592 = vrot.lane.b32.xlu0 %v1520, 16
        %v1593 = vpop.permute.xlu0 %1592
        %1594 = vrot.lane.b32.xlu0 %v1523, 16
        %v1595 = vpop.permute.xlu0 %1594
        %v1596 = vrot.slane %v1146, 1
        %v1597 = vrot.slane %v1147, 1
        %v1598 = vsel %vm911, %v1596, %v1597
        %v1599 = vrot.slane %v1148, 1
        %v1600 = vrot.slane %v1149, 1
        %v1601 = vsel %vm911, %v1599, %v1600
        %v1602 = vrot.slane %v1150, 1
        %v1603 = vrot.slane %v1151, 1
        %v1604 = vsel %vm911, %v1602, %v1603
        %v1605 = vrot.slane %v1152, 1
        %v1606 = vrot.slane %v1153, 1
        %v1607 = vsel %vm911, %v1605, %v1606
        %v1608 = vrot.slane %v1154, 1
        %v1609 = vrot.slane %v1155, 1
        %v1610 = vsel %vm911, %v1608, %v1609
        %v1611 = vrot.slane %v1156, 1
        %v1612 = vrot.slane %v1157, 1
        %v1613 = vsel %vm911, %v1611, %v1612
        %v1614 = vrot.slane %v1158, 1
        %v1615 = vrot.slane %v1159, 1
        %v1616 = vsel %vm911, %v1614, %v1615
        %v1617 = vrot.slane %v1160, 1
        %v1618 = vrot.slane %v1161, 1
        %v1619 = vsel %vm911, %v1617, %v1618
        %v1620 = vrot.slane %v1162, 1
        %v1621 = vrot.slane %v1163, 1
        %v1622 = vsel %vm911, %v1620, %v1621
        %v1623 = vrot.slane %v1164, 1
        %v1624 = vrot.slane %v1165, 1
        %v1625 = vsel %vm911, %v1623, %v1624
        %v1626 = vrot.slane %v1166, 1
        %v1627 = vrot.slane %v1167, 1
        %v1628 = vsel %vm911, %v1626, %v1627
        %v1629 = vrot.slane %v1168, 1
        %v1630 = vrot.slane %v1169, 1
        %v1631 = vsel %vm911, %v1629, %v1630
        %v1632 = vrot.slane %v1170, 1
        %v1633 = vrot.slane %v1171, 1
        %v1634 = vsel %vm911, %v1632, %v1633
        %v1635 = vrot.slane %v1172, 1
        %v1636 = vrot.slane %v1173, 1
        %v1637 = vsel %vm911, %v1635, %v1636
        %v1638 = vrot.slane %v1174, 1
        %v1639 = vrot.slane %v1175, 1
        %v1640 = vsel %vm911, %v1638, %v1639
        %v1641 = vrot.slane %v1176, 1
        %v1642 = vrot.slane %v1177, 1
        %v1643 = vsel %vm911, %v1641, %v1642
        %v1644 = vrot.slane %v1178, 1
        %v1645 = vrot.slane %v1179, 1
        %v1646 = vsel %vm911, %v1644, %v1645
        %v1647 = vrot.slane %v1180, 1
        %v1648 = vrot.slane %v1181, 1
        %v1649 = vsel %vm911, %v1647, %v1648
        %1650 = vrot.lane.b32.xlu0 %v1598, 20
        %v1651 = vpop.permute.xlu0 %1650
        %1652 = vrot.lane.b32.xlu0 %v1597, 20
        %v1653 = vpop.permute.xlu0 %1652
        %1654 = vrot.lane.b32.xlu0 %v1601, 20
        %v1655 = vpop.permute.xlu0 %1654
        %1656 = vrot.lane.b32.xlu0 %v1600, 20
        %v1657 = vpop.permute.xlu0 %1656
        %1658 = vrot.lane.b32.xlu0 %v1604, 20
        %v1659 = vpop.permute.xlu0 %1658
        %1660 = vrot.lane.b32.xlu0 %v1603, 20
        %v1661 = vpop.permute.xlu0 %1660
        %1662 = vrot.lane.b32.xlu0 %v1607, 20
        %v1663 = vpop.permute.xlu0 %1662
        %1664 = vrot.lane.b32.xlu0 %v1606, 20
        %v1665 = vpop.permute.xlu0 %1664
        %1666 = vrot.lane.b32.xlu0 %v1610, 20
        %v1667 = vpop.permute.xlu0 %1666
        %1668 = vrot.lane.b32.xlu0 %v1609, 20
        %v1669 = vpop.permute.xlu0 %1668
        %1670 = vrot.lane.b32.xlu0 %v1613, 20
        %v1671 = vpop.permute.xlu0 %1670
        %1672 = vrot.lane.b32.xlu0 %v1612, 20
        %v1673 = vpop.permute.xlu0 %1672
        %1674 = vrot.lane.b32.xlu0 %v1616, 20
        %v1675 = vpop.permute.xlu0 %1674
        %1676 = vrot.lane.b32.xlu0 %v1615, 20
        %v1677 = vpop.permute.xlu0 %1676
        %1678 = vrot.lane.b32.xlu0 %v1619, 20
        %v1679 = vpop.permute.xlu0 %1678
        %1680 = vrot.lane.b32.xlu0 %v1618, 20
        %v1681 = vpop.permute.xlu0 %1680
        %1682 = vrot.lane.b32.xlu0 %v1622, 20
        %v1683 = vpop.permute.xlu0 %1682
        %1684 = vrot.lane.b32.xlu0 %v1621, 20
        %v1685 = vpop.permute.xlu0 %1684
        %1686 = vrot.lane.b32.xlu0 %v1625, 20
        %v1687 = vpop.permute.xlu0 %1686
        %1688 = vrot.lane.b32.xlu0 %v1624, 20
        %v1689 = vpop.permute.xlu0 %1688
        %1690 = vrot.lane.b32.xlu0 %v1628, 20
        %v1691 = vpop.permute.xlu0 %1690
        %1692 = vrot.lane.b32.xlu0 %v1627, 20
        %v1693 = vpop.permute.xlu0 %1692
        %1694 = vrot.lane.b32.xlu0 %v1631, 20
        %v1695 = vpop.permute.xlu0 %1694
        %1696 = vrot.lane.b32.xlu0 %v1630, 20
        %v1697 = vpop.permute.xlu0 %1696
        %1698 = vrot.lane.b32.xlu0 %v1634, 20
        %v1699 = vpop.permute.xlu0 %1698
        %1700 = vrot.lane.b32.xlu0 %v1633, 20
        %v1701 = vpop.permute.xlu0 %1700
        %1702 = vrot.lane.b32.xlu0 %v1637, 20
        %v1703 = vpop.permute.xlu0 %1702
        %1704 = vrot.lane.b32.xlu0 %v1636, 20
        %v1705 = vpop.permute.xlu0 %1704
        %1706 = vrot.lane.b32.xlu0 %v1640, 20
        %v1707 = vpop.permute.xlu0 %1706
        %1708 = vrot.lane.b32.xlu0 %v1639, 20
        %v1709 = vpop.permute.xlu0 %1708
        %1710 = vrot.lane.b32.xlu0 %v1643, 20
        %v1711 = vpop.permute.xlu0 %1710
        %1712 = vrot.lane.b32.xlu0 %v1642, 20
        %v1713 = vpop.permute.xlu0 %1712
        %1714 = vrot.lane.b32.xlu0 %v1646, 20
        %v1715 = vpop.permute.xlu0 %1714
        %1716 = vrot.lane.b32.xlu0 %v1645, 20
        %v1717 = vpop.permute.xlu0 %1716
        %1718 = vrot.lane.b32.xlu0 %v1649, 20
        %v1719 = vpop.permute.xlu0 %1718
        %1720 = vrot.lane.b32.xlu0 %v1648, 20
        %v1721 = vpop.permute.xlu0 %1720
        %v1776 = vunpack.c.l.b16 %v370
        %v1777 = vunpack.c.l.b16 %v371
        %v1778 = vunpack.c.l.b16 %v372
        %v1779 = vunpack.c.l.b16 %v373
        %v1780 = vunpack.c.l.b16 %v374
        %v1781 = vunpack.c.l.b16 %v375
        %v1782 = vunpack.c.l.b16 %v376
        %v1783 = vunpack.c.l.b16 %v377
        %v1784 = vunpack.c.l.b16 %v378
        %v1785 = vunpack.c.l.b16 %v379
        %v1786 = vunpack.c.l.b16 %v380
        %v1787 = vunpack.c.l.b16 %v381
        %v1788 = vunpack.c.l.b16 %v382
        %v1789 = vunpack.c.l.b16 %v383
        %v1790 = vunpack.c.l.b16 %v384
        %v1791 = vunpack.c.l.b16 %v385
        %v1792 = vunpack.c.l.b16 %v386
        %v1793 = vunpack.c.l.b16 %v387
        %v1794 = vunpack.c.l.b16 %v388
        %v1795 = vunpack.c.l.b16 %v389
        %v1796 = vunpack.c.l.b16 %v390
        %v1797 = vunpack.c.l.b16 %v391
        %v1798 = vunpack.c.l.b16 %v392
        %v1799 = vunpack.c.l.b16 %v393
        %v1800 = vunpack.c.l.b16 %v394
        %v1801 = vunpack.c.l.b16 %v395
        %v1802 = vunpack.c.l.b16 %v396
        %v1803 = vunpack.c.l.b16 %v397
        %v1804 = vunpack.c.l.b16 %v398
        %v1805 = vunpack.c.l.b16 %v399
        %v1806 = vunpack.c.l.b16 %v400
        %v1807 = vunpack.c.l.b16 %v401
        %v1808 = vunpack.c.l.b16 %v402
        %v1809 = vunpack.c.l.b16 %v403
        %v1810 = vunpack.c.l.b16 %v404
        %v1811 = vunpack.c.l.b16 %v405
        %v1812 = vunpack.c.l.b16 %v406
        %v1813 = vunpack.c.l.b16 %v407
        %v1814 = vunpack.c.l.b16 %v408
        %v1815 = vunpack.c.l.b16 %v409
        %v1816 = vunpack.c.l.b16 %v410
        %v1817 = vunpack.c.l.b16 %v411
        %v1818 = vunpack.c.l.b16 %v412
        %v1819 = vunpack.c.l.b16 %v413
        %v1820 = vunpack.c.l.b16 %v414
        %v1821 = vunpack.c.l.b16 %v415
        %v1822 = vunpack.c.l.b16 %v416
        %v1823 = vunpack.c.l.b16 %v417
        %v1824 = vunpack.c.l.b16 %v418
        %v1825 = vunpack.c.l.b16 %v419
        %v1826 = vunpack.c.l.b16 %v420
        %v1827 = vunpack.c.l.b16 %v421
        %v1828 = vunpack.c.l.b16 %v422
        %v1829 = vunpack.c.l.b16 %v423
        %v1830 = vpack.c.b16 %v1777, %v1776
        %v1831 = vpack.c.b16 %v1778, %v1778
        %v1832 = vpack.c.b16 %v1780, %v1779
        %v1833 = vpack.c.b16 %v1781, %v1781
        %v1834 = vpack.c.b16 %v1783, %v1782
        %v1835 = vpack.c.b16 %v1784, %v1784
        %v1836 = vpack.c.b16 %v1786, %v1785
        %v1837 = vpack.c.b16 %v1787, %v1787
        %v1838 = vpack.c.b16 %v1789, %v1788
        %v1839 = vpack.c.b16 %v1790, %v1790
        %v1840 = vpack.c.b16 %v1792, %v1791
        %v1841 = vpack.c.b16 %v1793, %v1793
        %v1842 = vpack.c.b16 %v1795, %v1794
        %v1843 = vpack.c.b16 %v1796, %v1796
        %v1844 = vpack.c.b16 %v1798, %v1797
        %v1845 = vpack.c.b16 %v1799, %v1799
        %v1846 = vpack.c.b16 %v1801, %v1800
        %v1847 = vpack.c.b16 %v1802, %v1802
        %v1848 = vpack.c.b16 %v1804, %v1803
        %v1849 = vpack.c.b16 %v1805, %v1805
        %v1850 = vpack.c.b16 %v1807, %v1806
        %v1851 = vpack.c.b16 %v1808, %v1808
        %v1852 = vpack.c.b16 %v1810, %v1809
        %v1853 = vpack.c.b16 %v1811, %v1811
        %v1854 = vpack.c.b16 %v1813, %v1812
        %v1855 = vpack.c.b16 %v1814, %v1814
        %v1856 = vpack.c.b16 %v1816, %v1815
        %v1857 = vpack.c.b16 %v1817, %v1817
        %v1858 = vpack.c.b16 %v1819, %v1818
        %v1859 = vpack.c.b16 %v1820, %v1820
        %v1860 = vpack.c.b16 %v1822, %v1821
        %v1861 = vpack.c.b16 %v1823, %v1823
        %v1862 = vpack.c.b16 %v1825, %v1824
        %v1863 = vpack.c.b16 %v1826, %v1826
        %v1864 = vpack.c.b16 %v1828, %v1827
        %v1865 = vpack.c.b16 %v1829, %v1829
        %1866 = vrot.lane.b32.xlu0 %v1830, 24
        %v1867 = vpop.permute.xlu0 %1866
        %1868 = vrot.lane.b32.xlu0 %v1831, 24
        %v1869 = vpop.permute.xlu0 %1868
        %1870 = vrot.lane.b32.xlu0 %v1832, 24
        %v1871 = vpop.permute.xlu0 %1870
        %1872 = vrot.lane.b32.xlu0 %v1833, 24
        %v1873 = vpop.permute.xlu0 %1872
        %1874 = vrot.lane.b32.xlu0 %v1834, 24
        %v1875 = vpop.permute.xlu0 %1874
        %1876 = vrot.lane.b32.xlu0 %v1835, 24
        %v1877 = vpop.permute.xlu0 %1876
        %1878 = vrot.lane.b32.xlu0 %v1836, 24
        %v1879 = vpop.permute.xlu0 %1878
        %1880 = vrot.lane.b32.xlu0 %v1837, 24
        %v1881 = vpop.permute.xlu0 %1880
        %1882 = vrot.lane.b32.xlu0 %v1838, 24
        %v1883 = vpop.permute.xlu0 %1882
        %1884 = vrot.lane.b32.xlu0 %v1839, 24
        %v1885 = vpop.permute.xlu0 %1884
        %1886 = vrot.lane.b32.xlu0 %v1840, 24
        %v1887 = vpop.permute.xlu0 %1886
        %1888 = vrot.lane.b32.xlu0 %v1841, 24
        %v1889 = vpop.permute.xlu0 %1888
        %1890 = vrot.lane.b32.xlu0 %v1842, 24
        %v1891 = vpop.permute.xlu0 %1890
        %1892 = vrot.lane.b32.xlu0 %v1843, 24
        %v1893 = vpop.permute.xlu0 %1892
        %1894 = vrot.lane.b32.xlu0 %v1844, 24
        %v1895 = vpop.permute.xlu0 %1894
        %1896 = vrot.lane.b32.xlu0 %v1845, 24
        %v1897 = vpop.permute.xlu0 %1896
        %1898 = vrot.lane.b32.xlu0 %v1846, 24
        %v1899 = vpop.permute.xlu0 %1898
        %1900 = vrot.lane.b32.xlu0 %v1847, 24
        %v1901 = vpop.permute.xlu0 %1900
        %1902 = vrot.lane.b32.xlu0 %v1848, 24
        %v1903 = vpop.permute.xlu0 %1902
        %1904 = vrot.lane.b32.xlu0 %v1849, 24
        %v1905 = vpop.permute.xlu0 %1904
        %1906 = vrot.lane.b32.xlu0 %v1850, 24
        %v1907 = vpop.permute.xlu0 %1906
        %1908 = vrot.lane.b32.xlu0 %v1851, 24
        %v1909 = vpop.permute.xlu0 %1908
        %1910 = vrot.lane.b32.xlu0 %v1852, 24
        %v1911 = vpop.permute.xlu0 %1910
        %1912 = vrot.lane.b32.xlu0 %v1853, 24
        %v1913 = vpop.permute.xlu0 %1912
        %1914 = vrot.lane.b32.xlu0 %v1854, 24
        %v1915 = vpop.permute.xlu0 %1914
        %1916 = vrot.lane.b32.xlu0 %v1855, 24
        %v1917 = vpop.permute.xlu0 %1916
        %1918 = vrot.lane.b32.xlu0 %v1856, 24
        %v1919 = vpop.permute.xlu0 %1918
        %1920 = vrot.lane.b32.xlu0 %v1857, 24
        %v1921 = vpop.permute.xlu0 %1920
        %1922 = vrot.lane.b32.xlu0 %v1858, 24
        %v1923 = vpop.permute.xlu0 %1922
        %1924 = vrot.lane.b32.xlu0 %v1859, 24
        %v1925 = vpop.permute.xlu0 %1924
        %1926 = vrot.lane.b32.xlu0 %v1860, 24
        %v1927 = vpop.permute.xlu0 %1926
        %1928 = vrot.lane.b32.xlu0 %v1861, 24
        %v1929 = vpop.permute.xlu0 %1928
        %1930 = vrot.lane.b32.xlu0 %v1862, 24
        %v1931 = vpop.permute.xlu0 %1930
        %1932 = vrot.lane.b32.xlu0 %v1863, 24
        %v1933 = vpop.permute.xlu0 %1932
        %1934 = vrot.lane.b32.xlu0 %v1864, 24
        %v1935 = vpop.permute.xlu0 %1934
        %1936 = vrot.lane.b32.xlu0 %v1865, 24
        %v1937 = vpop.permute.xlu0 %1936
        %v1939 = vshrl.u32 %v1830, 16
        %v1941 = vshll.u32 %v1830, 16
        %v1943 = vrot.slane %v1941, 1
        %v1944 = vor.u32 %v1939, %v1943
        %v1946 = vshll.u32 %v1831, 16
        %v1948 = vrot.slane %v1946, 1
        %v1949 = vsel %vm568, %v1944, %v1948
        %v1950 = vshrl.u32 %v1831, 16
        %v1952 = vor.u32 %v1950, %v1948
        %v1954 = vshrl.u32 %v1832, 16
        %v1956 = vshll.u32 %v1832, 16
        %v1958 = vrot.slane %v1956, 1
        %v1959 = vor.u32 %v1954, %v1958
        %v1961 = vshll.u32 %v1833, 16
        %v1963 = vrot.slane %v1961, 1
        %v1964 = vsel %vm568, %v1959, %v1963
        %v1965 = vshrl.u32 %v1833, 16
        %v1967 = vor.u32 %v1965, %v1963
        %v1969 = vshrl.u32 %v1834, 16
        %v1971 = vshll.u32 %v1834, 16
        %v1973 = vrot.slane %v1971, 1
        %v1974 = vor.u32 %v1969, %v1973
        %v1976 = vshll.u32 %v1835, 16
        %v1978 = vrot.slane %v1976, 1
        %v1979 = vsel %vm568, %v1974, %v1978
        %v1980 = vshrl.u32 %v1835, 16
        %v1982 = vor.u32 %v1980, %v1978
        %v1984 = vshrl.u32 %v1836, 16
        %v1986 = vshll.u32 %v1836, 16
        %v1988 = vrot.slane %v1986, 1
        %v1989 = vor.u32 %v1984, %v1988
        %v1991 = vshll.u32 %v1837, 16
        %v1993 = vrot.slane %v1991, 1
        %v1994 = vsel %vm568, %v1989, %v1993
        %v1995 = vshrl.u32 %v1837, 16
        %v1997 = vor.u32 %v1995, %v1993
        %v1999 = vshrl.u32 %v1838, 16
        %v2001 = vshll.u32 %v1838, 16
        %v2003 = vrot.slane %v2001, 1
        %v2004 = vor.u32 %v1999, %v2003
        %v2006 = vshll.u32 %v1839, 16
        %v2008 = vrot.slane %v2006, 1
        %v2009 = vsel %vm568, %v2004, %v2008
        %v2010 = vshrl.u32 %v1839, 16
        %v2012 = vor.u32 %v2010, %v2008
        %v2014 = vshrl.u32 %v1840, 16
        %v2016 = vshll.u32 %v1840, 16
        %v2018 = vrot.slane %v2016, 1
        %v2019 = vor.u32 %v2014, %v2018
        %v2021 = vshll.u32 %v1841, 16
        %v2023 = vrot.slane %v2021, 1
        %v2024 = vsel %vm568, %v2019, %v2023
        %v2025 = vshrl.u32 %v1841, 16
        %v2027 = vor.u32 %v2025, %v2023
        %v2029 = vshrl.u32 %v1842, 16
        %v2031 = vshll.u32 %v1842, 16
        %v2033 = vrot.slane %v2031, 1
        %v2034 = vor.u32 %v2029, %v2033
        %v2036 = vshll.u32 %v1843, 16
        %v2038 = vrot.slane %v2036, 1
        %v2039 = vsel %vm568, %v2034, %v2038
        %v2040 = vshrl.u32 %v1843, 16
        %v2042 = vor.u32 %v2040, %v2038
        %v2044 = vshrl.u32 %v1844, 16
        %v2046 = vshll.u32 %v1844, 16
        %v2048 = vrot.slane %v2046, 1
        %v2049 = vor.u32 %v2044, %v2048
        %v2051 = vshll.u32 %v1845, 16
        %v2053 = vrot.slane %v2051, 1
        %v2054 = vsel %vm568, %v2049, %v2053
        %v2055 = vshrl.u32 %v1845, 16
        %v2057 = vor.u32 %v2055, %v2053
        %v2059 = vshrl.u32 %v1846, 16
        %v2061 = vshll.u32 %v1846, 16
        %v2063 = vrot.slane %v2061, 1
        %v2064 = vor.u32 %v2059, %v2063
        %v2066 = vshll.u32 %v1847, 16
        %v2068 = vrot.slane %v2066, 1
        %v2069 = vsel %vm568, %v2064, %v2068
        %v2070 = vshrl.u32 %v1847, 16
        %v2072 = vor.u32 %v2070, %v2068
        %v2074 = vshrl.u32 %v1848, 16
        %v2076 = vshll.u32 %v1848, 16
        %v2078 = vrot.slane %v2076, 1
        %v2079 = vor.u32 %v2074, %v2078
        %v2081 = vshll.u32 %v1849, 16
        %v2083 = vrot.slane %v2081, 1
        %v2084 = vsel %vm568, %v2079, %v2083
        %v2085 = vshrl.u32 %v1849, 16
        %v2087 = vor.u32 %v2085, %v2083
        %v2089 = vshrl.u32 %v1850, 16
        %v2091 = vshll.u32 %v1850, 16
        %v2093 = vrot.slane %v2091, 1
        %v2094 = vor.u32 %v2089, %v2093
        %v2096 = vshll.u32 %v1851, 16
        %v2098 = vrot.slane %v2096, 1
        %v2099 = vsel %vm568, %v2094, %v2098
        %v2100 = vshrl.u32 %v1851, 16
        %v2102 = vor.u32 %v2100, %v2098
        %v2104 = vshrl.u32 %v1852, 16
        %v2106 = vshll.u32 %v1852, 16
        %v2108 = vrot.slane %v2106, 1
        %v2109 = vor.u32 %v2104, %v2108
        %v2111 = vshll.u32 %v1853, 16
        %v2113 = vrot.slane %v2111, 1
        %v2114 = vsel %vm568, %v2109, %v2113
        %v2115 = vshrl.u32 %v1853, 16
        %v2117 = vor.u32 %v2115, %v2113
        %v2119 = vshrl.u32 %v1854, 16
        %v2121 = vshll.u32 %v1854, 16
        %v2123 = vrot.slane %v2121, 1
        %v2124 = vor.u32 %v2119, %v2123
        %v2126 = vshll.u32 %v1855, 16
        %v2128 = vrot.slane %v2126, 1
        %v2129 = vsel %vm568, %v2124, %v2128
        %v2130 = vshrl.u32 %v1855, 16
        %v2132 = vor.u32 %v2130, %v2128
        %v2134 = vshrl.u32 %v1856, 16
        %v2136 = vshll.u32 %v1856, 16
        %v2138 = vrot.slane %v2136, 1
        %v2139 = vor.u32 %v2134, %v2138
        %v2141 = vshll.u32 %v1857, 16
        %v2143 = vrot.slane %v2141, 1
        %v2144 = vsel %vm568, %v2139, %v2143
        %v2145 = vshrl.u32 %v1857, 16
        %v2147 = vor.u32 %v2145, %v2143
        %v2149 = vshrl.u32 %v1858, 16
        %v2151 = vshll.u32 %v1858, 16
        %v2153 = vrot.slane %v2151, 1
        %v2154 = vor.u32 %v2149, %v2153
        %v2156 = vshll.u32 %v1859, 16
        %v2158 = vrot.slane %v2156, 1
        %v2159 = vsel %vm568, %v2154, %v2158
        %v2160 = vshrl.u32 %v1859, 16
        %v2162 = vor.u32 %v2160, %v2158
        %v2164 = vshrl.u32 %v1860, 16
        %v2166 = vshll.u32 %v1860, 16
        %v2168 = vrot.slane %v2166, 1
        %v2169 = vor.u32 %v2164, %v2168
        %v2171 = vshll.u32 %v1861, 16
        %v2173 = vrot.slane %v2171, 1
        %v2174 = vsel %vm568, %v2169, %v2173
        %v2175 = vshrl.u32 %v1861, 16
        %v2177 = vor.u32 %v2175, %v2173
        %v2179 = vshrl.u32 %v1862, 16
        %v2181 = vshll.u32 %v1862, 16
        %v2183 = vrot.slane %v2181, 1
        %v2184 = vor.u32 %v2179, %v2183
        %v2186 = vshll.u32 %v1863, 16
        %v2188 = vrot.slane %v2186, 1
        %v2189 = vsel %vm568, %v2184, %v2188
        %v2190 = vshrl.u32 %v1863, 16
        %v2192 = vor.u32 %v2190, %v2188
        %v2194 = vshrl.u32 %v1864, 16
        %v2196 = vshll.u32 %v1864, 16
        %v2198 = vrot.slane %v2196, 1
        %v2199 = vor.u32 %v2194, %v2198
        %v2201 = vshll.u32 %v1865, 16
        %v2203 = vrot.slane %v2201, 1
        %v2204 = vsel %vm568, %v2199, %v2203
        %v2205 = vshrl.u32 %v1865, 16
        %v2207 = vor.u32 %v2205, %v2203
        %2208 = vrot.lane.b32.xlu0 %v1949, 28
        %v2209 = vpop.permute.xlu0 %2208
        %2210 = vrot.lane.b32.xlu0 %v1952, 28
        %v2211 = vpop.permute.xlu0 %2210
        %2212 = vrot.lane.b32.xlu0 %v1964, 28
        %v2213 = vpop.permute.xlu0 %2212
        %2214 = vrot.lane.b32.xlu0 %v1967, 28
        %v2215 = vpop.permute.xlu0 %2214
        %2216 = vrot.lane.b32.xlu0 %v1979, 28
        %v2217 = vpop.permute.xlu0 %2216
        %2218 = vrot.lane.b32.xlu0 %v1982, 28
        %v2219 = vpop.permute.xlu0 %2218
        %2220 = vrot.lane.b32.xlu0 %v1994, 28
        %v2221 = vpop.permute.xlu0 %2220
        %2222 = vrot.lane.b32.xlu0 %v1997, 28
        %v2223 = vpop.permute.xlu0 %2222
        %2224 = vrot.lane.b32.xlu0 %v2009, 28
        %v2225 = vpop.permute.xlu0 %2224
        %2226 = vrot.lane.b32.xlu0 %v2012, 28
        %v2227 = vpop.permute.xlu0 %2226
        %2228 = vrot.lane.b32.xlu0 %v2024, 28
        %v2229 = vpop.permute.xlu0 %2228
        %2230 = vrot.lane.b32.xlu0 %v2027, 28
        %v2231 = vpop.permute.xlu0 %2230
        %2232 = vrot.lane.b32.xlu0 %v2039, 28
        %v2233 = vpop.permute.xlu0 %2232
        %2234 = vrot.lane.b32.xlu0 %v2042, 28
        %v2235 = vpop.permute.xlu0 %2234
        %2236 = vrot.lane.b32.xlu0 %v2054, 28
        %v2237 = vpop.permute.xlu0 %2236
        %2238 = vrot.lane.b32.xlu0 %v2057, 28
        %v2239 = vpop.permute.xlu0 %2238
        %2240 = vrot.lane.b32.xlu0 %v2069, 28
        %v2241 = vpop.permute.xlu0 %2240
        %2242 = vrot.lane.b32.xlu0 %v2072, 28
        %v2243 = vpop.permute.xlu0 %2242
        %2244 = vrot.lane.b32.xlu0 %v2084, 28
        %v2245 = vpop.permute.xlu0 %2244
        %2246 = vrot.lane.b32.xlu0 %v2087, 28
        %v2247 = vpop.permute.xlu0 %2246
        %2248 = vrot.lane.b32.xlu0 %v2099, 28
        %v2249 = vpop.permute.xlu0 %2248
        %2250 = vrot.lane.b32.xlu0 %v2102, 28
        %v2251 = vpop.permute.xlu0 %2250
        %2252 = vrot.lane.b32.xlu0 %v2114, 28
        %v2253 = vpop.permute.xlu0 %2252
        %2254 = vrot.lane.b32.xlu0 %v2117, 28
        %v2255 = vpop.permute.xlu0 %2254
        %2256 = vrot.lane.b32.xlu0 %v2129, 28
        %v2257 = vpop.permute.xlu0 %2256
        %2258 = vrot.lane.b32.xlu0 %v2132, 28
        %v2259 = vpop.permute.xlu0 %2258
        %2260 = vrot.lane.b32.xlu0 %v2144, 28
        %v2261 = vpop.permute.xlu0 %2260
        %2262 = vrot.lane.b32.xlu0 %v2147, 28
        %v2263 = vpop.permute.xlu0 %2262
        %2264 = vrot.lane.b32.xlu0 %v2159, 28
        %v2265 = vpop.permute.xlu0 %2264
        %2266 = vrot.lane.b32.xlu0 %v2162, 28
        %v2267 = vpop.permute.xlu0 %2266
        %2268 = vrot.lane.b32.xlu0 %v2174, 28
        %v2269 = vpop.permute.xlu0 %2268
        %2270 = vrot.lane.b32.xlu0 %v2177, 28
        %v2271 = vpop.permute.xlu0 %2270
        %2272 = vrot.lane.b32.xlu0 %v2189, 28
        %v2273 = vpop.permute.xlu0 %2272
        %2274 = vrot.lane.b32.xlu0 %v2192, 28
        %v2275 = vpop.permute.xlu0 %2274
        %2276 = vrot.lane.b32.xlu0 %v2204, 28
        %v2277 = vpop.permute.xlu0 %2276
        %2278 = vrot.lane.b32.xlu0 %v2207, 28
        %v2279 = vpop.permute.xlu0 %2278
        %v2280 = vrot.slane %v1830, 1
        %v2281 = vrot.slane %v1831, 1
        %v2282 = vsel %vm911, %v2280, %v2281
        %v2283 = vrot.slane %v1832, 1
        %v2284 = vrot.slane %v1833, 1
        %v2285 = vsel %vm911, %v2283, %v2284
        %v2286 = vrot.slane %v1834, 1
        %v2287 = vrot.slane %v1835, 1
        %v2288 = vsel %vm911, %v2286, %v2287
        %v2289 = vrot.slane %v1836, 1
        %v2290 = vrot.slane %v1837, 1
        %v2291 = vsel %vm911, %v2289, %v2290
        %v2292 = vrot.slane %v1838, 1
        %v2293 = vrot.slane %v1839, 1
        %v2294 = vsel %vm911, %v2292, %v2293
        %v2295 = vrot.slane %v1840, 1
        %v2296 = vrot.slane %v1841, 1
        %v2297 = vsel %vm911, %v2295, %v2296
        %v2298 = vrot.slane %v1842, 1
        %v2299 = vrot.slane %v1843, 1
        %v2300 = vsel %vm911, %v2298, %v2299
        %v2301 = vrot.slane %v1844, 1
        %v2302 = vrot.slane %v1845, 1
        %v2303 = vsel %vm911, %v2301, %v2302
        %v2304 = vrot.slane %v1846, 1
        %v2305 = vrot.slane %v1847, 1
        %v2306 = vsel %vm911, %v2304, %v2305
        %v2307 = vrot.slane %v1848, 1
        %v2308 = vrot.slane %v1849, 1
        %v2309 = vsel %vm911, %v2307, %v2308
        %v2310 = vrot.slane %v1850, 1
        %v2311 = vrot.slane %v1851, 1
        %v2312 = vsel %vm911, %v2310, %v2311
        %v2313 = vrot.slane %v1852, 1
        %v2314 = vrot.slane %v1853, 1
        %v2315 = vsel %vm911, %v2313, %v2314
        %v2316 = vrot.slane %v1854, 1
        %v2317 = vrot.slane %v1855, 1
        %v2318 = vsel %vm911, %v2316, %v2317
        %v2319 = vrot.slane %v1856, 1
        %v2320 = vrot.slane %v1857, 1
        %v2321 = vsel %vm911, %v2319, %v2320
        %v2322 = vrot.slane %v1858, 1
        %v2323 = vrot.slane %v1859, 1
        %v2324 = vsel %vm911, %v2322, %v2323
        %v2325 = vrot.slane %v1860, 1
        %v2326 = vrot.slane %v1861, 1
        %v2327 = vsel %vm911, %v2325, %v2326
        %v2328 = vrot.slane %v1862, 1
        %v2329 = vrot.slane %v1863, 1
        %v2330 = vsel %vm911, %v2328, %v2329
        %v2331 = vrot.slane %v1864, 1
        %v2332 = vrot.slane %v1865, 1
        %v2333 = vsel %vm911, %v2331, %v2332
        %2334 = vrot.lane.b32.xlu0 %v2282, 32
        %v2335 = vpop.permute.xlu0 %2334
        %2336 = vrot.lane.b32.xlu0 %v2281, 32
        %v2337 = vpop.permute.xlu0 %2336
        %2338 = vrot.lane.b32.xlu0 %v2285, 32
        %v2339 = vpop.permute.xlu0 %2338
        %2340 = vrot.lane.b32.xlu0 %v2284, 32
        %v2341 = vpop.permute.xlu0 %2340
        %2342 = vrot.lane.b32.xlu0 %v2288, 32
        %v2343 = vpop.permute.xlu0 %2342
        %2344 = vrot.lane.b32.xlu0 %v2287, 32
        %v2345 = vpop.permute.xlu0 %2344
        %2346 = vrot.lane.b32.xlu0 %v2291, 32
        %v2347 = vpop.permute.xlu0 %2346
        %2348 = vrot.lane.b32.xlu0 %v2290, 32
        %v2349 = vpop.permute.xlu0 %2348
        %2350 = vrot.lane.b32.xlu0 %v2294, 32
        %v2351 = vpop.permute.xlu0 %2350
        %2352 = vrot.lane.b32.xlu0 %v2293, 32
        %v2353 = vpop.permute.xlu0 %2352
        %2354 = vrot.lane.b32.xlu0 %v2297, 32
        %v2355 = vpop.permute.xlu0 %2354
        %2356 = vrot.lane.b32.xlu0 %v2296, 32
        %v2357 = vpop.permute.xlu0 %2356
        %2358 = vrot.lane.b32.xlu0 %v2300, 32
        %v2359 = vpop.permute.xlu0 %2358
        %2360 = vrot.lane.b32.xlu0 %v2299, 32
        %v2361 = vpop.permute.xlu0 %2360
        %2362 = vrot.lane.b32.xlu0 %v2303, 32
        %v2363 = vpop.permute.xlu0 %2362
        %2364 = vrot.lane.b32.xlu0 %v2302, 32
        %v2365 = vpop.permute.xlu0 %2364
        %2366 = vrot.lane.b32.xlu0 %v2306, 32
        %v2367 = vpop.permute.xlu0 %2366
        %2368 = vrot.lane.b32.xlu0 %v2305, 32
        %v2369 = vpop.permute.xlu0 %2368
        %2370 = vrot.lane.b32.xlu0 %v2309, 32
        %v2371 = vpop.permute.xlu0 %2370
        %2372 = vrot.lane.b32.xlu0 %v2308, 32
        %v2373 = vpop.permute.xlu0 %2372
        %2374 = vrot.lane.b32.xlu0 %v2312, 32
        %v2375 = vpop.permute.xlu0 %2374
        %2376 = vrot.lane.b32.xlu0 %v2311, 32
        %v2377 = vpop.permute.xlu0 %2376
        %2378 = vrot.lane.b32.xlu0 %v2315, 32
        %v2379 = vpop.permute.xlu0 %2378
        %2380 = vrot.lane.b32.xlu0 %v2314, 32
        %v2381 = vpop.permute.xlu0 %2380
        %2382 = vrot.lane.b32.xlu0 %v2318, 32
        %v2383 = vpop.permute.xlu0 %2382
        %2384 = vrot.lane.b32.xlu0 %v2317, 32
        %v2385 = vpop.permute.xlu0 %2384
        %2386 = vrot.lane.b32.xlu0 %v2321, 32
        %v2387 = vpop.permute.xlu0 %2386
        %2388 = vrot.lane.b32.xlu0 %v2320, 32
        %v2389 = vpop.permute.xlu0 %2388
        %2390 = vrot.lane.b32.xlu0 %v2324, 32
        %v2391 = vpop.permute.xlu0 %2390
        %2392 = vrot.lane.b32.xlu0 %v2323, 32
        %v2393 = vpop.permute.xlu0 %2392
        %2394 = vrot.lane.b32.xlu0 %v2327, 32
        %v2395 = vpop.permute.xlu0 %2394
        %2396 = vrot.lane.b32.xlu0 %v2326, 32
        %v2397 = vpop.permute.xlu0 %2396
        %2398 = vrot.lane.b32.xlu0 %v2330, 32
        %v2399 = vpop.permute.xlu0 %2398
        %2400 = vrot.lane.b32.xlu0 %v2329, 32
        %v2401 = vpop.permute.xlu0 %2400
        %2402 = vrot.lane.b32.xlu0 %v2333, 32
        %v2403 = vpop.permute.xlu0 %2402
        %2404 = vrot.lane.b32.xlu0 %v2332, 32
        %v2405 = vpop.permute.xlu0 %2404
        %vm2406 = vcmask 31744
        %v2408 = vsel %vm2406, %v532, %v840
        %v2410 = vsel %vm2406, %v533, %v842
        %v2412 = vsel %vm2406, %v534, %v844
        %v2414 = vsel %vm2406, %v535, %v846
        %v2416 = vsel %vm2406, %v536, %v848
        %v2418 = vsel %vm2406, %v537, %v850
        %v2420 = vsel %vm2406, %v538, %v852
        %v2422 = vsel %vm2406, %v539, %v854
        %v2424 = vsel %vm2406, %v540, %v856
        %v2426 = vsel %vm2406, %v541, %v858
        %v2428 = vsel %vm2406, %v542, %v860
        %v2430 = vsel %vm2406, %v543, %v862
        %v2432 = vsel %vm2406, %v544, %v864
        %v2434 = vsel %vm2406, %v545, %v866
        %v2436 = vsel %vm2406, %v546, %v868
        %v2438 = vsel %vm2406, %v547, %v870
        %v2440 = vsel %vm2406, %v548, %v872
        %v2442 = vsel %vm2406, %v549, %v874
        %v2444 = vsel %vm2406, %v550, %v876
        %v2446 = vsel %vm2406, %v551, %v878
        %v2448 = vsel %vm2406, %v552, %v880
        %v2450 = vsel %vm2406, %v553, %v882
        %v2452 = vsel %vm2406, %v554, %v884
        %v2454 = vsel %vm2406, %v555, %v886
        %v2456 = vsel %vm2406, %v556, %v888
        %v2458 = vsel %vm2406, %v557, %v890
        %v2460 = vsel %vm2406, %v558, %v892
        %v2462 = vsel %vm2406, %v559, %v894
        %v2464 = vsel %vm2406, %v560, %v896
        %v2466 = vsel %vm2406, %v561, %v898
        %v2468 = vsel %vm2406, %v562, %v900
        %v2470 = vsel %vm2406, %v563, %v902
        %v2472 = vsel %vm2406, %v564, %v904
        %v2474 = vsel %vm2406, %v565, %v906
        %v2476 = vsel %vm2406, %v566, %v908
        %v2478 = vsel %vm2406, %v567, %v910
        %vm2479 = vcmask 64512
        %v2481 = vsel %vm2479, %v2408, %v967
        %v2483 = vsel %vm2479, %v2410, %v969
        %v2485 = vsel %vm2479, %v2412, %v971
        %v2487 = vsel %vm2479, %v2414, %v973
        %v2489 = vsel %vm2479, %v2416, %v975
        %v2491 = vsel %vm2479, %v2418, %v977
        %v2493 = vsel %vm2479, %v2420, %v979
        %v2495 = vsel %vm2479, %v2422, %v981
        %v2497 = vsel %vm2479, %v2424, %v983
        %v2499 = vsel %vm2479, %v2426, %v985
        %v2501 = vsel %vm2479, %v2428, %v987
        %v2503 = vsel %vm2479, %v2430, %v989
        %v2505 = vsel %vm2479, %v2432, %v991
        %v2507 = vsel %vm2479, %v2434, %v993
        %v2509 = vsel %vm2479, %v2436, %v995
        %v2511 = vsel %vm2479, %v2438, %v997
        %v2513 = vsel %vm2479, %v2440, %v999
        %v2515 = vsel %vm2479, %v2442, %v1001
        %v2517 = vsel %vm2479, %v2444, %v1003
        %v2519 = vsel %vm2479, %v2446, %v1005
        %v2521 = vsel %vm2479, %v2448, %v1007
        %v2523 = vsel %vm2479, %v2450, %v1009
        %v2525 = vsel %vm2479, %v2452, %v1011
        %v2527 = vsel %vm2479, %v2454, %v1013
        %v2529 = vsel %vm2479, %v2456, %v1015
        %v2531 = vsel %vm2479, %v2458, %v1017
        %v2533 = vsel %vm2479, %v2460, %v1019
        %v2535 = vsel %vm2479, %v2462, %v1021
        %v2537 = vsel %vm2479, %v2464, %v1023
        %v2539 = vsel %vm2479, %v2466, %v1025
        %v2541 = vsel %vm2479, %v2468, %v1027
        %v2543 = vsel %vm2479, %v2470, %v1029
        %v2545 = vsel %vm2479, %v2472, %v1031
        %v2547 = vsel %vm2479, %v2474, %v1033
        %v2549 = vsel %vm2479, %v2476, %v1035
        %v2551 = vsel %vm2479, %v2478, %v1037
        %vm2552 = vcmask 97280
        %v2554 = vsel %vm2552, %v2481, %v1183
        %v2556 = vsel %vm2552, %v2483, %v1185
        %v2558 = vsel %vm2552, %v2485, %v1187
        %v2560 = vsel %vm2552, %v2487, %v1189
        %v2562 = vsel %vm2552, %v2489, %v1191
        %v2564 = vsel %vm2552, %v2491, %v1193
        %v2566 = vsel %vm2552, %v2493, %v1195
        %v2568 = vsel %vm2552, %v2495, %v1197
        %v2570 = vsel %vm2552, %v2497, %v1199
        %v2572 = vsel %vm2552, %v2499, %v1201
        %v2574 = vsel %vm2552, %v2501, %v1203
        %v2576 = vsel %vm2552, %v2503, %v1205
        %v2578 = vsel %vm2552, %v2505, %v1207
        %v2580 = vsel %vm2552, %v2507, %v1209
        %v2582 = vsel %vm2552, %v2509, %v1211
        %v2584 = vsel %vm2552, %v2511, %v1213
        %v2586 = vsel %vm2552, %v2513, %v1215
        %v2588 = vsel %vm2552, %v2515, %v1217
        %v2590 = vsel %vm2552, %v2517, %v1219
        %v2592 = vsel %vm2552, %v2519, %v1221
        %v2594 = vsel %vm2552, %v2521, %v1223
        %v2596 = vsel %vm2552, %v2523, %v1225
        %v2598 = vsel %vm2552, %v2525, %v1227
        %v2600 = vsel %vm2552, %v2527, %v1229
        %v2602 = vsel %vm2552, %v2529, %v1231
        %v2604 = vsel %vm2552, %v2531, %v1233
        %v2606 = vsel %vm2552, %v2533, %v1235
        %v2608 = vsel %vm2552, %v2535, %v1237
        %v2610 = vsel %vm2552, %v2537, %v1239
        %v2612 = vsel %vm2552, %v2539, %v1241
        %v2614 = vsel %vm2552, %v2541, %v1243
        %v2616 = vsel %vm2552, %v2543, %v1245
        %v2618 = vsel %vm2552, %v2545, %v1247
        %v2620 = vsel %vm2552, %v2547, %v1249
        %v2622 = vsel %vm2552, %v2549, %v1251
        %v2624 = vsel %vm2552, %v2551, %v1253
        %vm2625 = vcmask 130048
        %v2627 = vsel %vm2625, %v2554, %v1525
        %v2629 = vsel %vm2625, %v2556, %v1527
        %v2631 = vsel %vm2625, %v2558, %v1529
        %v2633 = vsel %vm2625, %v2560, %v1531
        %v2635 = vsel %vm2625, %v2562, %v1533
        %v2637 = vsel %vm2625, %v2564, %v1535
        %v2639 = vsel %vm2625, %v2566, %v1537
        %v2641 = vsel %vm2625, %v2568, %v1539
        %v2643 = vsel %vm2625, %v2570, %v1541
        %v2645 = vsel %vm2625, %v2572, %v1543
        %v2647 = vsel %vm2625, %v2574, %v1545
        %v2649 = vsel %vm2625, %v2576, %v1547
        %v2651 = vsel %vm2625, %v2578, %v1549
        %v2653 = vsel %vm2625, %v2580, %v1551
        %v2655 = vsel %vm2625, %v2582, %v1553
        %v2657 = vsel %vm2625, %v2584, %v1555
        %v2659 = vsel %vm2625, %v2586, %v1557
        %v2661 = vsel %vm2625, %v2588, %v1559
        %v2663 = vsel %vm2625, %v2590, %v1561
        %v2665 = vsel %vm2625, %v2592, %v1563
        %v2667 = vsel %vm2625, %v2594, %v1565
        %v2669 = vsel %vm2625, %v2596, %v1567
        %v2671 = vsel %vm2625, %v2598, %v1569
        %v2673 = vsel %vm2625, %v2600, %v1571
        %v2675 = vsel %vm2625, %v2602, %v1573
        %v2677 = vsel %vm2625, %v2604, %v1575
        %v2679 = vsel %vm2625, %v2606, %v1577
        %v2681 = vsel %vm2625, %v2608, %v1579
        %v2683 = vsel %vm2625, %v2610, %v1581
        %v2685 = vsel %vm2625, %v2612, %v1583
        %v2687 = vsel %vm2625, %v2614, %v1585
        %v2689 = vsel %vm2625, %v2616, %v1587
        %v2691 = vsel %vm2625, %v2618, %v1589
        %v2693 = vsel %vm2625, %v2620, %v1591
        %v2695 = vsel %vm2625, %v2622, %v1593
        %v2697 = vsel %vm2625, %v2624, %v1595
        %vm2698 = vcmask 162816
        %v2700 = vsel %vm2698, %v2627, %v1651
        %v2702 = vsel %vm2698, %v2629, %v1653
        %v2704 = vsel %vm2698, %v2631, %v1655
        %v2706 = vsel %vm2698, %v2633, %v1657
        %v2708 = vsel %vm2698, %v2635, %v1659
        %v2710 = vsel %vm2698, %v2637, %v1661
        %v2712 = vsel %vm2698, %v2639, %v1663
        %v2714 = vsel %vm2698, %v2641, %v1665
        %v2716 = vsel %vm2698, %v2643, %v1667
        %v2718 = vsel %vm2698, %v2645, %v1669
        %v2720 = vsel %vm2698, %v2647, %v1671
        %v2722 = vsel %vm2698, %v2649, %v1673
        %v2724 = vsel %vm2698, %v2651, %v1675
        %v2726 = vsel %vm2698, %v2653, %v1677
        %v2728 = vsel %vm2698, %v2655, %v1679
        %v2730 = vsel %vm2698, %v2657, %v1681
        %v2732 = vsel %vm2698, %v2659, %v1683
        %v2734 = vsel %vm2698, %v2661, %v1685
        %v2736 = vsel %vm2698, %v2663, %v1687
        %v2738 = vsel %vm2698, %v2665, %v1689
        %v2740 = vsel %vm2698, %v2667, %v1691
        %v2742 = vsel %vm2698, %v2669, %v1693
        %v2744 = vsel %vm2698, %v2671, %v1695
        %v2746 = vsel %vm2698, %v2673, %v1697
        %v2748 = vsel %vm2698, %v2675, %v1699
        %v2750 = vsel %vm2698, %v2677, %v1701
        %v2752 = vsel %vm2698, %v2679, %v1703
        %v2754 = vsel %vm2698, %v2681, %v1705
        %v2756 = vsel %vm2698, %v2683, %v1707
        %v2758 = vsel %vm2698, %v2685, %v1709
        %v2760 = vsel %vm2698, %v2687, %v1711
        %v2762 = vsel %vm2698, %v2689, %v1713
        %v2764 = vsel %vm2698, %v2691, %v1715
        %v2766 = vsel %vm2698, %v2693, %v1717
        %v2768 = vsel %vm2698, %v2695, %v1719
        %v2770 = vsel %vm2698, %v2697, %v1721
        %vm2771 = vcmask 195584
        %v2773 = vsel %vm2771, %v2700, %v1867
        %v2775 = vsel %vm2771, %v2702, %v1869
        %v2777 = vsel %vm2771, %v2704, %v1871
        %v2779 = vsel %vm2771, %v2706, %v1873
        %v2781 = vsel %vm2771, %v2708, %v1875
        %v2783 = vsel %vm2771, %v2710, %v1877
        %v2785 = vsel %vm2771, %v2712, %v1879
        %v2787 = vsel %vm2771, %v2714, %v1881
        %v2789 = vsel %vm2771, %v2716, %v1883
        %v2791 = vsel %vm2771, %v2718, %v1885
        %v2793 = vsel %vm2771, %v2720, %v1887
        %v2795 = vsel %vm2771, %v2722, %v1889
        %v2797 = vsel %vm2771, %v2724, %v1891
        %v2799 = vsel %vm2771, %v2726, %v1893
        %v2801 = vsel %vm2771, %v2728, %v1895
        %v2803 = vsel %vm2771, %v2730, %v1897
        %v2805 = vsel %vm2771, %v2732, %v1899
        %v2807 = vsel %vm2771, %v2734, %v1901
        %v2809 = vsel %vm2771, %v2736, %v1903
        %v2811 = vsel %vm2771, %v2738, %v1905
        %v2813 = vsel %vm2771, %v2740, %v1907
        %v2815 = vsel %vm2771, %v2742, %v1909
        %v2817 = vsel %vm2771, %v2744, %v1911
        %v2819 = vsel %vm2771, %v2746, %v1913
        %v2821 = vsel %vm2771, %v2748, %v1915
        %v2823 = vsel %vm2771, %v2750, %v1917
        %v2825 = vsel %vm2771, %v2752, %v1919
        %v2827 = vsel %vm2771, %v2754, %v1921
        %v2829 = vsel %vm2771, %v2756, %v1923
        %v2831 = vsel %vm2771, %v2758, %v1925
        %v2833 = vsel %vm2771, %v2760, %v1927
        %v2835 = vsel %vm2771, %v2762, %v1929
        %v2837 = vsel %vm2771, %v2764, %v1931
        %v2839 = vsel %vm2771, %v2766, %v1933
        %v2841 = vsel %vm2771, %v2768, %v1935
        %v2843 = vsel %vm2771, %v2770, %v1937
        %vm2844 = vcmask 228352
        %v2846 = vsel %vm2844, %v2773, %v2209
        %v2848 = vsel %vm2844, %v2775, %v2211
        %v2850 = vsel %vm2844, %v2777, %v2213
        %v2852 = vsel %vm2844, %v2779, %v2215
        %v2854 = vsel %vm2844, %v2781, %v2217
        %v2856 = vsel %vm2844, %v2783, %v2219
        %v2858 = vsel %vm2844, %v2785, %v2221
        %v2860 = vsel %vm2844, %v2787, %v2223
        %v2862 = vsel %vm2844, %v2789, %v2225
        %v2864 = vsel %vm2844, %v2791, %v2227
        %v2866 = vsel %vm2844, %v2793, %v2229
        %v2868 = vsel %vm2844, %v2795, %v2231
        %v2870 = vsel %vm2844, %v2797, %v2233
        %v2872 = vsel %vm2844, %v2799, %v2235
        %v2874 = vsel %vm2844, %v2801, %v2237
        %v2876 = vsel %vm2844, %v2803, %v2239
        %v2878 = vsel %vm2844, %v2805, %v2241
        %v2880 = vsel %vm2844, %v2807, %v2243
        %v2882 = vsel %vm2844, %v2809, %v2245
        %v2884 = vsel %vm2844, %v2811, %v2247
        %v2886 = vsel %vm2844, %v2813, %v2249
        %v2888 = vsel %vm2844, %v2815, %v2251
        %v2890 = vsel %vm2844, %v2817, %v2253
        %v2892 = vsel %vm2844, %v2819, %v2255
        %v2894 = vsel %vm2844, %v2821, %v2257
        %v2896 = vsel %vm2844, %v2823, %v2259
        %v2898 = vsel %vm2844, %v2825, %v2261
        %v2900 = vsel %vm2844, %v2827, %v2263
        %v2902 = vsel %vm2844, %v2829, %v2265
        %v2904 = vsel %vm2844, %v2831, %v2267
        %v2906 = vsel %vm2844, %v2833, %v2269
        %v2908 = vsel %vm2844, %v2835, %v2271
        %v2910 = vsel %vm2844, %v2837, %v2273
        %v2912 = vsel %vm2844, %v2839, %v2275
        %v2914 = vsel %vm2844, %v2841, %v2277
        %v2916 = vsel %vm2844, %v2843, %v2279
        %vm2917 = vcmask 261120
        %v2919 = vsel %vm2917, %v2846, %v2335
        %v2921 = vsel %vm2917, %v2848, %v2337
        %v2923 = vsel %vm2917, %v2850, %v2339
        %v2925 = vsel %vm2917, %v2852, %v2341
        %v2927 = vsel %vm2917, %v2854, %v2343
        %v2929 = vsel %vm2917, %v2856, %v2345
        %v2931 = vsel %vm2917, %v2858, %v2347
        %v2933 = vsel %vm2917, %v2860, %v2349
        %v2935 = vsel %vm2917, %v2862, %v2351
        %v2937 = vsel %vm2917, %v2864, %v2353
        %v2939 = vsel %vm2917, %v2866, %v2355
        %v2941 = vsel %vm2917, %v2868, %v2357
        %v2943 = vsel %vm2917, %v2870, %v2359
        %v2945 = vsel %vm2917, %v2872, %v2361
        %v2947 = vsel %vm2917, %v2874, %v2363
        %v2949 = vsel %vm2917, %v2876, %v2365
        %v2951 = vsel %vm2917, %v2878, %v2367
        %v2953 = vsel %vm2917, %v2880, %v2369
        %v2955 = vsel %vm2917, %v2882, %v2371
        %v2957 = vsel %vm2917, %v2884, %v2373
        %v2959 = vsel %vm2917, %v2886, %v2375
        %v2961 = vsel %vm2917, %v2888, %v2377
        %v2963 = vsel %vm2917, %v2890, %v2379
        %v2965 = vsel %vm2917, %v2892, %v2381
        %v2967 = vsel %vm2917, %v2894, %v2383
        %v2969 = vsel %vm2917, %v2896, %v2385
        %v2971 = vsel %vm2917, %v2898, %v2387
        %v2973 = vsel %vm2917, %v2900, %v2389
        %v2975 = vsel %vm2917, %v2902, %v2391
        %v2977 = vsel %vm2917, %v2904, %v2393
        %v2979 = vsel %vm2917, %v2906, %v2395
        %v2981 = vsel %vm2917, %v2908, %v2397
        %v2983 = vsel %vm2917, %v2910, %v2399
        %v2985 = vsel %vm2917, %v2912, %v2401
        %v2987 = vsel %vm2917, %v2914, %v2403
        %v2989 = vsel %vm2917, %v2916, %v2405
        %v2990 = vld [vmem:[%s1] sm:$0xf]
        %v2991 = vld [vmem:[%s1 + $0x4] sm:$0xf]
        %v2992 = vld [vmem:[%s1 + $0x8] sm:$0xf]
        %v2993 = vld [vmem:[%s1 + $0xc] sm:$0xf]
        %v2994 = vld [vmem:[%s1 + $0x10] sm:$0x3]
        %v3031 = vcombine.high %v2919, %v2919
        %v3033 = vunpack.c.l.s4 1966171168
        %v3034 = vunpack.c.0.s8 %v3033
        %v3035 = vlaneseq
        %v3036 = vshrl.u32 %v3035, 7
        %v3037 = vsub.s32 %v3034, %v3036
        %v3038 = vrot.slane %v2919, %v3037
        %v3040 = vunpack.c.l.s4 1966171168
        %v3041 = vunpack.c.0.s8 %v3040
        %v3042 = vlaneseq
        %v3043 = vshrl.u32 %v3042, 7
        %v3044 = vsub.s32 %v3041, %v3043
        %v3045 = vrot.slane %v3031, %v3044
        %v3046 = vcombine.high %v3038, %v3038
        %v3047 = vcombine.high %v3045, %v3045
        %v3049 = vunpack.c.l.s4 1966171168
        %v3050 = vunpack.c.0.s8 %v3049
        %v3051 = vlaneseq
        %v3052 = vshrl.u32 %v3051, 7
        %v3053 = vsub.s32 %v3050, %v3052
        %v3054 = vrot.slane %v3038, %v3053
        %v3056 = vunpack.c.l.s4 1966171168
        %v3057 = vunpack.c.0.s8 %v3056
        %v3058 = vlaneseq
        %v3059 = vshrl.u32 %v3058, 7
        %v3060 = vsub.s32 %v3057, %v3059
        %v3061 = vrot.slane %v3045, %v3060
        %v3063 = vunpack.c.l.s4 1966171168
        %v3064 = vunpack.c.0.s8 %v3063
        %v3065 = vlaneseq
        %v3066 = vshrl.u32 %v3065, 7
        %v3067 = vsub.s32 %v3064, %v3066
        %v3068 = vrot.slane %v3046, %v3067
        %v3070 = vunpack.c.l.s4 1966171168
        %v3071 = vunpack.c.0.s8 %v3070
        %v3072 = vlaneseq
        %v3073 = vshrl.u32 %v3072, 7
        %v3074 = vsub.s32 %v3071, %v3073
        %v3075 = vrot.slane %v3047, %v3074
        %v3076 = vcombine.high %v3054, %v3054
        %v3077 = vcombine.high %v3061, %v3061
        %v3078 = vcombine.high %v3068, %v3068
        %v3079 = vcombine.high %v3075, %v3075
        %v3081 = vunpack.c.l.s4 1966171168
        %v3082 = vunpack.c.0.s8 %v3081
        %v3083 = vlaneseq
        %v3084 = vshrl.u32 %v3083, 7
        %v3085 = vsub.s32 %v3082, %v3084
        %v3086 = vrot.slane %v2921, %v3085
        %v3088 = vunpack.c.l.s4 1966171168
        %v3089 = vunpack.c.0.s8 %v3088
        %v3090 = vlaneseq
        %v3091 = vshrl.u32 %v3090, 7
        %v3092 = vsub.s32 %v3089, %v3091
        %v3093 = vrot.slane %v3086, %v3092
        %v3094 = vcombine.high %v2923, %v2923
        %v3096 = vunpack.c.l.s4 1966171168
        %v3097 = vunpack.c.0.s8 %v3096
        %v3098 = vlaneseq
        %v3099 = vshrl.u32 %v3098, 7
        %v3100 = vsub.s32 %v3097, %v3099
        %v3101 = vrot.slane %v2923, %v3100
        %v3103 = vunpack.c.l.s4 1966171168
        %v3104 = vunpack.c.0.s8 %v3103
        %v3105 = vlaneseq
        %v3106 = vshrl.u32 %v3105, 7
        %v3107 = vsub.s32 %v3104, %v3106
        %v3108 = vrot.slane %v3094, %v3107
        %v3109 = vcombine.high %v3101, %v3101
        %v3110 = vcombine.high %v3108, %v3108
        %v3112 = vunpack.c.l.s4 1966171168
        %v3113 = vunpack.c.0.s8 %v3112
        %v3114 = vlaneseq
        %v3115 = vshrl.u32 %v3114, 7
        %v3116 = vsub.s32 %v3113, %v3115
        %v3117 = vrot.slane %v3101, %v3116
        %v3119 = vunpack.c.l.s4 1966171168
        %v3120 = vunpack.c.0.s8 %v3119
        %v3121 = vlaneseq
        %v3122 = vshrl.u32 %v3121, 7
        %v3123 = vsub.s32 %v3120, %v3122
        %v3124 = vrot.slane %v3108, %v3123
        %v3126 = vunpack.c.l.s4 1966171168
        %v3127 = vunpack.c.0.s8 %v3126
        %v3128 = vlaneseq
        %v3129 = vshrl.u32 %v3128, 7
        %v3130 = vsub.s32 %v3127, %v3129
        %v3131 = vrot.slane %v3109, %v3130
        %v3133 = vunpack.c.l.s4 1966171168
        %v3134 = vunpack.c.0.s8 %v3133
        %v3135 = vlaneseq
        %v3136 = vshrl.u32 %v3135, 7
        %v3137 = vsub.s32 %v3134, %v3136
        %v3138 = vrot.slane %v3110, %v3137
        %v3139 = vcombine.high %v3117, %v3117
        %v3140 = vcombine.high %v3124, %v3124
        %v3141 = vcombine.high %v3131, %v3131
        %v3142 = vcombine.high %v3138, %v3138
        %v3144 = vunpack.c.l.s4 1966171168
        %v3145 = vunpack.c.0.s8 %v3144
        %v3146 = vlaneseq
        %v3147 = vshrl.u32 %v3146, 7
        %v3148 = vsub.s32 %v3145, %v3147
        %v3149 = vrot.slane %v2925, %v3148
        %v3151 = vunpack.c.l.s4 1966171168
        %v3152 = vunpack.c.0.s8 %v3151
        %v3153 = vlaneseq
        %v3154 = vshrl.u32 %v3153, 7
        %v3155 = vsub.s32 %v3152, %v3154
        %v3156 = vrot.slane %v3149, %v3155
        %v3157 = vcombine.high %v2927, %v2927
        %v3159 = vunpack.c.l.s4 1966171168
        %v3160 = vunpack.c.0.s8 %v3159
        %v3161 = vlaneseq
        %v3162 = vshrl.u32 %v3161, 7
        %v3163 = vsub.s32 %v3160, %v3162
        %v3164 = vrot.slane %v2927, %v3163
        %v3166 = vunpack.c.l.s4 1966171168
        %v3167 = vunpack.c.0.s8 %v3166
        %v3168 = vlaneseq
        %v3169 = vshrl.u32 %v3168, 7
        %v3170 = vsub.s32 %v3167, %v3169
        %v3171 = vrot.slane %v3157, %v3170
        %v3172 = vcombine.high %v3164, %v3164
        %v3173 = vcombine.high %v3171, %v3171
        %v3175 = vunpack.c.l.s4 1966171168
        %v3176 = vunpack.c.0.s8 %v3175
        %v3177 = vlaneseq
        %v3178 = vshrl.u32 %v3177, 7
        %v3179 = vsub.s32 %v3176, %v3178
        %v3180 = vrot.slane %v3164, %v3179
        %v3182 = vunpack.c.l.s4 1966171168
        %v3183 = vunpack.c.0.s8 %v3182
        %v3184 = vlaneseq
        %v3185 = vshrl.u32 %v3184, 7
        %v3186 = vsub.s32 %v3183, %v3185
        %v3187 = vrot.slane %v3171, %v3186
        %v3189 = vunpack.c.l.s4 1966171168
        %v3190 = vunpack.c.0.s8 %v3189
        %v3191 = vlaneseq
        %v3192 = vshrl.u32 %v3191, 7
        %v3193 = vsub.s32 %v3190, %v3192
        %v3194 = vrot.slane %v3172, %v3193
        %v3196 = vunpack.c.l.s4 1966171168
        %v3197 = vunpack.c.0.s8 %v3196
        %v3198 = vlaneseq
        %v3199 = vshrl.u32 %v3198, 7
        %v3200 = vsub.s32 %v3197, %v3199
        %v3201 = vrot.slane %v3173, %v3200
        %v3202 = vcombine.high %v3180, %v3180
        %v3203 = vcombine.high %v3187, %v3187
        %v3204 = vcombine.high %v3194, %v3194
        %v3205 = vcombine.high %v3201, %v3201
        %v3207 = vunpack.c.l.s4 1966171168
        %v3208 = vunpack.c.0.s8 %v3207
        %v3209 = vlaneseq
        %v3210 = vshrl.u32 %v3209, 7
        %v3211 = vsub.s32 %v3208, %v3210
        %v3212 = vrot.slane %v2929, %v3211
        %v3214 = vunpack.c.l.s4 1966171168
        %v3215 = vunpack.c.0.s8 %v3214
        %v3216 = vlaneseq
        %v3217 = vshrl.u32 %v3216, 7
        %v3218 = vsub.s32 %v3215, %v3217
        %v3219 = vrot.slane %v3212, %v3218
        %v3220 = vcombine.high %v2931, %v2931
        %v3222 = vunpack.c.l.s4 1966171168
        %v3223 = vunpack.c.0.s8 %v3222
        %v3224 = vlaneseq
        %v3225 = vshrl.u32 %v3224, 7
        %v3226 = vsub.s32 %v3223, %v3225
        %v3227 = vrot.slane %v2931, %v3226
        %v3229 = vunpack.c.l.s4 1966171168
        %v3230 = vunpack.c.0.s8 %v3229
        %v3231 = vlaneseq
        %v3232 = vshrl.u32 %v3231, 7
        %v3233 = vsub.s32 %v3230, %v3232
        %v3234 = vrot.slane %v3220, %v3233
        %v3235 = vcombine.high %v3227, %v3227
        %v3236 = vcombine.high %v3234, %v3234
        %v3238 = vunpack.c.l.s4 1966171168
        %v3239 = vunpack.c.0.s8 %v3238
        %v3240 = vlaneseq
        %v3241 = vshrl.u32 %v3240, 7
        %v3242 = vsub.s32 %v3239, %v3241
        %v3243 = vrot.slane %v3227, %v3242
        %v3245 = vunpack.c.l.s4 1966171168
        %v3246 = vunpack.c.0.s8 %v3245
        %v3247 = vlaneseq
        %v3248 = vshrl.u32 %v3247, 7
        %v3249 = vsub.s32 %v3246, %v3248
        %v3250 = vrot.slane %v3234, %v3249
        %v3252 = vunpack.c.l.s4 1966171168
        %v3253 = vunpack.c.0.s8 %v3252
        %v3254 = vlaneseq
        %v3255 = vshrl.u32 %v3254, 7
        %v3256 = vsub.s32 %v3253, %v3255
        %v3257 = vrot.slane %v3235, %v3256
        %v3259 = vunpack.c.l.s4 1966171168
        %v3260 = vunpack.c.0.s8 %v3259
        %v3261 = vlaneseq
        %v3262 = vshrl.u32 %v3261, 7
        %v3263 = vsub.s32 %v3260, %v3262
        %v3264 = vrot.slane %v3236, %v3263
        %v3265 = vcombine.high %v3243, %v3243
        %v3266 = vcombine.high %v3250, %v3250
        %v3267 = vcombine.high %v3257, %v3257
        %v3268 = vcombine.high %v3264, %v3264
        %v3270 = vunpack.c.l.s4 1966171168
        %v3271 = vunpack.c.0.s8 %v3270
        %v3272 = vlaneseq
        %v3273 = vshrl.u32 %v3272, 7
        %v3274 = vsub.s32 %v3271, %v3273
        %v3275 = vrot.slane %v2933, %v3274
        %v3277 = vunpack.c.l.s4 1966171168
        %v3278 = vunpack.c.0.s8 %v3277
        %v3279 = vlaneseq
        %v3280 = vshrl.u32 %v3279, 7
        %v3281 = vsub.s32 %v3278, %v3280
        %v3282 = vrot.slane %v3275, %v3281
        %v3283 = vcombine.high %v2935, %v2935
        %v3285 = vunpack.c.l.s4 1966171168
        %v3286 = vunpack.c.0.s8 %v3285
        %v3287 = vlaneseq
        %v3288 = vshrl.u32 %v3287, 7
        %v3289 = vsub.s32 %v3286, %v3288
        %v3290 = vrot.slane %v2935, %v3289
        %v3292 = vunpack.c.l.s4 1966171168
        %v3293 = vunpack.c.0.s8 %v3292
        %v3294 = vlaneseq
        %v3295 = vshrl.u32 %v3294, 7
        %v3296 = vsub.s32 %v3293, %v3295
        %v3297 = vrot.slane %v3283, %v3296
        %v3298 = vcombine.high %v3290, %v3290
        %v3299 = vcombine.high %v3297, %v3297
        %v3301 = vunpack.c.l.s4 1966171168
        %v3302 = vunpack.c.0.s8 %v3301
        %v3303 = vlaneseq
        %v3304 = vshrl.u32 %v3303, 7
        %v3305 = vsub.s32 %v3302, %v3304
        %v3306 = vrot.slane %v3290, %v3305
        %v3308 = vunpack.c.l.s4 1966171168
        %v3309 = vunpack.c.0.s8 %v3308
        %v3310 = vlaneseq
        %v3311 = vshrl.u32 %v3310, 7
        %v3312 = vsub.s32 %v3309, %v3311
        %v3313 = vrot.slane %v3297, %v3312
        %v3315 = vunpack.c.l.s4 1966171168
        %v3316 = vunpack.c.0.s8 %v3315
        %v3317 = vlaneseq
        %v3318 = vshrl.u32 %v3317, 7
        %v3319 = vsub.s32 %v3316, %v3318
        %v3320 = vrot.slane %v3298, %v3319
        %v3322 = vunpack.c.l.s4 1966171168
        %v3323 = vunpack.c.0.s8 %v3322
        %v3324 = vlaneseq
        %v3325 = vshrl.u32 %v3324, 7
        %v3326 = vsub.s32 %v3323, %v3325
        %v3327 = vrot.slane %v3299, %v3326
        %v3328 = vcombine.high %v3306, %v3306
        %v3329 = vcombine.high %v3313, %v3313
        %v3330 = vcombine.high %v3320, %v3320
        %v3331 = vcombine.high %v3327, %v3327
        %v3333 = vunpack.c.l.s4 1966171168
        %v3334 = vunpack.c.0.s8 %v3333
        %v3335 = vlaneseq
        %v3336 = vshrl.u32 %v3335, 7
        %v3337 = vsub.s32 %v3334, %v3336
        %v3338 = vrot.slane %v2937, %v3337
        %v3340 = vunpack.c.l.s4 1966171168
        %v3341 = vunpack.c.0.s8 %v3340
        %v3342 = vlaneseq
        %v3343 = vshrl.u32 %v3342, 7
        %v3344 = vsub.s32 %v3341, %v3343
        %v3345 = vrot.slane %v3338, %v3344
        %v3346 = vcombine.high %v2939, %v2939
        %v3348 = vunpack.c.l.s4 1966171168
        %v3349 = vunpack.c.0.s8 %v3348
        %v3350 = vlaneseq
        %v3351 = vshrl.u32 %v3350, 7
        %v3352 = vsub.s32 %v3349, %v3351
        %v3353 = vrot.slane %v2939, %v3352
        %v3355 = vunpack.c.l.s4 1966171168
        %v3356 = vunpack.c.0.s8 %v3355
        %v3357 = vlaneseq
        %v3358 = vshrl.u32 %v3357, 7
        %v3359 = vsub.s32 %v3356, %v3358
        %v3360 = vrot.slane %v3346, %v3359
        %v3361 = vcombine.high %v3353, %v3353
        %v3362 = vcombine.high %v3360, %v3360
        %v3364 = vunpack.c.l.s4 1966171168
        %v3365 = vunpack.c.0.s8 %v3364
        %v3366 = vlaneseq
        %v3367 = vshrl.u32 %v3366, 7
        %v3368 = vsub.s32 %v3365, %v3367
        %v3369 = vrot.slane %v3353, %v3368
        %v3371 = vunpack.c.l.s4 1966171168
        %v3372 = vunpack.c.0.s8 %v3371
        %v3373 = vlaneseq
        %v3374 = vshrl.u32 %v3373, 7
        %v3375 = vsub.s32 %v3372, %v3374
        %v3376 = vrot.slane %v3360, %v3375
        %v3378 = vunpack.c.l.s4 1966171168
        %v3379 = vunpack.c.0.s8 %v3378
        %v3380 = vlaneseq
        %v3381 = vshrl.u32 %v3380, 7
        %v3382 = vsub.s32 %v3379, %v3381
        %v3383 = vrot.slane %v3361, %v3382
        %v3385 = vunpack.c.l.s4 1966171168
        %v3386 = vunpack.c.0.s8 %v3385
        %v3387 = vlaneseq
        %v3388 = vshrl.u32 %v3387, 7
        %v3389 = vsub.s32 %v3386, %v3388
        %v3390 = vrot.slane %v3362, %v3389
        %v3391 = vcombine.high %v3369, %v3369
        %v3392 = vcombine.high %v3376, %v3376
        %v3393 = vcombine.high %v3383, %v3383
        %v3394 = vcombine.high %v3390, %v3390
        %v3396 = vunpack.c.l.s4 1966171168
        %v3397 = vunpack.c.0.s8 %v3396
        %v3398 = vlaneseq
        %v3399 = vshrl.u32 %v3398, 7
        %v3400 = vsub.s32 %v3397, %v3399
        %v3401 = vrot.slane %v2941, %v3400
        %v3403 = vunpack.c.l.s4 1966171168
        %v3404 = vunpack.c.0.s8 %v3403
        %v3405 = vlaneseq
        %v3406 = vshrl.u32 %v3405, 7
        %v3407 = vsub.s32 %v3404, %v3406
        %v3408 = vrot.slane %v3401, %v3407
        %v3409 = vcombine.high %v2943, %v2943
        %v3411 = vunpack.c.l.s4 1966171168
        %v3412 = vunpack.c.0.s8 %v3411
        %v3413 = vlaneseq
        %v3414 = vshrl.u32 %v3413, 7
        %v3415 = vsub.s32 %v3412, %v3414
        %v3416 = vrot.slane %v2943, %v3415
        %v3418 = vunpack.c.l.s4 1966171168
        %v3419 = vunpack.c.0.s8 %v3418
        %v3420 = vlaneseq
        %v3421 = vshrl.u32 %v3420, 7
        %v3422 = vsub.s32 %v3419, %v3421
        %v3423 = vrot.slane %v3409, %v3422
        %v3424 = vcombine.high %v3416, %v3416
        %v3425 = vcombine.high %v3423, %v3423
        %v3427 = vunpack.c.l.s4 1966171168
        %v3428 = vunpack.c.0.s8 %v3427
        %v3429 = vlaneseq
        %v3430 = vshrl.u32 %v3429, 7
        %v3431 = vsub.s32 %v3428, %v3430
        %v3432 = vrot.slane %v3416, %v3431
        %v3434 = vunpack.c.l.s4 1966171168
        %v3435 = vunpack.c.0.s8 %v3434
        %v3436 = vlaneseq
        %v3437 = vshrl.u32 %v3436, 7
        %v3438 = vsub.s32 %v3435, %v3437
        %v3439 = vrot.slane %v3423, %v3438
        %v3441 = vunpack.c.l.s4 1966171168
        %v3442 = vunpack.c.0.s8 %v3441
        %v3443 = vlaneseq
        %v3444 = vshrl.u32 %v3443, 7
        %v3445 = vsub.s32 %v3442, %v3444
        %v3446 = vrot.slane %v3424, %v3445
        %v3448 = vunpack.c.l.s4 1966171168
        %v3449 = vunpack.c.0.s8 %v3448
        %v3450 = vlaneseq
        %v3451 = vshrl.u32 %v3450, 7
        %v3452 = vsub.s32 %v3449, %v3451
        %v3453 = vrot.slane %v3425, %v3452
        %v3454 = vcombine.high %v3432, %v3432
        %v3455 = vcombine.high %v3439, %v3439
        %v3456 = vcombine.high %v3446, %v3446
        %v3457 = vcombine.high %v3453, %v3453
        %v3459 = vunpack.c.l.s4 1966171168
        %v3460 = vunpack.c.0.s8 %v3459
        %v3461 = vlaneseq
        %v3462 = vshrl.u32 %v3461, 7
        %v3463 = vsub.s32 %v3460, %v3462
        %v3464 = vrot.slane %v2945, %v3463
        %v3466 = vunpack.c.l.s4 1966171168
        %v3467 = vunpack.c.0.s8 %v3466
        %v3468 = vlaneseq
        %v3469 = vshrl.u32 %v3468, 7
        %v3470 = vsub.s32 %v3467, %v3469
        %v3471 = vrot.slane %v3464, %v3470
        %v3472 = vcombine.high %v2947, %v2947
        %v3474 = vunpack.c.l.s4 1966171168
        %v3475 = vunpack.c.0.s8 %v3474
        %v3476 = vlaneseq
        %v3477 = vshrl.u32 %v3476, 7
        %v3478 = vsub.s32 %v3475, %v3477
        %v3479 = vrot.slane %v2947, %v3478
        %v3481 = vunpack.c.l.s4 1966171168
        %v3482 = vunpack.c.0.s8 %v3481
        %v3483 = vlaneseq
        %v3484 = vshrl.u32 %v3483, 7
        %v3485 = vsub.s32 %v3482, %v3484
        %v3486 = vrot.slane %v3472, %v3485
        %v3487 = vcombine.high %v3479, %v3479
        %v3488 = vcombine.high %v3486, %v3486
        %v3490 = vunpack.c.l.s4 1966171168
        %v3491 = vunpack.c.0.s8 %v3490
        %v3492 = vlaneseq
        %v3493 = vshrl.u32 %v3492, 7
        %v3494 = vsub.s32 %v3491, %v3493
        %v3495 = vrot.slane %v3479, %v3494
        %v3497 = vunpack.c.l.s4 1966171168
        %v3498 = vunpack.c.0.s8 %v3497
        %v3499 = vlaneseq
        %v3500 = vshrl.u32 %v3499, 7
        %v3501 = vsub.s32 %v3498, %v3500
        %v3502 = vrot.slane %v3486, %v3501
        %v3504 = vunpack.c.l.s4 1966171168
        %v3505 = vunpack.c.0.s8 %v3504
        %v3506 = vlaneseq
        %v3507 = vshrl.u32 %v3506, 7
        %v3508 = vsub.s32 %v3505, %v3507
        %v3509 = vrot.slane %v3487, %v3508
        %v3511 = vunpack.c.l.s4 1966171168
        %v3512 = vunpack.c.0.s8 %v3511
        %v3513 = vlaneseq
        %v3514 = vshrl.u32 %v3513, 7
        %v3515 = vsub.s32 %v3512, %v3514
        %v3516 = vrot.slane %v3488, %v3515
        %v3517 = vcombine.high %v3495, %v3495
        %v3518 = vcombine.high %v3502, %v3502
        %v3519 = vcombine.high %v3509, %v3509
        %v3520 = vcombine.high %v3516, %v3516
        %v3522 = vunpack.c.l.s4 1966171168
        %v3523 = vunpack.c.0.s8 %v3522
        %v3524 = vlaneseq
        %v3525 = vshrl.u32 %v3524, 7
        %v3526 = vsub.s32 %v3523, %v3525
        %v3527 = vrot.slane %v2949, %v3526
        %v3529 = vunpack.c.l.s4 1966171168
        %v3530 = vunpack.c.0.s8 %v3529
        %v3531 = vlaneseq
        %v3532 = vshrl.u32 %v3531, 7
        %v3533 = vsub.s32 %v3530, %v3532
        %v3534 = vrot.slane %v3527, %v3533
        %v3535 = vcombine.high %v2951, %v2951
        %v3537 = vunpack.c.l.s4 1966171168
        %v3538 = vunpack.c.0.s8 %v3537
        %v3539 = vlaneseq
        %v3540 = vshrl.u32 %v3539, 7
        %v3541 = vsub.s32 %v3538, %v3540
        %v3542 = vrot.slane %v2951, %v3541
        %v3544 = vunpack.c.l.s4 1966171168
        %v3545 = vunpack.c.0.s8 %v3544
        %v3546 = vlaneseq
        %v3547 = vshrl.u32 %v3546, 7
        %v3548 = vsub.s32 %v3545, %v3547
        %v3549 = vrot.slane %v3535, %v3548
        %v3550 = vcombine.high %v3542, %v3542
        %v3551 = vcombine.high %v3549, %v3549
        %v3553 = vunpack.c.l.s4 1966171168
        %v3554 = vunpack.c.0.s8 %v3553
        %v3555 = vlaneseq
        %v3556 = vshrl.u32 %v3555, 7
        %v3557 = vsub.s32 %v3554, %v3556
        %v3558 = vrot.slane %v3542, %v3557
        %v3560 = vunpack.c.l.s4 1966171168
        %v3561 = vunpack.c.0.s8 %v3560
        %v3562 = vlaneseq
        %v3563 = vshrl.u32 %v3562, 7
        %v3564 = vsub.s32 %v3561, %v3563
        %v3565 = vrot.slane %v3549, %v3564
        %v3567 = vunpack.c.l.s4 1966171168
        %v3568 = vunpack.c.0.s8 %v3567
        %v3569 = vlaneseq
        %v3570 = vshrl.u32 %v3569, 7
        %v3571 = vsub.s32 %v3568, %v3570
        %v3572 = vrot.slane %v3550, %v3571
        %v3574 = vunpack.c.l.s4 1966171168
        %v3575 = vunpack.c.0.s8 %v3574
        %v3576 = vlaneseq
        %v3577 = vshrl.u32 %v3576, 7
        %v3578 = vsub.s32 %v3575, %v3577
        %v3579 = vrot.slane %v3551, %v3578
        %v3580 = vcombine.high %v3558, %v3558
        %v3581 = vcombine.high %v3565, %v3565
        %v3582 = vcombine.high %v3572, %v3572
        %v3583 = vcombine.high %v3579, %v3579
        %v3585 = vunpack.c.l.s4 1966171168
        %v3586 = vunpack.c.0.s8 %v3585
        %v3587 = vlaneseq
        %v3588 = vshrl.u32 %v3587, 7
        %v3589 = vsub.s32 %v3586, %v3588
        %v3590 = vrot.slane %v2953, %v3589
        %v3592 = vunpack.c.l.s4 1966171168
        %v3593 = vunpack.c.0.s8 %v3592
        %v3594 = vlaneseq
        %v3595 = vshrl.u32 %v3594, 7
        %v3596 = vsub.s32 %v3593, %v3595
        %v3597 = vrot.slane %v3590, %v3596
        %v3598 = vcombine.high %v2955, %v2955
        %v3600 = vunpack.c.l.s4 1966171168
        %v3601 = vunpack.c.0.s8 %v3600
        %v3602 = vlaneseq
        %v3603 = vshrl.u32 %v3602, 7
        %v3604 = vsub.s32 %v3601, %v3603
        %v3605 = vrot.slane %v2955, %v3604
        %v3607 = vunpack.c.l.s4 1966171168
        %v3608 = vunpack.c.0.s8 %v3607
        %v3609 = vlaneseq
        %v3610 = vshrl.u32 %v3609, 7
        %v3611 = vsub.s32 %v3608, %v3610
        %v3612 = vrot.slane %v3598, %v3611
        %v3613 = vcombine.high %v3605, %v3605
        %v3614 = vcombine.high %v3612, %v3612
        %v3616 = vunpack.c.l.s4 1966171168
        %v3617 = vunpack.c.0.s8 %v3616
        %v3618 = vlaneseq
        %v3619 = vshrl.u32 %v3618, 7
        %v3620 = vsub.s32 %v3617, %v3619
        %v3621 = vrot.slane %v3605, %v3620
        %v3623 = vunpack.c.l.s4 1966171168
        %v3624 = vunpack.c.0.s8 %v3623
        %v3625 = vlaneseq
        %v3626 = vshrl.u32 %v3625, 7
        %v3627 = vsub.s32 %v3624, %v3626
        %v3628 = vrot.slane %v3612, %v3627
        %v3630 = vunpack.c.l.s4 1966171168
        %v3631 = vunpack.c.0.s8 %v3630
        %v3632 = vlaneseq
        %v3633 = vshrl.u32 %v3632, 7
        %v3634 = vsub.s32 %v3631, %v3633
        %v3635 = vrot.slane %v3613, %v3634
        %v3637 = vunpack.c.l.s4 1966171168
        %v3638 = vunpack.c.0.s8 %v3637
        %v3639 = vlaneseq
        %v3640 = vshrl.u32 %v3639, 7
        %v3641 = vsub.s32 %v3638, %v3640
        %v3642 = vrot.slane %v3614, %v3641
        %v3643 = vcombine.high %v3621, %v3621
        %v3644 = vcombine.high %v3628, %v3628
        %v3645 = vcombine.high %v3635, %v3635
        %v3646 = vcombine.high %v3642, %v3642
        %v3648 = vunpack.c.l.s4 1966171168
        %v3649 = vunpack.c.0.s8 %v3648
        %v3650 = vlaneseq
        %v3651 = vshrl.u32 %v3650, 7
        %v3652 = vsub.s32 %v3649, %v3651
        %v3653 = vrot.slane %v2957, %v3652
        %v3655 = vunpack.c.l.s4 1966171168
        %v3656 = vunpack.c.0.s8 %v3655
        %v3657 = vlaneseq
        %v3658 = vshrl.u32 %v3657, 7
        %v3659 = vsub.s32 %v3656, %v3658
        %v3660 = vrot.slane %v3653, %v3659
        %v3661 = vcombine.high %v2959, %v2959
        %v3663 = vunpack.c.l.s4 1966171168
        %v3664 = vunpack.c.0.s8 %v3663
        %v3665 = vlaneseq
        %v3666 = vshrl.u32 %v3665, 7
        %v3667 = vsub.s32 %v3664, %v3666
        %v3668 = vrot.slane %v2959, %v3667
        %v3670 = vunpack.c.l.s4 1966171168
        %v3671 = vunpack.c.0.s8 %v3670
        %v3672 = vlaneseq
        %v3673 = vshrl.u32 %v3672, 7
        %v3674 = vsub.s32 %v3671, %v3673
        %v3675 = vrot.slane %v3661, %v3674
        %v3676 = vcombine.high %v3668, %v3668
        %v3677 = vcombine.high %v3675, %v3675
        %v3679 = vunpack.c.l.s4 1966171168
        %v3680 = vunpack.c.0.s8 %v3679
        %v3681 = vlaneseq
        %v3682 = vshrl.u32 %v3681, 7
        %v3683 = vsub.s32 %v3680, %v3682
        %v3684 = vrot.slane %v3668, %v3683
        %v3686 = vunpack.c.l.s4 1966171168
        %v3687 = vunpack.c.0.s8 %v3686
        %v3688 = vlaneseq
        %v3689 = vshrl.u32 %v3688, 7
        %v3690 = vsub.s32 %v3687, %v3689
        %v3691 = vrot.slane %v3675, %v3690
        %v3693 = vunpack.c.l.s4 1966171168
        %v3694 = vunpack.c.0.s8 %v3693
        %v3695 = vlaneseq
        %v3696 = vshrl.u32 %v3695, 7
        %v3697 = vsub.s32 %v3694, %v3696
        %v3698 = vrot.slane %v3676, %v3697
        %v3700 = vunpack.c.l.s4 1966171168
        %v3701 = vunpack.c.0.s8 %v3700
        %v3702 = vlaneseq
        %v3703 = vshrl.u32 %v3702, 7
        %v3704 = vsub.s32 %v3701, %v3703
        %v3705 = vrot.slane %v3677, %v3704
        %v3706 = vcombine.high %v3684, %v3684
        %v3707 = vcombine.high %v3691, %v3691
        %v3708 = vcombine.high %v3698, %v3698
        %v3709 = vcombine.high %v3705, %v3705
        %v3711 = vunpack.c.l.s4 1966171168
        %v3712 = vunpack.c.0.s8 %v3711
        %v3713 = vlaneseq
        %v3714 = vshrl.u32 %v3713, 7
        %v3715 = vsub.s32 %v3712, %v3714
        %v3716 = vrot.slane %v2961, %v3715
        %v3718 = vunpack.c.l.s4 1966171168
        %v3719 = vunpack.c.0.s8 %v3718
        %v3720 = vlaneseq
        %v3721 = vshrl.u32 %v3720, 7
        %v3722 = vsub.s32 %v3719, %v3721
        %v3723 = vrot.slane %v3716, %v3722
        %v3724 = vcombine.high %v2963, %v2963
        %v3726 = vunpack.c.l.s4 1966171168
        %v3727 = vunpack.c.0.s8 %v3726
        %v3728 = vlaneseq
        %v3729 = vshrl.u32 %v3728, 7
        %v3730 = vsub.s32 %v3727, %v3729
        %v3731 = vrot.slane %v2963, %v3730
        %v3733 = vunpack.c.l.s4 1966171168
        %v3734 = vunpack.c.0.s8 %v3733
        %v3735 = vlaneseq
        %v3736 = vshrl.u32 %v3735, 7
        %v3737 = vsub.s32 %v3734, %v3736
        %v3738 = vrot.slane %v3724, %v3737
        %v3739 = vcombine.high %v3731, %v3731
        %v3740 = vcombine.high %v3738, %v3738
        %v3742 = vunpack.c.l.s4 1966171168
        %v3743 = vunpack.c.0.s8 %v3742
        %v3744 = vlaneseq
        %v3745 = vshrl.u32 %v3744, 7
        %v3746 = vsub.s32 %v3743, %v3745
        %v3747 = vrot.slane %v3731, %v3746
        %v3749 = vunpack.c.l.s4 1966171168
        %v3750 = vunpack.c.0.s8 %v3749
        %v3751 = vlaneseq
        %v3752 = vshrl.u32 %v3751, 7
        %v3753 = vsub.s32 %v3750, %v3752
        %v3754 = vrot.slane %v3738, %v3753
        %v3756 = vunpack.c.l.s4 1966171168
        %v3757 = vunpack.c.0.s8 %v3756
        %v3758 = vlaneseq
        %v3759 = vshrl.u32 %v3758, 7
        %v3760 = vsub.s32 %v3757, %v3759
        %v3761 = vrot.slane %v3739, %v3760
        %v3763 = vunpack.c.l.s4 1966171168
        %v3764 = vunpack.c.0.s8 %v3763
        %v3765 = vlaneseq
        %v3766 = vshrl.u32 %v3765, 7
        %v3767 = vsub.s32 %v3764, %v3766
        %v3768 = vrot.slane %v3740, %v3767
        %v3769 = vcombine.high %v3747, %v3747
        %v3770 = vcombine.high %v3754, %v3754
        %v3771 = vcombine.high %v3761, %v3761
        %v3772 = vcombine.high %v3768, %v3768
        %v3774 = vunpack.c.l.s4 1966171168
        %v3775 = vunpack.c.0.s8 %v3774
        %v3776 = vlaneseq
        %v3777 = vshrl.u32 %v3776, 7
        %v3778 = vsub.s32 %v3775, %v3777
        %v3779 = vrot.slane %v2965, %v3778
        %v3781 = vunpack.c.l.s4 1966171168
        %v3782 = vunpack.c.0.s8 %v3781
        %v3783 = vlaneseq
        %v3784 = vshrl.u32 %v3783, 7
        %v3785 = vsub.s32 %v3782, %v3784
        %v3786 = vrot.slane %v3779, %v3785
        %v3787 = vcombine.high %v2967, %v2967
        %v3789 = vunpack.c.l.s4 1966171168
        %v3790 = vunpack.c.0.s8 %v3789
        %v3791 = vlaneseq
        %v3792 = vshrl.u32 %v3791, 7
        %v3793 = vsub.s32 %v3790, %v3792
        %v3794 = vrot.slane %v2967, %v3793
        %v3796 = vunpack.c.l.s4 1966171168
        %v3797 = vunpack.c.0.s8 %v3796
        %v3798 = vlaneseq
        %v3799 = vshrl.u32 %v3798, 7
        %v3800 = vsub.s32 %v3797, %v3799
        %v3801 = vrot.slane %v3787, %v3800
        %v3802 = vcombine.high %v3794, %v3794
        %v3803 = vcombine.high %v3801, %v3801
        %v3805 = vunpack.c.l.s4 1966171168
        %v3806 = vunpack.c.0.s8 %v3805
        %v3807 = vlaneseq
        %v3808 = vshrl.u32 %v3807, 7
        %v3809 = vsub.s32 %v3806, %v3808
        %v3810 = vrot.slane %v3794, %v3809
        %v3812 = vunpack.c.l.s4 1966171168
        %v3813 = vunpack.c.0.s8 %v3812
        %v3814 = vlaneseq
        %v3815 = vshrl.u32 %v3814, 7
        %v3816 = vsub.s32 %v3813, %v3815
        %v3817 = vrot.slane %v3801, %v3816
        %v3819 = vunpack.c.l.s4 1966171168
        %v3820 = vunpack.c.0.s8 %v3819
        %v3821 = vlaneseq
        %v3822 = vshrl.u32 %v3821, 7
        %v3823 = vsub.s32 %v3820, %v3822
        %v3824 = vrot.slane %v3802, %v3823
        %v3826 = vunpack.c.l.s4 1966171168
        %v3827 = vunpack.c.0.s8 %v3826
        %v3828 = vlaneseq
        %v3829 = vshrl.u32 %v3828, 7
        %v3830 = vsub.s32 %v3827, %v3829
        %v3831 = vrot.slane %v3803, %v3830
        %v3832 = vcombine.high %v3810, %v3810
        %v3833 = vcombine.high %v3817, %v3817
        %v3834 = vcombine.high %v3824, %v3824
        %v3835 = vcombine.high %v3831, %v3831
        %v3837 = vunpack.c.l.s4 1966171168
        %v3838 = vunpack.c.0.s8 %v3837
        %v3839 = vlaneseq
        %v3840 = vshrl.u32 %v3839, 7
        %v3841 = vsub.s32 %v3838, %v3840
        %v3842 = vrot.slane %v2969, %v3841
        %v3844 = vunpack.c.l.s4 1966171168
        %v3845 = vunpack.c.0.s8 %v3844
        %v3846 = vlaneseq
        %v3847 = vshrl.u32 %v3846, 7
        %v3848 = vsub.s32 %v3845, %v3847
        %v3849 = vrot.slane %v3842, %v3848
        %v3850 = vcombine.high %v2971, %v2971
        %v3852 = vunpack.c.l.s4 1966171168
        %v3853 = vunpack.c.0.s8 %v3852
        %v3854 = vlaneseq
        %v3855 = vshrl.u32 %v3854, 7
        %v3856 = vsub.s32 %v3853, %v3855
        %v3857 = vrot.slane %v2971, %v3856
        %v3859 = vunpack.c.l.s4 1966171168
        %v3860 = vunpack.c.0.s8 %v3859
        %v3861 = vlaneseq
        %v3862 = vshrl.u32 %v3861, 7
        %v3863 = vsub.s32 %v3860, %v3862
        %v3864 = vrot.slane %v3850, %v3863
        %v3865 = vcombine.high %v3857, %v3857
        %v3866 = vcombine.high %v3864, %v3864
        %v3868 = vunpack.c.l.s4 1966171168
        %v3869 = vunpack.c.0.s8 %v3868
        %v3870 = vlaneseq
        %v3871 = vshrl.u32 %v3870, 7
        %v3872 = vsub.s32 %v3869, %v3871
        %v3873 = vrot.slane %v3857, %v3872
        %v3875 = vunpack.c.l.s4 1966171168
        %v3876 = vunpack.c.0.s8 %v3875
        %v3877 = vlaneseq
        %v3878 = vshrl.u32 %v3877, 7
        %v3879 = vsub.s32 %v3876, %v3878
        %v3880 = vrot.slane %v3864, %v3879
        %v3882 = vunpack.c.l.s4 1966171168
        %v3883 = vunpack.c.0.s8 %v3882
        %v3884 = vlaneseq
        %v3885 = vshrl.u32 %v3884, 7
        %v3886 = vsub.s32 %v3883, %v3885
        %v3887 = vrot.slane %v3865, %v3886
        %v3889 = vunpack.c.l.s4 1966171168
        %v3890 = vunpack.c.0.s8 %v3889
        %v3891 = vlaneseq
        %v3892 = vshrl.u32 %v3891, 7
        %v3893 = vsub.s32 %v3890, %v3892
        %v3894 = vrot.slane %v3866, %v3893
        %v3895 = vcombine.high %v3873, %v3873
        %v3896 = vcombine.high %v3880, %v3880
        %v3897 = vcombine.high %v3887, %v3887
        %v3898 = vcombine.high %v3894, %v3894
        %v3900 = vunpack.c.l.s4 1966171168
        %v3901 = vunpack.c.0.s8 %v3900
        %v3902 = vlaneseq
        %v3903 = vshrl.u32 %v3902, 7
        %v3904 = vsub.s32 %v3901, %v3903
        %v3905 = vrot.slane %v2973, %v3904
        %v3907 = vunpack.c.l.s4 1966171168
        %v3908 = vunpack.c.0.s8 %v3907
        %v3909 = vlaneseq
        %v3910 = vshrl.u32 %v3909, 7
        %v3911 = vsub.s32 %v3908, %v3910
        %v3912 = vrot.slane %v3905, %v3911
        %v3913 = vcombine.high %v2975, %v2975
        %v3915 = vunpack.c.l.s4 1966171168
        %v3916 = vunpack.c.0.s8 %v3915
        %v3917 = vlaneseq
        %v3918 = vshrl.u32 %v3917, 7
        %v3919 = vsub.s32 %v3916, %v3918
        %v3920 = vrot.slane %v2975, %v3919
        %v3922 = vunpack.c.l.s4 1966171168
        %v3923 = vunpack.c.0.s8 %v3922
        %v3924 = vlaneseq
        %v3925 = vshrl.u32 %v3924, 7
        %v3926 = vsub.s32 %v3923, %v3925
        %v3927 = vrot.slane %v3913, %v3926
        %v3928 = vcombine.high %v3920, %v3920
        %v3929 = vcombine.high %v3927, %v3927
        %v3931 = vunpack.c.l.s4 1966171168
        %v3932 = vunpack.c.0.s8 %v3931
        %v3933 = vlaneseq
        %v3934 = vshrl.u32 %v3933, 7
        %v3935 = vsub.s32 %v3932, %v3934
        %v3936 = vrot.slane %v3920, %v3935
        %v3938 = vunpack.c.l.s4 1966171168
        %v3939 = vunpack.c.0.s8 %v3938
        %v3940 = vlaneseq
        %v3941 = vshrl.u32 %v3940, 7
        %v3942 = vsub.s32 %v3939, %v3941
        %v3943 = vrot.slane %v3927, %v3942
        %v3945 = vunpack.c.l.s4 1966171168
        %v3946 = vunpack.c.0.s8 %v3945
        %v3947 = vlaneseq
        %v3948 = vshrl.u32 %v3947, 7
        %v3949 = vsub.s32 %v3946, %v3948
        %v3950 = vrot.slane %v3928, %v3949
        %v3952 = vunpack.c.l.s4 1966171168
        %v3953 = vunpack.c.0.s8 %v3952
        %v3954 = vlaneseq
        %v3955 = vshrl.u32 %v3954, 7
        %v3956 = vsub.s32 %v3953, %v3955
        %v3957 = vrot.slane %v3929, %v3956
        %v3958 = vcombine.high %v3936, %v3936
        %v3959 = vcombine.high %v3943, %v3943
        %v3960 = vcombine.high %v3950, %v3950
        %v3961 = vcombine.high %v3957, %v3957
        %v3963 = vunpack.c.l.s4 1966171168
        %v3964 = vunpack.c.0.s8 %v3963
        %v3965 = vlaneseq
        %v3966 = vshrl.u32 %v3965, 7
        %v3967 = vsub.s32 %v3964, %v3966
        %v3968 = vrot.slane %v2977, %v3967
        %v3970 = vunpack.c.l.s4 1966171168
        %v3971 = vunpack.c.0.s8 %v3970
        %v3972 = vlaneseq
        %v3973 = vshrl.u32 %v3972, 7
        %v3974 = vsub.s32 %v3971, %v3973
        %v3975 = vrot.slane %v3968, %v3974
        %v3976 = vcombine.high %v2979, %v2979
        %v3978 = vunpack.c.l.s4 1966171168
        %v3979 = vunpack.c.0.s8 %v3978
        %v3980 = vlaneseq
        %v3981 = vshrl.u32 %v3980, 7
        %v3982 = vsub.s32 %v3979, %v3981
        %v3983 = vrot.slane %v2979, %v3982
        %v3985 = vunpack.c.l.s4 1966171168
        %v3986 = vunpack.c.0.s8 %v3985
        %v3987 = vlaneseq
        %v3988 = vshrl.u32 %v3987, 7
        %v3989 = vsub.s32 %v3986, %v3988
        %v3990 = vrot.slane %v3976, %v3989
        %v3991 = vcombine.high %v3983, %v3983
        %v3992 = vcombine.high %v3990, %v3990
        %v3994 = vunpack.c.l.s4 1966171168
        %v3995 = vunpack.c.0.s8 %v3994
        %v3996 = vlaneseq
        %v3997 = vshrl.u32 %v3996, 7
        %v3998 = vsub.s32 %v3995, %v3997
        %v3999 = vrot.slane %v3983, %v3998
        %v4001 = vunpack.c.l.s4 1966171168
        %v4002 = vunpack.c.0.s8 %v4001
        %v4003 = vlaneseq
        %v4004 = vshrl.u32 %v4003, 7
        %v4005 = vsub.s32 %v4002, %v4004
        %v4006 = vrot.slane %v3990, %v4005
        %v4008 = vunpack.c.l.s4 1966171168
        %v4009 = vunpack.c.0.s8 %v4008
        %v4010 = vlaneseq
        %v4011 = vshrl.u32 %v4010, 7
        %v4012 = vsub.s32 %v4009, %v4011
        %v4013 = vrot.slane %v3991, %v4012
        %v4015 = vunpack.c.l.s4 1966171168
        %v4016 = vunpack.c.0.s8 %v4015
        %v4017 = vlaneseq
        %v4018 = vshrl.u32 %v4017, 7
        %v4019 = vsub.s32 %v4016, %v4018
        %v4020 = vrot.slane %v3992, %v4019
        %v4021 = vcombine.high %v3999, %v3999
        %v4022 = vcombine.high %v4006, %v4006
        %v4023 = vcombine.high %v4013, %v4013
        %v4024 = vcombine.high %v4020, %v4020
        %v4026 = vunpack.c.l.s4 1966171168
        %v4027 = vunpack.c.0.s8 %v4026
        %v4028 = vlaneseq
        %v4029 = vshrl.u32 %v4028, 7
        %v4030 = vsub.s32 %v4027, %v4029
        %v4031 = vrot.slane %v2981, %v4030
        %v4033 = vunpack.c.l.s4 1966171168
        %v4034 = vunpack.c.0.s8 %v4033
        %v4035 = vlaneseq
        %v4036 = vshrl.u32 %v4035, 7
        %v4037 = vsub.s32 %v4034, %v4036
        %v4038 = vrot.slane %v4031, %v4037
        %v4039 = vcombine.high %v2983, %v2983
        %v4041 = vunpack.c.l.s4 1966171168
        %v4042 = vunpack.c.0.s8 %v4041
        %v4043 = vlaneseq
        %v4044 = vshrl.u32 %v4043, 7
        %v4045 = vsub.s32 %v4042, %v4044
        %v4046 = vrot.slane %v2983, %v4045
        %v4048 = vunpack.c.l.s4 1966171168
        %v4049 = vunpack.c.0.s8 %v4048
        %v4050 = vlaneseq
        %v4051 = vshrl.u32 %v4050, 7
        %v4052 = vsub.s32 %v4049, %v4051
        %v4053 = vrot.slane %v4039, %v4052
        %v4054 = vcombine.high %v4046, %v4046
        %v4055 = vcombine.high %v4053, %v4053
        %v4057 = vunpack.c.l.s4 1966171168
        %v4058 = vunpack.c.0.s8 %v4057
        %v4059 = vlaneseq
        %v4060 = vshrl.u32 %v4059, 7
        %v4061 = vsub.s32 %v4058, %v4060
        %v4062 = vrot.slane %v4046, %v4061
        %v4064 = vunpack.c.l.s4 1966171168
        %v4065 = vunpack.c.0.s8 %v4064
        %v4066 = vlaneseq
        %v4067 = vshrl.u32 %v4066, 7
        %v4068 = vsub.s32 %v4065, %v4067
        %v4069 = vrot.slane %v4053, %v4068
        %v4071 = vunpack.c.l.s4 1966171168
        %v4072 = vunpack.c.0.s8 %v4071
        %v4073 = vlaneseq
        %v4074 = vshrl.u32 %v4073, 7
        %v4075 = vsub.s32 %v4072, %v4074
        %v4076 = vrot.slane %v4054, %v4075
        %v4078 = vunpack.c.l.s4 1966171168
        %v4079 = vunpack.c.0.s8 %v4078
        %v4080 = vlaneseq
        %v4081 = vshrl.u32 %v4080, 7
        %v4082 = vsub.s32 %v4079, %v4081
        %v4083 = vrot.slane %v4055, %v4082
        %v4084 = vcombine.high %v4062, %v4062
        %v4085 = vcombine.high %v4069, %v4069
        %v4086 = vcombine.high %v4076, %v4076
        %v4087 = vcombine.high %v4083, %v4083
        %v4089 = vunpack.c.l.s4 1966171168
        %v4090 = vunpack.c.0.s8 %v4089
        %v4091 = vlaneseq
        %v4092 = vshrl.u32 %v4091, 7
        %v4093 = vsub.s32 %v4090, %v4092
        %v4094 = vrot.slane %v2985, %v4093
        %v4096 = vunpack.c.l.s4 1966171168
        %v4097 = vunpack.c.0.s8 %v4096
        %v4098 = vlaneseq
        %v4099 = vshrl.u32 %v4098, 7
        %v4100 = vsub.s32 %v4097, %v4099
        %v4101 = vrot.slane %v4094, %v4100
        %v4102 = vcombine.high %v2987, %v2987
        %v4104 = vunpack.c.l.s4 1966171168
        %v4105 = vunpack.c.0.s8 %v4104
        %v4106 = vlaneseq
        %v4107 = vshrl.u32 %v4106, 7
        %v4108 = vsub.s32 %v4105, %v4107
        %v4109 = vrot.slane %v2987, %v4108
        %v4111 = vunpack.c.l.s4 1966171168
        %v4112 = vunpack.c.0.s8 %v4111
        %v4113 = vlaneseq
        %v4114 = vshrl.u32 %v4113, 7
        %v4115 = vsub.s32 %v4112, %v4114
        %v4116 = vrot.slane %v4102, %v4115
        %v4117 = vcombine.high %v4109, %v4109
        %v4118 = vcombine.high %v4116, %v4116
        %v4120 = vunpack.c.l.s4 1966171168
        %v4121 = vunpack.c.0.s8 %v4120
        %v4122 = vlaneseq
        %v4123 = vshrl.u32 %v4122, 7
        %v4124 = vsub.s32 %v4121, %v4123
        %v4125 = vrot.slane %v4109, %v4124
        %v4127 = vunpack.c.l.s4 1966171168
        %v4128 = vunpack.c.0.s8 %v4127
        %v4129 = vlaneseq
        %v4130 = vshrl.u32 %v4129, 7
        %v4131 = vsub.s32 %v4128, %v4130
        %v4132 = vrot.slane %v4116, %v4131
        %v4134 = vunpack.c.l.s4 1966171168
        %v4135 = vunpack.c.0.s8 %v4134
        %v4136 = vlaneseq
        %v4137 = vshrl.u32 %v4136, 7
        %v4138 = vsub.s32 %v4135, %v4137
        %v4139 = vrot.slane %v4117, %v4138
        %v4141 = vunpack.c.l.s4 1966171168
        %v4142 = vunpack.c.0.s8 %v4141
        %v4143 = vlaneseq
        %v4144 = vshrl.u32 %v4143, 7
        %v4145 = vsub.s32 %v4142, %v4144
        %v4146 = vrot.slane %v4118, %v4145
        %v4147 = vcombine.high %v4125, %v4125
        %v4148 = vcombine.high %v4132, %v4132
        %v4149 = vcombine.high %v4139, %v4139
        %v4150 = vcombine.high %v4146, %v4146
        %v4152 = vunpack.c.l.s4 1966171168
        %v4153 = vunpack.c.0.s8 %v4152
        %v4154 = vlaneseq
        %v4155 = vshrl.u32 %v4154, 7
        %v4156 = vsub.s32 %v4153, %v4155
        %v4157 = vrot.slane %v2989, %v4156
        %v4159 = vunpack.c.l.s4 1966171168
        %v4160 = vunpack.c.0.s8 %v4159
        %v4161 = vlaneseq
        %v4162 = vshrl.u32 %v4161, 7
        %v4163 = vsub.s32 %v4160, %v4162
        %v4164 = vrot.slane %v4157, %v4163
        %v4165 = vcombine.low %v3054, %v3068
        %v4166 = vcombine.low %v3076, %v3078
        %v4167 = vcombine.low %v3061, %v3075
        %v4168 = vcombine.low %v3077, %v3079
        %v4170 = vunpack.c.l.s4 1966171168
        %v4171 = vunpack.c.0.s8 %v4170
        %v4172 = vlaneseq
        %v4173 = vshrl.u32 %v4172, 7
        %v4174 = vsub.s32 %v4171, %v4173
        %v4175 = vrot.slane %v4165, %v4174
        %v4177 = vunpack.c.l.s4 1966171168
        %v4178 = vunpack.c.0.s8 %v4177
        %v4179 = vlaneseq
        %v4180 = vshrl.u32 %v4179, 7
        %v4181 = vsub.s32 %v4178, %v4180
        %v4182 = vrot.slane %v4166, %v4181
        %v4184 = vunpack.c.l.s4 1966171168
        %v4185 = vunpack.c.0.s8 %v4184
        %v4186 = vlaneseq
        %v4187 = vshrl.u32 %v4186, 7
        %v4188 = vsub.s32 %v4185, %v4187
        %v4189 = vrot.slane %v4167, %v4188
        %v4191 = vunpack.c.l.s4 1966171168
        %v4192 = vunpack.c.0.s8 %v4191
        %v4193 = vlaneseq
        %v4194 = vshrl.u32 %v4193, 7
        %v4195 = vsub.s32 %v4192, %v4194
        %v4196 = vrot.slane %v4168, %v4195
        %v4197 = vcombine.low %v4175, %v4182
        %v4198 = vcombine.low %v4189, %v4196
        %v4200 = vunpack.c.l.s4 1966171168
        %v4201 = vunpack.c.0.s8 %v4200
        %v4202 = vlaneseq
        %v4203 = vshrl.u32 %v4202, 7
        %v4204 = vsub.s32 %v4201, %v4203
        %v4205 = vrot.slane %v4197, %v4204
        %v4207 = vunpack.c.l.s4 1966171168
        %v4208 = vunpack.c.0.s8 %v4207
        %v4209 = vlaneseq
        %v4210 = vshrl.u32 %v4209, 7
        %v4211 = vsub.s32 %v4208, %v4210
        %v4212 = vrot.slane %v4198, %v4211
        %v4213 = vcombine.low %v4205, %v4212
        %v4214 = vcombine.low %v3093, %v3117
        %v4215 = vcombine.low %v3131, %v3139
        %v4216 = vcombine.low %v3141, %v3124
        %v4217 = vcombine.low %v3138, %v3140
        %v4219 = vunpack.c.l.s4 1966171168
        %v4220 = vunpack.c.0.s8 %v4219
        %v4221 = vlaneseq
        %v4222 = vshrl.u32 %v4221, 7
        %v4223 = vsub.s32 %v4220, %v4222
        %v4224 = vrot.slane %v4214, %v4223
        %v4226 = vunpack.c.l.s4 1966171168
        %v4227 = vunpack.c.0.s8 %v4226
        %v4228 = vlaneseq
        %v4229 = vshrl.u32 %v4228, 7
        %v4230 = vsub.s32 %v4227, %v4229
        %v4231 = vrot.slane %v4215, %v4230
        %v4233 = vunpack.c.l.s4 1966171168
        %v4234 = vunpack.c.0.s8 %v4233
        %v4235 = vlaneseq
        %v4236 = vshrl.u32 %v4235, 7
        %v4237 = vsub.s32 %v4234, %v4236
        %v4238 = vrot.slane %v4216, %v4237
        %v4240 = vunpack.c.l.s4 1966171168
        %v4241 = vunpack.c.0.s8 %v4240
        %v4242 = vlaneseq
        %v4243 = vshrl.u32 %v4242, 7
        %v4244 = vsub.s32 %v4241, %v4243
        %v4245 = vrot.slane %v4217, %v4244
        %v4246 = vcombine.low %v4224, %v4231
        %v4247 = vcombine.low %v4238, %v4245
        %v4249 = vunpack.c.l.s4 1966171168
        %v4250 = vunpack.c.0.s8 %v4249
        %v4251 = vlaneseq
        %v4252 = vshrl.u32 %v4251, 7
        %v4253 = vsub.s32 %v4250, %v4252
        %v4254 = vrot.slane %v4246, %v4253
        %v4256 = vunpack.c.l.s4 1966171168
        %v4257 = vunpack.c.0.s8 %v4256
        %v4258 = vlaneseq
        %v4259 = vshrl.u32 %v4258, 7
        %v4260 = vsub.s32 %v4257, %v4259
        %v4261 = vrot.slane %v4247, %v4260
        %v4262 = vcombine.low %v4254, %v4261
        %v4263 = vcombine.low %v3142, %v3156
        %v4264 = vcombine.low %v3180, %v3194
        %v4265 = vcombine.low %v3202, %v3204
        %v4266 = vcombine.low %v3187, %v3201
        %v4268 = vunpack.c.l.s4 1966171168
        %v4269 = vunpack.c.0.s8 %v4268
        %v4270 = vlaneseq
        %v4271 = vshrl.u32 %v4270, 7
        %v4272 = vsub.s32 %v4269, %v4271
        %v4273 = vrot.slane %v4263, %v4272
        %v4275 = vunpack.c.l.s4 1966171168
        %v4276 = vunpack.c.0.s8 %v4275
        %v4277 = vlaneseq
        %v4278 = vshrl.u32 %v4277, 7
        %v4279 = vsub.s32 %v4276, %v4278
        %v4280 = vrot.slane %v4264, %v4279
        %v4282 = vunpack.c.l.s4 1966171168
        %v4283 = vunpack.c.0.s8 %v4282
        %v4284 = vlaneseq
        %v4285 = vshrl.u32 %v4284, 7
        %v4286 = vsub.s32 %v4283, %v4285
        %v4287 = vrot.slane %v4265, %v4286
        %v4289 = vunpack.c.l.s4 1966171168
        %v4290 = vunpack.c.0.s8 %v4289
        %v4291 = vlaneseq
        %v4292 = vshrl.u32 %v4291, 7
        %v4293 = vsub.s32 %v4290, %v4292
        %v4294 = vrot.slane %v4266, %v4293
        %v4295 = vcombine.low %v4273, %v4280
        %v4296 = vcombine.low %v4287, %v4294
        %v4298 = vunpack.c.l.s4 1966171168
        %v4299 = vunpack.c.0.s8 %v4298
        %v4300 = vlaneseq
        %v4301 = vshrl.u32 %v4300, 7
        %v4302 = vsub.s32 %v4299, %v4301
        %v4303 = vrot.slane %v4295, %v4302
        %v4305 = vunpack.c.l.s4 1966171168
        %v4306 = vunpack.c.0.s8 %v4305
        %v4307 = vlaneseq
        %v4308 = vshrl.u32 %v4307, 7
        %v4309 = vsub.s32 %v4306, %v4308
        %v4310 = vrot.slane %v4296, %v4309
        %v4311 = vcombine.low %v4303, %v4310
        %v4312 = vcombine.low %v3203, %v3205
        %v4313 = vcombine.low %v3219, %v3243
        %v4314 = vcombine.low %v3257, %v3265
        %v4315 = vcombine.low %v3267, %v3250
        %v4317 = vunpack.c.l.s4 1966171168
        %v4318 = vunpack.c.0.s8 %v4317
        %v4319 = vlaneseq
        %v4320 = vshrl.u32 %v4319, 7
        %v4321 = vsub.s32 %v4318, %v4320
        %v4322 = vrot.slane %v4312, %v4321
        %v4324 = vunpack.c.l.s4 1966171168
        %v4325 = vunpack.c.0.s8 %v4324
        %v4326 = vlaneseq
        %v4327 = vshrl.u32 %v4326, 7
        %v4328 = vsub.s32 %v4325, %v4327
        %v4329 = vrot.slane %v4313, %v4328
        %v4331 = vunpack.c.l.s4 1966171168
        %v4332 = vunpack.c.0.s8 %v4331
        %v4333 = vlaneseq
        %v4334 = vshrl.u32 %v4333, 7
        %v4335 = vsub.s32 %v4332, %v4334
        %v4336 = vrot.slane %v4314, %v4335
        %v4338 = vunpack.c.l.s4 1966171168
        %v4339 = vunpack.c.0.s8 %v4338
        %v4340 = vlaneseq
        %v4341 = vshrl.u32 %v4340, 7
        %v4342 = vsub.s32 %v4339, %v4341
        %v4343 = vrot.slane %v4315, %v4342
        %v4344 = vcombine.low %v4322, %v4329
        %v4345 = vcombine.low %v4336, %v4343
        %v4347 = vunpack.c.l.s4 1966171168
        %v4348 = vunpack.c.0.s8 %v4347
        %v4349 = vlaneseq
        %v4350 = vshrl.u32 %v4349, 7
        %v4351 = vsub.s32 %v4348, %v4350
        %v4352 = vrot.slane %v4344, %v4351
        %v4354 = vunpack.c.l.s4 1966171168
        %v4355 = vunpack.c.0.s8 %v4354
        %v4356 = vlaneseq
        %v4357 = vshrl.u32 %v4356, 7
        %v4358 = vsub.s32 %v4355, %v4357
        %v4359 = vrot.slane %v4345, %v4358
        %v4360 = vcombine.low %v4352, %v4359
        %v4361 = vcombine.low %v3264, %v3266
        %v4362 = vcombine.low %v3268, %v3282
        %v4363 = vcombine.low %v3306, %v3320
        %v4364 = vcombine.low %v3328, %v3330
        %v4366 = vunpack.c.l.s4 1966171168
        %v4367 = vunpack.c.0.s8 %v4366
        %v4368 = vlaneseq
        %v4369 = vshrl.u32 %v4368, 7
        %v4370 = vsub.s32 %v4367, %v4369
        %v4371 = vrot.slane %v4361, %v4370
        %v4373 = vunpack.c.l.s4 1966171168
        %v4374 = vunpack.c.0.s8 %v4373
        %v4375 = vlaneseq
        %v4376 = vshrl.u32 %v4375, 7
        %v4377 = vsub.s32 %v4374, %v4376
        %v4378 = vrot.slane %v4362, %v4377
        %v4380 = vunpack.c.l.s4 1966171168
        %v4381 = vunpack.c.0.s8 %v4380
        %v4382 = vlaneseq
        %v4383 = vshrl.u32 %v4382, 7
        %v4384 = vsub.s32 %v4381, %v4383
        %v4385 = vrot.slane %v4363, %v4384
        %v4387 = vunpack.c.l.s4 1966171168
        %v4388 = vunpack.c.0.s8 %v4387
        %v4389 = vlaneseq
        %v4390 = vshrl.u32 %v4389, 7
        %v4391 = vsub.s32 %v4388, %v4390
        %v4392 = vrot.slane %v4364, %v4391
        %v4393 = vcombine.low %v4371, %v4378
        %v4394 = vcombine.low %v4385, %v4392
        %v4396 = vunpack.c.l.s4 1966171168
        %v4397 = vunpack.c.0.s8 %v4396
        %v4398 = vlaneseq
        %v4399 = vshrl.u32 %v4398, 7
        %v4400 = vsub.s32 %v4397, %v4399
        %v4401 = vrot.slane %v4393, %v4400
        %v4403 = vunpack.c.l.s4 1966171168
        %v4404 = vunpack.c.0.s8 %v4403
        %v4405 = vlaneseq
        %v4406 = vshrl.u32 %v4405, 7
        %v4407 = vsub.s32 %v4404, %v4406
        %v4408 = vrot.slane %v4394, %v4407
        %v4409 = vcombine.low %v4401, %v4408
        %v4410 = vcombine.low %v3313, %v3327
        %v4411 = vcombine.low %v3329, %v3331
        %v4412 = vcombine.low %v3345, %v3369
        %v4413 = vcombine.low %v3383, %v3391
        %v4415 = vunpack.c.l.s4 1966171168
        %v4416 = vunpack.c.0.s8 %v4415
        %v4417 = vlaneseq
        %v4418 = vshrl.u32 %v4417, 7
        %v4419 = vsub.s32 %v4416, %v4418
        %v4420 = vrot.slane %v4410, %v4419
        %v4422 = vunpack.c.l.s4 1966171168
        %v4423 = vunpack.c.0.s8 %v4422
        %v4424 = vlaneseq
        %v4425 = vshrl.u32 %v4424, 7
        %v4426 = vsub.s32 %v4423, %v4425
        %v4427 = vrot.slane %v4411, %v4426
        %v4429 = vunpack.c.l.s4 1966171168
        %v4430 = vunpack.c.0.s8 %v4429
        %v4431 = vlaneseq
        %v4432 = vshrl.u32 %v4431, 7
        %v4433 = vsub.s32 %v4430, %v4432
        %v4434 = vrot.slane %v4412, %v4433
        %v4436 = vunpack.c.l.s4 1966171168
        %v4437 = vunpack.c.0.s8 %v4436
        %v4438 = vlaneseq
        %v4439 = vshrl.u32 %v4438, 7
        %v4440 = vsub.s32 %v4437, %v4439
        %v4441 = vrot.slane %v4413, %v4440
        %v4442 = vcombine.low %v4420, %v4427
        %v4443 = vcombine.low %v4434, %v4441
        %v4445 = vunpack.c.l.s4 1966171168
        %v4446 = vunpack.c.0.s8 %v4445
        %v4447 = vlaneseq
        %v4448 = vshrl.u32 %v4447, 7
        %v4449 = vsub.s32 %v4446, %v4448
        %v4450 = vrot.slane %v4442, %v4449
        %v4452 = vunpack.c.l.s4 1966171168
        %v4453 = vunpack.c.0.s8 %v4452
        %v4454 = vlaneseq
        %v4455 = vshrl.u32 %v4454, 7
        %v4456 = vsub.s32 %v4453, %v4455
        %v4457 = vrot.slane %v4443, %v4456
        %v4458 = vcombine.low %v4450, %v4457
        %v4459 = vcombine.low %v3393, %v3376
        %v4460 = vcombine.low %v3390, %v3392
        %v4461 = vcombine.low %v3394, %v3408
        %v4462 = vcombine.low %v3432, %v3446
        %v4464 = vunpack.c.l.s4 1966171168
        %v4465 = vunpack.c.0.s8 %v4464
        %v4466 = vlaneseq
        %v4467 = vshrl.u32 %v4466, 7
        %v4468 = vsub.s32 %v4465, %v4467
        %v4469 = vrot.slane %v4459, %v4468
        %v4471 = vunpack.c.l.s4 1966171168
        %v4472 = vunpack.c.0.s8 %v4471
        %v4473 = vlaneseq
        %v4474 = vshrl.u32 %v4473, 7
        %v4475 = vsub.s32 %v4472, %v4474
        %v4476 = vrot.slane %v4460, %v4475
        %v4478 = vunpack.c.l.s4 1966171168
        %v4479 = vunpack.c.0.s8 %v4478
        %v4480 = vlaneseq
        %v4481 = vshrl.u32 %v4480, 7
        %v4482 = vsub.s32 %v4479, %v4481
        %v4483 = vrot.slane %v4461, %v4482
        %v4485 = vunpack.c.l.s4 1966171168
        %v4486 = vunpack.c.0.s8 %v4485
        %v4487 = vlaneseq
        %v4488 = vshrl.u32 %v4487, 7
        %v4489 = vsub.s32 %v4486, %v4488
        %v4490 = vrot.slane %v4462, %v4489
        %v4491 = vcombine.low %v4469, %v4476
        %v4492 = vcombine.low %v4483, %v4490
        %v4494 = vunpack.c.l.s4 1966171168
        %v4495 = vunpack.c.0.s8 %v4494
        %v4496 = vlaneseq
        %v4497 = vshrl.u32 %v4496, 7
        %v4498 = vsub.s32 %v4495, %v4497
        %v4499 = vrot.slane %v4491, %v4498
        %v4501 = vunpack.c.l.s4 1966171168
        %v4502 = vunpack.c.0.s8 %v4501
        %v4503 = vlaneseq
        %v4504 = vshrl.u32 %v4503, 7
        %v4505 = vsub.s32 %v4502, %v4504
        %v4506 = vrot.slane %v4492, %v4505
        %v4507 = vcombine.low %v4499, %v4506
        %v4508 = vcombine.low %v3454, %v3456
        %v4509 = vcombine.low %v3439, %v3453
        %v4510 = vcombine.low %v3455, %v3457
        %v4511 = vcombine.low %v3471, %v3495
        %v4513 = vunpack.c.l.s4 1966171168
        %v4514 = vunpack.c.0.s8 %v4513
        %v4515 = vlaneseq
        %v4516 = vshrl.u32 %v4515, 7
        %v4517 = vsub.s32 %v4514, %v4516
        %v4518 = vrot.slane %v4508, %v4517
        %v4520 = vunpack.c.l.s4 1966171168
        %v4521 = vunpack.c.0.s8 %v4520
        %v4522 = vlaneseq
        %v4523 = vshrl.u32 %v4522, 7
        %v4524 = vsub.s32 %v4521, %v4523
        %v4525 = vrot.slane %v4509, %v4524
        %v4527 = vunpack.c.l.s4 1966171168
        %v4528 = vunpack.c.0.s8 %v4527
        %v4529 = vlaneseq
        %v4530 = vshrl.u32 %v4529, 7
        %v4531 = vsub.s32 %v4528, %v4530
        %v4532 = vrot.slane %v4510, %v4531
        %v4534 = vunpack.c.l.s4 1966171168
        %v4535 = vunpack.c.0.s8 %v4534
        %v4536 = vlaneseq
        %v4537 = vshrl.u32 %v4536, 7
        %v4538 = vsub.s32 %v4535, %v4537
        %v4539 = vrot.slane %v4511, %v4538
        %v4540 = vcombine.low %v4518, %v4525
        %v4541 = vcombine.low %v4532, %v4539
        %v4543 = vunpack.c.l.s4 1966171168
        %v4544 = vunpack.c.0.s8 %v4543
        %v4545 = vlaneseq
        %v4546 = vshrl.u32 %v4545, 7
        %v4547 = vsub.s32 %v4544, %v4546
        %v4548 = vrot.slane %v4540, %v4547
        %v4550 = vunpack.c.l.s4 1966171168
        %v4551 = vunpack.c.0.s8 %v4550
        %v4552 = vlaneseq
        %v4553 = vshrl.u32 %v4552, 7
        %v4554 = vsub.s32 %v4551, %v4553
        %v4555 = vrot.slane %v4541, %v4554
        %v4556 = vcombine.low %v4548, %v4555
        %v4557 = vcombine.low %v3509, %v3517
        %v4558 = vcombine.low %v3519, %v3502
        %v4559 = vcombine.low %v3516, %v3518
        %v4560 = vcombine.low %v3520, %v3534
        %v4562 = vunpack.c.l.s4 1966171168
        %v4563 = vunpack.c.0.s8 %v4562
        %v4564 = vlaneseq
        %v4565 = vshrl.u32 %v4564, 7
        %v4566 = vsub.s32 %v4563, %v4565
        %v4567 = vrot.slane %v4557, %v4566
        %v4569 = vunpack.c.l.s4 1966171168
        %v4570 = vunpack.c.0.s8 %v4569
        %v4571 = vlaneseq
        %v4572 = vshrl.u32 %v4571, 7
        %v4573 = vsub.s32 %v4570, %v4572
        %v4574 = vrot.slane %v4558, %v4573
        %v4576 = vunpack.c.l.s4 1966171168
        %v4577 = vunpack.c.0.s8 %v4576
        %v4578 = vlaneseq
        %v4579 = vshrl.u32 %v4578, 7
        %v4580 = vsub.s32 %v4577, %v4579
        %v4581 = vrot.slane %v4559, %v4580
        %v4583 = vunpack.c.l.s4 1966171168
        %v4584 = vunpack.c.0.s8 %v4583
        %v4585 = vlaneseq
        %v4586 = vshrl.u32 %v4585, 7
        %v4587 = vsub.s32 %v4584, %v4586
        %v4588 = vrot.slane %v4560, %v4587
        %v4589 = vcombine.low %v4567, %v4574
        %v4590 = vcombine.low %v4581, %v4588
        %v4592 = vunpack.c.l.s4 1966171168
        %v4593 = vunpack.c.0.s8 %v4592
        %v4594 = vlaneseq
        %v4595 = vshrl.u32 %v4594, 7
        %v4596 = vsub.s32 %v4593, %v4595
        %v4597 = vrot.slane %v4589, %v4596
        %v4599 = vunpack.c.l.s4 1966171168
        %v4600 = vunpack.c.0.s8 %v4599
        %v4601 = vlaneseq
        %v4602 = vshrl.u32 %v4601, 7
        %v4603 = vsub.s32 %v4600, %v4602
        %v4604 = vrot.slane %v4590, %v4603
        %v4605 = vcombine.low %v4597, %v4604
        %v4606 = vcombine.low %v3558, %v3572
        %v4607 = vcombine.low %v3580, %v3582
        %v4608 = vcombine.low %v3565, %v3579
        %v4609 = vcombine.low %v3581, %v3583
        %v4611 = vunpack.c.l.s4 1966171168
        %v4612 = vunpack.c.0.s8 %v4611
        %v4613 = vlaneseq
        %v4614 = vshrl.u32 %v4613, 7
        %v4615 = vsub.s32 %v4612, %v4614
        %v4616 = vrot.slane %v4606, %v4615
        %v4618 = vunpack.c.l.s4 1966171168
        %v4619 = vunpack.c.0.s8 %v4618
        %v4620 = vlaneseq
        %v4621 = vshrl.u32 %v4620, 7
        %v4622 = vsub.s32 %v4619, %v4621
        %v4623 = vrot.slane %v4607, %v4622
        %v4625 = vunpack.c.l.s4 1966171168
        %v4626 = vunpack.c.0.s8 %v4625
        %v4627 = vlaneseq
        %v4628 = vshrl.u32 %v4627, 7
        %v4629 = vsub.s32 %v4626, %v4628
        %v4630 = vrot.slane %v4608, %v4629
        %v4632 = vunpack.c.l.s4 1966171168
        %v4633 = vunpack.c.0.s8 %v4632
        %v4634 = vlaneseq
        %v4635 = vshrl.u32 %v4634, 7
        %v4636 = vsub.s32 %v4633, %v4635
        %v4637 = vrot.slane %v4609, %v4636
        %v4638 = vcombine.low %v4616, %v4623
        %v4639 = vcombine.low %v4630, %v4637
        %v4641 = vunpack.c.l.s4 1966171168
        %v4642 = vunpack.c.0.s8 %v4641
        %v4643 = vlaneseq
        %v4644 = vshrl.u32 %v4643, 7
        %v4645 = vsub.s32 %v4642, %v4644
        %v4646 = vrot.slane %v4638, %v4645
        %v4648 = vunpack.c.l.s4 1966171168
        %v4649 = vunpack.c.0.s8 %v4648
        %v4650 = vlaneseq
        %v4651 = vshrl.u32 %v4650, 7
        %v4652 = vsub.s32 %v4649, %v4651
        %v4653 = vrot.slane %v4639, %v4652
        %v4654 = vcombine.low %v4646, %v4653
        %v4655 = vcombine.low %v3597, %v3621
        %v4656 = vcombine.low %v3635, %v3643
        %v4657 = vcombine.low %v3645, %v3628
        %v4658 = vcombine.low %v3642, %v3644
        %v4660 = vunpack.c.l.s4 1966171168
        %v4661 = vunpack.c.0.s8 %v4660
        %v4662 = vlaneseq
        %v4663 = vshrl.u32 %v4662, 7
        %v4664 = vsub.s32 %v4661, %v4663
        %v4665 = vrot.slane %v4655, %v4664
        %v4667 = vunpack.c.l.s4 1966171168
        %v4668 = vunpack.c.0.s8 %v4667
        %v4669 = vlaneseq
        %v4670 = vshrl.u32 %v4669, 7
        %v4671 = vsub.s32 %v4668, %v4670
        %v4672 = vrot.slane %v4656, %v4671
        %v4674 = vunpack.c.l.s4 1966171168
        %v4675 = vunpack.c.0.s8 %v4674
        %v4676 = vlaneseq
        %v4677 = vshrl.u32 %v4676, 7
        %v4678 = vsub.s32 %v4675, %v4677
        %v4679 = vrot.slane %v4657, %v4678
        %v4681 = vunpack.c.l.s4 1966171168
        %v4682 = vunpack.c.0.s8 %v4681
        %v4683 = vlaneseq
        %v4684 = vshrl.u32 %v4683, 7
        %v4685 = vsub.s32 %v4682, %v4684
        %v4686 = vrot.slane %v4658, %v4685
        %v4687 = vcombine.low %v4665, %v4672
        %v4688 = vcombine.low %v4679, %v4686
        %v4690 = vunpack.c.l.s4 1966171168
        %v4691 = vunpack.c.0.s8 %v4690
        %v4692 = vlaneseq
        %v4693 = vshrl.u32 %v4692, 7
        %v4694 = vsub.s32 %v4691, %v4693
        %v4695 = vrot.slane %v4687, %v4694
        %v4697 = vunpack.c.l.s4 1966171168
        %v4698 = vunpack.c.0.s8 %v4697
        %v4699 = vlaneseq
        %v4700 = vshrl.u32 %v4699, 7
        %v4701 = vsub.s32 %v4698, %v4700
        %v4702 = vrot.slane %v4688, %v4701
        %v4703 = vcombine.low %v4695, %v4702
        %v4704 = vcombine.low %v3646, %v3660
        %v4705 = vcombine.low %v3684, %v3698
        %v4706 = vcombine.low %v3706, %v3708
        %v4707 = vcombine.low %v3691, %v3705
        %v4709 = vunpack.c.l.s4 1966171168
        %v4710 = vunpack.c.0.s8 %v4709
        %v4711 = vlaneseq
        %v4712 = vshrl.u32 %v4711, 7
        %v4713 = vsub.s32 %v4710, %v4712
        %v4714 = vrot.slane %v4704, %v4713
        %v4716 = vunpack.c.l.s4 1966171168
        %v4717 = vunpack.c.0.s8 %v4716
        %v4718 = vlaneseq
        %v4719 = vshrl.u32 %v4718, 7
        %v4720 = vsub.s32 %v4717, %v4719
        %v4721 = vrot.slane %v4705, %v4720
        %v4723 = vunpack.c.l.s4 1966171168
        %v4724 = vunpack.c.0.s8 %v4723
        %v4725 = vlaneseq
        %v4726 = vshrl.u32 %v4725, 7
        %v4727 = vsub.s32 %v4724, %v4726
        %v4728 = vrot.slane %v4706, %v4727
        %v4730 = vunpack.c.l.s4 1966171168
        %v4731 = vunpack.c.0.s8 %v4730
        %v4732 = vlaneseq
        %v4733 = vshrl.u32 %v4732, 7
        %v4734 = vsub.s32 %v4731, %v4733
        %v4735 = vrot.slane %v4707, %v4734
        %v4736 = vcombine.low %v4714, %v4721
        %v4737 = vcombine.low %v4728, %v4735
        %v4739 = vunpack.c.l.s4 1966171168
        %v4740 = vunpack.c.0.s8 %v4739
        %v4741 = vlaneseq
        %v4742 = vshrl.u32 %v4741, 7
        %v4743 = vsub.s32 %v4740, %v4742
        %v4744 = vrot.slane %v4736, %v4743
        %v4746 = vunpack.c.l.s4 1966171168
        %v4747 = vunpack.c.0.s8 %v4746
        %v4748 = vlaneseq
        %v4749 = vshrl.u32 %v4748, 7
        %v4750 = vsub.s32 %v4747, %v4749
        %v4751 = vrot.slane %v4737, %v4750
        %v4752 = vcombine.low %v4744, %v4751
        %v4753 = vcombine.low %v3707, %v3709
        %v4754 = vcombine.low %v3723, %v3747
        %v4755 = vcombine.low %v3761, %v3769
        %v4756 = vcombine.low %v3771, %v3754
        %v4758 = vunpack.c.l.s4 1966171168
        %v4759 = vunpack.c.0.s8 %v4758
        %v4760 = vlaneseq
        %v4761 = vshrl.u32 %v4760, 7
        %v4762 = vsub.s32 %v4759, %v4761
        %v4763 = vrot.slane %v4753, %v4762
        %v4765 = vunpack.c.l.s4 1966171168
        %v4766 = vunpack.c.0.s8 %v4765
        %v4767 = vlaneseq
        %v4768 = vshrl.u32 %v4767, 7
        %v4769 = vsub.s32 %v4766, %v4768
        %v4770 = vrot.slane %v4754, %v4769
        %v4772 = vunpack.c.l.s4 1966171168
        %v4773 = vunpack.c.0.s8 %v4772
        %v4774 = vlaneseq
        %v4775 = vshrl.u32 %v4774, 7
        %v4776 = vsub.s32 %v4773, %v4775
        %v4777 = vrot.slane %v4755, %v4776
        %v4779 = vunpack.c.l.s4 1966171168
        %v4780 = vunpack.c.0.s8 %v4779
        %v4781 = vlaneseq
        %v4782 = vshrl.u32 %v4781, 7
        %v4783 = vsub.s32 %v4780, %v4782
        %v4784 = vrot.slane %v4756, %v4783
        %v4785 = vcombine.low %v4763, %v4770
        %v4786 = vcombine.low %v4777, %v4784
        %v4788 = vunpack.c.l.s4 1966171168
        %v4789 = vunpack.c.0.s8 %v4788
        %v4790 = vlaneseq
        %v4791 = vshrl.u32 %v4790, 7
        %v4792 = vsub.s32 %v4789, %v4791
        %v4793 = vrot.slane %v4785, %v4792
        %v4795 = vunpack.c.l.s4 1966171168
        %v4796 = vunpack.c.0.s8 %v4795
        %v4797 = vlaneseq
        %v4798 = vshrl.u32 %v4797, 7
        %v4799 = vsub.s32 %v4796, %v4798
        %v4800 = vrot.slane %v4786, %v4799
        %v4801 = vcombine.low %v4793, %v4800
        %v4802 = vcombine.low %v3768, %v3770
        %v4803 = vcombine.low %v3772, %v3786
        %v4804 = vcombine.low %v3810, %v3824
        %v4805 = vcombine.low %v3832, %v3834
        %v4807 = vunpack.c.l.s4 1966171168
        %v4808 = vunpack.c.0.s8 %v4807
        %v4809 = vlaneseq
        %v4810 = vshrl.u32 %v4809, 7
        %v4811 = vsub.s32 %v4808, %v4810
        %v4812 = vrot.slane %v4802, %v4811
        %v4814 = vunpack.c.l.s4 1966171168
        %v4815 = vunpack.c.0.s8 %v4814
        %v4816 = vlaneseq
        %v4817 = vshrl.u32 %v4816, 7
        %v4818 = vsub.s32 %v4815, %v4817
        %v4819 = vrot.slane %v4803, %v4818
        %v4821 = vunpack.c.l.s4 1966171168
        %v4822 = vunpack.c.0.s8 %v4821
        %v4823 = vlaneseq
        %v4824 = vshrl.u32 %v4823, 7
        %v4825 = vsub.s32 %v4822, %v4824
        %v4826 = vrot.slane %v4804, %v4825
        %v4828 = vunpack.c.l.s4 1966171168
        %v4829 = vunpack.c.0.s8 %v4828
        %v4830 = vlaneseq
        %v4831 = vshrl.u32 %v4830, 7
        %v4832 = vsub.s32 %v4829, %v4831
        %v4833 = vrot.slane %v4805, %v4832
        %v4834 = vcombine.low %v4812, %v4819
        %v4835 = vcombine.low %v4826, %v4833
        %v4837 = vunpack.c.l.s4 1966171168
        %v4838 = vunpack.c.0.s8 %v4837
        %v4839 = vlaneseq
        %v4840 = vshrl.u32 %v4839, 7
        %v4841 = vsub.s32 %v4838, %v4840
        %v4842 = vrot.slane %v4834, %v4841
        %v4844 = vunpack.c.l.s4 1966171168
        %v4845 = vunpack.c.0.s8 %v4844
        %v4846 = vlaneseq
        %v4847 = vshrl.u32 %v4846, 7
        %v4848 = vsub.s32 %v4845, %v4847
        %v4849 = vrot.slane %v4835, %v4848
        %v4850 = vcombine.low %v4842, %v4849
        %v4851 = vcombine.low %v3817, %v3831
        %v4852 = vcombine.low %v3833, %v3835
        %v4853 = vcombine.low %v3849, %v3873
        %v4854 = vcombine.low %v3887, %v3895
        %v4856 = vunpack.c.l.s4 1966171168
        %v4857 = vunpack.c.0.s8 %v4856
        %v4858 = vlaneseq
        %v4859 = vshrl.u32 %v4858, 7
        %v4860 = vsub.s32 %v4857, %v4859
        %v4861 = vrot.slane %v4851, %v4860
        %v4863 = vunpack.c.l.s4 1966171168
        %v4864 = vunpack.c.0.s8 %v4863
        %v4865 = vlaneseq
        %v4866 = vshrl.u32 %v4865, 7
        %v4867 = vsub.s32 %v4864, %v4866
        %v4868 = vrot.slane %v4852, %v4867
        %v4870 = vunpack.c.l.s4 1966171168
        %v4871 = vunpack.c.0.s8 %v4870
        %v4872 = vlaneseq
        %v4873 = vshrl.u32 %v4872, 7
        %v4874 = vsub.s32 %v4871, %v4873
        %v4875 = vrot.slane %v4853, %v4874
        %v4877 = vunpack.c.l.s4 1966171168
        %v4878 = vunpack.c.0.s8 %v4877
        %v4879 = vlaneseq
        %v4880 = vshrl.u32 %v4879, 7
        %v4881 = vsub.s32 %v4878, %v4880
        %v4882 = vrot.slane %v4854, %v4881
        %v4883 = vcombine.low %v4861, %v4868
        %v4884 = vcombine.low %v4875, %v4882
        %v4886 = vunpack.c.l.s4 1966171168
        %v4887 = vunpack.c.0.s8 %v4886
        %v4888 = vlaneseq
        %v4889 = vshrl.u32 %v4888, 7
        %v4890 = vsub.s32 %v4887, %v4889
        %v4891 = vrot.slane %v4883, %v4890
        %v4893 = vunpack.c.l.s4 1966171168
        %v4894 = vunpack.c.0.s8 %v4893
        %v4895 = vlaneseq
        %v4896 = vshrl.u32 %v4895, 7
        %v4897 = vsub.s32 %v4894, %v4896
        %v4898 = vrot.slane %v4884, %v4897
        %v4899 = vcombine.low %v4891, %v4898
        %v4900 = vcombine.low %v3897, %v3880
        %v4901 = vcombine.low %v3894, %v3896
        %v4902 = vcombine.low %v3898, %v3912
        %v4903 = vcombine.low %v3936, %v3950
        %v4905 = vunpack.c.l.s4 1966171168
        %v4906 = vunpack.c.0.s8 %v4905
        %v4907 = vlaneseq
        %v4908 = vshrl.u32 %v4907, 7
        %v4909 = vsub.s32 %v4906, %v4908
        %v4910 = vrot.slane %v4900, %v4909
        %v4912 = vunpack.c.l.s4 1966171168
        %v4913 = vunpack.c.0.s8 %v4912
        %v4914 = vlaneseq
        %v4915 = vshrl.u32 %v4914, 7
        %v4916 = vsub.s32 %v4913, %v4915
        %v4917 = vrot.slane %v4901, %v4916
        %v4919 = vunpack.c.l.s4 1966171168
        %v4920 = vunpack.c.0.s8 %v4919
        %v4921 = vlaneseq
        %v4922 = vshrl.u32 %v4921, 7
        %v4923 = vsub.s32 %v4920, %v4922
        %v4924 = vrot.slane %v4902, %v4923
        %v4926 = vunpack.c.l.s4 1966171168
        %v4927 = vunpack.c.0.s8 %v4926
        %v4928 = vlaneseq
        %v4929 = vshrl.u32 %v4928, 7
        %v4930 = vsub.s32 %v4927, %v4929
        %v4931 = vrot.slane %v4903, %v4930
        %v4932 = vcombine.low %v4910, %v4917
        %v4933 = vcombine.low %v4924, %v4931
        %v4935 = vunpack.c.l.s4 1966171168
        %v4936 = vunpack.c.0.s8 %v4935
        %v4937 = vlaneseq
        %v4938 = vshrl.u32 %v4937, 7
        %v4939 = vsub.s32 %v4936, %v4938
        %v4940 = vrot.slane %v4932, %v4939
        %v4942 = vunpack.c.l.s4 1966171168
        %v4943 = vunpack.c.0.s8 %v4942
        %v4944 = vlaneseq
        %v4945 = vshrl.u32 %v4944, 7
        %v4946 = vsub.s32 %v4943, %v4945
        %v4947 = vrot.slane %v4933, %v4946
        %v4948 = vcombine.low %v4940, %v4947
        %v4949 = vcombine.low %v3958, %v3960
        %v4950 = vcombine.low %v3943, %v3957
        %v4951 = vcombine.low %v3959, %v3961
        %v4952 = vcombine.low %v3975, %v3999
        %v4954 = vunpack.c.l.s4 1966171168
        %v4955 = vunpack.c.0.s8 %v4954
        %v4956 = vlaneseq
        %v4957 = vshrl.u32 %v4956, 7
        %v4958 = vsub.s32 %v4955, %v4957
        %v4959 = vrot.slane %v4949, %v4958
        %v4961 = vunpack.c.l.s4 1966171168
        %v4962 = vunpack.c.0.s8 %v4961
        %v4963 = vlaneseq
        %v4964 = vshrl.u32 %v4963, 7
        %v4965 = vsub.s32 %v4962, %v4964
        %v4966 = vrot.slane %v4950, %v4965
        %v4968 = vunpack.c.l.s4 1966171168
        %v4969 = vunpack.c.0.s8 %v4968
        %v4970 = vlaneseq
        %v4971 = vshrl.u32 %v4970, 7
        %v4972 = vsub.s32 %v4969, %v4971
        %v4973 = vrot.slane %v4951, %v4972
        %v4975 = vunpack.c.l.s4 1966171168
        %v4976 = vunpack.c.0.s8 %v4975
        %v4977 = vlaneseq
        %v4978 = vshrl.u32 %v4977, 7
        %v4979 = vsub.s32 %v4976, %v4978
        %v4980 = vrot.slane %v4952, %v4979
        %v4981 = vcombine.low %v4959, %v4966
        %v4982 = vcombine.low %v4973, %v4980
        %v4984 = vunpack.c.l.s4 1966171168
        %v4985 = vunpack.c.0.s8 %v4984
        %v4986 = vlaneseq
        %v4987 = vshrl.u32 %v4986, 7
        %v4988 = vsub.s32 %v4985, %v4987
        %v4989 = vrot.slane %v4981, %v4988
        %v4991 = vunpack.c.l.s4 1966171168
        %v4992 = vunpack.c.0.s8 %v4991
        %v4993 = vlaneseq
        %v4994 = vshrl.u32 %v4993, 7
        %v4995 = vsub.s32 %v4992, %v4994
        %v4996 = vrot.slane %v4982, %v4995
        %v4997 = vcombine.low %v4989, %v4996
        %v4998 = vcombine.low %v4013, %v4021
        %v4999 = vcombine.low %v4023, %v4006
        %v5000 = vcombine.low %v4020, %v4022
        %v5001 = vcombine.low %v4024, %v4038
        %v5003 = vunpack.c.l.s4 1966171168
        %v5004 = vunpack.c.0.s8 %v5003
        %v5005 = vlaneseq
        %v5006 = vshrl.u32 %v5005, 7
        %v5007 = vsub.s32 %v5004, %v5006
        %v5008 = vrot.slane %v4998, %v5007
        %v5010 = vunpack.c.l.s4 1966171168
        %v5011 = vunpack.c.0.s8 %v5010
        %v5012 = vlaneseq
        %v5013 = vshrl.u32 %v5012, 7
        %v5014 = vsub.s32 %v5011, %v5013
        %v5015 = vrot.slane %v4999, %v5014
        %v5017 = vunpack.c.l.s4 1966171168
        %v5018 = vunpack.c.0.s8 %v5017
        %v5019 = vlaneseq
        %v5020 = vshrl.u32 %v5019, 7
        %v5021 = vsub.s32 %v5018, %v5020
        %v5022 = vrot.slane %v5000, %v5021
        %v5024 = vunpack.c.l.s4 1966171168
        %v5025 = vunpack.c.0.s8 %v5024
        %v5026 = vlaneseq
        %v5027 = vshrl.u32 %v5026, 7
        %v5028 = vsub.s32 %v5025, %v5027
        %v5029 = vrot.slane %v5001, %v5028
        %v5030 = vcombine.low %v5008, %v5015
        %v5031 = vcombine.low %v5022, %v5029
        %v5033 = vunpack.c.l.s4 1966171168
        %v5034 = vunpack.c.0.s8 %v5033
        %v5035 = vlaneseq
        %v5036 = vshrl.u32 %v5035, 7
        %v5037 = vsub.s32 %v5034, %v5036
        %v5038 = vrot.slane %v5030, %v5037
        %v5040 = vunpack.c.l.s4 1966171168
        %v5041 = vunpack.c.0.s8 %v5040
        %v5042 = vlaneseq
        %v5043 = vshrl.u32 %v5042, 7
        %v5044 = vsub.s32 %v5041, %v5043
        %v5045 = vrot.slane %v5031, %v5044
        %v5046 = vcombine.low %v5038, %v5045
        %v5047 = vcombine.low %v4062, %v4076
        %v5048 = vcombine.low %v4084, %v4086
        %v5049 = vcombine.low %v4069, %v4083
        %v5050 = vcombine.low %v4085, %v4087
        %v5052 = vunpack.c.l.s4 1966171168
        %v5053 = vunpack.c.0.s8 %v5052
        %v5054 = vlaneseq
        %v5055 = vshrl.u32 %v5054, 7
        %v5056 = vsub.s32 %v5053, %v5055
        %v5057 = vrot.slane %v5047, %v5056
        %v5059 = vunpack.c.l.s4 1966171168
        %v5060 = vunpack.c.0.s8 %v5059
        %v5061 = vlaneseq
        %v5062 = vshrl.u32 %v5061, 7
        %v5063 = vsub.s32 %v5060, %v5062
        %v5064 = vrot.slane %v5048, %v5063
        %v5066 = vunpack.c.l.s4 1966171168
        %v5067 = vunpack.c.0.s8 %v5066
        %v5068 = vlaneseq
        %v5069 = vshrl.u32 %v5068, 7
        %v5070 = vsub.s32 %v5067, %v5069
        %v5071 = vrot.slane %v5049, %v5070
        %v5073 = vunpack.c.l.s4 1966171168
        %v5074 = vunpack.c.0.s8 %v5073
        %v5075 = vlaneseq
        %v5076 = vshrl.u32 %v5075, 7
        %v5077 = vsub.s32 %v5074, %v5076
        %v5078 = vrot.slane %v5050, %v5077
        %v5079 = vcombine.low %v5057, %v5064
        %v5080 = vcombine.low %v5071, %v5078
        %v5082 = vunpack.c.l.s4 1966171168
        %v5083 = vunpack.c.0.s8 %v5082
        %v5084 = vlaneseq
        %v5085 = vshrl.u32 %v5084, 7
        %v5086 = vsub.s32 %v5083, %v5085
        %v5087 = vrot.slane %v5079, %v5086
        %v5089 = vunpack.c.l.s4 1966171168
        %v5090 = vunpack.c.0.s8 %v5089
        %v5091 = vlaneseq
        %v5092 = vshrl.u32 %v5091, 7
        %v5093 = vsub.s32 %v5090, %v5092
        %v5094 = vrot.slane %v5080, %v5093
        %v5095 = vcombine.low %v5087, %v5094
        %v5096 = vcombine.low %v4101, %v4125
        %v5097 = vcombine.low %v4139, %v4147
        %v5098 = vcombine.low %v4149, %v4132
        %v5099 = vcombine.low %v4146, %v4148
        %v5101 = vunpack.c.l.s4 1966171168
        %v5102 = vunpack.c.0.s8 %v5101
        %v5103 = vlaneseq
        %v5104 = vshrl.u32 %v5103, 7
        %v5105 = vsub.s32 %v5102, %v5104
        %v5106 = vrot.slane %v5096, %v5105
        %v5108 = vunpack.c.l.s4 1966171168
        %v5109 = vunpack.c.0.s8 %v5108
        %v5110 = vlaneseq
        %v5111 = vshrl.u32 %v5110, 7
        %v5112 = vsub.s32 %v5109, %v5111
        %v5113 = vrot.slane %v5097, %v5112
        %v5115 = vunpack.c.l.s4 1966171168
        %v5116 = vunpack.c.0.s8 %v5115
        %v5117 = vlaneseq
        %v5118 = vshrl.u32 %v5117, 7
        %v5119 = vsub.s32 %v5116, %v5118
        %v5120 = vrot.slane %v5098, %v5119
        %v5122 = vunpack.c.l.s4 1966171168
        %v5123 = vunpack.c.0.s8 %v5122
        %v5124 = vlaneseq
        %v5125 = vshrl.u32 %v5124, 7
        %v5126 = vsub.s32 %v5123, %v5125
        %v5127 = vrot.slane %v5099, %v5126
        %v5128 = vcombine.low %v5106, %v5113
        %v5129 = vcombine.low %v5120, %v5127
        %v5131 = vunpack.c.l.s4 1966171168
        %v5132 = vunpack.c.0.s8 %v5131
        %v5133 = vlaneseq
        %v5134 = vshrl.u32 %v5133, 7
        %v5135 = vsub.s32 %v5132, %v5134
        %v5136 = vrot.slane %v5128, %v5135
        %v5138 = vunpack.c.l.s4 1966171168
        %v5139 = vunpack.c.0.s8 %v5138
        %v5140 = vlaneseq
        %v5141 = vshrl.u32 %v5140, 7
        %v5142 = vsub.s32 %v5139, %v5141
        %v5143 = vrot.slane %v5129, %v5142
        %v5144 = vcombine.low %v5136, %v5143
        %v5145 = vcombine.low %v4150, %v4164
        %v5147 = vunpack.c.l.s4 1966171168
        %v5148 = vunpack.c.0.s8 %v5147
        %v5149 = vlaneseq
        %v5150 = vshrl.u32 %v5149, 7
        %v5151 = vsub.s32 %v5148, %v5150
        %v5152 = vrot.slane %v5145, %v5151
        %v5154 = vunpack.c.l.s4 1966171168
        %v5155 = vunpack.c.0.s8 %v5154
        %v5156 = vlaneseq
        %v5157 = vshrl.u32 %v5156, 7
        %v5158 = vsub.s32 %v5155, %v5157
        %v5159 = vrot.slane %v5152, %v5158
        %v5165 = vunpack.c.l.b16 %v2990
        %v5166 = vunpack.c.l.b16 %v2991
        %v5167 = vunpack.c.l.b16 %v2992
        %v5168 = vunpack.c.l.b16 %v2993
        %v5169 = vunpack.c.l.b16 %v2994
        %v5170 = vpack.c.b16 %v5166, %v5165
        %v5171 = vpack.c.b16 %v5168, %v5167
        %v5172 = vpack.c.b16 %v5169, %v5169
        %vm5175 = vcmask 293888
        %v5177 = vsel %vm5175, %v4213, 0
        %v5180 = vsel %vm5175, %v4262, 0
        %v5183 = vsel %vm5175, %v4311, 0
        %v5186 = vsel %vm5175, %v4360, 0
        %v5189 = vsel %vm5175, %v4409, 0
        %v5192 = vsel %vm5175, %v4458, 0
        %v5195 = vsel %vm5175, %v4507, 0
        %v5198 = vsel %vm5175, %v4556, 0
        %v5201 = vsel %vm5175, %v4605, 0
        %v5204 = vsel %vm5175, %v4654, 0
        %v5207 = vsel %vm5175, %v4703, 0
        %v5210 = vsel %vm5175, %v4752, 0
        %v5213 = vsel %vm5175, %v4801, 0
        %v5216 = vsel %vm5175, %v4850, 0
        %v5219 = vsel %vm5175, %v4899, 0
        %v5222 = vsel %vm5175, %v4948, 0
        %v5225 = vsel %vm5175, %v4997, 0
        %v5228 = vsel %vm5175, %v5046, 0
        %v5231 = vsel %vm5175, %v5095, 0
        %v5234 = vsel %vm5175, %v5144, 0
        %v5237 = vsel %vm5175, %v5159, 0
        %vm5239 = vcmask 1041408
        %v5241 = vsel %vm5239, %v5172, 0
        %5243 = vmatprep.subr.bf16.mxu0 0
        %5244 = vmatpush1.bf16.msra.mxu0 0
        %5245 = vmatprep.subr.bf16.mxu0 0
        %5246 = vmatpush1.bf16.msra.mxu0 0
        %5247 = vmatprep.subr.bf16.mxu0 0
        %5248 = vmatpush1.bf16.msra.mxu0 0
        %5249 = vmatprep.subr.bf16.mxu0 0
        %5250 = vmatpush1.bf16.msra.mxu0 0
        %5251 = vmatprep.subr.bf16.mxu0 0
        %5252 = vmatpush1.bf16.msra.mxu0 0
        %5253 = vmatprep.subr.bf16.mxu0 0
        %5254 = vmatpush1.bf16.msra.mxu0 %v5241
        %5255 = vmatprep.subr.bf16.mxu0 0
        %5256 = vmatpush1.bf16.msra.mxu0 %v5171
        %5257 = vmatprep.subr.bf16.mxu0 0
        %5258 = vmatpush1.bf16.msra.mxu0 %v5170
        %5259 = vmatprep.subr.bf16.mxu0 0
        %5260 = vmatpush2.bf16.msra.mxu0 0
        %5261 = vmatprep.subr.bf16.mxu0 0
        %5262 = vmatpush2.bf16.msra.mxu0 0
        %5263 = vmatprep.subr.bf16.mxu0 0
        %5264 = vmatpush2.bf16.msra.mxu0 0
        %5265 = vmatprep.subr.bf16.mxu0 0
        %5266 = vmatpush2.bf16.msra.mxu0 0
        %5267 = vmatprep.subr.bf16.mxu0 0
        %5268 = vmatpush2.bf16.msra.mxu0 0
        %5269 = vmatprep.subr.bf16.mxu0 0
        %5270 = vmatpush2.bf16.msra.mxu0 0
        %5271 = vmatprep.subr.bf16.mxu0 0
        %5272 = vmatpush2.bf16.msra.mxu0 0
        %5273 = vmatprep.subr.bf16.mxu0 0
        %5274 = vmatpush2.bf16.msra.mxu0 0
        %5275 = vmatprep.mubr.bf16.mxu0 0
        %5276 = vmatmul.mubr.bf16.gmra.mxu0 %v5177
        %v5277 = vpop.f32.mrf.mxu0
        %v5278 = vadd.f32 0.0, %v5277
        %v5279 = vpop.f32.mrf.mxu0
        %v5280 = vpop.f32.mrf.mxu0
        %v5281 = vadd.f32 0.0, %v5280
        %v5282 = vpop.f32.mrf.mxu0
        %5283 = vmatprep.mubr.bf16.mxu0 0
        %5284 = vmatmul.mubr.bf16.gmra.mxu0 %v5180
        %v5285 = vpop.f32.mrf.mxu0
        %v5286 = vadd.f32 0.0, %v5285
        %v5287 = vpop.f32.mrf.mxu0
        %v5288 = vpop.f32.mrf.mxu0
        %v5289 = vadd.f32 0.0, %v5288
        %v5290 = vpop.f32.mrf.mxu0
        %5291 = vmatprep.mubr.bf16.mxu0 0
        %5292 = vmatmul.mubr.bf16.gmra.mxu0 %v5183
        %v5293 = vpop.f32.mrf.mxu0
        %v5294 = vadd.f32 0.0, %v5293
        %v5295 = vpop.f32.mrf.mxu0
        %v5296 = vpop.f32.mrf.mxu0
        %v5297 = vadd.f32 0.0, %v5296
        %v5298 = vpop.f32.mrf.mxu0
        %5299 = vmatprep.mubr.bf16.mxu0 0
        %5300 = vmatmul.mubr.bf16.gmra.mxu0 %v5186
        %v5301 = vpop.f32.mrf.mxu0
        %v5302 = vadd.f32 0.0, %v5301
        %v5303 = vpop.f32.mrf.mxu0
        %v5304 = vpop.f32.mrf.mxu0
        %v5305 = vadd.f32 0.0, %v5304
        %v5306 = vpop.f32.mrf.mxu0
        %5307 = vmatprep.mubr.bf16.mxu0 0
        %5308 = vmatmul.mubr.bf16.gmra.mxu0 %v5189
        %v5309 = vpop.f32.mrf.mxu0
        %v5310 = vadd.f32 0.0, %v5309
        %v5311 = vpop.f32.mrf.mxu0
        %v5312 = vpop.f32.mrf.mxu0
        %v5313 = vadd.f32 0.0, %v5312
        %v5314 = vpop.f32.mrf.mxu0
        %5315 = vmatprep.mubr.bf16.mxu0 0
        %5316 = vmatmul.mubr.bf16.gmra.mxu0 %v5192
        %v5317 = vpop.f32.mrf.mxu0
        %v5318 = vadd.f32 0.0, %v5317
        %v5319 = vpop.f32.mrf.mxu0
        %v5320 = vpop.f32.mrf.mxu0
        %v5321 = vadd.f32 0.0, %v5320
        %v5322 = vpop.f32.mrf.mxu0
        %5323 = vmatprep.mubr.bf16.mxu0 0
        %5324 = vmatmul.mubr.bf16.gmra.mxu0 %v5195
        %v5325 = vpop.f32.mrf.mxu0
        %v5326 = vadd.f32 0.0, %v5325
        %v5327 = vpop.f32.mrf.mxu0
        %v5328 = vpop.f32.mrf.mxu0
        %v5329 = vadd.f32 0.0, %v5328
        %v5330 = vpop.f32.mrf.mxu0
        %5331 = vmatprep.mubr.bf16.mxu0 0
        %5332 = vmatmul.mubr.bf16.gmra.mxu0 %v5198
        %v5333 = vpop.f32.mrf.mxu0
        %v5334 = vadd.f32 0.0, %v5333
        %v5335 = vpop.f32.mrf.mxu0
        %v5336 = vpop.f32.mrf.mxu0
        %v5337 = vadd.f32 0.0, %v5336
        %v5338 = vpop.f32.mrf.mxu0
        %5339 = vmatprep.mubr.bf16.mxu0 0
        %5340 = vmatmul.mubr.bf16.gmra.mxu0 %v5201
        %v5341 = vpop.f32.mrf.mxu0
        %v5342 = vadd.f32 0.0, %v5341
        %v5343 = vpop.f32.mrf.mxu0
        %v5344 = vpop.f32.mrf.mxu0
        %v5345 = vadd.f32 0.0, %v5344
        %v5346 = vpop.f32.mrf.mxu0
        %5347 = vmatprep.mubr.bf16.mxu0 0
        %5348 = vmatmul.mubr.bf16.gmra.mxu0 %v5204
        %v5349 = vpop.f32.mrf.mxu0
        %v5350 = vadd.f32 0.0, %v5349
        %v5351 = vpop.f32.mrf.mxu0
        %v5352 = vpop.f32.mrf.mxu0
        %v5353 = vadd.f32 0.0, %v5352
        %v5354 = vpop.f32.mrf.mxu0
        %5355 = vmatprep.mubr.bf16.mxu0 0
        %5356 = vmatmul.mubr.bf16.gmra.mxu0 %v5207
        %v5357 = vpop.f32.mrf.mxu0
        %v5358 = vadd.f32 0.0, %v5357
        %v5359 = vpop.f32.mrf.mxu0
        %v5360 = vpop.f32.mrf.mxu0
        %v5361 = vadd.f32 0.0, %v5360
        %v5362 = vpop.f32.mrf.mxu0
        %5363 = vmatprep.mubr.bf16.mxu0 0
        %5364 = vmatmul.mubr.bf16.gmra.mxu0 %v5210
        %v5365 = vpop.f32.mrf.mxu0
        %v5366 = vadd.f32 0.0, %v5365
        %v5367 = vpop.f32.mrf.mxu0
        %v5368 = vpop.f32.mrf.mxu0
        %v5369 = vadd.f32 0.0, %v5368
        %v5370 = vpop.f32.mrf.mxu0
        %5371 = vmatprep.mubr.bf16.mxu0 0
        %5372 = vmatmul.mubr.bf16.gmra.mxu0 %v5213
        %v5373 = vpop.f32.mrf.mxu0
        %v5374 = vadd.f32 0.0, %v5373
        %v5375 = vpop.f32.mrf.mxu0
        %v5376 = vpop.f32.mrf.mxu0
        %v5377 = vadd.f32 0.0, %v5376
        %v5378 = vpop.f32.mrf.mxu0
        %5379 = vmatprep.mubr.bf16.mxu0 0
        %5380 = vmatmul.mubr.bf16.gmra.mxu0 %v5216
        %v5381 = vpop.f32.mrf.mxu0
        %v5382 = vadd.f32 0.0, %v5381
        %v5383 = vpop.f32.mrf.mxu0
        %v5384 = vpop.f32.mrf.mxu0
        %v5385 = vadd.f32 0.0, %v5384
        %v5386 = vpop.f32.mrf.mxu0
        %5387 = vmatprep.mubr.bf16.mxu0 0
        %5388 = vmatmul.mubr.bf16.gmra.mxu0 %v5219
        %v5389 = vpop.f32.mrf.mxu0
        %v5390 = vadd.f32 0.0, %v5389
        %v5391 = vpop.f32.mrf.mxu0
        %v5392 = vpop.f32.mrf.mxu0
        %v5393 = vadd.f32 0.0, %v5392
        %v5394 = vpop.f32.mrf.mxu0
        %5395 = vmatprep.mubr.bf16.mxu0 0
        %5396 = vmatmul.mubr.bf16.gmra.mxu0 %v5222
        %v5397 = vpop.f32.mrf.mxu0
        %v5398 = vadd.f32 0.0, %v5397
        %v5399 = vpop.f32.mrf.mxu0
        %v5400 = vpop.f32.mrf.mxu0
        %v5401 = vadd.f32 0.0, %v5400
        %v5402 = vpop.f32.mrf.mxu0
        %5403 = vmatprep.mubr.bf16.mxu0 0
        %5404 = vmatmul.mubr.bf16.gmra.mxu0 %v5225
        %v5405 = vpop.f32.mrf.mxu0
        %v5406 = vadd.f32 0.0, %v5405
        %v5407 = vpop.f32.mrf.mxu0
        %v5408 = vpop.f32.mrf.mxu0
        %v5409 = vadd.f32 0.0, %v5408
        %v5410 = vpop.f32.mrf.mxu0
        %5411 = vmatprep.mubr.bf16.mxu0 0
        %5412 = vmatmul.mubr.bf16.gmra.mxu0 %v5228
        %v5413 = vpop.f32.mrf.mxu0
        %v5414 = vadd.f32 0.0, %v5413
        %v5415 = vpop.f32.mrf.mxu0
        %v5416 = vpop.f32.mrf.mxu0
        %v5417 = vadd.f32 0.0, %v5416
        %v5418 = vpop.f32.mrf.mxu0
        %5419 = vmatprep.mubr.bf16.mxu0 0
        %5420 = vmatmul.mubr.bf16.gmra.mxu0 %v5231
        %v5421 = vpop.f32.mrf.mxu0
        %v5422 = vadd.f32 0.0, %v5421
        %v5423 = vpop.f32.mrf.mxu0
        %v5424 = vpop.f32.mrf.mxu0
        %v5425 = vadd.f32 0.0, %v5424
        %v5426 = vpop.f32.mrf.mxu0
        %5427 = vmatprep.mubr.bf16.mxu0 0
        %5428 = vmatmul.mubr.bf16.gmra.mxu0 %v5234
        %v5429 = vpop.f32.mrf.mxu0
        %v5430 = vadd.f32 0.0, %v5429
        %v5431 = vpop.f32.mrf.mxu0
        %v5432 = vpop.f32.mrf.mxu0
        %v5433 = vadd.f32 0.0, %v5432
        %v5434 = vpop.f32.mrf.mxu0
        %5435 = vmatprep.mubr.bf16.mxu0 0
        %5436 = vmatmul.mubr.bf16.gmra.mxu0 %v5237
        %v5437 = vpop.f32.mrf.mxu0
        %v5438 = vadd.f32 0.0, %v5437
        %v5439 = vpop.f32.mrf.mxu0
        %v5440 = vpop.f32.mrf.mxu0
        %v5441 = vpop.f32.mrf.mxu0
        %5442 = vdwg.mxu0
        %v5484 = vcombine.high %v5278, %v5278
        %v5486 = vunpack.c.l.s4 1983009808
        %v5487 = vunpack.c.0.s8 %v5486
        %v5488 = vlaneseq
        %v5489 = vshrl.u32 %v5488, 7
        %v5490 = vsub.s32 %v5487, %v5489
        %v5491 = vrot.slane %v5278, %v5490
        %v5493 = vunpack.c.l.s4 1983009808
        %v5494 = vunpack.c.0.s8 %v5493
        %v5495 = vlaneseq
        %v5496 = vshrl.u32 %v5495, 7
        %v5497 = vsub.s32 %v5494, %v5496
        %v5498 = vrot.slane %v5484, %v5497
        %v5499 = vcombine.high %v5491, %v5491
        %v5500 = vcombine.high %v5498, %v5498
        %v5501 = vcombine.high %v5281, %v5281
        %v5503 = vunpack.c.l.s4 1983009808
        %v5504 = vunpack.c.0.s8 %v5503
        %v5505 = vlaneseq
        %v5506 = vshrl.u32 %v5505, 7
        %v5507 = vsub.s32 %v5504, %v5506
        %v5508 = vrot.slane %v5281, %v5507
        %v5510 = vunpack.c.l.s4 1983009808
        %v5511 = vunpack.c.0.s8 %v5510
        %v5512 = vlaneseq
        %v5513 = vshrl.u32 %v5512, 7
        %v5514 = vsub.s32 %v5511, %v5513
        %v5515 = vrot.slane %v5501, %v5514
        %v5516 = vcombine.high %v5508, %v5508
        %v5517 = vcombine.high %v5515, %v5515
        %v5518 = vcombine.high %v5286, %v5286
        %v5520 = vunpack.c.l.s4 1983009808
        %v5521 = vunpack.c.0.s8 %v5520
        %v5522 = vlaneseq
        %v5523 = vshrl.u32 %v5522, 7
        %v5524 = vsub.s32 %v5521, %v5523
        %v5525 = vrot.slane %v5286, %v5524
        %v5527 = vunpack.c.l.s4 1983009808
        %v5528 = vunpack.c.0.s8 %v5527
        %v5529 = vlaneseq
        %v5530 = vshrl.u32 %v5529, 7
        %v5531 = vsub.s32 %v5528, %v5530
        %v5532 = vrot.slane %v5518, %v5531
        %v5533 = vcombine.high %v5525, %v5525
        %v5534 = vcombine.high %v5532, %v5532
        %v5535 = vcombine.high %v5289, %v5289
        %v5537 = vunpack.c.l.s4 1983009808
        %v5538 = vunpack.c.0.s8 %v5537
        %v5539 = vlaneseq
        %v5540 = vshrl.u32 %v5539, 7
        %v5541 = vsub.s32 %v5538, %v5540
        %v5542 = vrot.slane %v5289, %v5541
        %v5544 = vunpack.c.l.s4 1983009808
        %v5545 = vunpack.c.0.s8 %v5544
        %v5546 = vlaneseq
        %v5547 = vshrl.u32 %v5546, 7
        %v5548 = vsub.s32 %v5545, %v5547
        %v5549 = vrot.slane %v5535, %v5548
        %v5550 = vcombine.high %v5542, %v5542
        %v5551 = vcombine.high %v5549, %v5549
        %v5552 = vcombine.high %v5294, %v5294
        %v5554 = vunpack.c.l.s4 1983009808
        %v5555 = vunpack.c.0.s8 %v5554
        %v5556 = vlaneseq
        %v5557 = vshrl.u32 %v5556, 7
        %v5558 = vsub.s32 %v5555, %v5557
        %v5559 = vrot.slane %v5294, %v5558
        %v5561 = vunpack.c.l.s4 1983009808
        %v5562 = vunpack.c.0.s8 %v5561
        %v5563 = vlaneseq
        %v5564 = vshrl.u32 %v5563, 7
        %v5565 = vsub.s32 %v5562, %v5564
        %v5566 = vrot.slane %v5552, %v5565
        %v5567 = vcombine.high %v5559, %v5559
        %v5568 = vcombine.high %v5566, %v5566
        %v5569 = vcombine.high %v5297, %v5297
        %v5571 = vunpack.c.l.s4 1983009808
        %v5572 = vunpack.c.0.s8 %v5571
        %v5573 = vlaneseq
        %v5574 = vshrl.u32 %v5573, 7
        %v5575 = vsub.s32 %v5572, %v5574
        %v5576 = vrot.slane %v5297, %v5575
        %v5578 = vunpack.c.l.s4 1983009808
        %v5579 = vunpack.c.0.s8 %v5578
        %v5580 = vlaneseq
        %v5581 = vshrl.u32 %v5580, 7
        %v5582 = vsub.s32 %v5579, %v5581
        %v5583 = vrot.slane %v5569, %v5582
        %v5584 = vcombine.high %v5576, %v5576
        %v5585 = vcombine.high %v5583, %v5583
        %v5586 = vcombine.high %v5302, %v5302
        %v5588 = vunpack.c.l.s4 1983009808
        %v5589 = vunpack.c.0.s8 %v5588
        %v5590 = vlaneseq
        %v5591 = vshrl.u32 %v5590, 7
        %v5592 = vsub.s32 %v5589, %v5591
        %v5593 = vrot.slane %v5302, %v5592
        %v5595 = vunpack.c.l.s4 1983009808
        %v5596 = vunpack.c.0.s8 %v5595
        %v5597 = vlaneseq
        %v5598 = vshrl.u32 %v5597, 7
        %v5599 = vsub.s32 %v5596, %v5598
        %v5600 = vrot.slane %v5586, %v5599
        %v5601 = vcombine.high %v5593, %v5593
        %v5602 = vcombine.high %v5600, %v5600
        %v5603 = vcombine.high %v5305, %v5305
        %v5605 = vunpack.c.l.s4 1983009808
        %v5606 = vunpack.c.0.s8 %v5605
        %v5607 = vlaneseq
        %v5608 = vshrl.u32 %v5607, 7
        %v5609 = vsub.s32 %v5606, %v5608
        %v5610 = vrot.slane %v5305, %v5609
        %v5612 = vunpack.c.l.s4 1983009808
        %v5613 = vunpack.c.0.s8 %v5612
        %v5614 = vlaneseq
        %v5615 = vshrl.u32 %v5614, 7
        %v5616 = vsub.s32 %v5613, %v5615
        %v5617 = vrot.slane %v5603, %v5616
        %v5618 = vcombine.high %v5610, %v5610
        %v5619 = vcombine.high %v5617, %v5617
        %v5620 = vcombine.high %v5310, %v5310
        %v5622 = vunpack.c.l.s4 1983009808
        %v5623 = vunpack.c.0.s8 %v5622
        %v5624 = vlaneseq
        %v5625 = vshrl.u32 %v5624, 7
        %v5626 = vsub.s32 %v5623, %v5625
        %v5627 = vrot.slane %v5310, %v5626
        %v5629 = vunpack.c.l.s4 1983009808
        %v5630 = vunpack.c.0.s8 %v5629
        %v5631 = vlaneseq
        %v5632 = vshrl.u32 %v5631, 7
        %v5633 = vsub.s32 %v5630, %v5632
        %v5634 = vrot.slane %v5620, %v5633
        %v5635 = vcombine.high %v5627, %v5627
        %v5636 = vcombine.high %v5634, %v5634
        %v5637 = vcombine.high %v5313, %v5313
        %v5639 = vunpack.c.l.s4 1983009808
        %v5640 = vunpack.c.0.s8 %v5639
        %v5641 = vlaneseq
        %v5642 = vshrl.u32 %v5641, 7
        %v5643 = vsub.s32 %v5640, %v5642
        %v5644 = vrot.slane %v5313, %v5643
        %v5646 = vunpack.c.l.s4 1983009808
        %v5647 = vunpack.c.0.s8 %v5646
        %v5648 = vlaneseq
        %v5649 = vshrl.u32 %v5648, 7
        %v5650 = vsub.s32 %v5647, %v5649
        %v5651 = vrot.slane %v5637, %v5650
        %v5652 = vcombine.high %v5644, %v5644
        %v5653 = vcombine.high %v5651, %v5651
        %v5654 = vcombine.high %v5318, %v5318
        %v5656 = vunpack.c.l.s4 1983009808
        %v5657 = vunpack.c.0.s8 %v5656
        %v5658 = vlaneseq
        %v5659 = vshrl.u32 %v5658, 7
        %v5660 = vsub.s32 %v5657, %v5659
        %v5661 = vrot.slane %v5318, %v5660
        %v5663 = vunpack.c.l.s4 1983009808
        %v5664 = vunpack.c.0.s8 %v5663
        %v5665 = vlaneseq
        %v5666 = vshrl.u32 %v5665, 7
        %v5667 = vsub.s32 %v5664, %v5666
        %v5668 = vrot.slane %v5654, %v5667
        %v5669 = vcombine.high %v5661, %v5661
        %v5670 = vcombine.high %v5668, %v5668
        %v5671 = vcombine.high %v5321, %v5321
        %v5673 = vunpack.c.l.s4 1983009808
        %v5674 = vunpack.c.0.s8 %v5673
        %v5675 = vlaneseq
        %v5676 = vshrl.u32 %v5675, 7
        %v5677 = vsub.s32 %v5674, %v5676
        %v5678 = vrot.slane %v5321, %v5677
        %v5680 = vunpack.c.l.s4 1983009808
        %v5681 = vunpack.c.0.s8 %v5680
        %v5682 = vlaneseq
        %v5683 = vshrl.u32 %v5682, 7
        %v5684 = vsub.s32 %v5681, %v5683
        %v5685 = vrot.slane %v5671, %v5684
        %v5686 = vcombine.high %v5678, %v5678
        %v5687 = vcombine.high %v5685, %v5685
        %v5688 = vcombine.high %v5326, %v5326
        %v5690 = vunpack.c.l.s4 1983009808
        %v5691 = vunpack.c.0.s8 %v5690
        %v5692 = vlaneseq
        %v5693 = vshrl.u32 %v5692, 7
        %v5694 = vsub.s32 %v5691, %v5693
        %v5695 = vrot.slane %v5326, %v5694
        %v5697 = vunpack.c.l.s4 1983009808
        %v5698 = vunpack.c.0.s8 %v5697
        %v5699 = vlaneseq
        %v5700 = vshrl.u32 %v5699, 7
        %v5701 = vsub.s32 %v5698, %v5700
        %v5702 = vrot.slane %v5688, %v5701
        %v5703 = vcombine.high %v5695, %v5695
        %v5704 = vcombine.high %v5702, %v5702
        %v5705 = vcombine.high %v5329, %v5329
        %v5707 = vunpack.c.l.s4 1983009808
        %v5708 = vunpack.c.0.s8 %v5707
        %v5709 = vlaneseq
        %v5710 = vshrl.u32 %v5709, 7
        %v5711 = vsub.s32 %v5708, %v5710
        %v5712 = vrot.slane %v5329, %v5711
        %v5714 = vunpack.c.l.s4 1983009808
        %v5715 = vunpack.c.0.s8 %v5714
        %v5716 = vlaneseq
        %v5717 = vshrl.u32 %v5716, 7
        %v5718 = vsub.s32 %v5715, %v5717
        %v5719 = vrot.slane %v5705, %v5718
        %v5720 = vcombine.high %v5712, %v5712
        %v5721 = vcombine.high %v5719, %v5719
        %v5722 = vcombine.high %v5334, %v5334
        %v5724 = vunpack.c.l.s4 1983009808
        %v5725 = vunpack.c.0.s8 %v5724
        %v5726 = vlaneseq
        %v5727 = vshrl.u32 %v5726, 7
        %v5728 = vsub.s32 %v5725, %v5727
        %v5729 = vrot.slane %v5334, %v5728
        %v5731 = vunpack.c.l.s4 1983009808
        %v5732 = vunpack.c.0.s8 %v5731
        %v5733 = vlaneseq
        %v5734 = vshrl.u32 %v5733, 7
        %v5735 = vsub.s32 %v5732, %v5734
        %v5736 = vrot.slane %v5722, %v5735
        %v5737 = vcombine.high %v5729, %v5729
        %v5738 = vcombine.high %v5736, %v5736
        %v5739 = vcombine.high %v5337, %v5337
        %v5741 = vunpack.c.l.s4 1983009808
        %v5742 = vunpack.c.0.s8 %v5741
        %v5743 = vlaneseq
        %v5744 = vshrl.u32 %v5743, 7
        %v5745 = vsub.s32 %v5742, %v5744
        %v5746 = vrot.slane %v5337, %v5745
        %v5748 = vunpack.c.l.s4 1983009808
        %v5749 = vunpack.c.0.s8 %v5748
        %v5750 = vlaneseq
        %v5751 = vshrl.u32 %v5750, 7
        %v5752 = vsub.s32 %v5749, %v5751
        %v5753 = vrot.slane %v5739, %v5752
        %v5754 = vcombine.high %v5746, %v5746
        %v5755 = vcombine.high %v5753, %v5753
        %v5756 = vcombine.high %v5342, %v5342
        %v5758 = vunpack.c.l.s4 1983009808
        %v5759 = vunpack.c.0.s8 %v5758
        %v5760 = vlaneseq
        %v5761 = vshrl.u32 %v5760, 7
        %v5762 = vsub.s32 %v5759, %v5761
        %v5763 = vrot.slane %v5342, %v5762
        %v5765 = vunpack.c.l.s4 1983009808
        %v5766 = vunpack.c.0.s8 %v5765
        %v5767 = vlaneseq
        %v5768 = vshrl.u32 %v5767, 7
        %v5769 = vsub.s32 %v5766, %v5768
        %v5770 = vrot.slane %v5756, %v5769
        %v5771 = vcombine.high %v5763, %v5763
        %v5772 = vcombine.high %v5770, %v5770
        %v5773 = vcombine.high %v5345, %v5345
        %v5775 = vunpack.c.l.s4 1983009808
        %v5776 = vunpack.c.0.s8 %v5775
        %v5777 = vlaneseq
        %v5778 = vshrl.u32 %v5777, 7
        %v5779 = vsub.s32 %v5776, %v5778
        %v5780 = vrot.slane %v5345, %v5779
        %v5782 = vunpack.c.l.s4 1983009808
        %v5783 = vunpack.c.0.s8 %v5782
        %v5784 = vlaneseq
        %v5785 = vshrl.u32 %v5784, 7
        %v5786 = vsub.s32 %v5783, %v5785
        %v5787 = vrot.slane %v5773, %v5786
        %v5788 = vcombine.high %v5780, %v5780
        %v5789 = vcombine.high %v5787, %v5787
        %v5790 = vcombine.high %v5350, %v5350
        %v5792 = vunpack.c.l.s4 1983009808
        %v5793 = vunpack.c.0.s8 %v5792
        %v5794 = vlaneseq
        %v5795 = vshrl.u32 %v5794, 7
        %v5796 = vsub.s32 %v5793, %v5795
        %v5797 = vrot.slane %v5350, %v5796
        %v5799 = vunpack.c.l.s4 1983009808
        %v5800 = vunpack.c.0.s8 %v5799
        %v5801 = vlaneseq
        %v5802 = vshrl.u32 %v5801, 7
        %v5803 = vsub.s32 %v5800, %v5802
        %v5804 = vrot.slane %v5790, %v5803
        %v5805 = vcombine.high %v5797, %v5797
        %v5806 = vcombine.high %v5804, %v5804
        %v5807 = vcombine.high %v5353, %v5353
        %v5809 = vunpack.c.l.s4 1983009808
        %v5810 = vunpack.c.0.s8 %v5809
        %v5811 = vlaneseq
        %v5812 = vshrl.u32 %v5811, 7
        %v5813 = vsub.s32 %v5810, %v5812
        %v5814 = vrot.slane %v5353, %v5813
        %v5816 = vunpack.c.l.s4 1983009808
        %v5817 = vunpack.c.0.s8 %v5816
        %v5818 = vlaneseq
        %v5819 = vshrl.u32 %v5818, 7
        %v5820 = vsub.s32 %v5817, %v5819
        %v5821 = vrot.slane %v5807, %v5820
        %v5822 = vcombine.high %v5814, %v5814
        %v5823 = vcombine.high %v5821, %v5821
        %v5824 = vcombine.high %v5358, %v5358
        %v5826 = vunpack.c.l.s4 1983009808
        %v5827 = vunpack.c.0.s8 %v5826
        %v5828 = vlaneseq
        %v5829 = vshrl.u32 %v5828, 7
        %v5830 = vsub.s32 %v5827, %v5829
        %v5831 = vrot.slane %v5358, %v5830
        %v5833 = vunpack.c.l.s4 1983009808
        %v5834 = vunpack.c.0.s8 %v5833
        %v5835 = vlaneseq
        %v5836 = vshrl.u32 %v5835, 7
        %v5837 = vsub.s32 %v5834, %v5836
        %v5838 = vrot.slane %v5824, %v5837
        %v5839 = vcombine.high %v5831, %v5831
        %v5840 = vcombine.high %v5838, %v5838
        %v5841 = vcombine.high %v5361, %v5361
        %v5843 = vunpack.c.l.s4 1983009808
        %v5844 = vunpack.c.0.s8 %v5843
        %v5845 = vlaneseq
        %v5846 = vshrl.u32 %v5845, 7
        %v5847 = vsub.s32 %v5844, %v5846
        %v5848 = vrot.slane %v5361, %v5847
        %v5850 = vunpack.c.l.s4 1983009808
        %v5851 = vunpack.c.0.s8 %v5850
        %v5852 = vlaneseq
        %v5853 = vshrl.u32 %v5852, 7
        %v5854 = vsub.s32 %v5851, %v5853
        %v5855 = vrot.slane %v5841, %v5854
        %v5856 = vcombine.high %v5848, %v5848
        %v5857 = vcombine.high %v5855, %v5855
        %v5858 = vcombine.high %v5366, %v5366
        %v5860 = vunpack.c.l.s4 1983009808
        %v5861 = vunpack.c.0.s8 %v5860
        %v5862 = vlaneseq
        %v5863 = vshrl.u32 %v5862, 7
        %v5864 = vsub.s32 %v5861, %v5863
        %v5865 = vrot.slane %v5366, %v5864
        %v5867 = vunpack.c.l.s4 1983009808
        %v5868 = vunpack.c.0.s8 %v5867
        %v5869 = vlaneseq
        %v5870 = vshrl.u32 %v5869, 7
        %v5871 = vsub.s32 %v5868, %v5870
        %v5872 = vrot.slane %v5858, %v5871
        %v5873 = vcombine.high %v5865, %v5865
        %v5874 = vcombine.high %v5872, %v5872
        %v5875 = vcombine.high %v5369, %v5369
        %v5877 = vunpack.c.l.s4 1983009808
        %v5878 = vunpack.c.0.s8 %v5877
        %v5879 = vlaneseq
        %v5880 = vshrl.u32 %v5879, 7
        %v5881 = vsub.s32 %v5878, %v5880
        %v5882 = vrot.slane %v5369, %v5881
        %v5884 = vunpack.c.l.s4 1983009808
        %v5885 = vunpack.c.0.s8 %v5884
        %v5886 = vlaneseq
        %v5887 = vshrl.u32 %v5886, 7
        %v5888 = vsub.s32 %v5885, %v5887
        %v5889 = vrot.slane %v5875, %v5888
        %v5890 = vcombine.high %v5882, %v5882
        %v5891 = vcombine.high %v5889, %v5889
        %v5892 = vcombine.high %v5374, %v5374
        %v5894 = vunpack.c.l.s4 1983009808
        %v5895 = vunpack.c.0.s8 %v5894
        %v5896 = vlaneseq
        %v5897 = vshrl.u32 %v5896, 7
        %v5898 = vsub.s32 %v5895, %v5897
        %v5899 = vrot.slane %v5374, %v5898
        %v5901 = vunpack.c.l.s4 1983009808
        %v5902 = vunpack.c.0.s8 %v5901
        %v5903 = vlaneseq
        %v5904 = vshrl.u32 %v5903, 7
        %v5905 = vsub.s32 %v5902, %v5904
        %v5906 = vrot.slane %v5892, %v5905
        %v5907 = vcombine.high %v5899, %v5899
        %v5908 = vcombine.high %v5906, %v5906
        %v5909 = vcombine.high %v5377, %v5377
        %v5911 = vunpack.c.l.s4 1983009808
        %v5912 = vunpack.c.0.s8 %v5911
        %v5913 = vlaneseq
        %v5914 = vshrl.u32 %v5913, 7
        %v5915 = vsub.s32 %v5912, %v5914
        %v5916 = vrot.slane %v5377, %v5915
        %v5918 = vunpack.c.l.s4 1983009808
        %v5919 = vunpack.c.0.s8 %v5918
        %v5920 = vlaneseq
        %v5921 = vshrl.u32 %v5920, 7
        %v5922 = vsub.s32 %v5919, %v5921
        %v5923 = vrot.slane %v5909, %v5922
        %v5924 = vcombine.high %v5916, %v5916
        %v5925 = vcombine.high %v5923, %v5923
        %v5926 = vcombine.high %v5382, %v5382
        %v5928 = vunpack.c.l.s4 1983009808
        %v5929 = vunpack.c.0.s8 %v5928
        %v5930 = vlaneseq
        %v5931 = vshrl.u32 %v5930, 7
        %v5932 = vsub.s32 %v5929, %v5931
        %v5933 = vrot.slane %v5382, %v5932
        %v5935 = vunpack.c.l.s4 1983009808
        %v5936 = vunpack.c.0.s8 %v5935
        %v5937 = vlaneseq
        %v5938 = vshrl.u32 %v5937, 7
        %v5939 = vsub.s32 %v5936, %v5938
        %v5940 = vrot.slane %v5926, %v5939
        %v5941 = vcombine.high %v5933, %v5933
        %v5942 = vcombine.high %v5940, %v5940
        %v5943 = vcombine.high %v5385, %v5385
        %v5945 = vunpack.c.l.s4 1983009808
        %v5946 = vunpack.c.0.s8 %v5945
        %v5947 = vlaneseq
        %v5948 = vshrl.u32 %v5947, 7
        %v5949 = vsub.s32 %v5946, %v5948
        %v5950 = vrot.slane %v5385, %v5949
        %v5952 = vunpack.c.l.s4 1983009808
        %v5953 = vunpack.c.0.s8 %v5952
        %v5954 = vlaneseq
        %v5955 = vshrl.u32 %v5954, 7
        %v5956 = vsub.s32 %v5953, %v5955
        %v5957 = vrot.slane %v5943, %v5956
        %v5958 = vcombine.high %v5950, %v5950
        %v5959 = vcombine.high %v5957, %v5957
        %v5960 = vcombine.high %v5390, %v5390
        %v5962 = vunpack.c.l.s4 1983009808
        %v5963 = vunpack.c.0.s8 %v5962
        %v5964 = vlaneseq
        %v5965 = vshrl.u32 %v5964, 7
        %v5966 = vsub.s32 %v5963, %v5965
        %v5967 = vrot.slane %v5390, %v5966
        %v5969 = vunpack.c.l.s4 1983009808
        %v5970 = vunpack.c.0.s8 %v5969
        %v5971 = vlaneseq
        %v5972 = vshrl.u32 %v5971, 7
        %v5973 = vsub.s32 %v5970, %v5972
        %v5974 = vrot.slane %v5960, %v5973
        %v5975 = vcombine.high %v5967, %v5967
        %v5976 = vcombine.high %v5974, %v5974
        %v5977 = vcombine.high %v5393, %v5393
        %v5979 = vunpack.c.l.s4 1983009808
        %v5980 = vunpack.c.0.s8 %v5979
        %v5981 = vlaneseq
        %v5982 = vshrl.u32 %v5981, 7
        %v5983 = vsub.s32 %v5980, %v5982
        %v5984 = vrot.slane %v5393, %v5983
        %v5986 = vunpack.c.l.s4 1983009808
        %v5987 = vunpack.c.0.s8 %v5986
        %v5988 = vlaneseq
        %v5989 = vshrl.u32 %v5988, 7
        %v5990 = vsub.s32 %v5987, %v5989
        %v5991 = vrot.slane %v5977, %v5990
        %v5992 = vcombine.high %v5984, %v5984
        %v5993 = vcombine.high %v5991, %v5991
        %v5994 = vcombine.high %v5398, %v5398
        %v5996 = vunpack.c.l.s4 1983009808
        %v5997 = vunpack.c.0.s8 %v5996
        %v5998 = vlaneseq
        %v5999 = vshrl.u32 %v5998, 7
        %v6000 = vsub.s32 %v5997, %v5999
        %v6001 = vrot.slane %v5398, %v6000
        %v6003 = vunpack.c.l.s4 1983009808
        %v6004 = vunpack.c.0.s8 %v6003
        %v6005 = vlaneseq
        %v6006 = vshrl.u32 %v6005, 7
        %v6007 = vsub.s32 %v6004, %v6006
        %v6008 = vrot.slane %v5994, %v6007
        %v6009 = vcombine.high %v6001, %v6001
        %v6010 = vcombine.high %v6008, %v6008
        %v6011 = vcombine.high %v5401, %v5401
        %v6013 = vunpack.c.l.s4 1983009808
        %v6014 = vunpack.c.0.s8 %v6013
        %v6015 = vlaneseq
        %v6016 = vshrl.u32 %v6015, 7
        %v6017 = vsub.s32 %v6014, %v6016
        %v6018 = vrot.slane %v5401, %v6017
        %v6020 = vunpack.c.l.s4 1983009808
        %v6021 = vunpack.c.0.s8 %v6020
        %v6022 = vlaneseq
        %v6023 = vshrl.u32 %v6022, 7
        %v6024 = vsub.s32 %v6021, %v6023
        %v6025 = vrot.slane %v6011, %v6024
        %v6026 = vcombine.high %v6018, %v6018
        %v6027 = vcombine.high %v6025, %v6025
        %v6028 = vcombine.high %v5406, %v5406
        %v6030 = vunpack.c.l.s4 1983009808
        %v6031 = vunpack.c.0.s8 %v6030
        %v6032 = vlaneseq
        %v6033 = vshrl.u32 %v6032, 7
        %v6034 = vsub.s32 %v6031, %v6033
        %v6035 = vrot.slane %v5406, %v6034
        %v6037 = vunpack.c.l.s4 1983009808
        %v6038 = vunpack.c.0.s8 %v6037
        %v6039 = vlaneseq
        %v6040 = vshrl.u32 %v6039, 7
        %v6041 = vsub.s32 %v6038, %v6040
        %v6042 = vrot.slane %v6028, %v6041
        %v6043 = vcombine.high %v6035, %v6035
        %v6044 = vcombine.high %v6042, %v6042
        %v6045 = vcombine.high %v5409, %v5409
        %v6047 = vunpack.c.l.s4 1983009808
        %v6048 = vunpack.c.0.s8 %v6047
        %v6049 = vlaneseq
        %v6050 = vshrl.u32 %v6049, 7
        %v6051 = vsub.s32 %v6048, %v6050
        %v6052 = vrot.slane %v5409, %v6051
        %v6054 = vunpack.c.l.s4 1983009808
        %v6055 = vunpack.c.0.s8 %v6054
        %v6056 = vlaneseq
        %v6057 = vshrl.u32 %v6056, 7
        %v6058 = vsub.s32 %v6055, %v6057
        %v6059 = vrot.slane %v6045, %v6058
        %v6060 = vcombine.high %v6052, %v6052
        %v6061 = vcombine.high %v6059, %v6059
        %v6062 = vcombine.high %v5414, %v5414
        %v6064 = vunpack.c.l.s4 1983009808
        %v6065 = vunpack.c.0.s8 %v6064
        %v6066 = vlaneseq
        %v6067 = vshrl.u32 %v6066, 7
        %v6068 = vsub.s32 %v6065, %v6067
        %v6069 = vrot.slane %v5414, %v6068
        %v6071 = vunpack.c.l.s4 1983009808
        %v6072 = vunpack.c.0.s8 %v6071
        %v6073 = vlaneseq
        %v6074 = vshrl.u32 %v6073, 7
        %v6075 = vsub.s32 %v6072, %v6074
        %v6076 = vrot.slane %v6062, %v6075
        %v6077 = vcombine.high %v6069, %v6069
        %v6078 = vcombine.high %v6076, %v6076
        %v6079 = vcombine.high %v5417, %v5417
        %v6081 = vunpack.c.l.s4 1983009808
        %v6082 = vunpack.c.0.s8 %v6081
        %v6083 = vlaneseq
        %v6084 = vshrl.u32 %v6083, 7
        %v6085 = vsub.s32 %v6082, %v6084
        %v6086 = vrot.slane %v5417, %v6085
        %v6088 = vunpack.c.l.s4 1983009808
        %v6089 = vunpack.c.0.s8 %v6088
        %v6090 = vlaneseq
        %v6091 = vshrl.u32 %v6090, 7
        %v6092 = vsub.s32 %v6089, %v6091
        %v6093 = vrot.slane %v6079, %v6092
        %v6094 = vcombine.high %v6086, %v6086
        %v6095 = vcombine.high %v6093, %v6093
        %v6096 = vcombine.high %v5422, %v5422
        %v6098 = vunpack.c.l.s4 1983009808
        %v6099 = vunpack.c.0.s8 %v6098
        %v6100 = vlaneseq
        %v6101 = vshrl.u32 %v6100, 7
        %v6102 = vsub.s32 %v6099, %v6101
        %v6103 = vrot.slane %v5422, %v6102
        %v6105 = vunpack.c.l.s4 1983009808
        %v6106 = vunpack.c.0.s8 %v6105
        %v6107 = vlaneseq
        %v6108 = vshrl.u32 %v6107, 7
        %v6109 = vsub.s32 %v6106, %v6108
        %v6110 = vrot.slane %v6096, %v6109
        %v6111 = vcombine.high %v6103, %v6103
        %v6112 = vcombine.high %v6110, %v6110
        %v6113 = vcombine.high %v5425, %v5425
        %v6115 = vunpack.c.l.s4 1983009808
        %v6116 = vunpack.c.0.s8 %v6115
        %v6117 = vlaneseq
        %v6118 = vshrl.u32 %v6117, 7
        %v6119 = vsub.s32 %v6116, %v6118
        %v6120 = vrot.slane %v5425, %v6119
        %v6122 = vunpack.c.l.s4 1983009808
        %v6123 = vunpack.c.0.s8 %v6122
        %v6124 = vlaneseq
        %v6125 = vshrl.u32 %v6124, 7
        %v6126 = vsub.s32 %v6123, %v6125
        %v6127 = vrot.slane %v6113, %v6126
        %v6128 = vcombine.high %v6120, %v6120
        %v6129 = vcombine.high %v6127, %v6127
        %v6130 = vcombine.high %v5430, %v5430
        %v6132 = vunpack.c.l.s4 1983009808
        %v6133 = vunpack.c.0.s8 %v6132
        %v6134 = vlaneseq
        %v6135 = vshrl.u32 %v6134, 7
        %v6136 = vsub.s32 %v6133, %v6135
        %v6137 = vrot.slane %v5430, %v6136
        %v6139 = vunpack.c.l.s4 1983009808
        %v6140 = vunpack.c.0.s8 %v6139
        %v6141 = vlaneseq
        %v6142 = vshrl.u32 %v6141, 7
        %v6143 = vsub.s32 %v6140, %v6142
        %v6144 = vrot.slane %v6130, %v6143
        %v6145 = vcombine.high %v6137, %v6137
        %v6146 = vcombine.high %v6144, %v6144
        %v6147 = vcombine.high %v5433, %v5433
        %v6149 = vunpack.c.l.s4 1983009808
        %v6150 = vunpack.c.0.s8 %v6149
        %v6151 = vlaneseq
        %v6152 = vshrl.u32 %v6151, 7
        %v6153 = vsub.s32 %v6150, %v6152
        %v6154 = vrot.slane %v5433, %v6153
        %v6156 = vunpack.c.l.s4 1983009808
        %v6157 = vunpack.c.0.s8 %v6156
        %v6158 = vlaneseq
        %v6159 = vshrl.u32 %v6158, 7
        %v6160 = vsub.s32 %v6157, %v6159
        %v6161 = vrot.slane %v6147, %v6160
        %v6162 = vcombine.high %v6154, %v6154
        %v6163 = vcombine.high %v6161, %v6161
        %v6165 = vunpack.c.l.s4 1983009808
        %v6166 = vunpack.c.0.s8 %v6165
        %v6167 = vlaneseq
        %v6168 = vshrl.u32 %v6167, 7
        %v6169 = vsub.s32 %v6166, %v6168
        %v6170 = vrot.slane %v5438, %v6169
        %v6171 = vcombine.high %v6170, %v6170
        %v6334 = vcombine.low %v5491, %v5499
        %v6335 = vcombine.low %v5498, %v5500
        %v6337 = vunpack.c.l.s4 1983009808
        %v6338 = vunpack.c.0.s8 %v6337
        %v6339 = vlaneseq
        %v6340 = vshrl.u32 %v6339, 7
        %v6341 = vsub.s32 %v6338, %v6340
        %v6342 = vrot.slane %v6334, %v6341
        %v6344 = vunpack.c.l.s4 1983009808
        %v6345 = vunpack.c.0.s8 %v6344
        %v6346 = vlaneseq
        %v6347 = vshrl.u32 %v6346, 7
        %v6348 = vsub.s32 %v6345, %v6347
        %v6349 = vrot.slane %v6335, %v6348
        %v6350 = vcombine.low %v6342, %v6349
        %v6351 = vcombine.low %v5508, %v5516
        %v6352 = vcombine.low %v5515, %v5517
        %v6354 = vunpack.c.l.s4 1983009808
        %v6355 = vunpack.c.0.s8 %v6354
        %v6356 = vlaneseq
        %v6357 = vshrl.u32 %v6356, 7
        %v6358 = vsub.s32 %v6355, %v6357
        %v6359 = vrot.slane %v6351, %v6358
        %v6361 = vunpack.c.l.s4 1983009808
        %v6362 = vunpack.c.0.s8 %v6361
        %v6363 = vlaneseq
        %v6364 = vshrl.u32 %v6363, 7
        %v6365 = vsub.s32 %v6362, %v6364
        %v6366 = vrot.slane %v6352, %v6365
        %v6367 = vcombine.low %v6359, %v6366
        %v6369 = vunpack.c.l.s4 1983009808
        %v6370 = vunpack.c.0.s8 %v6369
        %v6371 = vlaneseq
        %v6372 = vshrl.u32 %v6371, 7
        %v6373 = vsub.s32 %v6370, %v6372
        %v6374 = vrot.slane %v5525, %v6373
        %v6375 = vcombine.low %v5533, %v5532
        %v6376 = vcombine.low %v5534, %v5542
        %v6378 = vunpack.c.l.s4 1983009808
        %v6379 = vunpack.c.0.s8 %v6378
        %v6380 = vlaneseq
        %v6381 = vshrl.u32 %v6380, 7
        %v6382 = vsub.s32 %v6379, %v6381
        %v6383 = vrot.slane %v6375, %v6382
        %v6385 = vunpack.c.l.s4 1983009808
        %v6386 = vunpack.c.0.s8 %v6385
        %v6387 = vlaneseq
        %v6388 = vshrl.u32 %v6387, 7
        %v6389 = vsub.s32 %v6386, %v6388
        %v6390 = vrot.slane %v6376, %v6389
        %v6391 = vcombine.low %v6383, %v6390
        %v6392 = vcombine.low %v5550, %v5549
        %v6393 = vcombine.low %v5551, %v5559
        %v6395 = vunpack.c.l.s4 1983009808
        %v6396 = vunpack.c.0.s8 %v6395
        %v6397 = vlaneseq
        %v6398 = vshrl.u32 %v6397, 7
        %v6399 = vsub.s32 %v6396, %v6398
        %v6400 = vrot.slane %v6392, %v6399
        %v6402 = vunpack.c.l.s4 1983009808
        %v6403 = vunpack.c.0.s8 %v6402
        %v6404 = vlaneseq
        %v6405 = vshrl.u32 %v6404, 7
        %v6406 = vsub.s32 %v6403, %v6405
        %v6407 = vrot.slane %v6393, %v6406
        %v6408 = vcombine.low %v6400, %v6407
        %v6410 = vunpack.c.l.s4 1983009808
        %v6411 = vunpack.c.0.s8 %v6410
        %v6412 = vlaneseq
        %v6413 = vshrl.u32 %v6412, 7
        %v6414 = vsub.s32 %v6411, %v6413
        %v6415 = vrot.slane %v5567, %v6414
        %v6416 = vcombine.low %v5566, %v5568
        %v6417 = vcombine.low %v5576, %v5584
        %v6419 = vunpack.c.l.s4 1983009808
        %v6420 = vunpack.c.0.s8 %v6419
        %v6421 = vlaneseq
        %v6422 = vshrl.u32 %v6421, 7
        %v6423 = vsub.s32 %v6420, %v6422
        %v6424 = vrot.slane %v6416, %v6423
        %v6426 = vunpack.c.l.s4 1983009808
        %v6427 = vunpack.c.0.s8 %v6426
        %v6428 = vlaneseq
        %v6429 = vshrl.u32 %v6428, 7
        %v6430 = vsub.s32 %v6427, %v6429
        %v6431 = vrot.slane %v6417, %v6430
        %v6432 = vcombine.low %v6424, %v6431
        %v6433 = vcombine.low %v5583, %v5585
        %v6434 = vcombine.low %v5593, %v5601
        %v6436 = vunpack.c.l.s4 1983009808
        %v6437 = vunpack.c.0.s8 %v6436
        %v6438 = vlaneseq
        %v6439 = vshrl.u32 %v6438, 7
        %v6440 = vsub.s32 %v6437, %v6439
        %v6441 = vrot.slane %v6433, %v6440
        %v6443 = vunpack.c.l.s4 1983009808
        %v6444 = vunpack.c.0.s8 %v6443
        %v6445 = vlaneseq
        %v6446 = vshrl.u32 %v6445, 7
        %v6447 = vsub.s32 %v6444, %v6446
        %v6448 = vrot.slane %v6434, %v6447
        %v6449 = vcombine.low %v6441, %v6448
        %v6451 = vunpack.c.l.s4 1983009808
        %v6452 = vunpack.c.0.s8 %v6451
        %v6453 = vlaneseq
        %v6454 = vshrl.u32 %v6453, 7
        %v6455 = vsub.s32 %v6452, %v6454
        %v6456 = vrot.slane %v5600, %v6455
        %v6457 = vcombine.low %v5602, %v5610
        %v6458 = vcombine.low %v5618, %v5617
        %v6460 = vunpack.c.l.s4 1983009808
        %v6461 = vunpack.c.0.s8 %v6460
        %v6462 = vlaneseq
        %v6463 = vshrl.u32 %v6462, 7
        %v6464 = vsub.s32 %v6461, %v6463
        %v6465 = vrot.slane %v6457, %v6464
        %v6467 = vunpack.c.l.s4 1983009808
        %v6468 = vunpack.c.0.s8 %v6467
        %v6469 = vlaneseq
        %v6470 = vshrl.u32 %v6469, 7
        %v6471 = vsub.s32 %v6468, %v6470
        %v6472 = vrot.slane %v6458, %v6471
        %v6473 = vcombine.low %v6465, %v6472
        %v6474 = vcombine.low %v5619, %v5627
        %v6475 = vcombine.low %v5635, %v5634
        %v6477 = vunpack.c.l.s4 1983009808
        %v6478 = vunpack.c.0.s8 %v6477
        %v6479 = vlaneseq
        %v6480 = vshrl.u32 %v6479, 7
        %v6481 = vsub.s32 %v6478, %v6480
        %v6482 = vrot.slane %v6474, %v6481
        %v6484 = vunpack.c.l.s4 1983009808
        %v6485 = vunpack.c.0.s8 %v6484
        %v6486 = vlaneseq
        %v6487 = vshrl.u32 %v6486, 7
        %v6488 = vsub.s32 %v6485, %v6487
        %v6489 = vrot.slane %v6475, %v6488
        %v6490 = vcombine.low %v6482, %v6489
        %v6492 = vunpack.c.l.s4 1983009808
        %v6493 = vunpack.c.0.s8 %v6492
        %v6494 = vlaneseq
        %v6495 = vshrl.u32 %v6494, 7
        %v6496 = vsub.s32 %v6493, %v6495
        %v6497 = vrot.slane %v5636, %v6496
        %v6498 = vcombine.low %v5644, %v5652
        %v6499 = vcombine.low %v5651, %v5653
        %v6501 = vunpack.c.l.s4 1983009808
        %v6502 = vunpack.c.0.s8 %v6501
        %v6503 = vlaneseq
        %v6504 = vshrl.u32 %v6503, 7
        %v6505 = vsub.s32 %v6502, %v6504
        %v6506 = vrot.slane %v6498, %v6505
        %v6508 = vunpack.c.l.s4 1983009808
        %v6509 = vunpack.c.0.s8 %v6508
        %v6510 = vlaneseq
        %v6511 = vshrl.u32 %v6510, 7
        %v6512 = vsub.s32 %v6509, %v6511
        %v6513 = vrot.slane %v6499, %v6512
        %v6514 = vcombine.low %v6506, %v6513
        %v6515 = vcombine.low %v5661, %v5669
        %v6516 = vcombine.low %v5668, %v5670
        %v6518 = vunpack.c.l.s4 1983009808
        %v6519 = vunpack.c.0.s8 %v6518
        %v6520 = vlaneseq
        %v6521 = vshrl.u32 %v6520, 7
        %v6522 = vsub.s32 %v6519, %v6521
        %v6523 = vrot.slane %v6515, %v6522
        %v6525 = vunpack.c.l.s4 1983009808
        %v6526 = vunpack.c.0.s8 %v6525
        %v6527 = vlaneseq
        %v6528 = vshrl.u32 %v6527, 7
        %v6529 = vsub.s32 %v6526, %v6528
        %v6530 = vrot.slane %v6516, %v6529
        %v6531 = vcombine.low %v6523, %v6530
        %v6533 = vunpack.c.l.s4 1983009808
        %v6534 = vunpack.c.0.s8 %v6533
        %v6535 = vlaneseq
        %v6536 = vshrl.u32 %v6535, 7
        %v6537 = vsub.s32 %v6534, %v6536
        %v6538 = vrot.slane %v5678, %v6537
        %v6539 = vcombine.low %v5686, %v5685
        %v6540 = vcombine.low %v5687, %v5695
        %v6542 = vunpack.c.l.s4 1983009808
        %v6543 = vunpack.c.0.s8 %v6542
        %v6544 = vlaneseq
        %v6545 = vshrl.u32 %v6544, 7
        %v6546 = vsub.s32 %v6543, %v6545
        %v6547 = vrot.slane %v6539, %v6546
        %v6549 = vunpack.c.l.s4 1983009808
        %v6550 = vunpack.c.0.s8 %v6549
        %v6551 = vlaneseq
        %v6552 = vshrl.u32 %v6551, 7
        %v6553 = vsub.s32 %v6550, %v6552
        %v6554 = vrot.slane %v6540, %v6553
        %v6555 = vcombine.low %v6547, %v6554
        %v6556 = vcombine.low %v5703, %v5702
        %v6557 = vcombine.low %v5704, %v5712
        %v6559 = vunpack.c.l.s4 1983009808
        %v6560 = vunpack.c.0.s8 %v6559
        %v6561 = vlaneseq
        %v6562 = vshrl.u32 %v6561, 7
        %v6563 = vsub.s32 %v6560, %v6562
        %v6564 = vrot.slane %v6556, %v6563
        %v6566 = vunpack.c.l.s4 1983009808
        %v6567 = vunpack.c.0.s8 %v6566
        %v6568 = vlaneseq
        %v6569 = vshrl.u32 %v6568, 7
        %v6570 = vsub.s32 %v6567, %v6569
        %v6571 = vrot.slane %v6557, %v6570
        %v6572 = vcombine.low %v6564, %v6571
        %v6574 = vunpack.c.l.s4 1983009808
        %v6575 = vunpack.c.0.s8 %v6574
        %v6576 = vlaneseq
        %v6577 = vshrl.u32 %v6576, 7
        %v6578 = vsub.s32 %v6575, %v6577
        %v6579 = vrot.slane %v5720, %v6578
        %v6580 = vcombine.low %v5719, %v5721
        %v6581 = vcombine.low %v5729, %v5737
        %v6583 = vunpack.c.l.s4 1983009808
        %v6584 = vunpack.c.0.s8 %v6583
        %v6585 = vlaneseq
        %v6586 = vshrl.u32 %v6585, 7
        %v6587 = vsub.s32 %v6584, %v6586
        %v6588 = vrot.slane %v6580, %v6587
        %v6590 = vunpack.c.l.s4 1983009808
        %v6591 = vunpack.c.0.s8 %v6590
        %v6592 = vlaneseq
        %v6593 = vshrl.u32 %v6592, 7
        %v6594 = vsub.s32 %v6591, %v6593
        %v6595 = vrot.slane %v6581, %v6594
        %v6596 = vcombine.low %v6588, %v6595
        %v6597 = vcombine.low %v5736, %v5738
        %v6598 = vcombine.low %v5746, %v5754
        %v6600 = vunpack.c.l.s4 1983009808
        %v6601 = vunpack.c.0.s8 %v6600
        %v6602 = vlaneseq
        %v6603 = vshrl.u32 %v6602, 7
        %v6604 = vsub.s32 %v6601, %v6603
        %v6605 = vrot.slane %v6597, %v6604
        %v6607 = vunpack.c.l.s4 1983009808
        %v6608 = vunpack.c.0.s8 %v6607
        %v6609 = vlaneseq
        %v6610 = vshrl.u32 %v6609, 7
        %v6611 = vsub.s32 %v6608, %v6610
        %v6612 = vrot.slane %v6598, %v6611
        %v6613 = vcombine.low %v6605, %v6612
        %v6615 = vunpack.c.l.s4 1983009808
        %v6616 = vunpack.c.0.s8 %v6615
        %v6617 = vlaneseq
        %v6618 = vshrl.u32 %v6617, 7
        %v6619 = vsub.s32 %v6616, %v6618
        %v6620 = vrot.slane %v5753, %v6619
        %v6621 = vcombine.low %v5755, %v5763
        %v6622 = vcombine.low %v5771, %v5770
        %v6624 = vunpack.c.l.s4 1983009808
        %v6625 = vunpack.c.0.s8 %v6624
        %v6626 = vlaneseq
        %v6627 = vshrl.u32 %v6626, 7
        %v6628 = vsub.s32 %v6625, %v6627
        %v6629 = vrot.slane %v6621, %v6628
        %v6631 = vunpack.c.l.s4 1983009808
        %v6632 = vunpack.c.0.s8 %v6631
        %v6633 = vlaneseq
        %v6634 = vshrl.u32 %v6633, 7
        %v6635 = vsub.s32 %v6632, %v6634
        %v6636 = vrot.slane %v6622, %v6635
        %v6637 = vcombine.low %v6629, %v6636
        %v6638 = vcombine.low %v5772, %v5780
        %v6639 = vcombine.low %v5788, %v5787
        %v6641 = vunpack.c.l.s4 1983009808
        %v6642 = vunpack.c.0.s8 %v6641
        %v6643 = vlaneseq
        %v6644 = vshrl.u32 %v6643, 7
        %v6645 = vsub.s32 %v6642, %v6644
        %v6646 = vrot.slane %v6638, %v6645
        %v6648 = vunpack.c.l.s4 1983009808
        %v6649 = vunpack.c.0.s8 %v6648
        %v6650 = vlaneseq
        %v6651 = vshrl.u32 %v6650, 7
        %v6652 = vsub.s32 %v6649, %v6651
        %v6653 = vrot.slane %v6639, %v6652
        %v6654 = vcombine.low %v6646, %v6653
        %v6656 = vunpack.c.l.s4 1983009808
        %v6657 = vunpack.c.0.s8 %v6656
        %v6658 = vlaneseq
        %v6659 = vshrl.u32 %v6658, 7
        %v6660 = vsub.s32 %v6657, %v6659
        %v6661 = vrot.slane %v5789, %v6660
        %v6662 = vcombine.low %v5797, %v5805
        %v6663 = vcombine.low %v5804, %v5806
        %v6665 = vunpack.c.l.s4 1983009808
        %v6666 = vunpack.c.0.s8 %v6665
        %v6667 = vlaneseq
        %v6668 = vshrl.u32 %v6667, 7
        %v6669 = vsub.s32 %v6666, %v6668
        %v6670 = vrot.slane %v6662, %v6669
        %v6672 = vunpack.c.l.s4 1983009808
        %v6673 = vunpack.c.0.s8 %v6672
        %v6674 = vlaneseq
        %v6675 = vshrl.u32 %v6674, 7
        %v6676 = vsub.s32 %v6673, %v6675
        %v6677 = vrot.slane %v6663, %v6676
        %v6678 = vcombine.low %v6670, %v6677
        %v6679 = vcombine.low %v5814, %v5822
        %v6680 = vcombine.low %v5821, %v5823
        %v6682 = vunpack.c.l.s4 1983009808
        %v6683 = vunpack.c.0.s8 %v6682
        %v6684 = vlaneseq
        %v6685 = vshrl.u32 %v6684, 7
        %v6686 = vsub.s32 %v6683, %v6685
        %v6687 = vrot.slane %v6679, %v6686
        %v6689 = vunpack.c.l.s4 1983009808
        %v6690 = vunpack.c.0.s8 %v6689
        %v6691 = vlaneseq
        %v6692 = vshrl.u32 %v6691, 7
        %v6693 = vsub.s32 %v6690, %v6692
        %v6694 = vrot.slane %v6680, %v6693
        %v6695 = vcombine.low %v6687, %v6694
        %v6697 = vunpack.c.l.s4 1983009808
        %v6698 = vunpack.c.0.s8 %v6697
        %v6699 = vlaneseq
        %v6700 = vshrl.u32 %v6699, 7
        %v6701 = vsub.s32 %v6698, %v6700
        %v6702 = vrot.slane %v5831, %v6701
        %v6703 = vcombine.low %v5839, %v5838
        %v6704 = vcombine.low %v5840, %v5848
        %v6706 = vunpack.c.l.s4 1983009808
        %v6707 = vunpack.c.0.s8 %v6706
        %v6708 = vlaneseq
        %v6709 = vshrl.u32 %v6708, 7
        %v6710 = vsub.s32 %v6707, %v6709
        %v6711 = vrot.slane %v6703, %v6710
        %v6713 = vunpack.c.l.s4 1983009808
        %v6714 = vunpack.c.0.s8 %v6713
        %v6715 = vlaneseq
        %v6716 = vshrl.u32 %v6715, 7
        %v6717 = vsub.s32 %v6714, %v6716
        %v6718 = vrot.slane %v6704, %v6717
        %v6719 = vcombine.low %v6711, %v6718
        %v6720 = vcombine.low %v5856, %v5855
        %v6721 = vcombine.low %v5857, %v5865
        %v6723 = vunpack.c.l.s4 1983009808
        %v6724 = vunpack.c.0.s8 %v6723
        %v6725 = vlaneseq
        %v6726 = vshrl.u32 %v6725, 7
        %v6727 = vsub.s32 %v6724, %v6726
        %v6728 = vrot.slane %v6720, %v6727
        %v6730 = vunpack.c.l.s4 1983009808
        %v6731 = vunpack.c.0.s8 %v6730
        %v6732 = vlaneseq
        %v6733 = vshrl.u32 %v6732, 7
        %v6734 = vsub.s32 %v6731, %v6733
        %v6735 = vrot.slane %v6721, %v6734
        %v6736 = vcombine.low %v6728, %v6735
        %v6738 = vunpack.c.l.s4 1983009808
        %v6739 = vunpack.c.0.s8 %v6738
        %v6740 = vlaneseq
        %v6741 = vshrl.u32 %v6740, 7
        %v6742 = vsub.s32 %v6739, %v6741
        %v6743 = vrot.slane %v5873, %v6742
        %v6744 = vcombine.low %v5872, %v5874
        %v6745 = vcombine.low %v5882, %v5890
        %v6747 = vunpack.c.l.s4 1983009808
        %v6748 = vunpack.c.0.s8 %v6747
        %v6749 = vlaneseq
        %v6750 = vshrl.u32 %v6749, 7
        %v6751 = vsub.s32 %v6748, %v6750
        %v6752 = vrot.slane %v6744, %v6751
        %v6754 = vunpack.c.l.s4 1983009808
        %v6755 = vunpack.c.0.s8 %v6754
        %v6756 = vlaneseq
        %v6757 = vshrl.u32 %v6756, 7
        %v6758 = vsub.s32 %v6755, %v6757
        %v6759 = vrot.slane %v6745, %v6758
        %v6760 = vcombine.low %v6752, %v6759
        %v6761 = vcombine.low %v5889, %v5891
        %v6762 = vcombine.low %v5899, %v5907
        %v6764 = vunpack.c.l.s4 1983009808
        %v6765 = vunpack.c.0.s8 %v6764
        %v6766 = vlaneseq
        %v6767 = vshrl.u32 %v6766, 7
        %v6768 = vsub.s32 %v6765, %v6767
        %v6769 = vrot.slane %v6761, %v6768
        %v6771 = vunpack.c.l.s4 1983009808
        %v6772 = vunpack.c.0.s8 %v6771
        %v6773 = vlaneseq
        %v6774 = vshrl.u32 %v6773, 7
        %v6775 = vsub.s32 %v6772, %v6774
        %v6776 = vrot.slane %v6762, %v6775
        %v6777 = vcombine.low %v6769, %v6776
        %v6779 = vunpack.c.l.s4 1983009808
        %v6780 = vunpack.c.0.s8 %v6779
        %v6781 = vlaneseq
        %v6782 = vshrl.u32 %v6781, 7
        %v6783 = vsub.s32 %v6780, %v6782
        %v6784 = vrot.slane %v5906, %v6783
        %v6785 = vcombine.low %v5908, %v5916
        %v6786 = vcombine.low %v5924, %v5923
        %v6788 = vunpack.c.l.s4 1983009808
        %v6789 = vunpack.c.0.s8 %v6788
        %v6790 = vlaneseq
        %v6791 = vshrl.u32 %v6790, 7
        %v6792 = vsub.s32 %v6789, %v6791
        %v6793 = vrot.slane %v6785, %v6792
        %v6795 = vunpack.c.l.s4 1983009808
        %v6796 = vunpack.c.0.s8 %v6795
        %v6797 = vlaneseq
        %v6798 = vshrl.u32 %v6797, 7
        %v6799 = vsub.s32 %v6796, %v6798
        %v6800 = vrot.slane %v6786, %v6799
        %v6801 = vcombine.low %v6793, %v6800
        %v6802 = vcombine.low %v5925, %v5933
        %v6803 = vcombine.low %v5941, %v5940
        %v6805 = vunpack.c.l.s4 1983009808
        %v6806 = vunpack.c.0.s8 %v6805
        %v6807 = vlaneseq
        %v6808 = vshrl.u32 %v6807, 7
        %v6809 = vsub.s32 %v6806, %v6808
        %v6810 = vrot.slane %v6802, %v6809
        %v6812 = vunpack.c.l.s4 1983009808
        %v6813 = vunpack.c.0.s8 %v6812
        %v6814 = vlaneseq
        %v6815 = vshrl.u32 %v6814, 7
        %v6816 = vsub.s32 %v6813, %v6815
        %v6817 = vrot.slane %v6803, %v6816
        %v6818 = vcombine.low %v6810, %v6817
        %v6820 = vunpack.c.l.s4 1983009808
        %v6821 = vunpack.c.0.s8 %v6820
        %v6822 = vlaneseq
        %v6823 = vshrl.u32 %v6822, 7
        %v6824 = vsub.s32 %v6821, %v6823
        %v6825 = vrot.slane %v5942, %v6824
        %v6826 = vcombine.low %v5950, %v5958
        %v6827 = vcombine.low %v5957, %v5959
        %v6829 = vunpack.c.l.s4 1983009808
        %v6830 = vunpack.c.0.s8 %v6829
        %v6831 = vlaneseq
        %v6832 = vshrl.u32 %v6831, 7
        %v6833 = vsub.s32 %v6830, %v6832
        %v6834 = vrot.slane %v6826, %v6833
        %v6836 = vunpack.c.l.s4 1983009808
        %v6837 = vunpack.c.0.s8 %v6836
        %v6838 = vlaneseq
        %v6839 = vshrl.u32 %v6838, 7
        %v6840 = vsub.s32 %v6837, %v6839
        %v6841 = vrot.slane %v6827, %v6840
        %v6842 = vcombine.low %v6834, %v6841
        %v6843 = vcombine.low %v5967, %v5975
        %v6844 = vcombine.low %v5974, %v5976
        %v6846 = vunpack.c.l.s4 1983009808
        %v6847 = vunpack.c.0.s8 %v6846
        %v6848 = vlaneseq
        %v6849 = vshrl.u32 %v6848, 7
        %v6850 = vsub.s32 %v6847, %v6849
        %v6851 = vrot.slane %v6843, %v6850
        %v6853 = vunpack.c.l.s4 1983009808
        %v6854 = vunpack.c.0.s8 %v6853
        %v6855 = vlaneseq
        %v6856 = vshrl.u32 %v6855, 7
        %v6857 = vsub.s32 %v6854, %v6856
        %v6858 = vrot.slane %v6844, %v6857
        %v6859 = vcombine.low %v6851, %v6858
        %v6861 = vunpack.c.l.s4 1983009808
        %v6862 = vunpack.c.0.s8 %v6861
        %v6863 = vlaneseq
        %v6864 = vshrl.u32 %v6863, 7
        %v6865 = vsub.s32 %v6862, %v6864
        %v6866 = vrot.slane %v5984, %v6865
        %v6867 = vcombine.low %v5992, %v5991
        %v6868 = vcombine.low %v5993, %v6001
        %v6870 = vunpack.c.l.s4 1983009808
        %v6871 = vunpack.c.0.s8 %v6870
        %v6872 = vlaneseq
        %v6873 = vshrl.u32 %v6872, 7
        %v6874 = vsub.s32 %v6871, %v6873
        %v6875 = vrot.slane %v6867, %v6874
        %v6877 = vunpack.c.l.s4 1983009808
        %v6878 = vunpack.c.0.s8 %v6877
        %v6879 = vlaneseq
        %v6880 = vshrl.u32 %v6879, 7
        %v6881 = vsub.s32 %v6878, %v6880
        %v6882 = vrot.slane %v6868, %v6881
        %v6883 = vcombine.low %v6875, %v6882
        %v6884 = vcombine.low %v6009, %v6008
        %v6885 = vcombine.low %v6010, %v6018
        %v6887 = vunpack.c.l.s4 1983009808
        %v6888 = vunpack.c.0.s8 %v6887
        %v6889 = vlaneseq
        %v6890 = vshrl.u32 %v6889, 7
        %v6891 = vsub.s32 %v6888, %v6890
        %v6892 = vrot.slane %v6884, %v6891
        %v6894 = vunpack.c.l.s4 1983009808
        %v6895 = vunpack.c.0.s8 %v6894
        %v6896 = vlaneseq
        %v6897 = vshrl.u32 %v6896, 7
        %v6898 = vsub.s32 %v6895, %v6897
        %v6899 = vrot.slane %v6885, %v6898
        %v6900 = vcombine.low %v6892, %v6899
        %v6902 = vunpack.c.l.s4 1983009808
        %v6903 = vunpack.c.0.s8 %v6902
        %v6904 = vlaneseq
        %v6905 = vshrl.u32 %v6904, 7
        %v6906 = vsub.s32 %v6903, %v6905
        %v6907 = vrot.slane %v6026, %v6906
        %v6908 = vcombine.low %v6025, %v6027
        %v6909 = vcombine.low %v6035, %v6043
        %v6911 = vunpack.c.l.s4 1983009808
        %v6912 = vunpack.c.0.s8 %v6911
        %v6913 = vlaneseq
        %v6914 = vshrl.u32 %v6913, 7
        %v6915 = vsub.s32 %v6912, %v6914
        %v6916 = vrot.slane %v6908, %v6915
        %v6918 = vunpack.c.l.s4 1983009808
        %v6919 = vunpack.c.0.s8 %v6918
        %v6920 = vlaneseq
        %v6921 = vshrl.u32 %v6920, 7
        %v6922 = vsub.s32 %v6919, %v6921
        %v6923 = vrot.slane %v6909, %v6922
        %v6924 = vcombine.low %v6916, %v6923
        %v6925 = vcombine.low %v6042, %v6044
        %v6926 = vcombine.low %v6052, %v6060
        %v6928 = vunpack.c.l.s4 1983009808
        %v6929 = vunpack.c.0.s8 %v6928
        %v6930 = vlaneseq
        %v6931 = vshrl.u32 %v6930, 7
        %v6932 = vsub.s32 %v6929, %v6931
        %v6933 = vrot.slane %v6925, %v6932
        %v6935 = vunpack.c.l.s4 1983009808
        %v6936 = vunpack.c.0.s8 %v6935
        %v6937 = vlaneseq
        %v6938 = vshrl.u32 %v6937, 7
        %v6939 = vsub.s32 %v6936, %v6938
        %v6940 = vrot.slane %v6926, %v6939
        %v6941 = vcombine.low %v6933, %v6940
        %v6943 = vunpack.c.l.s4 1983009808
        %v6944 = vunpack.c.0.s8 %v6943
        %v6945 = vlaneseq
        %v6946 = vshrl.u32 %v6945, 7
        %v6947 = vsub.s32 %v6944, %v6946
        %v6948 = vrot.slane %v6059, %v6947
        %v6949 = vcombine.low %v6061, %v6069
        %v6950 = vcombine.low %v6077, %v6076
        %v6952 = vunpack.c.l.s4 1983009808
        %v6953 = vunpack.c.0.s8 %v6952
        %v6954 = vlaneseq
        %v6955 = vshrl.u32 %v6954, 7
        %v6956 = vsub.s32 %v6953, %v6955
        %v6957 = vrot.slane %v6949, %v6956
        %v6959 = vunpack.c.l.s4 1983009808
        %v6960 = vunpack.c.0.s8 %v6959
        %v6961 = vlaneseq
        %v6962 = vshrl.u32 %v6961, 7
        %v6963 = vsub.s32 %v6960, %v6962
        %v6964 = vrot.slane %v6950, %v6963
        %v6965 = vcombine.low %v6957, %v6964
        %v6966 = vcombine.low %v6078, %v6086
        %v6967 = vcombine.low %v6094, %v6093
        %v6969 = vunpack.c.l.s4 1983009808
        %v6970 = vunpack.c.0.s8 %v6969
        %v6971 = vlaneseq
        %v6972 = vshrl.u32 %v6971, 7
        %v6973 = vsub.s32 %v6970, %v6972
        %v6974 = vrot.slane %v6966, %v6973
        %v6976 = vunpack.c.l.s4 1983009808
        %v6977 = vunpack.c.0.s8 %v6976
        %v6978 = vlaneseq
        %v6979 = vshrl.u32 %v6978, 7
        %v6980 = vsub.s32 %v6977, %v6979
        %v6981 = vrot.slane %v6967, %v6980
        %v6982 = vcombine.low %v6974, %v6981
        %v6984 = vunpack.c.l.s4 1983009808
        %v6985 = vunpack.c.0.s8 %v6984
        %v6986 = vlaneseq
        %v6987 = vshrl.u32 %v6986, 7
        %v6988 = vsub.s32 %v6985, %v6987
        %v6989 = vrot.slane %v6095, %v6988
        %v6990 = vcombine.low %v6103, %v6111
        %v6991 = vcombine.low %v6110, %v6112
        %v6993 = vunpack.c.l.s4 1983009808
        %v6994 = vunpack.c.0.s8 %v6993
        %v6995 = vlaneseq
        %v6996 = vshrl.u32 %v6995, 7
        %v6997 = vsub.s32 %v6994, %v6996
        %v6998 = vrot.slane %v6990, %v6997
        %v7000 = vunpack.c.l.s4 1983009808
        %v7001 = vunpack.c.0.s8 %v7000
        %v7002 = vlaneseq
        %v7003 = vshrl.u32 %v7002, 7
        %v7004 = vsub.s32 %v7001, %v7003
        %v7005 = vrot.slane %v6991, %v7004
        %v7006 = vcombine.low %v6998, %v7005
        %v7007 = vcombine.low %v6120, %v6128
        %v7008 = vcombine.low %v6127, %v6129
        %v7010 = vunpack.c.l.s4 1983009808
        %v7011 = vunpack.c.0.s8 %v7010
        %v7012 = vlaneseq
        %v7013 = vshrl.u32 %v7012, 7
        %v7014 = vsub.s32 %v7011, %v7013
        %v7015 = vrot.slane %v7007, %v7014
        %v7017 = vunpack.c.l.s4 1983009808
        %v7018 = vunpack.c.0.s8 %v7017
        %v7019 = vlaneseq
        %v7020 = vshrl.u32 %v7019, 7
        %v7021 = vsub.s32 %v7018, %v7020
        %v7022 = vrot.slane %v7008, %v7021
        %v7023 = vcombine.low %v7015, %v7022
        %v7025 = vunpack.c.l.s4 1983009808
        %v7026 = vunpack.c.0.s8 %v7025
        %v7027 = vlaneseq
        %v7028 = vshrl.u32 %v7027, 7
        %v7029 = vsub.s32 %v7026, %v7028
        %v7030 = vrot.slane %v6137, %v7029
        %v7031 = vcombine.low %v6145, %v6144
        %v7032 = vcombine.low %v6146, %v6154
        %v7034 = vunpack.c.l.s4 1983009808
        %v7035 = vunpack.c.0.s8 %v7034
        %v7036 = vlaneseq
        %v7037 = vshrl.u32 %v7036, 7
        %v7038 = vsub.s32 %v7035, %v7037
        %v7039 = vrot.slane %v7031, %v7038
        %v7041 = vunpack.c.l.s4 1983009808
        %v7042 = vunpack.c.0.s8 %v7041
        %v7043 = vlaneseq
        %v7044 = vshrl.u32 %v7043, 7
        %v7045 = vsub.s32 %v7042, %v7044
        %v7046 = vrot.slane %v7032, %v7045
        %v7047 = vcombine.low %v7039, %v7046
        %v7048 = vcombine.low %v6162, %v6161
        %v7049 = vcombine.low %v6163, %v6170
        %v7051 = vunpack.c.l.s4 1983009808
        %v7052 = vunpack.c.0.s8 %v7051
        %v7053 = vlaneseq
        %v7054 = vshrl.u32 %v7053, 7
        %v7055 = vsub.s32 %v7052, %v7054
        %v7056 = vrot.slane %v7048, %v7055
        %v7058 = vunpack.c.l.s4 1983009808
        %v7059 = vunpack.c.0.s8 %v7058
        %v7060 = vlaneseq
        %v7061 = vshrl.u32 %v7060, 7
        %v7062 = vsub.s32 %v7059, %v7061
        %v7063 = vrot.slane %v7049, %v7062
        %v7064 = vcombine.low %v7056, %v7063
        %v7066 = vunpack.c.l.s4 1983009808
        %v7067 = vunpack.c.0.s8 %v7066
        %v7068 = vlaneseq
        %v7069 = vshrl.u32 %v7068, 7
        %v7070 = vsub.s32 %v7067, %v7069
        %v7071 = vrot.slane %v6171, %v7070
        %v7126 = vpack.c.bf16 %v6367, %v6350
        %v7127 = vpack.c.bf16 %v6374, %v6374
        %v7128 = vpack.c.bf16 %v6408, %v6391
        %v7129 = vpack.c.bf16 %v6415, %v6415
        %v7130 = vpack.c.bf16 %v6449, %v6432
        %v7131 = vpack.c.bf16 %v6456, %v6456
        %v7132 = vpack.c.bf16 %v6490, %v6473
        %v7133 = vpack.c.bf16 %v6497, %v6497
        %v7134 = vpack.c.bf16 %v6531, %v6514
        %v7135 = vpack.c.bf16 %v6538, %v6538
        %v7136 = vpack.c.bf16 %v6572, %v6555
        %v7137 = vpack.c.bf16 %v6579, %v6579
        %v7138 = vpack.c.bf16 %v6613, %v6596
        %v7139 = vpack.c.bf16 %v6620, %v6620
        %v7140 = vpack.c.bf16 %v6654, %v6637
        %v7141 = vpack.c.bf16 %v6661, %v6661
        %v7142 = vpack.c.bf16 %v6695, %v6678
        %v7143 = vpack.c.bf16 %v6702, %v6702
        %v7144 = vpack.c.bf16 %v6736, %v6719
        %v7145 = vpack.c.bf16 %v6743, %v6743
        %v7146 = vpack.c.bf16 %v6777, %v6760
        %v7147 = vpack.c.bf16 %v6784, %v6784
        %v7148 = vpack.c.bf16 %v6818, %v6801
        %v7149 = vpack.c.bf16 %v6825, %v6825
        %v7150 = vpack.c.bf16 %v6859, %v6842
        %v7151 = vpack.c.bf16 %v6866, %v6866
        %v7152 = vpack.c.bf16 %v6900, %v6883
        %v7153 = vpack.c.bf16 %v6907, %v6907
        %v7154 = vpack.c.bf16 %v6941, %v6924
        %v7155 = vpack.c.bf16 %v6948, %v6948
        %v7156 = vpack.c.bf16 %v6982, %v6965
        %v7157 = vpack.c.bf16 %v6989, %v6989
        %v7158 = vpack.c.bf16 %v7023, %v7006
        %v7159 = vpack.c.bf16 %v7030, %v7030
        %v7160 = vpack.c.bf16 %v7064, %v7047
        %v7161 = vpack.c.bf16 %v7071, %v7071
        %v7198 = vunpack.c.l.b16 %v7126
        %v7199 = vunpack.c.h.b16 %v7126
        %v7200 = vunpack.c.l.b16 %v7127
        %v7201 = vunpack.c.l.b16 %v7128
        %v7202 = vunpack.c.h.b16 %v7128
        %v7203 = vunpack.c.l.b16 %v7129
        %v7204 = vunpack.c.l.b16 %v7130
        %v7205 = vunpack.c.h.b16 %v7130
        %v7206 = vunpack.c.l.b16 %v7131
        %v7207 = vunpack.c.l.b16 %v7132
        %v7208 = vunpack.c.h.b16 %v7132
        %v7209 = vunpack.c.l.b16 %v7133
        %v7210 = vunpack.c.l.b16 %v7134
        %v7211 = vunpack.c.h.b16 %v7134
        %v7212 = vunpack.c.l.b16 %v7135
        %v7213 = vunpack.c.l.b16 %v7136
        %v7214 = vunpack.c.h.b16 %v7136
        %v7215 = vunpack.c.l.b16 %v7137
        %v7216 = vunpack.c.l.b16 %v7138
        %v7217 = vunpack.c.h.b16 %v7138
        %v7218 = vunpack.c.l.b16 %v7139
        %v7219 = vunpack.c.l.b16 %v7140
        %v7220 = vunpack.c.h.b16 %v7140
        %v7221 = vunpack.c.l.b16 %v7141
        %v7222 = vunpack.c.l.b16 %v7142
        %v7223 = vunpack.c.h.b16 %v7142
        %v7224 = vunpack.c.l.b16 %v7143
        %v7225 = vunpack.c.l.b16 %v7144
        %v7226 = vunpack.c.h.b16 %v7144
        %v7227 = vunpack.c.l.b16 %v7145
        %v7228 = vunpack.c.l.b16 %v7146
        %v7229 = vunpack.c.h.b16 %v7146
        %v7230 = vunpack.c.l.b16 %v7147
        %v7231 = vunpack.c.l.b16 %v7148
        %v7232 = vunpack.c.h.b16 %v7148
        %v7233 = vunpack.c.l.b16 %v7149
        %v7234 = vunpack.c.l.b16 %v7150
        %v7235 = vunpack.c.h.b16 %v7150
        %v7236 = vunpack.c.l.b16 %v7151
        %v7237 = vunpack.c.l.b16 %v7152
        %v7238 = vunpack.c.h.b16 %v7152
        %v7239 = vunpack.c.l.b16 %v7153
        %v7240 = vunpack.c.l.b16 %v7154
        %v7241 = vunpack.c.h.b16 %v7154
        %v7242 = vunpack.c.l.b16 %v7155
        %v7243 = vunpack.c.l.b16 %v7156
        %v7244 = vunpack.c.h.b16 %v7156
        %v7245 = vunpack.c.l.b16 %v7157
        %v7246 = vunpack.c.l.b16 %v7158
        %v7247 = vunpack.c.h.b16 %v7158
        %v7248 = vunpack.c.l.b16 %v7159
        %v7249 = vunpack.c.l.b16 %v7160
        %v7250 = vunpack.c.h.b16 %v7160
        %v7251 = vunpack.c.l.b16 %v7161
        %v7252 = vpack.c.b16 %v7198, %v7198
        %v7253 = vpack.c.b16 %v7199, %v7199
        %v7254 = vpack.c.b16 %v7200, %v7200
        %v7255 = vpack.c.b16 %v7201, %v7201
        %v7256 = vpack.c.b16 %v7202, %v7202
        %v7257 = vpack.c.b16 %v7203, %v7203
        %v7258 = vpack.c.b16 %v7204, %v7204
        %v7259 = vpack.c.b16 %v7205, %v7205
        %v7260 = vpack.c.b16 %v7206, %v7206
        %v7261 = vpack.c.b16 %v7207, %v7207
        %v7262 = vpack.c.b16 %v7208, %v7208
        %v7263 = vpack.c.b16 %v7209, %v7209
        %v7264 = vpack.c.b16 %v7210, %v7210
        %v7265 = vpack.c.b16 %v7211, %v7211
        %v7266 = vpack.c.b16 %v7212, %v7212
        %v7267 = vpack.c.b16 %v7213, %v7213
        %v7268 = vpack.c.b16 %v7214, %v7214
        %v7269 = vpack.c.b16 %v7215, %v7215
        %v7270 = vpack.c.b16 %v7216, %v7216
        %v7271 = vpack.c.b16 %v7217, %v7217
        %v7272 = vpack.c.b16 %v7218, %v7218
        %v7273 = vpack.c.b16 %v7219, %v7219
        %v7274 = vpack.c.b16 %v7220, %v7220
        %v7275 = vpack.c.b16 %v7221, %v7221
        %v7276 = vpack.c.b16 %v7222, %v7222
        %v7277 = vpack.c.b16 %v7223, %v7223
        %v7278 = vpack.c.b16 %v7224, %v7224
        %v7279 = vpack.c.b16 %v7225, %v7225
        %v7280 = vpack.c.b16 %v7226, %v7226
        %v7281 = vpack.c.b16 %v7227, %v7227
        %v7282 = vpack.c.b16 %v7228, %v7228
        %v7283 = vpack.c.b16 %v7229, %v7229
        %v7284 = vpack.c.b16 %v7230, %v7230
        %v7285 = vpack.c.b16 %v7231, %v7231
        %v7286 = vpack.c.b16 %v7232, %v7232
        %v7287 = vpack.c.b16 %v7233, %v7233
        %v7288 = vpack.c.b16 %v7234, %v7234
        %v7289 = vpack.c.b16 %v7235, %v7235
        %v7290 = vpack.c.b16 %v7236, %v7236
        %v7291 = vpack.c.b16 %v7237, %v7237
        %v7292 = vpack.c.b16 %v7238, %v7238
        %v7293 = vpack.c.b16 %v7239, %v7239
        %v7294 = vpack.c.b16 %v7240, %v7240
        %v7295 = vpack.c.b16 %v7241, %v7241
        %v7296 = vpack.c.b16 %v7242, %v7242
        %v7297 = vpack.c.b16 %v7243, %v7243
        %v7298 = vpack.c.b16 %v7244, %v7244
        %v7299 = vpack.c.b16 %v7245, %v7245
        %v7300 = vpack.c.b16 %v7246, %v7246
        %v7301 = vpack.c.b16 %v7247, %v7247
        %v7302 = vpack.c.b16 %v7248, %v7248
        %v7303 = vpack.c.b16 %v7249, %v7249
        %v7304 = vpack.c.b16 %v7250, %v7250
        %v7305 = vpack.c.b16 %v7251, %v7251
        %vm7360 = vcmask 60416
        %7361 = vst.msk [vmem:[%s240] sm:$0xf] %vm7360, %v7252
        %7362 = vst.msk [vmem:[%s240 + $0x4] sm:$0xf] %vm7360, %v7253
        %vm7363 = vcmask 57344
        %7364 = vst.msk [vmem:[%s240 + $0x8] sm:$0x1] %vm7363, %v7254
        %7365 = vst.msk [vmem:[%s240 + $0xc] sm:$0xf] %vm7360, %v7255
        %7366 = vst.msk [vmem:[%s240 + $0x10] sm:$0xf] %vm7360, %v7256
        %7367 = vst.msk [vmem:[%s240 + $0x14] sm:$0x1] %vm7363, %v7257
        %7368 = vst.msk [vmem:[%s240 + $0x18] sm:$0xf] %vm7360, %v7258
        %7369 = vst.msk [vmem:[%s240 + $0x1c] sm:$0xf] %vm7360, %v7259
        %7370 = vst.msk [vmem:[%s240 + $0x20] sm:$0x1] %vm7363, %v7260
        %7371 = vst.msk [vmem:[%s240 + $0x24] sm:$0xf] %vm7360, %v7261
        %7372 = vst.msk [vmem:[%s240 + $0x28] sm:$0xf] %vm7360, %v7262
        %7373 = vst.msk [vmem:[%s240 + $0x2c] sm:$0x1] %vm7363, %v7263
        %7374 = vst.msk [vmem:[%s240 + $0x30] sm:$0xf] %vm7360, %v7264
        %7375 = vst.msk [vmem:[%s240 + $0x34] sm:$0xf] %vm7360, %v7265
        %7376 = vst.msk [vmem:[%s240 + $0x38] sm:$0x1] %vm7363, %v7266
        %7377 = vst.msk [vmem:[%s240 + $0x3c] sm:$0xf] %vm7360, %v7267
        %7378 = vst.msk [vmem:[%s240 + $0x40] sm:$0xf] %vm7360, %v7268
        %7379 = vst.msk [vmem:[%s240 + $0x44] sm:$0x1] %vm7363, %v7269
        %7380 = vst.msk [vmem:[%s240 + $0x48] sm:$0xf] %vm7360, %v7270
        %7381 = vst.msk [vmem:[%s240 + $0x4c] sm:$0xf] %vm7360, %v7271
        %7382 = vst.msk [vmem:[%s240 + $0x50] sm:$0x1] %vm7363, %v7272
        %7383 = vst.msk [vmem:[%s240 + $0x54] sm:$0xf] %vm7360, %v7273
        %7384 = vst.msk [vmem:[%s240 + $0x58] sm:$0xf] %vm7360, %v7274
        %7385 = vst.msk [vmem:[%s240 + $0x5c] sm:$0x1] %vm7363, %v7275
        %7386 = vst.msk [vmem:[%s240 + $0x60] sm:$0xf] %vm7360, %v7276
        %7387 = vst.msk [vmem:[%s240 + $0x64] sm:$0xf] %vm7360, %v7277
        %7388 = vst.msk [vmem:[%s240 + $0x68] sm:$0x1] %vm7363, %v7278
        %7389 = vst.msk [vmem:[%s240 + $0x6c] sm:$0xf] %vm7360, %v7279
        %7390 = vst.msk [vmem:[%s240 + $0x70] sm:$0xf] %vm7360, %v7280
        %7391 = vst.msk [vmem:[%s240 + $0x74] sm:$0x1] %vm7363, %v7281
        %7392 = vst.msk [vmem:[%s240 + $0x78] sm:$0xf] %vm7360, %v7282
        %7393 = vst.msk [vmem:[%s240 + $0x7c] sm:$0xf] %vm7360, %v7283
        %7394 = vst.msk [vmem:[%s240 + $0x80] sm:$0x1] %vm7363, %v7284
        %7395 = vst.msk [vmem:[%s240 + $0x84] sm:$0xf] %vm7360, %v7285
        %7396 = vst.msk [vmem:[%s240 + $0x88] sm:$0xf] %vm7360, %v7286
        %7397 = vst.msk [vmem:[%s240 + $0x8c] sm:$0x1] %vm7363, %v7287
        %7398 = vst.msk [vmem:[%s240 + $0x90] sm:$0xf] %vm7360, %v7288
        %7399 = vst.msk [vmem:[%s240 + $0x94] sm:$0xf] %vm7360, %v7289
        %7400 = vst.msk [vmem:[%s240 + $0x98] sm:$0x1] %vm7363, %v7290
        %7401 = vst.msk [vmem:[%s240 + $0x9c] sm:$0xf] %vm7360, %v7291
        %7402 = vst.msk [vmem:[%s240 + $0xa0] sm:$0xf] %vm7360, %v7292
        %7403 = vst.msk [vmem:[%s240 + $0xa4] sm:$0x1] %vm7363, %v7293
        %7404 = vst.msk [vmem:[%s240 + $0xa8] sm:$0xf] %vm7360, %v7294
        %7405 = vst.msk [vmem:[%s240 + $0xac] sm:$0xf] %vm7360, %v7295
        %7406 = vst.msk [vmem:[%s240 + $0xb0] sm:$0x1] %vm7363, %v7296
        %7407 = vst.msk [vmem:[%s240 + $0xb4] sm:$0xf] %vm7360, %v7297
        %7408 = vst.msk [vmem:[%s240 + $0xb8] sm:$0xf] %vm7360, %v7298
        %7409 = vst.msk [vmem:[%s240 + $0xbc] sm:$0x1] %vm7363, %v7299
        %7410 = vst.msk [vmem:[%s240 + $0xc0] sm:$0xf] %vm7360, %v7300
        %7411 = vst.msk [vmem:[%s240 + $0xc4] sm:$0xf] %vm7360, %v7301
        %7412 = vst.msk [vmem:[%s240 + $0xc8] sm:$0x1] %vm7363, %v7302
        %7413 = vst.msk [vmem:[%s240 + $0xcc] sm:$0xf] %vm7360, %v7303
        %7414 = vst.msk [vmem:[%s240 + $0xd0] sm:$0xf] %vm7360, %v7304
        %7415 = vst.msk [vmem:[%s240 + $0xd4] sm:$0x1] %vm7363, %v7305
        %v7416 = vld [vmem:[%s219] sm:$0x1]
        %v7417 = vsel %vm2479, %v6350, 0.0
        %v7418 = vsel %vm2479, %v6367, 0.0
        %v7419 = vadd.f32 %v7417, %v7418
        %vm7420 = vcmask 58368
        %v7421 = vsel %vm7420, %v6374, 0.0
        %v7422 = vadd.f32 %v7419, %v7421
        %v7423 = vsel %vm2479, %v6391, 0.0
        %v7424 = vadd.f32 %v7422, %v7423
        %v7425 = vsel %vm2479, %v6408, 0.0
        %v7426 = vadd.f32 %v7424, %v7425
        %v7427 = vsel %vm7420, %v6415, 0.0
        %v7428 = vadd.f32 %v7426, %v7427
        %v7429 = vsel %vm2479, %v6432, 0.0
        %v7430 = vadd.f32 %v7428, %v7429
        %v7431 = vsel %vm2479, %v6449, 0.0
        %v7432 = vadd.f32 %v7430, %v7431
        %v7433 = vsel %vm7420, %v6456, 0.0
        %v7434 = vadd.f32 %v7432, %v7433
        %v7435 = vsel %vm2479, %v6473, 0.0
        %v7436 = vadd.f32 %v7434, %v7435
        %v7437 = vsel %vm2479, %v6490, 0.0
        %v7438 = vadd.f32 %v7436, %v7437
        %v7439 = vsel %vm7420, %v6497, 0.0
        %v7440 = vadd.f32 %v7438, %v7439
        %v7441 = vsel %vm2479, %v6514, 0.0
        %v7442 = vadd.f32 %v7440, %v7441
        %v7443 = vsel %vm2479, %v6531, 0.0
        %v7444 = vadd.f32 %v7442, %v7443
        %v7445 = vsel %vm7420, %v6538, 0.0
        %v7446 = vadd.f32 %v7444, %v7445
        %v7447 = vsel %vm2479, %v6555, 0.0
        %v7448 = vadd.f32 %v7446, %v7447
        %v7449 = vsel %vm2479, %v6572, 0.0
        %v7450 = vadd.f32 %v7448, %v7449
        %v7451 = vsel %vm7420, %v6579, 0.0
        %v7452 = vadd.f32 %v7450, %v7451
        %v7453 = vsel %vm2479, %v6596, 0.0
        %v7454 = vadd.f32 %v7452, %v7453
        %v7455 = vsel %vm2479, %v6613, 0.0
        %v7456 = vadd.f32 %v7454, %v7455
        %v7457 = vsel %vm7420, %v6620, 0.0
        %v7458 = vadd.f32 %v7456, %v7457
        %v7459 = vsel %vm2479, %v6637, 0.0
        %v7460 = vadd.f32 %v7458, %v7459
        %v7461 = vsel %vm2479, %v6654, 0.0
        %v7462 = vadd.f32 %v7460, %v7461
        %v7463 = vsel %vm7420, %v6661, 0.0
        %v7464 = vadd.f32 %v7462, %v7463
        %v7465 = vsel %vm2479, %v6678, 0.0
        %v7466 = vadd.f32 %v7464, %v7465
        %v7467 = vsel %vm2479, %v6695, 0.0
        %v7468 = vadd.f32 %v7466, %v7467
        %v7469 = vsel %vm7420, %v6702, 0.0
        %v7470 = vadd.f32 %v7468, %v7469
        %v7471 = vsel %vm2479, %v6719, 0.0
        %v7472 = vadd.f32 %v7470, %v7471
        %v7473 = vsel %vm2479, %v6736, 0.0
        %v7474 = vadd.f32 %v7472, %v7473
        %v7475 = vsel %vm7420, %v6743, 0.0
        %v7476 = vadd.f32 %v7474, %v7475
        %v7477 = vsel %vm2479, %v6760, 0.0
        %v7478 = vadd.f32 %v7476, %v7477
        %v7479 = vsel %vm2479, %v6777, 0.0
        %v7480 = vadd.f32 %v7478, %v7479
        %v7481 = vsel %vm7420, %v6784, 0.0
        %v7482 = vadd.f32 %v7480, %v7481
        %v7483 = vsel %vm2479, %v6801, 0.0
        %v7484 = vadd.f32 %v7482, %v7483
        %v7485 = vsel %vm2479, %v6818, 0.0
        %v7486 = vadd.f32 %v7484, %v7485
        %v7487 = vsel %vm7420, %v6825, 0.0
        %v7488 = vadd.f32 %v7486, %v7487
        %v7489 = vsel %vm2479, %v6842, 0.0
        %v7490 = vadd.f32 %v7488, %v7489
        %v7491 = vsel %vm2479, %v6859, 0.0
        %v7492 = vadd.f32 %v7490, %v7491
        %v7493 = vsel %vm7420, %v6866, 0.0
        %v7494 = vadd.f32 %v7492, %v7493
        %v7495 = vsel %vm2479, %v6883, 0.0
        %v7496 = vadd.f32 %v7494, %v7495
        %v7497 = vsel %vm2479, %v6900, 0.0
        %v7498 = vadd.f32 %v7496, %v7497
        %v7499 = vsel %vm7420, %v6907, 0.0
        %v7500 = vadd.f32 %v7498, %v7499
        %v7501 = vsel %vm2479, %v6924, 0.0
        %v7502 = vadd.f32 %v7500, %v7501
        %v7503 = vsel %vm2479, %v6941, 0.0
        %v7504 = vadd.f32 %v7502, %v7503
        %v7505 = vsel %vm7420, %v6948, 0.0
        %v7506 = vadd.f32 %v7504, %v7505
        %v7507 = vsel %vm2479, %v6965, 0.0
        %v7508 = vadd.f32 %v7506, %v7507
        %v7509 = vsel %vm2479, %v6982, 0.0
        %v7510 = vadd.f32 %v7508, %v7509
        %v7511 = vsel %vm7420, %v6989, 0.0
        %v7512 = vadd.f32 %v7510, %v7511
        %v7513 = vsel %vm2479, %v7006, 0.0
        %v7514 = vadd.f32 %v7512, %v7513
        %v7515 = vsel %vm2479, %v7023, 0.0
        %v7516 = vadd.f32 %v7514, %v7515
        %v7517 = vsel %vm7420, %v7030, 0.0
        %v7518 = vadd.f32 %v7516, %v7517
        %v7519 = vsel %vm2479, %v7047, 0.0
        %v7520 = vadd.f32 %v7518, %v7519
        %v7521 = vsel %vm2479, %v7064, 0.0
        %v7522 = vadd.f32 %v7520, %v7521
        %v7523 = vsel %vm7420, %v7071, 0.0
        %v7524 = vadd.f32 %v7522, %v7523
        %v7525 = vrot.slane %v7524, 4
        %v7526 = vadd.f32 %v7524, %v7525
        %v7527 = vrot.slane %v7526, 2
        %v7528 = vadd.f32 %v7526, %v7527
        %v7529 = vrot.slane %v7528, 1
        %v7530 = vadd.f32 %v7528, %v7529
        %v7531 = vadd.f32 %v7416, %v7530
        %7532 = vst.msk [vmem:[%s219] sm:$0x1] %vm7363, %v7531
        %v7533 = vld [vmem:[%s225] sm:$0x1]
        %v7534 = vmul.f32 %v5491, %v5491
        %v7535 = vmul.f32 %v5499, %v5499
        %v7536 = vmul.f32 %v5498, %v5498
        %v7537 = vmul.f32 %v5500, %v5500
        %v7538 = vmul.f32 %v5508, %v5508
        %v7539 = vmul.f32 %v5516, %v5516
        %v7540 = vmul.f32 %v5515, %v5515
        %v7541 = vmul.f32 %v5517, %v5517
        %v7542 = vmul.f32 %v5525, %v5525
        %v7543 = vmul.f32 %v5533, %v5533
        %v7544 = vmul.f32 %v5532, %v5532
        %v7545 = vmul.f32 %v5534, %v5534
        %v7546 = vmul.f32 %v5542, %v5542
        %v7547 = vmul.f32 %v5550, %v5550
        %v7548 = vmul.f32 %v5549, %v5549
        %v7549 = vmul.f32 %v5551, %v5551
        %v7550 = vmul.f32 %v5559, %v5559
        %v7551 = vmul.f32 %v5567, %v5567
        %v7552 = vmul.f32 %v5566, %v5566
        %v7553 = vmul.f32 %v5568, %v5568
        %v7554 = vmul.f32 %v5576, %v5576
        %v7555 = vmul.f32 %v5584, %v5584
        %v7556 = vmul.f32 %v5583, %v5583
        %v7557 = vmul.f32 %v5585, %v5585
        %v7558 = vmul.f32 %v5593, %v5593
        %v7559 = vmul.f32 %v5601, %v5601
        %v7560 = vmul.f32 %v5600, %v5600
        %v7561 = vmul.f32 %v5602, %v5602
        %v7562 = vmul.f32 %v5610, %v5610
        %v7563 = vmul.f32 %v5618, %v5618
        %v7564 = vmul.f32 %v5617, %v5617
        %v7565 = vmul.f32 %v5619, %v5619
        %v7566 = vmul.f32 %v5627, %v5627
        %v7567 = vmul.f32 %v5635, %v5635
        %v7568 = vmul.f32 %v5634, %v5634
        %v7569 = vmul.f32 %v5636, %v5636
        %v7570 = vmul.f32 %v5644, %v5644
        %v7571 = vmul.f32 %v5652, %v5652
        %v7572 = vmul.f32 %v5651, %v5651
        %v7573 = vmul.f32 %v5653, %v5653
        %v7574 = vmul.f32 %v5661, %v5661
        %v7575 = vmul.f32 %v5669, %v5669
        %v7576 = vmul.f32 %v5668, %v5668
        %v7577 = vmul.f32 %v5670, %v5670
        %v7578 = vmul.f32 %v5678, %v5678
        %v7579 = vmul.f32 %v5686, %v5686
        %v7580 = vmul.f32 %v5685, %v5685
        %v7581 = vmul.f32 %v5687, %v5687
        %v7582 = vmul.f32 %v5695, %v5695
        %v7583 = vmul.f32 %v5703, %v5703
        %v7584 = vmul.f32 %v5702, %v5702
        %v7585 = vmul.f32 %v5704, %v5704
        %v7586 = vmul.f32 %v5712, %v5712
        %v7587 = vmul.f32 %v5720, %v5720
        %v7588 = vmul.f32 %v5719, %v5719
        %v7589 = vmul.f32 %v5721, %v5721
        %v7590 = vmul.f32 %v5729, %v5729
        %v7591 = vmul.f32 %v5737, %v5737
        %v7592 = vmul.f32 %v5736, %v5736
        %v7593 = vmul.f32 %v5738, %v5738
        %v7594 = vmul.f32 %v5746, %v5746
        %v7595 = vmul.f32 %v5754, %v5754
        %v7596 = vmul.f32 %v5753, %v5753
        %v7597 = vmul.f32 %v5755, %v5755
        %v7598 = vmul.f32 %v5763, %v5763
        %v7599 = vmul.f32 %v5771, %v5771
        %v7600 = vmul.f32 %v5770, %v5770
        %v7601 = vmul.f32 %v5772, %v5772
        %v7602 = vmul.f32 %v5780, %v5780
        %v7603 = vmul.f32 %v5788, %v5788
        %v7604 = vmul.f32 %v5787, %v5787
        %v7605 = vmul.f32 %v5789, %v5789
        %v7606 = vmul.f32 %v5797, %v5797
        %v7607 = vmul.f32 %v5805, %v5805
        %v7608 = vmul.f32 %v5804, %v5804
        %v7609 = vmul.f32 %v5806, %v5806
        %v7610 = vmul.f32 %v5814, %v5814
        %v7611 = vmul.f32 %v5822, %v5822
        %v7612 = vmul.f32 %v5821, %v5821
        %v7613 = vmul.f32 %v5823, %v5823
        %v7614 = vmul.f32 %v5831, %v5831
        %v7615 = vmul.f32 %v5839, %v5839
        %v7616 = vmul.f32 %v5838, %v5838
        %v7617 = vmul.f32 %v5840, %v5840
        %v7618 = vmul.f32 %v5848, %v5848
        %v7619 = vmul.f32 %v5856, %v5856
        %v7620 = vmul.f32 %v5855, %v5855
        %v7621 = vmul.f32 %v5857, %v5857
        %v7622 = vmul.f32 %v5865, %v5865
        %v7623 = vmul.f32 %v5873, %v5873
        %v7624 = vmul.f32 %v5872, %v5872
        %v7625 = vmul.f32 %v5874, %v5874
        %v7626 = vmul.f32 %v5882, %v5882
        %v7627 = vmul.f32 %v5890, %v5890
        %v7628 = vmul.f32 %v5889, %v5889
        %v7629 = vmul.f32 %v5891, %v5891
        %v7630 = vmul.f32 %v5899, %v5899
        %v7631 = vmul.f32 %v5907, %v5907
        %v7632 = vmul.f32 %v5906, %v5906
        %v7633 = vmul.f32 %v5908, %v5908
        %v7634 = vmul.f32 %v5916, %v5916
        %v7635 = vmul.f32 %v5924, %v5924
        %v7636 = vmul.f32 %v5923, %v5923
        %v7637 = vmul.f32 %v5925, %v5925
        %v7638 = vmul.f32 %v5933, %v5933
        %v7639 = vmul.f32 %v5941, %v5941
        %v7640 = vmul.f32 %v5940, %v5940
        %v7641 = vmul.f32 %v5942, %v5942
        %v7642 = vmul.f32 %v5950, %v5950
        %v7643 = vmul.f32 %v5958, %v5958
        %v7644 = vmul.f32 %v5957, %v5957
        %v7645 = vmul.f32 %v5959, %v5959
        %v7646 = vmul.f32 %v5967, %v5967
        %v7647 = vmul.f32 %v5975, %v5975
        %v7648 = vmul.f32 %v5974, %v5974
        %v7649 = vmul.f32 %v5976, %v5976
        %v7650 = vmul.f32 %v5984, %v5984
        %v7651 = vmul.f32 %v5992, %v5992
        %v7652 = vmul.f32 %v5991, %v5991
        %v7653 = vmul.f32 %v5993, %v5993
        %v7654 = vmul.f32 %v6001, %v6001
        %v7655 = vmul.f32 %v6009, %v6009
        %v7656 = vmul.f32 %v6008, %v6008
        %v7657 = vmul.f32 %v6010, %v6010
        %v7658 = vmul.f32 %v6018, %v6018
        %v7659 = vmul.f32 %v6026, %v6026
        %v7660 = vmul.f32 %v6025, %v6025
        %v7661 = vmul.f32 %v6027, %v6027
        %v7662 = vmul.f32 %v6035, %v6035
        %v7663 = vmul.f32 %v6043, %v6043
        %v7664 = vmul.f32 %v6042, %v6042
        %v7665 = vmul.f32 %v6044, %v6044
        %v7666 = vmul.f32 %v6052, %v6052
        %v7667 = vmul.f32 %v6060, %v6060
        %v7668 = vmul.f32 %v6059, %v6059
        %v7669 = vmul.f32 %v6061, %v6061
        %v7670 = vmul.f32 %v6069, %v6069
        %v7671 = vmul.f32 %v6077, %v6077
        %v7672 = vmul.f32 %v6076, %v6076
        %v7673 = vmul.f32 %v6078, %v6078
        %v7674 = vmul.f32 %v6086, %v6086
        %v7675 = vmul.f32 %v6094, %v6094
        %v7676 = vmul.f32 %v6093, %v6093
        %v7677 = vmul.f32 %v6095, %v6095
        %v7678 = vmul.f32 %v6103, %v6103
        %v7679 = vmul.f32 %v6111, %v6111
        %v7680 = vmul.f32 %v6110, %v6110
        %v7681 = vmul.f32 %v6112, %v6112
        %v7682 = vmul.f32 %v6120, %v6120
        %v7683 = vmul.f32 %v6128, %v6128
        %v7684 = vmul.f32 %v6127, %v6127
        %v7685 = vmul.f32 %v6129, %v6129
        %v7686 = vmul.f32 %v6137, %v6137
        %v7687 = vmul.f32 %v6145, %v6145
        %v7688 = vmul.f32 %v6144, %v6144
        %v7689 = vmul.f32 %v6146, %v6146
        %v7690 = vmul.f32 %v6154, %v6154
        %v7691 = vmul.f32 %v6162, %v6162
        %v7692 = vmul.f32 %v6161, %v6161
        %v7693 = vmul.f32 %v6163, %v6163
        %v7694 = vmul.f32 %v6170, %v6170
        %v7695 = vmul.f32 %v6171, %v6171
        %v7858 = vcombine.low %v7534, %v7535
        %v7859 = vcombine.low %v7536, %v7537
        %v7861 = vunpack.c.l.s4 1983009808
        %v7862 = vunpack.c.0.s8 %v7861
        %v7863 = vlaneseq
        %v7864 = vshrl.u32 %v7863, 7
        %v7865 = vsub.s32 %v7862, %v7864
        %v7866 = vrot.slane %v7858, %v7865
        %v7868 = vunpack.c.l.s4 1983009808
        %v7869 = vunpack.c.0.s8 %v7868
        %v7870 = vlaneseq
        %v7871 = vshrl.u32 %v7870, 7
        %v7872 = vsub.s32 %v7869, %v7871
        %v7873 = vrot.slane %v7859, %v7872
        %v7874 = vcombine.low %v7866, %v7873
        %v7875 = vcombine.low %v7538, %v7539
        %v7876 = vcombine.low %v7540, %v7541
        %v7878 = vunpack.c.l.s4 1983009808
        %v7879 = vunpack.c.0.s8 %v7878
        %v7880 = vlaneseq
        %v7881 = vshrl.u32 %v7880, 7
        %v7882 = vsub.s32 %v7879, %v7881
        %v7883 = vrot.slane %v7875, %v7882
        %v7885 = vunpack.c.l.s4 1983009808
        %v7886 = vunpack.c.0.s8 %v7885
        %v7887 = vlaneseq
        %v7888 = vshrl.u32 %v7887, 7
        %v7889 = vsub.s32 %v7886, %v7888
        %v7890 = vrot.slane %v7876, %v7889
        %v7891 = vcombine.low %v7883, %v7890
        %v7893 = vunpack.c.l.s4 1983009808
        %v7894 = vunpack.c.0.s8 %v7893
        %v7895 = vlaneseq
        %v7896 = vshrl.u32 %v7895, 7
        %v7897 = vsub.s32 %v7894, %v7896
        %v7898 = vrot.slane %v7542, %v7897
        %v7899 = vcombine.low %v7543, %v7544
        %v7900 = vcombine.low %v7545, %v7546
        %v7902 = vunpack.c.l.s4 1983009808
        %v7903 = vunpack.c.0.s8 %v7902
        %v7904 = vlaneseq
        %v7905 = vshrl.u32 %v7904, 7
        %v7906 = vsub.s32 %v7903, %v7905
        %v7907 = vrot.slane %v7899, %v7906
        %v7909 = vunpack.c.l.s4 1983009808
        %v7910 = vunpack.c.0.s8 %v7909
        %v7911 = vlaneseq
        %v7912 = vshrl.u32 %v7911, 7
        %v7913 = vsub.s32 %v7910, %v7912
        %v7914 = vrot.slane %v7900, %v7913
        %v7915 = vcombine.low %v7907, %v7914
        %v7916 = vcombine.low %v7547, %v7548
        %v7917 = vcombine.low %v7549, %v7550
        %v7919 = vunpack.c.l.s4 1983009808
        %v7920 = vunpack.c.0.s8 %v7919
        %v7921 = vlaneseq
        %v7922 = vshrl.u32 %v7921, 7
        %v7923 = vsub.s32 %v7920, %v7922
        %v7924 = vrot.slane %v7916, %v7923
        %v7926 = vunpack.c.l.s4 1983009808
        %v7927 = vunpack.c.0.s8 %v7926
        %v7928 = vlaneseq
        %v7929 = vshrl.u32 %v7928, 7
        %v7930 = vsub.s32 %v7927, %v7929
        %v7931 = vrot.slane %v7917, %v7930
        %v7932 = vcombine.low %v7924, %v7931
        %v7934 = vunpack.c.l.s4 1983009808
        %v7935 = vunpack.c.0.s8 %v7934
        %v7936 = vlaneseq
        %v7937 = vshrl.u32 %v7936, 7
        %v7938 = vsub.s32 %v7935, %v7937
        %v7939 = vrot.slane %v7551, %v7938
        %v7940 = vcombine.low %v7552, %v7553
        %v7941 = vcombine.low %v7554, %v7555
        %v7943 = vunpack.c.l.s4 1983009808
        %v7944 = vunpack.c.0.s8 %v7943
        %v7945 = vlaneseq
        %v7946 = vshrl.u32 %v7945, 7
        %v7947 = vsub.s32 %v7944, %v7946
        %v7948 = vrot.slane %v7940, %v7947
        %v7950 = vunpack.c.l.s4 1983009808
        %v7951 = vunpack.c.0.s8 %v7950
        %v7952 = vlaneseq
        %v7953 = vshrl.u32 %v7952, 7
        %v7954 = vsub.s32 %v7951, %v7953
        %v7955 = vrot.slane %v7941, %v7954
        %v7956 = vcombine.low %v7948, %v7955
        %v7957 = vcombine.low %v7556, %v7557
        %v7958 = vcombine.low %v7558, %v7559
        %v7960 = vunpack.c.l.s4 1983009808
        %v7961 = vunpack.c.0.s8 %v7960
        %v7962 = vlaneseq
        %v7963 = vshrl.u32 %v7962, 7
        %v7964 = vsub.s32 %v7961, %v7963
        %v7965 = vrot.slane %v7957, %v7964
        %v7967 = vunpack.c.l.s4 1983009808
        %v7968 = vunpack.c.0.s8 %v7967
        %v7969 = vlaneseq
        %v7970 = vshrl.u32 %v7969, 7
        %v7971 = vsub.s32 %v7968, %v7970
        %v7972 = vrot.slane %v7958, %v7971
        %v7973 = vcombine.low %v7965, %v7972
        %v7975 = vunpack.c.l.s4 1983009808
        %v7976 = vunpack.c.0.s8 %v7975
        %v7977 = vlaneseq
        %v7978 = vshrl.u32 %v7977, 7
        %v7979 = vsub.s32 %v7976, %v7978
        %v7980 = vrot.slane %v7560, %v7979
        %v7981 = vcombine.low %v7561, %v7562
        %v7982 = vcombine.low %v7563, %v7564
        %v7984 = vunpack.c.l.s4 1983009808
        %v7985 = vunpack.c.0.s8 %v7984
        %v7986 = vlaneseq
        %v7987 = vshrl.u32 %v7986, 7
        %v7988 = vsub.s32 %v7985, %v7987
        %v7989 = vrot.slane %v7981, %v7988
        %v7991 = vunpack.c.l.s4 1983009808
        %v7992 = vunpack.c.0.s8 %v7991
        %v7993 = vlaneseq
        %v7994 = vshrl.u32 %v7993, 7
        %v7995 = vsub.s32 %v7992, %v7994
        %v7996 = vrot.slane %v7982, %v7995
        %v7997 = vcombine.low %v7989, %v7996
        %v7998 = vcombine.low %v7565, %v7566
        %v7999 = vcombine.low %v7567, %v7568
        %v8001 = vunpack.c.l.s4 1983009808
        %v8002 = vunpack.c.0.s8 %v8001
        %v8003 = vlaneseq
        %v8004 = vshrl.u32 %v8003, 7
        %v8005 = vsub.s32 %v8002, %v8004
        %v8006 = vrot.slane %v7998, %v8005
        %v8008 = vunpack.c.l.s4 1983009808
        %v8009 = vunpack.c.0.s8 %v8008
        %v8010 = vlaneseq
        %v8011 = vshrl.u32 %v8010, 7
        %v8012 = vsub.s32 %v8009, %v8011
        %v8013 = vrot.slane %v7999, %v8012
        %v8014 = vcombine.low %v8006, %v8013
        %v8016 = vunpack.c.l.s4 1983009808
        %v8017 = vunpack.c.0.s8 %v8016
        %v8018 = vlaneseq
        %v8019 = vshrl.u32 %v8018, 7
        %v8020 = vsub.s32 %v8017, %v8019
        %v8021 = vrot.slane %v7569, %v8020
        %v8022 = vcombine.low %v7570, %v7571
        %v8023 = vcombine.low %v7572, %v7573
        %v8025 = vunpack.c.l.s4 1983009808
        %v8026 = vunpack.c.0.s8 %v8025
        %v8027 = vlaneseq
        %v8028 = vshrl.u32 %v8027, 7
        %v8029 = vsub.s32 %v8026, %v8028
        %v8030 = vrot.slane %v8022, %v8029
        %v8032 = vunpack.c.l.s4 1983009808
        %v8033 = vunpack.c.0.s8 %v8032
        %v8034 = vlaneseq
        %v8035 = vshrl.u32 %v8034, 7
        %v8036 = vsub.s32 %v8033, %v8035
        %v8037 = vrot.slane %v8023, %v8036
        %v8038 = vcombine.low %v8030, %v8037
        %v8039 = vcombine.low %v7574, %v7575
        %v8040 = vcombine.low %v7576, %v7577
        %v8042 = vunpack.c.l.s4 1983009808
        %v8043 = vunpack.c.0.s8 %v8042
        %v8044 = vlaneseq
        %v8045 = vshrl.u32 %v8044, 7
        %v8046 = vsub.s32 %v8043, %v8045
        %v8047 = vrot.slane %v8039, %v8046
        %v8049 = vunpack.c.l.s4 1983009808
        %v8050 = vunpack.c.0.s8 %v8049
        %v8051 = vlaneseq
        %v8052 = vshrl.u32 %v8051, 7
        %v8053 = vsub.s32 %v8050, %v8052
        %v8054 = vrot.slane %v8040, %v8053
        %v8055 = vcombine.low %v8047, %v8054
        %v8057 = vunpack.c.l.s4 1983009808
        %v8058 = vunpack.c.0.s8 %v8057
        %v8059 = vlaneseq
        %v8060 = vshrl.u32 %v8059, 7
        %v8061 = vsub.s32 %v8058, %v8060
        %v8062 = vrot.slane %v7578, %v8061
        %v8063 = vcombine.low %v7579, %v7580
        %v8064 = vcombine.low %v7581, %v7582
        %v8066 = vunpack.c.l.s4 1983009808
        %v8067 = vunpack.c.0.s8 %v8066
        %v8068 = vlaneseq
        %v8069 = vshrl.u32 %v8068, 7
        %v8070 = vsub.s32 %v8067, %v8069
        %v8071 = vrot.slane %v8063, %v8070
        %v8073 = vunpack.c.l.s4 1983009808
        %v8074 = vunpack.c.0.s8 %v8073
        %v8075 = vlaneseq
        %v8076 = vshrl.u32 %v8075, 7
        %v8077 = vsub.s32 %v8074, %v8076
        %v8078 = vrot.slane %v8064, %v8077
        %v8079 = vcombine.low %v8071, %v8078
        %v8080 = vcombine.low %v7583, %v7584
        %v8081 = vcombine.low %v7585, %v7586
        %v8083 = vunpack.c.l.s4 1983009808
        %v8084 = vunpack.c.0.s8 %v8083
        %v8085 = vlaneseq
        %v8086 = vshrl.u32 %v8085, 7
        %v8087 = vsub.s32 %v8084, %v8086
        %v8088 = vrot.slane %v8080, %v8087
        %v8090 = vunpack.c.l.s4 1983009808
        %v8091 = vunpack.c.0.s8 %v8090
        %v8092 = vlaneseq
        %v8093 = vshrl.u32 %v8092, 7
        %v8094 = vsub.s32 %v8091, %v8093
        %v8095 = vrot.slane %v8081, %v8094
        %v8096 = vcombine.low %v8088, %v8095
        %v8098 = vunpack.c.l.s4 1983009808
        %v8099 = vunpack.c.0.s8 %v8098
        %v8100 = vlaneseq
        %v8101 = vshrl.u32 %v8100, 7
        %v8102 = vsub.s32 %v8099, %v8101
        %v8103 = vrot.slane %v7587, %v8102
        %v8104 = vcombine.low %v7588, %v7589
        %v8105 = vcombine.low %v7590, %v7591
        %v8107 = vunpack.c.l.s4 1983009808
        %v8108 = vunpack.c.0.s8 %v8107
        %v8109 = vlaneseq
        %v8110 = vshrl.u32 %v8109, 7
        %v8111 = vsub.s32 %v8108, %v8110
        %v8112 = vrot.slane %v8104, %v8111
        %v8114 = vunpack.c.l.s4 1983009808
        %v8115 = vunpack.c.0.s8 %v8114
        %v8116 = vlaneseq
        %v8117 = vshrl.u32 %v8116, 7
        %v8118 = vsub.s32 %v8115, %v8117
        %v8119 = vrot.slane %v8105, %v8118
        %v8120 = vcombine.low %v8112, %v8119
        %v8121 = vcombine.low %v7592, %v7593
        %v8122 = vcombine.low %v7594, %v7595
        %v8124 = vunpack.c.l.s4 1983009808
        %v8125 = vunpack.c.0.s8 %v8124
        %v8126 = vlaneseq
        %v8127 = vshrl.u32 %v8126, 7
        %v8128 = vsub.s32 %v8125, %v8127
        %v8129 = vrot.slane %v8121, %v8128
        %v8131 = vunpack.c.l.s4 1983009808
        %v8132 = vunpack.c.0.s8 %v8131
        %v8133 = vlaneseq
        %v8134 = vshrl.u32 %v8133, 7
        %v8135 = vsub.s32 %v8132, %v8134
        %v8136 = vrot.slane %v8122, %v8135
        %v8137 = vcombine.low %v8129, %v8136
        %v8139 = vunpack.c.l.s4 1983009808
        %v8140 = vunpack.c.0.s8 %v8139
        %v8141 = vlaneseq
        %v8142 = vshrl.u32 %v8141, 7
        %v8143 = vsub.s32 %v8140, %v8142
        %v8144 = vrot.slane %v7596, %v8143
        %v8145 = vcombine.low %v7597, %v7598
        %v8146 = vcombine.low %v7599, %v7600
        %v8148 = vunpack.c.l.s4 1983009808
        %v8149 = vunpack.c.0.s8 %v8148
        %v8150 = vlaneseq
        %v8151 = vshrl.u32 %v8150, 7
        %v8152 = vsub.s32 %v8149, %v8151
        %v8153 = vrot.slane %v8145, %v8152
        %v8155 = vunpack.c.l.s4 1983009808
        %v8156 = vunpack.c.0.s8 %v8155
        %v8157 = vlaneseq
        %v8158 = vshrl.u32 %v8157, 7
        %v8159 = vsub.s32 %v8156, %v8158
        %v8160 = vrot.slane %v8146, %v8159
        %v8161 = vcombine.low %v8153, %v8160
        %v8162 = vcombine.low %v7601, %v7602
        %v8163 = vcombine.low %v7603, %v7604
        %v8165 = vunpack.c.l.s4 1983009808
        %v8166 = vunpack.c.0.s8 %v8165
        %v8167 = vlaneseq
        %v8168 = vshrl.u32 %v8167, 7
        %v8169 = vsub.s32 %v8166, %v8168
        %v8170 = vrot.slane %v8162, %v8169
        %v8172 = vunpack.c.l.s4 1983009808
        %v8173 = vunpack.c.0.s8 %v8172
        %v8174 = vlaneseq
        %v8175 = vshrl.u32 %v8174, 7
        %v8176 = vsub.s32 %v8173, %v8175
        %v8177 = vrot.slane %v8163, %v8176
        %v8178 = vcombine.low %v8170, %v8177
        %v8180 = vunpack.c.l.s4 1983009808
        %v8181 = vunpack.c.0.s8 %v8180
        %v8182 = vlaneseq
        %v8183 = vshrl.u32 %v8182, 7
        %v8184 = vsub.s32 %v8181, %v8183
        %v8185 = vrot.slane %v7605, %v8184
        %v8186 = vcombine.low %v7606, %v7607
        %v8187 = vcombine.low %v7608, %v7609
        %v8189 = vunpack.c.l.s4 1983009808
        %v8190 = vunpack.c.0.s8 %v8189
        %v8191 = vlaneseq
        %v8192 = vshrl.u32 %v8191, 7
        %v8193 = vsub.s32 %v8190, %v8192
        %v8194 = vrot.slane %v8186, %v8193
        %v8196 = vunpack.c.l.s4 1983009808
        %v8197 = vunpack.c.0.s8 %v8196
        %v8198 = vlaneseq
        %v8199 = vshrl.u32 %v8198, 7
        %v8200 = vsub.s32 %v8197, %v8199
        %v8201 = vrot.slane %v8187, %v8200
        %v8202 = vcombine.low %v8194, %v8201
        %v8203 = vcombine.low %v7610, %v7611
        %v8204 = vcombine.low %v7612, %v7613
        %v8206 = vunpack.c.l.s4 1983009808
        %v8207 = vunpack.c.0.s8 %v8206
        %v8208 = vlaneseq
        %v8209 = vshrl.u32 %v8208, 7
        %v8210 = vsub.s32 %v8207, %v8209
        %v8211 = vrot.slane %v8203, %v8210
        %v8213 = vunpack.c.l.s4 1983009808
        %v8214 = vunpack.c.0.s8 %v8213
        %v8215 = vlaneseq
        %v8216 = vshrl.u32 %v8215, 7
        %v8217 = vsub.s32 %v8214, %v8216
        %v8218 = vrot.slane %v8204, %v8217
        %v8219 = vcombine.low %v8211, %v8218
        %v8221 = vunpack.c.l.s4 1983009808
        %v8222 = vunpack.c.0.s8 %v8221
        %v8223 = vlaneseq
        %v8224 = vshrl.u32 %v8223, 7
        %v8225 = vsub.s32 %v8222, %v8224
        %v8226 = vrot.slane %v7614, %v8225
        %v8227 = vcombine.low %v7615, %v7616
        %v8228 = vcombine.low %v7617, %v7618
        %v8230 = vunpack.c.l.s4 1983009808
        %v8231 = vunpack.c.0.s8 %v8230
        %v8232 = vlaneseq
        %v8233 = vshrl.u32 %v8232, 7
        %v8234 = vsub.s32 %v8231, %v8233
        %v8235 = vrot.slane %v8227, %v8234
        %v8237 = vunpack.c.l.s4 1983009808
        %v8238 = vunpack.c.0.s8 %v8237
        %v8239 = vlaneseq
        %v8240 = vshrl.u32 %v8239, 7
        %v8241 = vsub.s32 %v8238, %v8240
        %v8242 = vrot.slane %v8228, %v8241
        %v8243 = vcombine.low %v8235, %v8242
        %v8244 = vcombine.low %v7619, %v7620
        %v8245 = vcombine.low %v7621, %v7622
        %v8247 = vunpack.c.l.s4 1983009808
        %v8248 = vunpack.c.0.s8 %v8247
        %v8249 = vlaneseq
        %v8250 = vshrl.u32 %v8249, 7
        %v8251 = vsub.s32 %v8248, %v8250
        %v8252 = vrot.slane %v8244, %v8251
        %v8254 = vunpack.c.l.s4 1983009808
        %v8255 = vunpack.c.0.s8 %v8254
        %v8256 = vlaneseq
        %v8257 = vshrl.u32 %v8256, 7
        %v8258 = vsub.s32 %v8255, %v8257
        %v8259 = vrot.slane %v8245, %v8258
        %v8260 = vcombine.low %v8252, %v8259
        %v8262 = vunpack.c.l.s4 1983009808
        %v8263 = vunpack.c.0.s8 %v8262
        %v8264 = vlaneseq
        %v8265 = vshrl.u32 %v8264, 7
        %v8266 = vsub.s32 %v8263, %v8265
        %v8267 = vrot.slane %v7623, %v8266
        %v8268 = vcombine.low %v7624, %v7625
        %v8269 = vcombine.low %v7626, %v7627
        %v8271 = vunpack.c.l.s4 1983009808
        %v8272 = vunpack.c.0.s8 %v8271
        %v8273 = vlaneseq
        %v8274 = vshrl.u32 %v8273, 7
        %v8275 = vsub.s32 %v8272, %v8274
        %v8276 = vrot.slane %v8268, %v8275
        %v8278 = vunpack.c.l.s4 1983009808
        %v8279 = vunpack.c.0.s8 %v8278
        %v8280 = vlaneseq
        %v8281 = vshrl.u32 %v8280, 7
        %v8282 = vsub.s32 %v8279, %v8281
        %v8283 = vrot.slane %v8269, %v8282
        %v8284 = vcombine.low %v8276, %v8283
        %v8285 = vcombine.low %v7628, %v7629
        %v8286 = vcombine.low %v7630, %v7631
        %v8288 = vunpack.c.l.s4 1983009808
        %v8289 = vunpack.c.0.s8 %v8288
        %v8290 = vlaneseq
        %v8291 = vshrl.u32 %v8290, 7
        %v8292 = vsub.s32 %v8289, %v8291
        %v8293 = vrot.slane %v8285, %v8292
        %v8295 = vunpack.c.l.s4 1983009808
        %v8296 = vunpack.c.0.s8 %v8295
        %v8297 = vlaneseq
        %v8298 = vshrl.u32 %v8297, 7
        %v8299 = vsub.s32 %v8296, %v8298
        %v8300 = vrot.slane %v8286, %v8299
        %v8301 = vcombine.low %v8293, %v8300
        %v8303 = vunpack.c.l.s4 1983009808
        %v8304 = vunpack.c.0.s8 %v8303
        %v8305 = vlaneseq
        %v8306 = vshrl.u32 %v8305, 7
        %v8307 = vsub.s32 %v8304, %v8306
        %v8308 = vrot.slane %v7632, %v8307
        %v8309 = vcombine.low %v7633, %v7634
        %v8310 = vcombine.low %v7635, %v7636
        %v8312 = vunpack.c.l.s4 1983009808
        %v8313 = vunpack.c.0.s8 %v8312
        %v8314 = vlaneseq
        %v8315 = vshrl.u32 %v8314, 7
        %v8316 = vsub.s32 %v8313, %v8315
        %v8317 = vrot.slane %v8309, %v8316
        %v8319 = vunpack.c.l.s4 1983009808
        %v8320 = vunpack.c.0.s8 %v8319
        %v8321 = vlaneseq
        %v8322 = vshrl.u32 %v8321, 7
        %v8323 = vsub.s32 %v8320, %v8322
        %v8324 = vrot.slane %v8310, %v8323
        %v8325 = vcombine.low %v8317, %v8324
        %v8326 = vcombine.low %v7637, %v7638
        %v8327 = vcombine.low %v7639, %v7640
        %v8329 = vunpack.c.l.s4 1983009808
        %v8330 = vunpack.c.0.s8 %v8329
        %v8331 = vlaneseq
        %v8332 = vshrl.u32 %v8331, 7
        %v8333 = vsub.s32 %v8330, %v8332
        %v8334 = vrot.slane %v8326, %v8333
        %v8336 = vunpack.c.l.s4 1983009808
        %v8337 = vunpack.c.0.s8 %v8336
        %v8338 = vlaneseq
        %v8339 = vshrl.u32 %v8338, 7
        %v8340 = vsub.s32 %v8337, %v8339
        %v8341 = vrot.slane %v8327, %v8340
        %v8342 = vcombine.low %v8334, %v8341
        %v8344 = vunpack.c.l.s4 1983009808
        %v8345 = vunpack.c.0.s8 %v8344
        %v8346 = vlaneseq
        %v8347 = vshrl.u32 %v8346, 7
        %v8348 = vsub.s32 %v8345, %v8347
        %v8349 = vrot.slane %v7641, %v8348
        %v8350 = vcombine.low %v7642, %v7643
        %v8351 = vcombine.low %v7644, %v7645
        %v8353 = vunpack.c.l.s4 1983009808
        %v8354 = vunpack.c.0.s8 %v8353
        %v8355 = vlaneseq
        %v8356 = vshrl.u32 %v8355, 7
        %v8357 = vsub.s32 %v8354, %v8356
        %v8358 = vrot.slane %v8350, %v8357
        %v8360 = vunpack.c.l.s4 1983009808
        %v8361 = vunpack.c.0.s8 %v8360
        %v8362 = vlaneseq
        %v8363 = vshrl.u32 %v8362, 7
        %v8364 = vsub.s32 %v8361, %v8363
        %v8365 = vrot.slane %v8351, %v8364
        %v8366 = vcombine.low %v8358, %v8365
        %v8367 = vcombine.low %v7646, %v7647
        %v8368 = vcombine.low %v7648, %v7649
        %v8370 = vunpack.c.l.s4 1983009808
        %v8371 = vunpack.c.0.s8 %v8370
        %v8372 = vlaneseq
        %v8373 = vshrl.u32 %v8372, 7
        %v8374 = vsub.s32 %v8371, %v8373
        %v8375 = vrot.slane %v8367, %v8374
        %v8377 = vunpack.c.l.s4 1983009808
        %v8378 = vunpack.c.0.s8 %v8377
        %v8379 = vlaneseq
        %v8380 = vshrl.u32 %v8379, 7
        %v8381 = vsub.s32 %v8378, %v8380
        %v8382 = vrot.slane %v8368, %v8381
        %v8383 = vcombine.low %v8375, %v8382
        %v8385 = vunpack.c.l.s4 1983009808
        %v8386 = vunpack.c.0.s8 %v8385
        %v8387 = vlaneseq
        %v8388 = vshrl.u32 %v8387, 7
        %v8389 = vsub.s32 %v8386, %v8388
        %v8390 = vrot.slane %v7650, %v8389
        %v8391 = vcombine.low %v7651, %v7652
        %v8392 = vcombine.low %v7653, %v7654
        %v8394 = vunpack.c.l.s4 1983009808
        %v8395 = vunpack.c.0.s8 %v8394
        %v8396 = vlaneseq
        %v8397 = vshrl.u32 %v8396, 7
        %v8398 = vsub.s32 %v8395, %v8397
        %v8399 = vrot.slane %v8391, %v8398
        %v8401 = vunpack.c.l.s4 1983009808
        %v8402 = vunpack.c.0.s8 %v8401
        %v8403 = vlaneseq
        %v8404 = vshrl.u32 %v8403, 7
        %v8405 = vsub.s32 %v8402, %v8404
        %v8406 = vrot.slane %v8392, %v8405
        %v8407 = vcombine.low %v8399, %v8406
        %v8408 = vcombine.low %v7655, %v7656
        %v8409 = vcombine.low %v7657, %v7658
        %v8411 = vunpack.c.l.s4 1983009808
        %v8412 = vunpack.c.0.s8 %v8411
        %v8413 = vlaneseq
        %v8414 = vshrl.u32 %v8413, 7
        %v8415 = vsub.s32 %v8412, %v8414
        %v8416 = vrot.slane %v8408, %v8415
        %v8418 = vunpack.c.l.s4 1983009808
        %v8419 = vunpack.c.0.s8 %v8418
        %v8420 = vlaneseq
        %v8421 = vshrl.u32 %v8420, 7
        %v8422 = vsub.s32 %v8419, %v8421
        %v8423 = vrot.slane %v8409, %v8422
        %v8424 = vcombine.low %v8416, %v8423
        %v8426 = vunpack.c.l.s4 1983009808
        %v8427 = vunpack.c.0.s8 %v8426
        %v8428 = vlaneseq
        %v8429 = vshrl.u32 %v8428, 7
        %v8430 = vsub.s32 %v8427, %v8429
        %v8431 = vrot.slane %v7659, %v8430
        %v8432 = vcombine.low %v7660, %v7661
        %v8433 = vcombine.low %v7662, %v7663
        %v8435 = vunpack.c.l.s4 1983009808
        %v8436 = vunpack.c.0.s8 %v8435
        %v8437 = vlaneseq
        %v8438 = vshrl.u32 %v8437, 7
        %v8439 = vsub.s32 %v8436, %v8438
        %v8440 = vrot.slane %v8432, %v8439
        %v8442 = vunpack.c.l.s4 1983009808
        %v8443 = vunpack.c.0.s8 %v8442
        %v8444 = vlaneseq
        %v8445 = vshrl.u32 %v8444, 7
        %v8446 = vsub.s32 %v8443, %v8445
        %v8447 = vrot.slane %v8433, %v8446
        %v8448 = vcombine.low %v8440, %v8447
        %v8449 = vcombine.low %v7664, %v7665
        %v8450 = vcombine.low %v7666, %v7667
        %v8452 = vunpack.c.l.s4 1983009808
        %v8453 = vunpack.c.0.s8 %v8452
        %v8454 = vlaneseq
        %v8455 = vshrl.u32 %v8454, 7
        %v8456 = vsub.s32 %v8453, %v8455
        %v8457 = vrot.slane %v8449, %v8456
        %v8459 = vunpack.c.l.s4 1983009808
        %v8460 = vunpack.c.0.s8 %v8459
        %v8461 = vlaneseq
        %v8462 = vshrl.u32 %v8461, 7
        %v8463 = vsub.s32 %v8460, %v8462
        %v8464 = vrot.slane %v8450, %v8463
        %v8465 = vcombine.low %v8457, %v8464
        %v8467 = vunpack.c.l.s4 1983009808
        %v8468 = vunpack.c.0.s8 %v8467
        %v8469 = vlaneseq
        %v8470 = vshrl.u32 %v8469, 7
        %v8471 = vsub.s32 %v8468, %v8470
        %v8472 = vrot.slane %v7668, %v8471
        %v8473 = vcombine.low %v7669, %v7670
        %v8474 = vcombine.low %v7671, %v7672
        %v8476 = vunpack.c.l.s4 1983009808
        %v8477 = vunpack.c.0.s8 %v8476
        %v8478 = vlaneseq
        %v8479 = vshrl.u32 %v8478, 7
        %v8480 = vsub.s32 %v8477, %v8479
        %v8481 = vrot.slane %v8473, %v8480
        %v8483 = vunpack.c.l.s4 1983009808
        %v8484 = vunpack.c.0.s8 %v8483
        %v8485 = vlaneseq
        %v8486 = vshrl.u32 %v8485, 7
        %v8487 = vsub.s32 %v8484, %v8486
        %v8488 = vrot.slane %v8474, %v8487
        %v8489 = vcombine.low %v8481, %v8488
        %v8490 = vcombine.low %v7673, %v7674
        %v8491 = vcombine.low %v7675, %v7676
        %v8493 = vunpack.c.l.s4 1983009808
        %v8494 = vunpack.c.0.s8 %v8493
        %v8495 = vlaneseq
        %v8496 = vshrl.u32 %v8495, 7
        %v8497 = vsub.s32 %v8494, %v8496
        %v8498 = vrot.slane %v8490, %v8497
        %v8500 = vunpack.c.l.s4 1983009808
        %v8501 = vunpack.c.0.s8 %v8500
        %v8502 = vlaneseq
        %v8503 = vshrl.u32 %v8502, 7
        %v8504 = vsub.s32 %v8501, %v8503
        %v8505 = vrot.slane %v8491, %v8504
        %v8506 = vcombine.low %v8498, %v8505
        %v8508 = vunpack.c.l.s4 1983009808
        %v8509 = vunpack.c.0.s8 %v8508
        %v8510 = vlaneseq
        %v8511 = vshrl.u32 %v8510, 7
        %v8512 = vsub.s32 %v8509, %v8511
        %v8513 = vrot.slane %v7677, %v8512
        %v8514 = vcombine.low %v7678, %v7679
        %v8515 = vcombine.low %v7680, %v7681
        %v8517 = vunpack.c.l.s4 1983009808
        %v8518 = vunpack.c.0.s8 %v8517
        %v8519 = vlaneseq
        %v8520 = vshrl.u32 %v8519, 7
        %v8521 = vsub.s32 %v8518, %v8520
        %v8522 = vrot.slane %v8514, %v8521
        %v8524 = vunpack.c.l.s4 1983009808
        %v8525 = vunpack.c.0.s8 %v8524
        %v8526 = vlaneseq
        %v8527 = vshrl.u32 %v8526, 7
        %v8528 = vsub.s32 %v8525, %v8527
        %v8529 = vrot.slane %v8515, %v8528
        %v8530 = vcombine.low %v8522, %v8529
        %v8531 = vcombine.low %v7682, %v7683
        %v8532 = vcombine.low %v7684, %v7685
        %v8534 = vunpack.c.l.s4 1983009808
        %v8535 = vunpack.c.0.s8 %v8534
        %v8536 = vlaneseq
        %v8537 = vshrl.u32 %v8536, 7
        %v8538 = vsub.s32 %v8535, %v8537
        %v8539 = vrot.slane %v8531, %v8538
        %v8541 = vunpack.c.l.s4 1983009808
        %v8542 = vunpack.c.0.s8 %v8541
        %v8543 = vlaneseq
        %v8544 = vshrl.u32 %v8543, 7
        %v8545 = vsub.s32 %v8542, %v8544
        %v8546 = vrot.slane %v8532, %v8545
        %v8547 = vcombine.low %v8539, %v8546
        %v8549 = vunpack.c.l.s4 1983009808
        %v8550 = vunpack.c.0.s8 %v8549
        %v8551 = vlaneseq
        %v8552 = vshrl.u32 %v8551, 7
        %v8553 = vsub.s32 %v8550, %v8552
        %v8554 = vrot.slane %v7686, %v8553
        %v8555 = vcombine.low %v7687, %v7688
        %v8556 = vcombine.low %v7689, %v7690
        %v8558 = vunpack.c.l.s4 1983009808
        %v8559 = vunpack.c.0.s8 %v8558
        %v8560 = vlaneseq
        %v8561 = vshrl.u32 %v8560, 7
        %v8562 = vsub.s32 %v8559, %v8561
        %v8563 = vrot.slane %v8555, %v8562
        %v8565 = vunpack.c.l.s4 1983009808
        %v8566 = vunpack.c.0.s8 %v8565
        %v8567 = vlaneseq
        %v8568 = vshrl.u32 %v8567, 7
        %v8569 = vsub.s32 %v8566, %v8568
        %v8570 = vrot.slane %v8556, %v8569
        %v8571 = vcombine.low %v8563, %v8570
        %v8572 = vcombine.low %v7691, %v7692
        %v8573 = vcombine.low %v7693, %v7694
        %v8575 = vunpack.c.l.s4 1983009808
        %v8576 = vunpack.c.0.s8 %v8575
        %v8577 = vlaneseq
        %v8578 = vshrl.u32 %v8577, 7
        %v8579 = vsub.s32 %v8576, %v8578
        %v8580 = vrot.slane %v8572, %v8579
        %v8582 = vunpack.c.l.s4 1983009808
        %v8583 = vunpack.c.0.s8 %v8582
        %v8584 = vlaneseq
        %v8585 = vshrl.u32 %v8584, 7
        %v8586 = vsub.s32 %v8583, %v8585
        %v8587 = vrot.slane %v8573, %v8586
        %v8588 = vcombine.low %v8580, %v8587
        %v8590 = vunpack.c.l.s4 1983009808
        %v8591 = vunpack.c.0.s8 %v8590
        %v8592 = vlaneseq
        %v8593 = vshrl.u32 %v8592, 7
        %v8594 = vsub.s32 %v8591, %v8593
        %v8595 = vrot.slane %v7695, %v8594
        %v8650 = vsel %vm2479, %v7874, 0.0
        %v8651 = vsel %vm2479, %v7891, 0.0
        %v8652 = vadd.f32 %v8650, %v8651
        %v8653 = vsel %vm7420, %v7898, 0.0
        %v8654 = vadd.f32 %v8652, %v8653
        %v8655 = vsel %vm2479, %v7915, 0.0
        %v8656 = vadd.f32 %v8654, %v8655
        %v8657 = vsel %vm2479, %v7932, 0.0
        %v8658 = vadd.f32 %v8656, %v8657
        %v8659 = vsel %vm7420, %v7939, 0.0
        %v8660 = vadd.f32 %v8658, %v8659
        %v8661 = vsel %vm2479, %v7956, 0.0
        %v8662 = vadd.f32 %v8660, %v8661
        %v8663 = vsel %vm2479, %v7973, 0.0
        %v8664 = vadd.f32 %v8662, %v8663
        %v8665 = vsel %vm7420, %v7980, 0.0
        %v8666 = vadd.f32 %v8664, %v8665
        %v8667 = vsel %vm2479, %v7997, 0.0
        %v8668 = vadd.f32 %v8666, %v8667
        %v8669 = vsel %vm2479, %v8014, 0.0
        %v8670 = vadd.f32 %v8668, %v8669
        %v8671 = vsel %vm7420, %v8021, 0.0
        %v8672 = vadd.f32 %v8670, %v8671
        %v8673 = vsel %vm2479, %v8038, 0.0
        %v8674 = vadd.f32 %v8672, %v8673
        %v8675 = vsel %vm2479, %v8055, 0.0
        %v8676 = vadd.f32 %v8674, %v8675
        %v8677 = vsel %vm7420, %v8062, 0.0
        %v8678 = vadd.f32 %v8676, %v8677
        %v8679 = vsel %vm2479, %v8079, 0.0
        %v8680 = vadd.f32 %v8678, %v8679
        %v8681 = vsel %vm2479, %v8096, 0.0
        %v8682 = vadd.f32 %v8680, %v8681
        %v8683 = vsel %vm7420, %v8103, 0.0
        %v8684 = vadd.f32 %v8682, %v8683
        %v8685 = vsel %vm2479, %v8120, 0.0
        %v8686 = vadd.f32 %v8684, %v8685
        %v8687 = vsel %vm2479, %v8137, 0.0
        %v8688 = vadd.f32 %v8686, %v8687
        %v8689 = vsel %vm7420, %v8144, 0.0
        %v8690 = vadd.f32 %v8688, %v8689
        %v8691 = vsel %vm2479, %v8161, 0.0
        %v8692 = vadd.f32 %v8690, %v8691
        %v8693 = vsel %vm2479, %v8178, 0.0
        %v8694 = vadd.f32 %v8692, %v8693
        %v8695 = vsel %vm7420, %v8185, 0.0
        %v8696 = vadd.f32 %v8694, %v8695
        %v8697 = vsel %vm2479, %v8202, 0.0
        %v8698 = vadd.f32 %v8696, %v8697
        %v8699 = vsel %vm2479, %v8219, 0.0
        %v8700 = vadd.f32 %v8698, %v8699
        %v8701 = vsel %vm7420, %v8226, 0.0
        %v8702 = vadd.f32 %v8700, %v8701
        %v8703 = vsel %vm2479, %v8243, 0.0
        %v8704 = vadd.f32 %v8702, %v8703
        %v8705 = vsel %vm2479, %v8260, 0.0
        %v8706 = vadd.f32 %v8704, %v8705
        %v8707 = vsel %vm7420, %v8267, 0.0
        %v8708 = vadd.f32 %v8706, %v8707
        %v8709 = vsel %vm2479, %v8284, 0.0
        %v8710 = vadd.f32 %v8708, %v8709
        %v8711 = vsel %vm2479, %v8301, 0.0
        %v8712 = vadd.f32 %v8710, %v8711
        %v8713 = vsel %vm7420, %v8308, 0.0
        %v8714 = vadd.f32 %v8712, %v8713
        %v8715 = vsel %vm2479, %v8325, 0.0
        %v8716 = vadd.f32 %v8714, %v8715
        %v8717 = vsel %vm2479, %v8342, 0.0
        %v8718 = vadd.f32 %v8716, %v8717
        %v8719 = vsel %vm7420, %v8349, 0.0
        %v8720 = vadd.f32 %v8718, %v8719
        %v8721 = vsel %vm2479, %v8366, 0.0
        %v8722 = vadd.f32 %v8720, %v8721
        %v8723 = vsel %vm2479, %v8383, 0.0
        %v8724 = vadd.f32 %v8722, %v8723
        %v8725 = vsel %vm7420, %v8390, 0.0
        %v8726 = vadd.f32 %v8724, %v8725
        %v8727 = vsel %vm2479, %v8407, 0.0
        %v8728 = vadd.f32 %v8726, %v8727
        %v8729 = vsel %vm2479, %v8424, 0.0
        %v8730 = vadd.f32 %v8728, %v8729
        %v8731 = vsel %vm7420, %v8431, 0.0
        %v8732 = vadd.f32 %v8730, %v8731
        %v8733 = vsel %vm2479, %v8448, 0.0
        %v8734 = vadd.f32 %v8732, %v8733
        %v8735 = vsel %vm2479, %v8465, 0.0
        %v8736 = vadd.f32 %v8734, %v8735
        %v8737 = vsel %vm7420, %v8472, 0.0
        %v8738 = vadd.f32 %v8736, %v8737
        %v8739 = vsel %vm2479, %v8489, 0.0
        %v8740 = vadd.f32 %v8738, %v8739
        %v8741 = vsel %vm2479, %v8506, 0.0
        %v8742 = vadd.f32 %v8740, %v8741
        %v8743 = vsel %vm7420, %v8513, 0.0
        %v8744 = vadd.f32 %v8742, %v8743
        %v8745 = vsel %vm2479, %v8530, 0.0
        %v8746 = vadd.f32 %v8744, %v8745
        %v8747 = vsel %vm2479, %v8547, 0.0
        %v8748 = vadd.f32 %v8746, %v8747
        %v8749 = vsel %vm7420, %v8554, 0.0
        %v8750 = vadd.f32 %v8748, %v8749
        %v8751 = vsel %vm2479, %v8571, 0.0
        %v8752 = vadd.f32 %v8750, %v8751
        %v8753 = vsel %vm2479, %v8588, 0.0
        %v8754 = vadd.f32 %v8752, %v8753
        %v8755 = vsel %vm7420, %v8595, 0.0
        %v8756 = vadd.f32 %v8754, %v8755
        %v8757 = vrot.slane %v8756, 4
        %v8758 = vadd.f32 %v8756, %v8757
        %v8759 = vrot.slane %v8758, 2
        %v8760 = vadd.f32 %v8758, %v8759
        %v8761 = vrot.slane %v8760, 1
        %v8762 = vadd.f32 %v8760, %v8761
        %v8763 = vadd.f32 %v7533, %v8762
        %8764 = vst.msk [vmem:[%s225] sm:$0x1] %vm7363, %v8763
        %s8765 = smul.u32 18, %s27
        %p8766 = scmp.lt.s32.totalorder %s26, 1
        %s8767 = scalar_select %p8766, %s26, 1
        %p8768 = scmp.lt.s32.totalorder %s8765, 17
        %s8769 = scalar_select %p8768, %s8765, 17
        %s8770 = smul.addr %s8769, 3
        %s8771 = smul.addr %s8767, 54
        %s8772 = sadd.s32 %s8770, %s8771
        %s8773 = smul.addr %s8772, 4
        %s8774 = scalar_lea.vmem %s2, %s8773
        %s8775 = sand.u32 %s117, 1
        %s8776 = scalar_lea.sflag [#allocation3], %s8775
        %s8777 = sand.u32 %s117, 1
        %s8778 = scalar_lea.vmem [#allocation2], %s8777
        %s8779 = sand.u32 %s143, 1
        %s8780 = scalar_lea.sflag [#allocation5], %s8779
        %s8781 = sand.u32 %s143, 1
        %s8782 = scalar_lea.vmem [#allocation4], %s8781
        // Predicated region
        $region33: #{tpu_custom_call.1} parent=27 // pred_check
          %p8783 = pneg %p101
        $region34: #{tpu_custom_call.1} parent=27 // pred_check_branch
          %8785 = sbr.rel (%p8783) target = $region36
        $region35: #{tpu_custom_call.1} parent=27 // pred_region
          %s8786 = smul.u32 18, %s27
        $region36: #{tpu_custom_call.1} parent=27 // pred_fallthru
          _
        // Predicated region
        $region37: #{tpu_custom_call.1} parent=27 // pred_check
          %p8787 = pneg %p127
        $region38: #{tpu_custom_call.1} parent=27 // pred_check_branch
          %8789 = sbr.rel (%p8787) target = $region40
        $region39: #{tpu_custom_call.1} parent=27 // pred_region
          %s8791 = ssub.s32 16, 16
          %8792 = vsyncadd %s8776, %s8791
          %s8793 = smul.addr %s26, 16
          %s8794 = scalar_lea.hbm %s3, %s8793
          %s8796 = sshll.u32 %s8778, 4
          %s8797 = int_to_ptr.vmem [resolvable:$true] %s8796
          %8799 = dma.vmem_to_hbm [thread:$0]  %s8797, 16, %s8794, %s8776
        $region40: #{tpu_custom_call.1} parent=27 // pred_fallthru
          _
        // Predicated region
        $region41: #{tpu_custom_call.1} parent=27 // pred_check
          %p8800 = pneg %p153
        $region42: #{tpu_custom_call.1} parent=27 // pred_check_branch
          %8802 = sbr.rel (%p8800) target = $region44
        $region43: #{tpu_custom_call.1} parent=27 // pred_region
          %s8804 = ssub.s32 16, 16
          %8805 = vsyncadd %s8780, %s8804
          %s8806 = smul.addr %s26, 16
          %s8807 = scalar_lea.hbm %s4, %s8806
          %s8809 = sshll.u32 %s8782, 4
          %s8810 = int_to_ptr.vmem [resolvable:$true] %s8809
          %8812 = dma.vmem_to_hbm [thread:$0]  %s8810, 16, %s8807, %s8780
        $region44: #{tpu_custom_call.1} parent=27 // pred_fallthru
          _
      $region28: #{tpu_custom_call.1} parent=5 // pred_fallthru
        _
      %p8813 = scmp.le.s32.totalorder 2, %s17
      // Predicated region
      $region45: #{tpu_custom_call.1} parent=5 // pred_check
        %p8814 = pneg %p8813
      $region46: #{tpu_custom_call.1} parent=5 // pred_check_branch
        %8816 = sbr.rel (%p8814) target = $region48
      $region47: #{tpu_custom_call.1} parent=5 // pred_region
        %s8817 = ssub.s32 %s17, 2
        // Predicated region
        $region49: #{tpu_custom_call.1} parent=47 // pred_check
          %p8818 = pneg %p107
        $region50: #{tpu_custom_call.1} parent=47 // pred_check_branch
          %8820 = sbr.rel (%p8818) target = $region52
        $region51: #{tpu_custom_call.1} parent=47 // pred_region
          %s8821 = smul.u32 18, %s29
          %p8822 = scmp.lt.s32.totalorder %s28, 1
          %s8823 = scalar_select %p8822, %s28, 1
          %p8824 = scmp.lt.s32.totalorder %s8821, 17
          %s8825 = scalar_select %p8824, %s8821, 17
          %s8826 = smul.addr %s8825, 3
          %s8827 = smul.addr %s8823, 54
          %s8828 = sadd.s32 %s8826, %s8827
          %s8829 = smul.addr %s8828, 4
          %s8830 = scalar_lea.vmem %s2, %s8829
        $region52: #{tpu_custom_call.1} parent=47 // pred_fallthru
          _
        // Predicated region
        $region53: #{tpu_custom_call.1} parent=47 // pred_check
          %p8831 = pneg %p133
        $region54: #{tpu_custom_call.1} parent=47 // pred_check_branch
          %8833 = sbr.rel (%p8831) target = $region56
        $region55: #{tpu_custom_call.1} parent=47 // pred_region
          %s8834 = sand.u32 %s118, 1
          %s8835 = scalar_lea.sflag [#allocation3], %s8834
          %s8836 = sand.u32 %s118, 1
          %s8837 = scalar_lea.vmem [#allocation2], %s8836
          %8838 = dma.done %s8835, 16
        $region56: #{tpu_custom_call.1} parent=47 // pred_fallthru
          _
        // Predicated region
        $region57: #{tpu_custom_call.1} parent=47 // pred_check
          %p8839 = pneg %p159
        $region58: #{tpu_custom_call.1} parent=47 // pred_check_branch
          %8841 = sbr.rel (%p8839) target = $region60
        $region59: #{tpu_custom_call.1} parent=47 // pred_region
          %s8842 = sand.u32 %s144, 1
          %s8843 = scalar_lea.sflag [#allocation5], %s8842
          %s8844 = sand.u32 %s144, 1
          %s8845 = scalar_lea.vmem [#allocation4], %s8844
          %8846 = dma.done %s8843, 16
        $region60: #{tpu_custom_call.1} parent=47 // pred_fallthru
          _
      $region48: #{tpu_custom_call.1} parent=5 // pred_fallthru
        _
    $region6: #{tpu_custom_call.1} parent=1 // loop_footer
      %s21 = sadd.s32 1, %s17
    $region7: #{tpu_custom_call.1} parent=1 // loop_footer_branch
      %16 = sbr.rel target = $region3
    $region8: #{tpu_custom_call.1} parent=1 // loop_exit
      _
    %8847 = vsyncpa [#allocation3], 1
    %s8848 = scalar_lea.sflag [#allocation3], 1
    %8849 = vsyncpa %s8848, 1
    %8850 = vsyncpa [#allocation5], 1
    %s8851 = scalar_lea.sflag [#allocation5], 1
    %8852 = vsyncpa %s8851, 1

</llo_original>
